<compile_context>
chip_gen: v5e
topology: v5e:2x2
jax: 0.10.0
libtpu: 0.0.40
codegen_flags: <defaults>
</compile_context>

<pallas_src>
import functools

import jax
import jax.numpy as jnp
import numpy as np
from jax import lax
from jax.experimental import pallas as pl
from jax.experimental.pallas import tpu as pltpu

# ----------------------------------------------------------------------------
# Problem configuration (matches KalmanNet.__init__ shape arithmetic).
# ----------------------------------------------------------------------------
STATE_DIM = 4          # m
OBS_DIM = 2            # n
IN_MULT = 5            # in_mult_KNet
OUT_MULT = 40          # out_mult_KNet

D_HID_Q = STATE_DIM ** 2                           # 16
D_HID_SIGMA = STATE_DIM ** 2                       # 16
D_HID_S = OBS_DIM ** 2                             # 4
D_567 = 2 * STATE_DIM * IN_MULT + 2 * OBS_DIM * IN_MULT   # 60
D_HID_FC2 = (D_HID_S + D_HID_SIGMA) * OUT_MULT     # 800
D_HID_FC2_PAD = 896                                # 7 * 128 (lane padded)
D_OUT_FC2 = OBS_DIM * STATE_DIM                    # 8

BATCH = 128            # >= 128 per perf review (fills MXU rows)
BATCH_GROUP = 64       # per-core batch block; grid splits groups across cores
SEQ_LEN = 12

Y_LANES = 16           # [y (2) | y @ p_expand (8) | pad (6)]
OUT_LANES = 64         # packed belief record per step

# Packed belief lane offsets (both for s0 input and the (T, B, 64) output).
O_POST = 0             # m1x_posterior            (4)
O_POST_PREV = 4        # m1x_posterior_previous   (4)
O_PRIOR_PREV = 8       # m1x_prior_previous       (4)
O_Y_PREV = 12          # y_previous               (2)
O_HQ = 16              # h_Q                      (16)
O_HSIG = 32            # h_Sigma                  (16)
O_HS = 48              # h_S                      (4)
STATE_USED = 52

FUSED_KEYS = [
    "w_prior",
    "nrm_reduce", "nrm_expand", "s_pairsum",
    "w567", "b567",
    "gq_w", "gq_b",
    "gsig_w", "gsig_b",
    "gs_w", "gs_b",
    "w_fc14", "b_fc14",
    "w_fc2a3a", "b_fc2a3a",
    "w_2b3", "b_2b3",
    "fc4_wb",
]
F32_MAT_KEYS = frozenset({"w_prior", "s_pairsum"})       # Kalman-update path: f32
BIAS_KEYS = frozenset({"b567", "gq_b", "gsig_b", "gs_b",
                       "b_fc14", "b_fc2a3a", "b_2b3"})   # added in f32


# ----------------------------------------------------------------------------
# Backend-agnostic fused step (runs inside the kernel, in the XLA mirror and in
# float64 numpy for the algebraic-equivalence check).
# ----------------------------------------------------------------------------
def _dot_bf16(a, b):
    # Neural-net matmuls: bf16 operands, f32 accumulation on the MXU.
    return jnp.dot(a.astype(jnp.bfloat16), b.astype(jnp.bfloat16),
                   preferred_element_type=jnp.float32)


def _dot_f32(a, b):
    # Kalman state-update matmuls (prior propagation, gain application): f32.
    return jnp.dot(a, b, preferred_element_type=jnp.float32)


def gru_combine(g, h, xp):
    """PyTorch nn.GRU cell (seq_len == 1); g = [gi(3h) | gh(3h)], gates [r,z,n].
    r and z share a single sigmoid over the contiguous 2h slice (1 EUP push)."""
    hid = h.shape[1]
    gi, gh = g[:, :3 * hid], g[:, 3 * hid:]
    rz = 1.0 / (1.0 + xp.exp(-(gi[:, :2 * hid] + gh[:, :2 * hid])))
    r, z = rz[:, :hid], rz[:, hid:]
    n = xp.tanh(gi[:, 2 * hid:] + r * gh[:, 2 * hid:])
    return (1.0 - z) * n + z * h


def fused_step(carry, w, y, y_exp, xp, dot_nn, dot_kf):
    """One KalmanNet filter step on the fused / folded weights."""
    post, post_prev, prior_prev, y_prev, h_q, h_sig, h_s = carry
    m, n = STATE_DIM, OBS_DIM

    # step_prior (fused): [m1x_prior | m1y | m1y @ p_expand] in one matmul.
    prior = dot_kf(post, w["w_prior"])
    m1x_prior = prior[:, 0:m]
    m1y = prior[:, m:m + n]
    m1y_exp = prior[:, m + n:m + n + m * n]
    diff_y = y - m1y
    diff_y_exp = y_exp - m1y_exp

    # step_KGain_est: the four L2 normalizations share one reduce / one
    # inverse-sqrt / one expand / one multiply.
    d12 = xp.concatenate([post - post_prev, post - prior_prev,
                          y - y_prev, diff_y], axis=1)           # (B, 12)
    sumsq = dot_nn(d12 * d12, w["nrm_reduce"])                    # (B, 4)
    inv = 1.0 / xp.sqrt(xp.maximum(sumsq, 1e-24))                 # == 1/max(||.||,1e-12)
    d12n = d12 * dot_nn(inv, w["nrm_expand"])                     # (B, 12)

    # FC5 | FC6 | FC7 as one block-diagonal matmul.
    out567 = xp.maximum(dot_nn(d12n, w["w567"]) + w["b567"], 0.0)  # (B, 60)

    # GRU_Q: [gi | gh] from one matmul over [out567 | h_Q].
    gq = dot_nn(xp.concatenate([out567, h_q], axis=1), w["gq_w"]) + w["gq_b"]
    h_q_new = gru_combine(gq, h_q, xp)                             # out_Q

    # GRU_Sigma: [gi | gh] from one matmul over [out567 | out_Q | h_Sigma].
    gsig = dot_nn(xp.concatenate([out567, h_q_new, h_sig], axis=1),
                  w["gsig_w"]) + w["gsig_b"]
    out_sigma = gru_combine(gsig, h_sig, xp)

    # FC1 and FC4's out_Sigma contribution from one matmul.
    f14 = dot_nn(out_sigma, w["w_fc14"]) + w["b_fc14"]             # (B, 20)
    out_fc1 = xp.maximum(f14[:, 0:n * n], 0.0)
    fc4a = f14[:, n * n:]

    # GRU_S: [gi | gh] from one matmul over [out567 | out_FC1 | h_S].
    gs = dot_nn(xp.concatenate([out567, out_fc1, h_s], axis=1),
                w["gs_w"]) + w["gs_b"]
    h_s_new = gru_combine(gs, h_s, xp)                             # out_S

    # FC2 hidden (padded to 896 lanes) and FC3's h_S contribution in one matmul.
    big1 = dot_nn(xp.concatenate([out_sigma, h_s_new], axis=1),
                  w["w_fc2a3a"]) + w["b_fc2a3a"]                   # (B, 912)
    hid = xp.maximum(big1[:, 0:D_HID_FC2_PAD], 0.0)
    fc3a = big1[:, D_HID_FC2_PAD:]

    # FC2 output (Kalman gain) and FC3's out_FC2 contribution in one matmul.
    big2 = dot_nn(hid, w["w_2b3"]) + w["b_2b3"]                    # (B, 24)
    out_fc2 = big2[:, 0:m * n]
    fc3b = big2[:, m * n:]

    out_fc3 = xp.maximum(fc3a + fc3b, 0.0)
    h_sig_new = xp.maximum(fc4a + dot_nn(out_fc3, w["fc4_wb"]), 0.0)   # out_FC4

    # posterior = m1x_prior + K @ diff_y  (vectorized torch.baddbmm).
    kd = dot_kf(diff_y_exp * out_fc2, w["s_pairsum"])              # (B, m)
    posterior = m1x_prior + kd

    return (posterior, post, m1x_prior, y, h_q_new, h_sig_new, h_s_new)


def _unpack_belief(s):
    return (s[:, O_POST:O_POST + STATE_DIM],
            s[:, O_POST_PREV:O_POST_PREV + STATE_DIM],
            s[:, O_PRIOR_PREV:O_PRIOR_PREV + STATE_DIM],
            s[:, O_Y_PREV:O_Y_PREV + OBS_DIM],
            s[:, O_HQ:O_HQ + D_HID_Q],
            s[:, O_HSIG:O_HSIG + D_HID_SIGMA],
            s[:, O_HS:O_HS + D_HID_S])


# ----------------------------------------------------------------------------
# Pallas kernel: full T-step filter for one batch group.
# ----------------------------------------------------------------------------
def _kalman_filter_kernel(*refs):
    y_ref, s0_ref = refs[0], refs[1]
    nw = len(FUSED_KEYS)
    w = {k: r[...] for k, r in zip(FUSED_KEYS, refs[2:2 + nw])}   # hoisted loads
    out_ref = refs[2 + nw]

    seq_len = y_ref.shape[0]

    # Zero the (few) unused output lanes once so the whole slab is defined.
    out_ref[...] = jnp.zeros(out_ref.shape, out_ref.dtype)

    carry0 = _unpack_belief(s0_ref[...])

    def step(t, carry):
        yt = y_ref[t]                                  # (BG, 16)
        y = yt[:, 0:OBS_DIM]
        y_exp = yt[:, OBS_DIM:OBS_DIM + STATE_DIM * OBS_DIM]
        new_carry = fused_step(carry, w, y, y_exp, jnp, _dot_bf16, _dot_f32)
        posterior, post, m1x_prior, y_cur, h_q, h_sig, h_s = new_carry
        out_ref[t, :, O_POST:O_POST + STATE_DIM] = posterior
        out_ref[t, :, O_POST_PREV:O_POST_PREV + STATE_DIM] = post
        out_ref[t, :, O_PRIOR_PREV:O_PRIOR_PREV + STATE_DIM] = m1x_prior
        out_ref[t, :, O_Y_PREV:O_Y_PREV + OBS_DIM] = y_cur
        out_ref[t, :, O_HQ:O_HQ + D_HID_Q] = h_q
        out_ref[t, :, O_HSIG:O_HSIG + D_HID_SIGMA] = h_sig
        out_ref[t, :, O_HS:O_HS + D_HID_S] = h_s
        return new_carry

    lax.fori_loop(0, seq_len, step, carry0)


@functools.partial(jax.jit, static_argnames=("batch_group",))
def kalman_net_filter(y_slab, s0, fused, *, batch_group=BATCH_GROUP):
    """Run the full KalmanNet filter over a measurement sequence.

    y_slab: (T, B, 16) = [y | y @ p_expand | pad]    (see build_y_slab)
    s0:     (B, 64) packed initial belief            (see pack_belief)
    Returns (T, B, 64): packed belief record after every step (posterior at
    lanes 0:4, m1x_prior at 8:12, GRU hidden states at 16:52).
    """
    seq_len, batch, y_lanes = y_slab.shape
    assert y_lanes == Y_LANES and s0.shape == (batch, OUT_LANES)
    bg = min(batch_group, batch)
    assert batch % bg == 0 and bg % 8 == 0
    num_groups = batch // bg

    inputs = [y_slab, s0] + [fused[k] for k in FUSED_KEYS]
    in_specs = [
        pl.BlockSpec((seq_len, bg, Y_LANES), lambda g: (0, g, 0)),
        pl.BlockSpec((bg, OUT_LANES), lambda g: (g, 0)),
    ] + [pl.BlockSpec(tuple(fused[k].shape), lambda g: (0, 0)) for k in FUSED_KEYS]
    out_spec = pl.BlockSpec((seq_len, bg, OUT_LANES), lambda g: (0, g, 0))

    # Footprint per grid step (double-buffered blocked I/O + bf16 weights +
    # f32 intermediates of the 896-wide FC2 pair) is well under 2 MiB.
    return pl.pallas_call(
        _kalman_filter_kernel,
        out_shape=jax.ShapeDtypeStruct((seq_len, batch, OUT_LANES), jnp.float32),
        grid=(num_groups,),
        in_specs=in_specs,
        out_specs=out_spec,
        compiler_params=pltpu.CompilerParams(
            dimension_semantics=("parallel",),        # v7x: one group per core
            vmem_limit_bytes=16 * 1024 * 1024),
    )(*inputs)


# ----------------------------------------------------------------------------
# Matched-precision XLA mirror of the fused math (validation of the kernel).
# ----------------------------------------------------------------------------
@jax.jit
def fused_mirror(y_slab, s0, fused):
    def body(carry, yt):
        y = yt[:, 0:OBS_DIM]
        y_exp = yt[:, OBS_DIM:OBS_DIM + STATE_DIM * OBS_DIM]
        new_carry = fused_step(carry, fused, y, y_exp, jnp, _dot_bf16, _dot_f32)
        return new_carry, new_carry[0]
    carry, posts = lax.scan(body, _unpack_belief(s0), y_slab)
    return posts, carry


# ----------------------------------------------------------------------------
# Host-side weight construction (PyTorch-equivalent raw weights) and fusion.
# ----------------------------------------------------------------------------
def _uniform(key, shape, scale):
    return jax.random.uniform(key, shape, jnp.float32, -scale, scale)


def make_weights(key):
    keys = iter(jax.random.split(key, 64))
    w = {}
    # Dynamics (synthetic linear system): F = I + 0.05*U, H = [I_n|0] + 0.05*U.
    F = jnp.eye(STATE_DIM, dtype=jnp.float32) + _uniform(next(keys), (STATE_DIM, STATE_DIM), 0.05)
    H = (jnp.eye(OBS_DIM, STATE_DIM, dtype=jnp.float32)
         + _uniform(next(keys), (OBS_DIM, STATE_DIM), 0.05))
    w["Ft"], w["Ht"] = F.T, H.T

    def linear(name, d_in, d_out):
        s = 1.0 / np.sqrt(d_in)
        w[name + "_w"] = _uniform(next(keys), (d_in, d_out), s)
        w[name + "_b"] = _uniform(next(keys), (1, d_out), s)

    linear("fc1", D_HID_SIGMA, OBS_DIM ** 2)
    linear("fc2a", D_HID_S + D_HID_SIGMA, D_HID_FC2)
    linear("fc2b", D_HID_FC2, D_OUT_FC2)
    w["fc2a_b"] = jnp.zeros((1, D_HID_FC2), jnp.float32)   # init_weights(): bias = 0
    w["fc2b_b"] = jnp.zeros((1, D_OUT_FC2), jnp.float32)
    linear("fc3", D_HID_S + D_OUT_FC2, STATE_DIM ** 2)
    linear("fc4", D_HID_SIGMA + STATE_DIM ** 2, D_HID_SIGMA)
    linear("fc5", STATE_DIM, STATE_DIM * IN_MULT)
    linear("fc6", STATE_DIM, STATE_DIM * IN_MULT)
    linear("fc7", 2 * OBS_DIM, 2 * OBS_DIM * IN_MULT)

    def gru(name, d_in, d_hid):
        s = 1.0 / np.sqrt(d_hid)
        w[name + "_wi"] = _uniform(next(keys), (d_in, 3 * d_hid), s)
        w[name + "_wh"] = _uniform(next(keys), (d_hid, 3 * d_hid), s)
        w[name + "_bi"] = _uniform(next(keys), (1, 3 * d_hid), s)
        w[name + "_bh"] = _uniform(next(keys), (1, 3 * d_hid), s)

    gru("gq", STATE_DIM * IN_MULT, D_HID_Q)
    gru("gsig", D_HID_Q + STATE_DIM * IN_MULT, D_HID_SIGMA)
    gru("gs", OBS_DIM ** 2 + 2 * OBS_DIM * IN_MULT, D_HID_S)
    return w


def prepare_fused_weights(w, dtype=np.float64):
    """Host-side fusion / folding / padding of the raw KalmanNet weights."""
    def A(x):
        return np.asarray(x, dtype=dtype)

    out = {}
    Ft, Ht = A(w["Ft"]), A(w["Ht"])
    FtHt = Ft @ Ht
    # prior: post @ w_prior = [m1x_prior | m1y | m1y @ p_expand]
    out["w_prior"] = np.concatenate([Ft, FtHt, np.tile(FtHt, (1, STATE_DIM))], axis=1)

    # Fused-normalize helpers (group sizes 4, 4, 2, 2).
    R = np.zeros((12, 4), dtype)
    R[0:4, 0] = 1.0; R[4:8, 1] = 1.0; R[8:10, 2] = 1.0; R[10:12, 3] = 1.0
    out["nrm_reduce"] = R
    out["nrm_expand"] = np.ascontiguousarray(R.T)
    S = np.zeros((STATE_DIM * OBS_DIM, STATE_DIM), dtype)
    for r in range(STATE_DIM * OBS_DIM):
        S[r, r // OBS_DIM] = 1.0
    out["s_pairsum"] = S

    # FC5 | FC6 | FC7 block diagonal.
    w567 = np.zeros((12, D_567), dtype)
    w567[0:4, 0:20] = A(w["fc5_w"]); w567[4:8, 20:40] = A(w["fc6_w"])
    w567[8:12, 40:60] = A(w["fc7_w"])
    out["w567"] = w567
    out["b567"] = np.concatenate([A(w["fc5_b"]), A(w["fc6_b"]), A(w["fc7_b"])], axis=1)

    # GRU_Q: input [out567(60) | h_Q(16)] -> [gi(48) | gh(48)].
    gq = np.zeros((76, 96), dtype)
    gq[0:20, 0:48] = A(w["gq_wi"])
    gq[60:76, 48:96] = A(w["gq_wh"])
    out["gq_w"] = gq
    out["gq_b"] = np.concatenate([A(w["gq_bi"]), A(w["gq_bh"])], axis=1)

    # GRU_Sigma: input [out567(60) | out_Q(16) | h_Sigma(16)] -> [gi | gh].
    gsig = np.zeros((92, 96), dtype)
    gsig[20:40, 0:48] = A(w["gsig_wi"])[16:36]   # out_FC6 part
    gsig[60:76, 0:48] = A(w["gsig_wi"])[0:16]    # out_Q part
    gsig[76:92, 48:96] = A(w["gsig_wh"])
    out["gsig_w"] = gsig
    out["gsig_b"] = np.concatenate([A(w["gsig_bi"]), A(w["gsig_bh"])], axis=1)

    # GRU_S: input [out567(60) | out_FC1(4) | h_S(4)] -> [gi(12) | gh(12)].
    gs = np.zeros((68, 24), dtype)
    gs[40:60, 0:12] = A(w["gs_wi"])[4:24]        # out_FC7 part
    gs[60:64, 0:12] = A(w["gs_wi"])[0:4]         # out_FC1 part
    gs[64:68, 12:24] = A(w["gs_wh"])
    out["gs_w"] = gs
    out["gs_b"] = np.concatenate([A(w["gs_bi"]), A(w["gs_bh"])], axis=1)

    # FC1 + FC4's out_Sigma contribution: out_sigma(16) -> [fc1(4) | fc4a(16)].
    w14 = np.zeros((16, 20), dtype)
    w14[:, 0:4] = A(w["fc1_w"]); w14[:, 4:20] = A(w["fc4_w"])[0:16]
    out["w_fc14"] = w14
    out["b_fc14"] = np.concatenate([A(w["fc1_b"]), A(w["fc4_b"])], axis=1)

    # FC2 layer 0 (hidden padded 800->896) + FC3's h_S contribution.
    wa = np.zeros((20, D_HID_FC2_PAD + 16), dtype)
    wa[0:20, 0:D_HID_FC2] = A(w["fc2a_w"])
    wa[16:20, D_HID_FC2_PAD:] = A(w["fc3_w"])[0:4]
    out["w_fc2a3a"] = wa
    ba = np.zeros((1, D_HID_FC2_PAD + 16), dtype)
    ba[:, 0:D_HID_FC2] = A(w["fc2a_b"])
    ba[:, D_HID_FC2_PAD:] = A(w["fc3_b"])
    out["b_fc2a3a"] = ba

    # FC2 layer 2 + FC3's out_FC2 contribution in one matmul.
    fc2b_pad = np.zeros((D_HID_FC2_PAD, D_OUT_FC2), dtype)
    fc2b_pad[0:D_HID_FC2, :] = A(w["fc2b_w"])
    fc3_wb = A(w["fc3_w"])[4:12]
    out["w_2b3"] = np.concatenate([fc2b_pad, fc2b_pad @ fc3_wb], axis=1)
    out["b_2b3"] = np.concatenate([A(w["fc2b_b"]), A(w["fc2b_b"]) @ fc3_wb], axis=1)

    out["fc4_wb"] = A(w["fc4_w"])[16:32]
    return out


def to_device_weights(fused_np):
    """bf16 for neural-net matmul operands, f32 for biases and Kalman-path mats."""
    dev = {}
    for k, v in fused_np.items():
        v32 = jnp.asarray(np.asarray(v, np.float32))
        dev[k] = v32 if (k in F32_MAT_KEYS or k in BIAS_KEYS) else v32.astype(jnp.bfloat16)
    return dev


# ----------------------------------------------------------------------------
# Belief initialization and I/O packing (mirror of KalmanNet.init_beliefs).
# ----------------------------------------------------------------------------
def init_belief(post, Ht, xp, dot):
    b = post.shape[0]
    h_q = xp.tile(xp.eye(STATE_DIM, dtype=post.dtype).reshape(1, -1), (b, 1))
    h_sig = xp.zeros((b, STATE_DIM * STATE_DIM), dtype=post.dtype)
    h_s = xp.tile(xp.eye(OBS_DIM, dtype=post.dtype).reshape(1, -1), (b, 1))
    return {"post": post, "post_prev": post, "prior_prev": post,
            "y_prev": dot(post, Ht), "hQ": h_q, "hSig": h_sig, "hS": h_s}


def _belief_tuple(st):
    return (st["post"], st["post_prev"], st["prior_prev"], st["y_prev"],
            st["hQ"], st["hSig"], st["hS"])


def pack_belief(st):
    b = st["post"].shape[0]
    gap1 = jnp.zeros((b, O_HQ - (O_Y_PREV + OBS_DIM)), jnp.float32)
    gap2 = jnp.zeros((b, OUT_LANES - STATE_USED), jnp.float32)
    return jnp.concatenate(
        [st["post"], st["post_prev"], st["prior_prev"], st["y_prev"], gap1,
         st["hQ"], st["hSig"], st["hS"], gap2], axis=1).astype(jnp.float32)


def build_y_slab(y_seq):
    y32 = y_seq.astype(jnp.float32)
    y_exp = jnp.tile(y32, (1, 1, STATE_DIM))                     # y @ p_expand
    pad = jnp.zeros(y32.shape[:2] + (Y_LANES - OBS_DIM - STATE_DIM * OBS_DIM,),
                    jnp.float32)
    return jnp.concatenate([y32, y_exp, pad], axis=-1)


# ----------------------------------------------------------------------------
# float64 numpy reference of the ORIGINAL (unfused) KalmanNet forward — used to
# prove that the fused algebra preserves the module's semantics exactly.
# ----------------------------------------------------------------------------
def _normalize_np(x):
    nrm = np.sqrt(np.sum(x * x, axis=1, keepdims=True))
    return x / np.maximum(nrm, 1e-12)


def _gru_ref_np(x, h, wi, wh, bi, bh):
    gi = x @ wi + bi
    gh = h @ wh + bh
    hid = h.shape[1]
    r = 1.0 / (1.0 + np.exp(-(gi[:, :hid] + gh[:, :hid])))
    z = 1.0 / (1.0 + np.exp(-(gi[:, hid:2 * hid] + gh[:, hid:2 * hid])))
    n = np.tanh(gi[:, 2 * hid:] + r * gh[:, 2 * hid:])
    return (1.0 - z) * n + z * h


def original_step_np(st, w, y):
    post, post_prev = st["post"], st["post_prev"]
    prior_prev, y_prev = st["prior_prev"], st["y_prev"]
    h_q, h_sig, h_s = st["hQ"], st["hSig"], st["hS"]

    m1x_prior = post @ w["Ft"]
    m1y = m1x_prior @ w["Ht"]

    obs_diff = _normalize_np(y - y_prev)
    obs_innov = _normalize_np(y - m1y)
    fw_evol = _normalize_np(post - post_prev)
    fw_upd = _normalize_np(post - prior_prev)

    out_fc5 = np.maximum(fw_evol @ w["fc5_w"] + w["fc5_b"], 0.0)
    h_q_new = _gru_ref_np(out_fc5, h_q, w["gq_wi"], w["gq_wh"], w["gq_bi"], w["gq_bh"])

    out_fc6 = np.maximum(fw_upd @ w["fc6_w"] + w["fc6_b"], 0.0)
    out_sigma = _gru_ref_np(np.concatenate([h_q_new, out_fc6], axis=1), h_sig,
                            w["gsig_wi"], w["gsig_wh"], w["gsig_bi"], w["gsig_bh"])

    out_fc1 = np.maximum(out_sigma @ w["fc1_w"] + w["fc1_b"], 0.0)
    out_fc7 = np.maximum(np.concatenate([obs_diff, obs_innov], axis=1) @ w["fc7_w"]
                         + w["fc7_b"], 0.0)
    h_s_new = _gru_ref_np(np.concatenate([out_fc1, out_fc7], axis=1), h_s,
                          w["gs_wi"], w["gs_wh"], w["gs_bi"], w["gs_bh"])

    hid = np.maximum(np.concatenate([out_sigma, h_s_new], axis=1) @ w["fc2a_w"]
                     + w["fc2a_b"], 0.0)
    out_fc2 = hid @ w["fc2b_w"] + w["fc2b_b"]

    out_fc3 = np.maximum(np.concatenate([h_s_new, out_fc2], axis=1) @ w["fc3_w"]
                         + w["fc3_b"], 0.0)
    h_sig_new = np.maximum(np.concatenate([out_sigma, out_fc3], axis=1) @ w["fc4_w"]
                           + w["fc4_b"], 0.0)

    K = out_fc2.reshape(-1, STATE_DIM, OBS_DIM)
    diff_y = y - m1y
    posterior = m1x_prior + np.einsum("bij,bj->bi", K, diff_y)

    new_st = {"post": posterior, "post_prev": post, "prior_prev": m1x_prior,
              "y_prev": y, "hQ": h_q_new, "hSig": h_sig_new, "hS": h_s_new}
    return posterior, new_st


# ----------------------------------------------------------------------------
# Main
# ----------------------------------------------------------------------------
if __name__ == "__main__":
    key = jax.random.PRNGKey(0)
    k_w, k_x0, k_y = jax.random.split(key, 3)

    raw = make_weights(k_w)                                       # f32 jnp
    raw_np = {k: np.asarray(v, dtype=np.float64) for k, v in raw.items()}
    fused_np = prepare_fused_weights(raw_np, np.float64)          # f64 numpy
    fused_dev = to_device_weights(fused_np)                       # bf16/f32 jnp

    init_state = jax.random.normal(k_x0, (BATCH, STATE_DIM, 1), jnp.float32)
    y_seq = 0.5 * jax.random.normal(k_y, (SEQ_LEN, BATCH, OBS_DIM), jnp.float32)

    # --- 1) float64 check: fused algebra == original KalmanNet algebra -------
    post0_np = np.asarray(init_state, np.float64).reshape(BATCH, STATE_DIM)
    y_np = np.asarray(y_seq, np.float64)
    st = init_belief(post0_np, raw_np["Ht"], np, np.dot)
    carry = _belief_tuple(st)
    max_algebra_err = 0.0
    ref_posts = []
    for t in range(SEQ_LEN):
        post_ref, st = original_step_np(st, raw_np, y_np[t])
        ref_posts.append(post_ref)
        carry = fused_step(carry, fused_np, y_np[t],
                           np.tile(y_np[t], (1, STATE_DIM)), np, np.dot, np.dot)
        for a, b in zip(carry, _belief_tuple(st)):
            max_algebra_err = max(max_algebra_err, float(np.max(np.abs(a - b))))
    ref_posts = np.stack(ref_posts, axis=0)
    assert max_algebra_err < 1e-6, f"fused-algebra mismatch: {max_algebra_err}"

    # --- 2) TPU: Pallas kernel vs matched-precision XLA mirror --------------
    post0 = jnp.reshape(init_state, (BATCH, STATE_DIM)).astype(jnp.float32)
    belief0 = init_belief(post0, raw["Ht"], jnp, _dot_f32)
    s0 = pack_belief(belief0)                                     # (B, 64)
    y_slab = build_y_slab(y_seq)                                  # (T, B, 16)

    out_slab = jax.block_until_ready(
        kalman_net_filter(y_slab, s0, fused_dev, batch_group=BATCH_GROUP))
    posts_mirror, final_carry = fused_mirror(y_slab, s0, fused_dev)
    posts_mirror = jax.block_until_ready(posts_mirror)

    kernel_posts = np.asarray(out_slab[:, :, O_POST:O_POST + STATE_DIM])
    np.testing.assert_allclose(kernel_posts, np.asarray(posts_mirror),
                               rtol=2e-2, atol=2e-2)
    final = np.asarray(out_slab[-1])
    np.testing.assert_allclose(final[:, O_HQ:O_HQ + D_HID_Q],
                               np.asarray(final_carry[4]), rtol=2e-2, atol=2e-2)
    np.testing.assert_allclose(final[:, O_HSIG:O_HSIG + D_HID_SIGMA],
                               np.asarray(final_carry[5]), rtol=2e-2, atol=2e-2)
    np.testing.assert_allclose(final[:, O_HS:O_HS + D_HID_S],
                               np.asarray(final_carry[6]), rtol=2e-2, atol=2e-2)
    np.testing.assert_allclose(final[:, O_PRIOR_PREV:O_PRIOR_PREV + STATE_DIM],
                               np.asarray(final_carry[2]), rtol=2e-2, atol=2e-2)

    assert out_slab.shape == (SEQ_LEN, BATCH, OUT_LANES)
    assert np.all(np.isfinite(np.asarray(out_slab)))
    dev_vs_f64 = float(np.max(np.abs(kernel_posts - ref_posts)))
    print(f"max |kernel - float64 reference| over posteriors: {dev_vs_f64:.3e}")
    print("KERNEL_OK")
</pallas_src>

<mosaic_0001>
module attributes {stable_mosaic.version = 11 : i64} {
  func.func @_kalman_filter_kernel(%arg0: i32, %arg1: memref<12x64x16xf32, #tpu.memory_space<vmem>>, %arg2: memref<64x64xf32, #tpu.memory_space<vmem>>, %arg3: memref<4x14xf32, #tpu.memory_space<vmem>>, %arg4: memref<12x4xbf16, #tpu.memory_space<vmem>>, %arg5: memref<4x12xbf16, #tpu.memory_space<vmem>>, %arg6: memref<8x4xf32, #tpu.memory_space<vmem>>, %arg7: memref<12x60xbf16, #tpu.memory_space<vmem>>, %arg8: memref<1x60xf32, #tpu.memory_space<vmem>>, %arg9: memref<76x96xbf16, #tpu.memory_space<vmem>>, %arg10: memref<1x96xf32, #tpu.memory_space<vmem>>, %arg11: memref<92x96xbf16, #tpu.memory_space<vmem>>, %arg12: memref<1x96xf32, #tpu.memory_space<vmem>>, %arg13: memref<68x24xbf16, #tpu.memory_space<vmem>>, %arg14: memref<1x24xf32, #tpu.memory_space<vmem>>, %arg15: memref<16x20xbf16, #tpu.memory_space<vmem>>, %arg16: memref<1x20xf32, #tpu.memory_space<vmem>>, %arg17: memref<20x912xbf16, #tpu.memory_space<vmem>>, %arg18: memref<1x912xf32, #tpu.memory_space<vmem>>, %arg19: memref<896x24xbf16, #tpu.memory_space<vmem>>, %arg20: memref<1x24xf32, #tpu.memory_space<vmem>>, %arg21: memref<16x16xbf16, #tpu.memory_space<vmem>>, %arg22: memref<12x64x64xf32, #tpu.memory_space<vmem>>) attributes {dimension_semantics = [#tpu.dimension_semantics<parallel>], iteration_bounds = array<i64: 2>, scalar_prefetch = 0 : i64, scratch_operands = 0 : i64, tpu.core_type = #tpu.core_type<tc>, window_params = [{transform_indices = @transform_0, window_bounds = array<i64: 12, 64, 16>}, {transform_indices = @transform_1, window_bounds = array<i64: 64, 64>}, {pipeline_mode = #tpu.pipeline_mode<synchronous>, transform_indices = @transform_2, window_bounds = array<i64: 4, 14>}, {pipeline_mode = #tpu.pipeline_mode<synchronous>, transform_indices = @transform_3, window_bounds = array<i64: 12, 4>}, {pipeline_mode = #tpu.pipeline_mode<synchronous>, transform_indices = @transform_4, window_bounds = array<i64: 4, 12>}, {pipeline_mode = #tpu.pipeline_mode<synchronous>, transform_indices = @transform_5, window_bounds = array<i64: 8, 4>}, {pipeline_mode = #tpu.pipeline_mode<synchronous>, transform_indices = @transform_6, window_bounds = array<i64: 12, 60>}, {pipeline_mode = #tpu.pipeline_mode<synchronous>, transform_indices = @transform_7, window_bounds = array<i64: 1, 60>}, {pipeline_mode = #tpu.pipeline_mode<synchronous>, transform_indices = @transform_8, window_bounds = array<i64: 76, 96>}, {pipeline_mode = #tpu.pipeline_mode<synchronous>, transform_indices = @transform_9, window_bounds = array<i64: 1, 96>}, {pipeline_mode = #tpu.pipeline_mode<synchronous>, transform_indices = @transform_10, window_bounds = array<i64: 92, 96>}, {pipeline_mode = #tpu.pipeline_mode<synchronous>, transform_indices = @transform_11, window_bounds = array<i64: 1, 96>}, {pipeline_mode = #tpu.pipeline_mode<synchronous>, transform_indices = @transform_12, window_bounds = array<i64: 68, 24>}, {pipeline_mode = #tpu.pipeline_mode<synchronous>, transform_indices = @transform_13, window_bounds = array<i64: 1, 24>}, {pipeline_mode = #tpu.pipeline_mode<synchronous>, transform_indices = @transform_14, window_bounds = array<i64: 16, 20>}, {pipeline_mode = #tpu.pipeline_mode<synchronous>, transform_indices = @transform_15, window_bounds = array<i64: 1, 20>}, {pipeline_mode = #tpu.pipeline_mode<synchronous>, transform_indices = @transform_16, window_bounds = array<i64: 20, 912>}, {pipeline_mode = #tpu.pipeline_mode<synchronous>, transform_indices = @transform_17, window_bounds = array<i64: 1, 912>}, {pipeline_mode = #tpu.pipeline_mode<synchronous>, transform_indices = @transform_18, window_bounds = array<i64: 896, 24>}, {pipeline_mode = #tpu.pipeline_mode<synchronous>, transform_indices = @transform_19, window_bounds = array<i64: 1, 24>}, {pipeline_mode = #tpu.pipeline_mode<synchronous>, transform_indices = @transform_20, window_bounds = array<i64: 16, 16>}, {transform_indices = @transform_21, window_bounds = array<i64: 12, 64, 64>}]} {
    %c0 = arith.constant 0 : index
    %c0_0 = arith.constant 0 : index
    %0 = vector.load %arg3[%c0, %c0_0] : memref<4x14xf32, #tpu.memory_space<vmem>>, vector<4x14xf32>
    %c0_1 = arith.constant 0 : index
    %c0_2 = arith.constant 0 : index
    %1 = vector.load %arg4[%c0_1, %c0_2] : memref<12x4xbf16, #tpu.memory_space<vmem>>, vector<12x4xbf16>
    %c0_3 = arith.constant 0 : index
    %c0_4 = arith.constant 0 : index
    %2 = vector.load %arg5[%c0_3, %c0_4] : memref<4x12xbf16, #tpu.memory_space<vmem>>, vector<4x12xbf16>
    %c0_5 = arith.constant 0 : index
    %c0_6 = arith.constant 0 : index
    %3 = vector.load %arg6[%c0_5, %c0_6] : memref<8x4xf32, #tpu.memory_space<vmem>>, vector<8x4xf32>
    %c0_7 = arith.constant 0 : index
    %c0_8 = arith.constant 0 : index
    %4 = vector.load %arg7[%c0_7, %c0_8] : memref<12x60xbf16, #tpu.memory_space<vmem>>, vector<12x60xbf16>
    %c0_9 = arith.constant 0 : index
    %c0_10 = arith.constant 0 : index
    %5 = vector.load %arg8[%c0_9, %c0_10] : memref<1x60xf32, #tpu.memory_space<vmem>>, vector<1x60xf32>
    %c0_11 = arith.constant 0 : index
    %c0_12 = arith.constant 0 : index
    %6 = vector.load %arg9[%c0_11, %c0_12] : memref<76x96xbf16, #tpu.memory_space<vmem>>, vector<76x96xbf16>
    %c0_13 = arith.constant 0 : index
    %c0_14 = arith.constant 0 : index
    %7 = vector.load %arg10[%c0_13, %c0_14] : memref<1x96xf32, #tpu.memory_space<vmem>>, vector<1x96xf32>
    %c0_15 = arith.constant 0 : index
    %c0_16 = arith.constant 0 : index
    %8 = vector.load %arg11[%c0_15, %c0_16] : memref<92x96xbf16, #tpu.memory_space<vmem>>, vector<92x96xbf16>
    %c0_17 = arith.constant 0 : index
    %c0_18 = arith.constant 0 : index
    %9 = vector.load %arg12[%c0_17, %c0_18] : memref<1x96xf32, #tpu.memory_space<vmem>>, vector<1x96xf32>
    %c0_19 = arith.constant 0 : index
    %c0_20 = arith.constant 0 : index
    %10 = vector.load %arg13[%c0_19, %c0_20] : memref<68x24xbf16, #tpu.memory_space<vmem>>, vector<68x24xbf16>
    %c0_21 = arith.constant 0 : index
    %c0_22 = arith.constant 0 : index
    %11 = vector.load %arg14[%c0_21, %c0_22] : memref<1x24xf32, #tpu.memory_space<vmem>>, vector<1x24xf32>
    %c0_23 = arith.constant 0 : index
    %c0_24 = arith.constant 0 : index
    %12 = vector.load %arg15[%c0_23, %c0_24] : memref<16x20xbf16, #tpu.memory_space<vmem>>, vector<16x20xbf16>
    %c0_25 = arith.constant 0 : index
    %c0_26 = arith.constant 0 : index
    %13 = vector.load %arg16[%c0_25, %c0_26] : memref<1x20xf32, #tpu.memory_space<vmem>>, vector<1x20xf32>
    %c0_27 = arith.constant 0 : index
    %c0_28 = arith.constant 0 : index
    %14 = vector.load %arg17[%c0_27, %c0_28] : memref<20x912xbf16, #tpu.memory_space<vmem>>, vector<20x912xbf16>
    %c0_29 = arith.constant 0 : index
    %c0_30 = arith.constant 0 : index
    %15 = vector.load %arg18[%c0_29, %c0_30] : memref<1x912xf32, #tpu.memory_space<vmem>>, vector<1x912xf32>
    %c0_31 = arith.constant 0 : index
    %c0_32 = arith.constant 0 : index
    %16 = vector.load %arg19[%c0_31, %c0_32] : memref<896x24xbf16, #tpu.memory_space<vmem>>, vector<896x24xbf16>
    %c0_33 = arith.constant 0 : index
    %c0_34 = arith.constant 0 : index
    %17 = vector.load %arg20[%c0_33, %c0_34] : memref<1x24xf32, #tpu.memory_space<vmem>>, vector<1x24xf32>
    %c0_35 = arith.constant 0 : index
    %c0_36 = arith.constant 0 : index
    %18 = vector.load %arg21[%c0_35, %c0_36] : memref<16x16xbf16, #tpu.memory_space<vmem>>, vector<16x16xbf16>
    %cst = arith.constant 0.000000e+00 : f32
    %19 = vector.broadcast %cst : f32 to vector<12x64x64xf32>
    %c0_37 = arith.constant 0 : index
    %c0_38 = arith.constant 0 : index
    %c0_39 = arith.constant 0 : index
    %20 = vector.load %arg22[%c0_37, %c0_38, %c0_39] : memref<12x64x64xf32, #tpu.memory_space<vmem>>, vector<12x64x64xf32>
    tpu.vector_store %arg22[%c0_37, %c0_38, %c0_39], %19 {strides = array<i32>} : memref<12x64x64xf32, #tpu.memory_space<vmem>>, vector<12x64x64xf32>,
    %c0_40 = arith.constant 0 : index
    %c0_41 = arith.constant 0 : index
    %21 = vector.load %arg2[%c0_40, %c0_41] : memref<64x64xf32, #tpu.memory_space<vmem>>, vector<64x64xf32>
    %22 = vector.extract_strided_slice %21 {offsets = [0, 0], sizes = [64, 4], strides = [1, 1]} : vector<64x64xf32> to vector<64x4xf32>
    %23 = vector.extract_strided_slice %21 {offsets = [0, 4], sizes = [64, 4], strides = [1, 1]} : vector<64x64xf32> to vector<64x4xf32>
    %24 = vector.extract_strided_slice %21 {offsets = [0, 8], sizes = [64, 4], strides = [1, 1]} : vector<64x64xf32> to vector<64x4xf32>
    %25 = vector.extract_strided_slice %21 {offsets = [0, 12], sizes = [64, 2], strides = [1, 1]} : vector<64x64xf32> to vector<64x2xf32>
    %26 = vector.extract_strided_slice %21 {offsets = [0, 16], sizes = [64, 16], strides = [1, 1]} : vector<64x64xf32> to vector<64x16xf32>
    %27 = vector.extract_strided_slice %21 {offsets = [0, 32], sizes = [64, 16], strides = [1, 1]} : vector<64x64xf32> to vector<64x16xf32>
    %28 = vector.extract_strided_slice %21 {offsets = [0, 48], sizes = [64, 4], strides = [1, 1]} : vector<64x64xf32> to vector<64x4xf32>
    %c0_i32 = arith.constant 0 : i32
    %c12_i32 = arith.constant 12 : i32
    %29 = arith.addi %c0_i32, %c12_i32 : i32
    %c1_i32 = arith.constant 1 : i32
    %30:7 = scf.for %arg23 = %c0_i32 to %29 step %c1_i32 iter_args(%arg24 = %22, %arg25 = %23, %arg26 = %24, %arg27 = %25, %arg28 = %26, %arg29 = %27, %arg30 = %28) -> (vector<64x4xf32>, vector<64x4xf32>, vector<64x4xf32>, vector<64x2xf32>, vector<64x16xf32>, vector<64x16xf32>, vector<64x4xf32>)  : i32 {
      %31 = arith.index_cast %arg23 : i32 to index
      %c0_43 = arith.constant 0 : index
      %c0_44 = arith.constant 0 : index
      %32 = vector.load %arg1[%31, %c0_43, %c0_44] : memref<12x64x16xf32, #tpu.memory_space<vmem>>, vector<1x64x16xf32>
      %33 = vector.shape_cast %32 : vector<1x64x16xf32> to vector<64x16xf32>
      %34 = vector.extract_strided_slice %33 {offsets = [0, 0], sizes = [64, 2], strides = [1, 1]} : vector<64x16xf32> to vector<64x2xf32>
      %35 = vector.extract_strided_slice %33 {offsets = [0, 2], sizes = [64, 8], strides = [1, 1]} : vector<64x16xf32> to vector<64x8xf32>
      %cst_45 = arith.constant dense<0.000000e+00> : vector<64x14xf32>
      %36 = tpu.matmul %arg24, %0, %cst_45 {dimension_numbers = #tpu.dot_dimension_numbers<[1], [0], [0], [1], [0, 0, 1, 1], [], []>} : vector<64x4xf32>, vector<4x14xf32>, vector<64x14xf32> -> vector<64x14xf32>
      %37 = vector.extract_strided_slice %36 {offsets = [0, 0], sizes = [64, 4], strides = [1, 1]} : vector<64x14xf32> to vector<64x4xf32>
      %38 = vector.extract_strided_slice %36 {offsets = [0, 4], sizes = [64, 2], strides = [1, 1]} : vector<64x14xf32> to vector<64x2xf32>
      %39 = vector.extract_strided_slice %36 {offsets = [0, 6], sizes = [64, 8], strides = [1, 1]} : vector<64x14xf32> to vector<64x8xf32>
      %40 = arith.subf %34, %38 : vector<64x2xf32>
      %41 = arith.subf %35, %39 : vector<64x8xf32>
      %42 = arith.subf %arg24, %arg25 : vector<64x4xf32>
      %43 = arith.subf %arg24, %arg26 : vector<64x4xf32>
      %44 = arith.subf %34, %arg27 : vector<64x2xf32>
      %45 = tpu.concatenate %42, %43, %44, %40 in 1 : vector<64x4xf32>, vector<64x4xf32>, vector<64x2xf32>, vector<64x2xf32> -> vector<64x12xf32>
      %46 = arith.mulf %45, %45 : vector<64x12xf32>
      %47 = arith.truncf %46 : vector<64x12xf32> to vector<64x12xbf16>
      %cst_46 = arith.constant dense<0.000000e+00> : vector<64x4xf32>
      %48 = tpu.matmul %47, %1, %cst_46 {dimension_numbers = #tpu.dot_dimension_numbers<[1], [0], [0], [1], [0, 0, 1, 1], [], []>} : vector<64x12xbf16>, vector<12x4xbf16>, vector<64x4xf32> -> vector<64x4xf32>
      %cst_47 = arith.constant 1.000000e-24 : f32
      %49 = vector.broadcast %cst_47 : f32 to vector<64x4xf32>
      %50 = arith.maximumf %48, %49 : vector<64x4xf32>
      %51 = math.sqrt %50 : vector<64x4xf32>
      %cst_48 = arith.constant 1.000000e+00 : f32
      %52 = vector.broadcast %cst_48 : f32 to vector<64x4xf32>
      %53 = arith.divf %52, %51 : vector<64x4xf32>
      %54 = arith.truncf %53 : vector<64x4xf32> to vector<64x4xbf16>
      %cst_49 = arith.constant dense<0.000000e+00> : vector<64x12xf32>
      %55 = tpu.matmul %54, %2, %cst_49 {dimension_numbers = #tpu.dot_dimension_numbers<[1], [0], [0], [1], [0, 0, 1, 1], [], []>} : vector<64x4xbf16>, vector<4x12xbf16>, vector<64x12xf32> -> vector<64x12xf32>
      %56 = arith.mulf %45, %55 : vector<64x12xf32>
      %57 = arith.truncf %56 : vector<64x12xf32> to vector<64x12xbf16>
      %cst_50 = arith.constant dense<0.000000e+00> : vector<64x60xf32>
      %58 = tpu.matmul %57, %4, %cst_50 {dimension_numbers = #tpu.dot_dimension_numbers<[1], [0], [0], [1], [0, 0, 1, 1], [], []>} : vector<64x12xbf16>, vector<12x60xbf16>, vector<64x60xf32> -> vector<64x60xf32>
      %59 = vector.broadcast %5 : vector<1x60xf32> to vector<64x60xf32>
      %60 = arith.addf %58, %59 : vector<64x60xf32>
      %cst_51 = arith.constant 0.000000e+00 : f32
      %61 = vector.broadcast %cst_51 : f32 to vector<64x60xf32>
      %62 = arith.maximumf %60, %61 : vector<64x60xf32>
      %63 = tpu.concatenate %62, %arg28 in 1 : vector<64x60xf32>, vector<64x16xf32> -> vector<64x76xf32>
      %64 = arith.truncf %63 : vector<64x76xf32> to vector<64x76xbf16>
      %cst_52 = arith.constant dense<0.000000e+00> : vector<64x96xf32>
      %65 = tpu.matmul %64, %6, %cst_52 {dimension_numbers = #tpu.dot_dimension_numbers<[1], [0], [0], [1], [0, 0, 1, 1], [], []>} : vector<64x76xbf16>, vector<76x96xbf16>, vector<64x96xf32> -> vector<64x96xf32>
      %66 = vector.broadcast %7 : vector<1x96xf32> to vector<64x96xf32>
      %67 = arith.addf %65, %66 : vector<64x96xf32>
      %68 = vector.extract_strided_slice %67 {offsets = [0, 0], sizes = [64, 48], strides = [1, 1]} : vector<64x96xf32> to vector<64x48xf32>
      %69 = vector.extract_strided_slice %67 {offsets = [0, 48], sizes = [64, 48], strides = [1, 1]} : vector<64x96xf32> to vector<64x48xf32>
      %70 = vector.extract_strided_slice %68 {offsets = [0, 0], sizes = [64, 32], strides = [1, 1]} : vector<64x48xf32> to vector<64x32xf32>
      %71 = vector.extract_strided_slice %69 {offsets = [0, 0], sizes = [64, 32], strides = [1, 1]} : vector<64x48xf32> to vector<64x32xf32>
      %72 = arith.addf %70, %71 : vector<64x32xf32>
      %cst_53 = arith.constant 0.000000e+00 : f32
      %73 = vector.broadcast %cst_53 : f32 to vector<64x32xf32>
      %74 = arith.subf %73, %72 : vector<64x32xf32>
      %75 = math.exp %74 : vector<64x32xf32>
      %cst_54 = arith.constant 1.000000e+00 : f32
      %76 = vector.broadcast %cst_54 : f32 to vector<64x32xf32>
      %77 = arith.addf %76, %75 : vector<64x32xf32>
      %cst_55 = arith.constant 1.000000e+00 : f32
      %78 = vector.broadcast %cst_55 : f32 to vector<64x32xf32>
      %79 = arith.divf %78, %77 : vector<64x32xf32>
      %80 = vector.extract_strided_slice %79 {offsets = [0, 0], sizes = [64, 16], strides = [1, 1]} : vector<64x32xf32> to vector<64x16xf32>
      %81 = vector.extract_strided_slice %79 {offsets = [0, 16], sizes = [64, 16], strides = [1, 1]} : vector<64x32xf32> to vector<64x16xf32>
      %82 = vector.extract_strided_slice %68 {offsets = [0, 32], sizes = [64, 16], strides = [1, 1]} : vector<64x48xf32> to vector<64x16xf32>
      %83 = vector.extract_strided_slice %69 {offsets = [0, 32], sizes = [64, 16], strides = [1, 1]} : vector<64x48xf32> to vector<64x16xf32>
      %84 = arith.mulf %80, %83 : vector<64x16xf32>
      %85 = arith.addf %82, %84 : vector<64x16xf32>
      %86 = math.tanh %85 : vector<64x16xf32>
      %cst_56 = arith.constant 1.000000e+00 : f32
      %87 = vector.broadcast %cst_56 : f32 to vector<64x16xf32>
      %88 = arith.subf %87, %81 : vector<64x16xf32>
      %89 = arith.mulf %88, %86 : vector<64x16xf32>
      %90 = arith.mulf %81, %arg28 : vector<64x16xf32>
      %91 = arith.addf %89, %90 : vector<64x16xf32>
      %92 = tpu.concatenate %62, %91, %arg29 in 1 : vector<64x60xf32>, vector<64x16xf32>, vector<64x16xf32> -> vector<64x92xf32>
      %93 = arith.truncf %92 : vector<64x92xf32> to vector<64x92xbf16>
      %cst_57 = arith.constant dense<0.000000e+00> : vector<64x96xf32>
      %94 = tpu.matmul %93, %8, %cst_57 {dimension_numbers = #tpu.dot_dimension_numbers<[1], [0], [0], [1], [0, 0, 1, 1], [], []>} : vector<64x92xbf16>, vector<92x96xbf16>, vector<64x96xf32> -> vector<64x96xf32>
      %95 = vector.broadcast %9 : vector<1x96xf32> to vector<64x96xf32>
      %96 = arith.addf %94, %95 : vector<64x96xf32>
      %97 = vector.extract_strided_slice %96 {offsets = [0, 0], sizes = [64, 48], strides = [1, 1]} : vector<64x96xf32> to vector<64x48xf32>
      %98 = vector.extract_strided_slice %96 {offsets = [0, 48], sizes = [64, 48], strides = [1, 1]} : vector<64x96xf32> to vector<64x48xf32>
      %99 = vector.extract_strided_slice %97 {offsets = [0, 0], sizes = [64, 32], strides = [1, 1]} : vector<64x48xf32> to vector<64x32xf32>
      %100 = vector.extract_strided_slice %98 {offsets = [0, 0], sizes = [64, 32], strides = [1, 1]} : vector<64x48xf32> to vector<64x32xf32>
      %101 = arith.addf %99, %100 : vector<64x32xf32>
      %cst_58 = arith.constant 0.000000e+00 : f32
      %102 = vector.broadcast %cst_58 : f32 to vector<64x32xf32>
      %103 = arith.subf %102, %101 : vector<64x32xf32>
      %104 = math.exp %103 : vector<64x32xf32>
      %cst_59 = arith.constant 1.000000e+00 : f32
      %105 = vector.broadcast %cst_59 : f32 to vector<64x32xf32>
      %106 = arith.addf %105, %104 : vector<64x32xf32>
      %cst_60 = arith.constant 1.000000e+00 : f32
      %107 = vector.broadcast %cst_60 : f32 to vector<64x32xf32>
      %108 = arith.divf %107, %106 : vector<64x32xf32>
      %109 = vector.extract_strided_slice %108 {offsets = [0, 0], sizes = [64, 16], strides = [1, 1]} : vector<64x32xf32> to vector<64x16xf32>
      %110 = vector.extract_strided_slice %108 {offsets = [0, 16], sizes = [64, 16], strides = [1, 1]} : vector<64x32xf32> to vector<64x16xf32>
      %111 = vector.extract_strided_slice %97 {offsets = [0, 32], sizes = [64, 16], strides = [1, 1]} : vector<64x48xf32> to vector<64x16xf32>
      %112 = vector.extract_strided_slice %98 {offsets = [0, 32], sizes = [64, 16], strides = [1, 1]} : vector<64x48xf32> to vector<64x16xf32>
      %113 = arith.mulf %109, %112 : vector<64x16xf32>
      %114 = arith.addf %111, %113 : vector<64x16xf32>
      %115 = math.tanh %114 : vector<64x16xf32>
      %cst_61 = arith.constant 1.000000e+00 : f32
      %116 = vector.broadcast %cst_61 : f32 to vector<64x16xf32>
      %117 = arith.subf %116, %110 : vector<64x16xf32>
      %118 = arith.mulf %117, %115 : vector<64x16xf32>
      %119 = arith.mulf %110, %arg29 : vector<64x16xf32>
      %120 = arith.addf %118, %119 : vector<64x16xf32>
      %121 = arith.truncf %120 : vector<64x16xf32> to vector<64x16xbf16>
      %cst_62 = arith.constant dense<0.000000e+00> : vector<64x20xf32>
      %122 = tpu.matmul %121, %12, %cst_62 {dimension_numbers = #tpu.dot_dimension_numbers<[1], [0], [0], [1], [0, 0, 1, 1], [], []>} : vector<64x16xbf16>, vector<16x20xbf16>, vector<64x20xf32> -> vector<64x20xf32>
      %123 = vector.broadcast %13 : vector<1x20xf32> to vector<64x20xf32>
      %124 = arith.addf %122, %123 : vector<64x20xf32>
      %125 = vector.extract_strided_slice %124 {offsets = [0, 0], sizes = [64, 4], strides = [1, 1]} : vector<64x20xf32> to vector<64x4xf32>
      %cst_63 = arith.constant 0.000000e+00 : f32
      %126 = vector.broadcast %cst_63 : f32 to vector<64x4xf32>
      %127 = arith.maximumf %125, %126 : vector<64x4xf32>
      %128 = vector.extract_strided_slice %124 {offsets = [0, 4], sizes = [64, 16], strides = [1, 1]} : vector<64x20xf32> to vector<64x16xf32>
      %129 = tpu.concatenate %62, %127, %arg30 in 1 : vector<64x60xf32>, vector<64x4xf32>, vector<64x4xf32> -> vector<64x68xf32>
      %130 = arith.truncf %129 : vector<64x68xf32> to vector<64x68xbf16>
      %cst_64 = arith.constant dense<0.000000e+00> : vector<64x24xf32>
      %131 = tpu.matmul %130, %10, %cst_64 {dimension_numbers = #tpu.dot_dimension_numbers<[1], [0], [0], [1], [0, 0, 1, 1], [], []>} : vector<64x68xbf16>, vector<68x24xbf16>, vector<64x24xf32> -> vector<64x24xf32>
      %132 = vector.broadcast %11 : vector<1x24xf32> to vector<64x24xf32>
      %133 = arith.addf %131, %132 : vector<64x24xf32>
      %134 = vector.extract_strided_slice %133 {offsets = [0, 0], sizes = [64, 12], strides = [1, 1]} : vector<64x24xf32> to vector<64x12xf32>
      %135 = vector.extract_strided_slice %133 {offsets = [0, 12], sizes = [64, 12], strides = [1, 1]} : vector<64x24xf32> to vector<64x12xf32>
      %136 = vector.extract_strided_slice %134 {offsets = [0, 0], sizes = [64, 8], strides = [1, 1]} : vector<64x12xf32> to vector<64x8xf32>
      %137 = vector.extract_strided_slice %135 {offsets = [0, 0], sizes = [64, 8], strides = [1, 1]} : vector<64x12xf32> to vector<64x8xf32>
      %138 = arith.addf %136, %137 : vector<64x8xf32>
      %cst_65 = arith.constant 0.000000e+00 : f32
      %139 = vector.broadcast %cst_65 : f32 to vector<64x8xf32>
      %140 = arith.subf %139, %138 : vector<64x8xf32>
      %141 = math.exp %140 : vector<64x8xf32>
      %cst_66 = arith.constant 1.000000e+00 : f32
      %142 = vector.broadcast %cst_66 : f32 to vector<64x8xf32>
      %143 = arith.addf %142, %141 : vector<64x8xf32>
      %cst_67 = arith.constant 1.000000e+00 : f32
      %144 = vector.broadcast %cst_67 : f32 to vector<64x8xf32>
      %145 = arith.divf %144, %143 : vector<64x8xf32>
      %146 = vector.extract_strided_slice %145 {offsets = [0, 0], sizes = [64, 4], strides = [1, 1]} : vector<64x8xf32> to vector<64x4xf32>
      %147 = vector.extract_strided_slice %145 {offsets = [0, 4], sizes = [64, 4], strides = [1, 1]} : vector<64x8xf32> to vector<64x4xf32>
      %148 = vector.extract_strided_slice %134 {offsets = [0, 8], sizes = [64, 4], strides = [1, 1]} : vector<64x12xf32> to vector<64x4xf32>
      %149 = vector.extract_strided_slice %135 {offsets = [0, 8], sizes = [64, 4], strides = [1, 1]} : vector<64x12xf32> to vector<64x4xf32>
      %150 = arith.mulf %146, %149 : vector<64x4xf32>
      %151 = arith.addf %148, %150 : vector<64x4xf32>
      %152 = math.tanh %151 : vector<64x4xf32>
      %cst_68 = arith.constant 1.000000e+00 : f32
      %153 = vector.broadcast %cst_68 : f32 to vector<64x4xf32>
      %154 = arith.subf %153, %147 : vector<64x4xf32>
      %155 = arith.mulf %154, %152 : vector<64x4xf32>
      %156 = arith.mulf %147, %arg30 : vector<64x4xf32>
      %157 = arith.addf %155, %156 : vector<64x4xf32>
      %158 = tpu.concatenate %120, %157 in 1 : vector<64x16xf32>, vector<64x4xf32> -> vector<64x20xf32>
      %159 = arith.truncf %158 : vector<64x20xf32> to vector<64x20xbf16>
      %cst_69 = arith.constant dense<0.000000e+00> : vector<64x912xf32>
      %160 = tpu.matmul %159, %14, %cst_69 {dimension_numbers = #tpu.dot_dimension_numbers<[1], [0], [0], [1], [0, 0, 1, 1], [], []>} : vector<64x20xbf16>, vector<20x912xbf16>, vector<64x912xf32> -> vector<64x912xf32>
      %161 = vector.broadcast %15 : vector<1x912xf32> to vector<64x912xf32>
      %162 = arith.addf %160, %161 : vector<64x912xf32>
      %163 = vector.extract_strided_slice %162 {offsets = [0, 0], sizes = [64, 896], strides = [1, 1]} : vector<64x912xf32> to vector<64x896xf32>
      %cst_70 = arith.constant 0.000000e+00 : f32
      %164 = vector.broadcast %cst_70 : f32 to vector<64x896xf32>
      %165 = arith.maximumf %163, %164 : vector<64x896xf32>
      %166 = vector.extract_strided_slice %162 {offsets = [0, 896], sizes = [64, 16], strides = [1, 1]} : vector<64x912xf32> to vector<64x16xf32>
      %167 = arith.truncf %165 : vector<64x896xf32> to vector<64x896xbf16>
      %cst_71 = arith.constant dense<0.000000e+00> : vector<64x24xf32>
      %168 = tpu.matmul %167, %16, %cst_71 {dimension_numbers = #tpu.dot_dimension_numbers<[1], [0], [0], [1], [0, 0, 1, 1], [], []>} : vector<64x896xbf16>, vector<896x24xbf16>, vector<64x24xf32> -> vector<64x24xf32>
      %169 = vector.broadcast %17 : vector<1x24xf32> to vector<64x24xf32>
      %170 = arith.addf %168, %169 : vector<64x24xf32>
      %171 = vector.extract_strided_slice %170 {offsets = [0, 0], sizes = [64, 8], strides = [1, 1]} : vector<64x24xf32> to vector<64x8xf32>
      %172 = vector.extract_strided_slice %170 {offsets = [0, 8], sizes = [64, 16], strides = [1, 1]} : vector<64x24xf32> to vector<64x16xf32>
      %173 = arith.addf %166, %172 : vector<64x16xf32>
      %cst_72 = arith.constant 0.000000e+00 : f32
      %174 = vector.broadcast %cst_72 : f32 to vector<64x16xf32>
      %175 = arith.maximumf %173, %174 : vector<64x16xf32>
      %176 = arith.truncf %175 : vector<64x16xf32> to vector<64x16xbf16>
      %cst_73 = arith.constant dense<0.000000e+00> : vector<64x16xf32>
      %177 = tpu.matmul %176, %18, %cst_73 {dimension_numbers = #tpu.dot_dimension_numbers<[1], [0], [0], [1], [0, 0, 1, 1], [], []>} : vector<64x16xbf16>, vector<16x16xbf16>, vector<64x16xf32> -> vector<64x16xf32>
      %178 = arith.addf %128, %177 : vector<64x16xf32>
      %cst_74 = arith.constant 0.000000e+00 : f32
      %179 = vector.broadcast %cst_74 : f32 to vector<64x16xf32>
      %180 = arith.maximumf %178, %179 : vector<64x16xf32>
      %181 = arith.mulf %41, %171 : vector<64x8xf32>
      %cst_75 = arith.constant dense<0.000000e+00> : vector<64x4xf32>
      %182 = tpu.matmul %181, %3, %cst_75 {dimension_numbers = #tpu.dot_dimension_numbers<[1], [0], [0], [1], [0, 0, 1, 1], [], []>} : vector<64x8xf32>, vector<8x4xf32>, vector<64x4xf32> -> vector<64x4xf32>
      %183 = arith.addf %37, %182 : vector<64x4xf32>
      %184 = arith.index_cast %arg23 : i32 to index
      %c0_76 = arith.constant 0 : index
      %c0_77 = arith.constant 0 : index
      %185 = vector.load %arg22[%184, %c0_76, %c0_77] : memref<12x64x64xf32, #tpu.memory_space<vmem>>, vector<1x64x4xf32>
      %186 = vector.shape_cast %185 : vector<1x64x4xf32> to vector<64x4xf32>
      %187 = vector.shape_cast %183 : vector<64x4xf32> to vector<1x64x4xf32>
      tpu.vector_store %arg22[%184, %c0_76, %c0_77], %187 {strides = array<i32>} : memref<12x64x64xf32, #tpu.memory_space<vmem>>, vector<1x64x4xf32>,
      %188 = arith.index_cast %arg23 : i32 to index
      %c0_78 = arith.constant 0 : index
      %c4 = arith.constant 4 : index
      %189 = vector.load %arg22[%188, %c0_78, %c4] : memref<12x64x64xf32, #tpu.memory_space<vmem>>, vector<1x64x4xf32>
      %190 = vector.shape_cast %189 : vector<1x64x4xf32> to vector<64x4xf32>
      %191 = vector.shape_cast %arg24 : vector<64x4xf32> to vector<1x64x4xf32>
      tpu.vector_store %arg22[%188, %c0_78, %c4], %191 {strides = array<i32>} : memref<12x64x64xf32, #tpu.memory_space<vmem>>, vector<1x64x4xf32>,
      %192 = arith.index_cast %arg23 : i32 to index
      %c0_79 = arith.constant 0 : index
      %c8 = arith.constant 8 : index
      %193 = vector.load %arg22[%192, %c0_79, %c8] : memref<12x64x64xf32, #tpu.memory_space<vmem>>, vector<1x64x4xf32>
      %194 = vector.shape_cast %193 : vector<1x64x4xf32> to vector<64x4xf32>
      %195 = vector.shape_cast %37 : vector<64x4xf32> to vector<1x64x4xf32>
      tpu.vector_store %arg22[%192, %c0_79, %c8], %195 {strides = array<i32>} : memref<12x64x64xf32, #tpu.memory_space<vmem>>, vector<1x64x4xf32>,
      %196 = arith.index_cast %arg23 : i32 to index
      %c0_80 = arith.constant 0 : index
      %c12 = arith.constant 12 : index
      %197 = vector.load %arg22[%196, %c0_80, %c12] : memref<12x64x64xf32, #tpu.memory_space<vmem>>, vector<1x64x2xf32>
      %198 = vector.shape_cast %197 : vector<1x64x2xf32> to vector<64x2xf32>
      %199 = vector.shape_cast %34 : vector<64x2xf32> to vector<1x64x2xf32>
      tpu.vector_store %arg22[%196, %c0_80, %c12], %199 {strides = array<i32>} : memref<12x64x64xf32, #tpu.memory_space<vmem>>, vector<1x64x2xf32>,
      %200 = arith.index_cast %arg23 : i32 to index
      %c0_81 = arith.constant 0 : index
      %c16 = arith.constant 16 : index
      %201 = vector.load %arg22[%200, %c0_81, %c16] : memref<12x64x64xf32, #tpu.memory_space<vmem>>, vector<1x64x16xf32>
      %202 = vector.shape_cast %201 : vector<1x64x16xf32> to vector<64x16xf32>
      %203 = vector.shape_cast %91 : vector<64x16xf32> to vector<1x64x16xf32>
      tpu.vector_store %arg22[%200, %c0_81, %c16], %203 {strides = array<i32>} : memref<12x64x64xf32, #tpu.memory_space<vmem>>, vector<1x64x16xf32>,
      %204 = arith.index_cast %arg23 : i32 to index
      %c0_82 = arith.constant 0 : index
      %c32 = arith.constant 32 : index
      %205 = vector.load %arg22[%204, %c0_82, %c32] : memref<12x64x64xf32, #tpu.memory_space<vmem>>, vector<1x64x16xf32>
      %206 = vector.shape_cast %205 : vector<1x64x16xf32> to vector<64x16xf32>
      %207 = vector.shape_cast %180 : vector<64x16xf32> to vector<1x64x16xf32>
      tpu.vector_store %arg22[%204, %c0_82, %c32], %207 {strides = array<i32>} : memref<12x64x64xf32, #tpu.memory_space<vmem>>, vector<1x64x16xf32>,
      %208 = arith.index_cast %arg23 : i32 to index
      %c0_83 = arith.constant 0 : index
      %c48 = arith.constant 48 : index
      %209 = vector.load %arg22[%208, %c0_83, %c48] : memref<12x64x64xf32, #tpu.memory_space<vmem>>, vector<1x64x4xf32>
      %210 = vector.shape_cast %209 : vector<1x64x4xf32> to vector<64x4xf32>
      %211 = vector.shape_cast %157 : vector<64x4xf32> to vector<1x64x4xf32>
      tpu.vector_store %arg22[%208, %c0_83, %c48], %211 {strides = array<i32>} : memref<12x64x64xf32, #tpu.memory_space<vmem>>, vector<1x64x4xf32>,
      scf.yield %183, %arg24, %37, %34, %91, %180, %157 : vector<64x4xf32>, vector<64x4xf32>, vector<64x4xf32>, vector<64x2xf32>, vector<64x16xf32>, vector<64x16xf32>, vector<64x4xf32>
    }
    %c12_i32_42 = arith.constant 12 : i32
    return
  }
  func.func @transform_0(%arg0: i32) -> (i32, i32, i32) {
    %c0_i32 = arith.constant 0 : i32
    %c0_i32_0 = arith.constant 0 : i32
    %c0_i32_1 = arith.constant 0 : i32
    return %c0_i32, %arg0, %c0_i32_0 : i32, i32, i32
  }
  func.func @transform_1(%arg0: i32) -> (i32, i32) {
    %c0_i32 = arith.constant 0 : i32
    %c0_i32_0 = arith.constant 0 : i32
    return %arg0, %c0_i32 : i32, i32
  }
  func.func @transform_2(%arg0: i32) -> (i32, i32) {
    %c0_i32 = arith.constant 0 : i32
    %c0_i32_0 = arith.constant 0 : i32
    %c0_i32_1 = arith.constant 0 : i32
    return %c0_i32, %c0_i32_0 : i32, i32
  }
  func.func @transform_3(%arg0: i32) -> (i32, i32) {
    %c0_i32 = arith.constant 0 : i32
    %c0_i32_0 = arith.constant 0 : i32
    %c0_i32_1 = arith.constant 0 : i32
    return %c0_i32, %c0_i32_0 : i32, i32
  }
  func.func @transform_4(%arg0: i32) -> (i32, i32) {
    %c0_i32 = arith.constant 0 : i32
    %c0_i32_0 = arith.constant 0 : i32
    %c0_i32_1 = arith.constant 0 : i32
    return %c0_i32, %c0_i32_0 : i32, i32
  }
  func.func @transform_5(%arg0: i32) -> (i32, i32) {
    %c0_i32 = arith.constant 0 : i32
    %c0_i32_0 = arith.constant 0 : i32
    %c0_i32_1 = arith.constant 0 : i32
    return %c0_i32, %c0_i32_0 : i32, i32
  }
  func.func @transform_6(%arg0: i32) -> (i32, i32) {
    %c0_i32 = arith.constant 0 : i32
    %c0_i32_0 = arith.constant 0 : i32
    %c0_i32_1 = arith.constant 0 : i32
    return %c0_i32, %c0_i32_0 : i32, i32
  }
  func.func @transform_7(%arg0: i32) -> (i32, i32) {
    %c0_i32 = arith.constant 0 : i32
    %c0_i32_0 = arith.constant 0 : i32
    %c0_i32_1 = arith.constant 0 : i32
    return %c0_i32, %c0_i32_0 : i32, i32
  }
  func.func @transform_8(%arg0: i32) -> (i32, i32) {
    %c0_i32 = arith.constant 0 : i32
    %c0_i32_0 = arith.constant 0 : i32
    %c0_i32_1 = arith.constant 0 : i32
    return %c0_i32, %c0_i32_0 : i32, i32
  }
  func.func @transform_9(%arg0: i32) -> (i32, i32) {
    %c0_i32 = arith.constant 0 : i32
    %c0_i32_0 = arith.constant 0 : i32
    %c0_i32_1 = arith.constant 0 : i32
    return %c0_i32, %c0_i32_0 : i32, i32
  }
  func.func @transform_10(%arg0: i32) -> (i32, i32) {
    %c0_i32 = arith.constant 0 : i32
    %c0_i32_0 = arith.constant 0 : i32
    %c0_i32_1 = arith.constant 0 : i32
    return %c0_i32, %c0_i32_0 : i32, i32
  }
  func.func @transform_11(%arg0: i32) -> (i32, i32) {
    %c0_i32 = arith.constant 0 : i32
    %c0_i32_0 = arith.constant 0 : i32
    %c0_i32_1 = arith.constant 0 : i32
    return %c0_i32, %c0_i32_0 : i32, i32
  }
  func.func @transform_12(%arg0: i32) -> (i32, i32) {
    %c0_i32 = arith.constant 0 : i32
    %c0_i32_0 = arith.constant 0 : i32
    %c0_i32_1 = arith.constant 0 : i32
    return %c0_i32, %c0_i32_0 : i32, i32
  }
  func.func @transform_13(%arg0: i32) -> (i32, i32) {
    %c0_i32 = arith.constant 0 : i32
    %c0_i32_0 = arith.constant 0 : i32
    %c0_i32_1 = arith.constant 0 : i32
    return %c0_i32, %c0_i32_0 : i32, i32
  }
  func.func @transform_14(%arg0: i32) -> (i32, i32) {
    %c0_i32 = arith.constant 0 : i32
    %c0_i32_0 = arith.constant 0 : i32
    %c0_i32_1 = arith.constant 0 : i32
    return %c0_i32, %c0_i32_0 : i32, i32
  }
  func.func @transform_15(%arg0: i32) -> (i32, i32) {
    %c0_i32 = arith.constant 0 : i32
    %c0_i32_0 = arith.constant 0 : i32
    %c0_i32_1 = arith.constant 0 : i32
    return %c0_i32, %c0_i32_0 : i32, i32
  }
  func.func @transform_16(%arg0: i32) -> (i32, i32) {
    %c0_i32 = arith.constant 0 : i32
    %c0_i32_0 = arith.constant 0 : i32
    %c0_i32_1 = arith.constant 0 : i32
    return %c0_i32, %c0_i32_0 : i32, i32
  }
  func.func @transform_17(%arg0: i32) -> (i32, i32) {
    %c0_i32 = arith.constant 0 : i32
    %c0_i32_0 = arith.constant 0 : i32
    %c0_i32_1 = arith.constant 0 : i32
    return %c0_i32, %c0_i32_0 : i32, i32
  }
  func.func @transform_18(%arg0: i32) -> (i32, i32) {
    %c0_i32 = arith.constant 0 : i32
    %c0_i32_0 = arith.constant 0 : i32
    %c0_i32_1 = arith.constant 0 : i32
    return %c0_i32, %c0_i32_0 : i32, i32
  }
  func.func @transform_19(%arg0: i32) -> (i32, i32) {
    %c0_i32 = arith.constant 0 : i32
    %c0_i32_0 = arith.constant 0 : i32
    %c0_i32_1 = arith.constant 0 : i32
    return %c0_i32, %c0_i32_0 : i32, i32
  }
  func.func @transform_20(%arg0: i32) -> (i32, i32) {
    %c0_i32 = arith.constant 0 : i32
    %c0_i32_0 = arith.constant 0 : i32
    %c0_i32_1 = arith.constant 0 : i32
    return %c0_i32, %c0_i32_0 : i32, i32
  }
  func.func @transform_21(%arg0: i32) -> (i32, i32, i32) {
    %c0_i32 = arith.constant 0 : i32
    %c0_i32_0 = arith.constant 0 : i32
    %c0_i32_1 = arith.constant 0 : i32
    return %c0_i32, %arg0, %c0_i32_0 : i32, i32, i32
  }
}

</mosaic_0001>

<llo_original>
// kernel: kalman_net_filter.1
$region0: #{kalman_net_filter.1}
  #allocation0 [shape = 'u32[]', space=smem, size = 0x4, offset = 0x4, fixed_abs, tag = 'smem constant byte address 0x4 - core index']
  #allocation1 [shape = 'u32[72,128]{1,0:T(1,128)}', space=vmem, size = 0x9000, scoped, tag = 'internal scratch']
  %s0 = inlined_call_operand.vmem [shape: f32[12,128,16], index: 0, kind: input, shape index: {}]
  %s1 = inlined_call_operand.vmem [shape: f32[128,64], index: 1, kind: input, shape index: {}]
  %s2 = inlined_call_operand.vmem [shape: f32[4,14], index: 2, kind: input, shape index: {}]
  %s3 = inlined_call_operand.vmem [shape: bf16[12,4], index: 3, kind: input, shape index: {}]
  %s4 = inlined_call_operand.vmem [shape: bf16[4,12], index: 4, kind: input, shape index: {}]
  %s5 = inlined_call_operand.vmem [shape: f32[8,4], index: 5, kind: input, shape index: {}]
  %s6 = inlined_call_operand.vmem [shape: bf16[12,60], index: 6, kind: input, shape index: {}]
  %s7 = inlined_call_operand.vmem [shape: f32[1,60], index: 7, kind: input, shape index: {}]
  %s8 = inlined_call_operand.vmem [shape: bf16[76,96], index: 8, kind: input, shape index: {}]
  %s9 = inlined_call_operand.vmem [shape: f32[1,96], index: 9, kind: input, shape index: {}]
  %s10 = inlined_call_operand.vmem [shape: bf16[92,96], index: 10, kind: input, shape index: {}]
  %s11 = inlined_call_operand.vmem [shape: f32[1,96], index: 11, kind: input, shape index: {}]
  %s12 = inlined_call_operand.vmem [shape: bf16[68,24], index: 12, kind: input, shape index: {}]
  %s13 = inlined_call_operand.vmem [shape: f32[1,24], index: 13, kind: input, shape index: {}]
  %s14 = inlined_call_operand.vmem [shape: bf16[16,20], index: 14, kind: input, shape index: {}]
  %s15 = inlined_call_operand.vmem [shape: f32[1,20], index: 15, kind: input, shape index: {}]
  %s16 = inlined_call_operand.vmem [shape: bf16[20,912], index: 16, kind: input, shape index: {}]
  %s17 = inlined_call_operand.vmem [shape: f32[1,912], index: 17, kind: input, shape index: {}]
  %s18 = inlined_call_operand.vmem [shape: bf16[896,24], index: 18, kind: input, shape index: {}]
  %s19 = inlined_call_operand.vmem [shape: f32[1,24], index: 19, kind: input, shape index: {}]
  %s20 = inlined_call_operand.vmem [shape: bf16[16,16], index: 20, kind: input, shape index: {}]
  %s21 = inlined_call_operand.vmem [shape: f32[12,128,64], index: 21, kind: output, shape index: {}]
  %s22 = sld [smem:[#allocation0]]
  $region196: #{kalman_net_filter.1} parent=0
    _
  %s24 = ssub.s32 1, %s22
  %s25 = scalar_select 0, %s24, %s22
  $region1: #{kalman_net_filter.1} parent=0
    #allocation2 [shape = 'u8[786432]{0}', space=vmem, size = 0xc0000, scoped, tag = 'input window, operand 0']
    #allocation3 [shape = 'u8[786432]{0}', space=vmem, size = 0xc0000, scoped, tag = 'output window, operand 0']
    loop: start=0, step=1, limit=4
    $region2: #{kalman_net_filter.1} parent=1 // loop_pre_header
      _
    $region3: #{kalman_net_filter.1} parent=1 // loop_header
      %s27 = sphi 0, %s31
      %p28 = scmp.ge.s32.totalorder %s27, 4
      %s37 = sphi 0, %s39
      %s40 = sphi 0, %s37
      %s41 = sphi 0, %s40
      %s57 = sphi 0, %s41
      %s63 = sphi 0, %s65
      %s66 = sphi 0, %s63
      %s67 = sphi 0, %s66
      %s83 = sphi 0, %s67
      %s87 = sphi 0, %s87
      %s89 = sphi 0, %s87
      %s90 = sphi 0, %s89
      %s104 = sphi 0, %s90
      %s108 = sphi 0, %s108
      %s110 = sphi 0, %s108
      %s111 = sphi 0, %s110
      %s125 = sphi 0, %s111
      %s129 = sphi 0, %s129
      %s131 = sphi 0, %s129
      %s132 = sphi 0, %s131
      %s146 = sphi 0, %s132
      %s150 = sphi 0, %s150
      %s152 = sphi 0, %s150
      %s153 = sphi 0, %s152
      %s167 = sphi 0, %s153
      %s171 = sphi 0, %s171
      %s173 = sphi 0, %s171
      %s174 = sphi 0, %s173
      %s188 = sphi 0, %s174
      %s192 = sphi 0, %s192
      %s194 = sphi 0, %s192
      %s195 = sphi 0, %s194
      %s209 = sphi 0, %s195
      %s213 = sphi 0, %s213
      %s215 = sphi 0, %s213
      %s216 = sphi 0, %s215
      %s230 = sphi 0, %s216
      %s234 = sphi 0, %s234
      %s236 = sphi 0, %s234
      %s237 = sphi 0, %s236
      %s251 = sphi 0, %s237
      %s255 = sphi 0, %s255
      %s257 = sphi 0, %s255
      %s258 = sphi 0, %s257
      %s272 = sphi 0, %s258
      %s276 = sphi 0, %s276
      %s278 = sphi 0, %s276
      %s279 = sphi 0, %s278
      %s293 = sphi 0, %s279
      %s297 = sphi 0, %s297
      %s299 = sphi 0, %s297
      %s300 = sphi 0, %s299
      %s314 = sphi 0, %s300
      %s318 = sphi 0, %s318
      %s320 = sphi 0, %s318
      %s321 = sphi 0, %s320
      %s335 = sphi 0, %s321
      %s339 = sphi 0, %s339
      %s341 = sphi 0, %s339
      %s342 = sphi 0, %s341
      %s356 = sphi 0, %s342
      %s360 = sphi 0, %s360
      %s362 = sphi 0, %s360
      %s363 = sphi 0, %s362
      %s377 = sphi 0, %s363
      %s381 = sphi 0, %s381
      %s383 = sphi 0, %s381
      %s384 = sphi 0, %s383
      %s398 = sphi 0, %s384
      %s402 = sphi 0, %s402
      %s404 = sphi 0, %s402
      %s405 = sphi 0, %s404
      %s419 = sphi 0, %s405
      %s423 = sphi 0, %s423
      %s425 = sphi 0, %s423
      %s426 = sphi 0, %s425
      %s440 = sphi 0, %s426
      %s444 = sphi 0, %s444
      %s446 = sphi 0, %s444
      %s447 = sphi 0, %s446
      %s461 = sphi 0, %s447
      %s465 = sphi 0, %s465
      %s467 = sphi 0, %s465
      %s468 = sphi 0, %s467
      %s482 = sphi 0, %s468
      %s488 = sphi 0, %s490
      %s491 = sphi 0, %s488
      %s492 = sphi 0, %s491
      %s508 = sphi 0, %s492
    $region4: #{kalman_net_filter.1} parent=1 // loop_header_branch
      %30 = sbr.rel (%p28) target = $region8
    $region5: #{kalman_net_filter.1} parent=1 // loop_body
      %s32 = ssub.s32 %s27, 1
      %s33 = ssub.s32 %s27, 2
      %s34 = sadd.s32 %s27, 1
      %s35 = ssub.s32 %s27, %s34
      %p36 = scmp.eq.s32.totalorder %s35, 0
      %s38 = sadd.s32 %s37, 1
      %s39 = scalar_select %p36, %s37, %s38
      %p42 = pneg %p36
      %p43 = scmp.eq.s32.totalorder %s27, 1
      %p44 = por %p42, %p43
      %p45 = scmp.ne.s32.totalorder %s37, %s40
      %p46 = scmp.eq.s32.totalorder %s27, 0
      %p47 = por %p45, %p46
      %p48 = scmp.ne.s32.totalorder %s37, %s40
      %p49 = scmp.eq.s32.totalorder %s32, 1
      %p50 = por %p48, %p49
      %p51 = scmp.ne.s32.totalorder %s40, %s41
      %p52 = scmp.eq.s32.totalorder %s32, 0
      %p53 = por %p51, %p52
      %p54 = scmp.ne.s32.totalorder %s40, %s41
      %p55 = scmp.eq.s32.totalorder %s33, 1
      %p56 = por %p54, %p55
      %p58 = scmp.ne.s32.totalorder %s41, %s57
      %p59 = scmp.eq.s32.totalorder %s33, 0
      %p60 = por %p58, %p59
      %s61 = ssub.s32 %s27, %s34
      %p62 = scmp.eq.s32.totalorder %s61, 0
      %s64 = sadd.s32 %s63, 1
      %s65 = scalar_select %p62, %s63, %s64
      %p68 = pneg %p62
      %p69 = scmp.eq.s32.totalorder %s27, 1
      %p70 = por %p68, %p69
      %p71 = scmp.ne.s32.totalorder %s63, %s66
      %p72 = scmp.eq.s32.totalorder %s27, 0
      %p73 = por %p71, %p72
      %p74 = scmp.ne.s32.totalorder %s63, %s66
      %p75 = scmp.eq.s32.totalorder %s32, 1
      %p76 = por %p74, %p75
      %p77 = scmp.ne.s32.totalorder %s66, %s67
      %p78 = scmp.eq.s32.totalorder %s32, 0
      %p79 = por %p77, %p78
      %p80 = scmp.ne.s32.totalorder %s66, %s67
      %p81 = scmp.eq.s32.totalorder %s33, 1
      %p82 = por %p80, %p81
      %p84 = scmp.ne.s32.totalorder %s67, %s83
      %p85 = scmp.eq.s32.totalorder %s33, 0
      %p86 = por %p84, %p85
      %s88 = sadd.s32 %s87, 1
      %p91 = scmp.eq.s32.totalorder %s27, 1
      %p92 = scmp.ne.s32.totalorder %s87, %s89
      %p93 = scmp.eq.s32.totalorder %s27, 0
      %p94 = por %p92, %p93
      %p95 = scmp.ne.s32.totalorder %s87, %s89
      %p96 = scmp.eq.s32.totalorder %s32, 1
      %p97 = por %p95, %p96
      %p98 = scmp.ne.s32.totalorder %s89, %s90
      %p99 = scmp.eq.s32.totalorder %s32, 0
      %p100 = por %p98, %p99
      %p101 = scmp.ne.s32.totalorder %s89, %s90
      %p102 = scmp.eq.s32.totalorder %s33, 1
      %p103 = por %p101, %p102
      %p105 = scmp.ne.s32.totalorder %s90, %s104
      %p106 = scmp.eq.s32.totalorder %s33, 0
      %p107 = por %p105, %p106
      %s109 = sadd.s32 %s108, 1
      %p112 = scmp.eq.s32.totalorder %s27, 1
      %p113 = scmp.ne.s32.totalorder %s108, %s110
      %p114 = scmp.eq.s32.totalorder %s27, 0
      %p115 = por %p113, %p114
      %p116 = scmp.ne.s32.totalorder %s108, %s110
      %p117 = scmp.eq.s32.totalorder %s32, 1
      %p118 = por %p116, %p117
      %p119 = scmp.ne.s32.totalorder %s110, %s111
      %p120 = scmp.eq.s32.totalorder %s32, 0
      %p121 = por %p119, %p120
      %p122 = scmp.ne.s32.totalorder %s110, %s111
      %p123 = scmp.eq.s32.totalorder %s33, 1
      %p124 = por %p122, %p123
      %p126 = scmp.ne.s32.totalorder %s111, %s125
      %p127 = scmp.eq.s32.totalorder %s33, 0
      %p128 = por %p126, %p127
      %s130 = sadd.s32 %s129, 1
      %p133 = scmp.eq.s32.totalorder %s27, 1
      %p134 = scmp.ne.s32.totalorder %s129, %s131
      %p135 = scmp.eq.s32.totalorder %s27, 0
      %p136 = por %p134, %p135
      %p137 = scmp.ne.s32.totalorder %s129, %s131
      %p138 = scmp.eq.s32.totalorder %s32, 1
      %p139 = por %p137, %p138
      %p140 = scmp.ne.s32.totalorder %s131, %s132
      %p141 = scmp.eq.s32.totalorder %s32, 0
      %p142 = por %p140, %p141
      %p143 = scmp.ne.s32.totalorder %s131, %s132
      %p144 = scmp.eq.s32.totalorder %s33, 1
      %p145 = por %p143, %p144
      %p147 = scmp.ne.s32.totalorder %s132, %s146
      %p148 = scmp.eq.s32.totalorder %s33, 0
      %p149 = por %p147, %p148
      %s151 = sadd.s32 %s150, 1
      %p154 = scmp.eq.s32.totalorder %s27, 1
      %p155 = scmp.ne.s32.totalorder %s150, %s152
      %p156 = scmp.eq.s32.totalorder %s27, 0
      %p157 = por %p155, %p156
      %p158 = scmp.ne.s32.totalorder %s150, %s152
      %p159 = scmp.eq.s32.totalorder %s32, 1
      %p160 = por %p158, %p159
      %p161 = scmp.ne.s32.totalorder %s152, %s153
      %p162 = scmp.eq.s32.totalorder %s32, 0
      %p163 = por %p161, %p162
      %p164 = scmp.ne.s32.totalorder %s152, %s153
      %p165 = scmp.eq.s32.totalorder %s33, 1
      %p166 = por %p164, %p165
      %p168 = scmp.ne.s32.totalorder %s153, %s167
      %p169 = scmp.eq.s32.totalorder %s33, 0
      %p170 = por %p168, %p169
      %s172 = sadd.s32 %s171, 1
      %p175 = scmp.eq.s32.totalorder %s27, 1
      %p176 = scmp.ne.s32.totalorder %s171, %s173
      %p177 = scmp.eq.s32.totalorder %s27, 0
      %p178 = por %p176, %p177
      %p179 = scmp.ne.s32.totalorder %s171, %s173
      %p180 = scmp.eq.s32.totalorder %s32, 1
      %p181 = por %p179, %p180
      %p182 = scmp.ne.s32.totalorder %s173, %s174
      %p183 = scmp.eq.s32.totalorder %s32, 0
      %p184 = por %p182, %p183
      %p185 = scmp.ne.s32.totalorder %s173, %s174
      %p186 = scmp.eq.s32.totalorder %s33, 1
      %p187 = por %p185, %p186
      %p189 = scmp.ne.s32.totalorder %s174, %s188
      %p190 = scmp.eq.s32.totalorder %s33, 0
      %p191 = por %p189, %p190
      %s193 = sadd.s32 %s192, 1
      %p196 = scmp.eq.s32.totalorder %s27, 1
      %p197 = scmp.ne.s32.totalorder %s192, %s194
      %p198 = scmp.eq.s32.totalorder %s27, 0
      %p199 = por %p197, %p198
      %p200 = scmp.ne.s32.totalorder %s192, %s194
      %p201 = scmp.eq.s32.totalorder %s32, 1
      %p202 = por %p200, %p201
      %p203 = scmp.ne.s32.totalorder %s194, %s195
      %p204 = scmp.eq.s32.totalorder %s32, 0
      %p205 = por %p203, %p204
      %p206 = scmp.ne.s32.totalorder %s194, %s195
      %p207 = scmp.eq.s32.totalorder %s33, 1
      %p208 = por %p206, %p207
      %p210 = scmp.ne.s32.totalorder %s195, %s209
      %p211 = scmp.eq.s32.totalorder %s33, 0
      %p212 = por %p210, %p211
      %s214 = sadd.s32 %s213, 1
      %p217 = scmp.eq.s32.totalorder %s27, 1
      %p218 = scmp.ne.s32.totalorder %s213, %s215
      %p219 = scmp.eq.s32.totalorder %s27, 0
      %p220 = por %p218, %p219
      %p221 = scmp.ne.s32.totalorder %s213, %s215
      %p222 = scmp.eq.s32.totalorder %s32, 1
      %p223 = por %p221, %p222
      %p224 = scmp.ne.s32.totalorder %s215, %s216
      %p225 = scmp.eq.s32.totalorder %s32, 0
      %p226 = por %p224, %p225
      %p227 = scmp.ne.s32.totalorder %s215, %s216
      %p228 = scmp.eq.s32.totalorder %s33, 1
      %p229 = por %p227, %p228
      %p231 = scmp.ne.s32.totalorder %s216, %s230
      %p232 = scmp.eq.s32.totalorder %s33, 0
      %p233 = por %p231, %p232
      %s235 = sadd.s32 %s234, 1
      %p238 = scmp.eq.s32.totalorder %s27, 1
      %p239 = scmp.ne.s32.totalorder %s234, %s236
      %p240 = scmp.eq.s32.totalorder %s27, 0
      %p241 = por %p239, %p240
      %p242 = scmp.ne.s32.totalorder %s234, %s236
      %p243 = scmp.eq.s32.totalorder %s32, 1
      %p244 = por %p242, %p243
      %p245 = scmp.ne.s32.totalorder %s236, %s237
      %p246 = scmp.eq.s32.totalorder %s32, 0
      %p247 = por %p245, %p246
      %p248 = scmp.ne.s32.totalorder %s236, %s237
      %p249 = scmp.eq.s32.totalorder %s33, 1
      %p250 = por %p248, %p249
      %p252 = scmp.ne.s32.totalorder %s237, %s251
      %p253 = scmp.eq.s32.totalorder %s33, 0
      %p254 = por %p252, %p253
      %s256 = sadd.s32 %s255, 1
      %p259 = scmp.eq.s32.totalorder %s27, 1
      %p260 = scmp.ne.s32.totalorder %s255, %s257
      %p261 = scmp.eq.s32.totalorder %s27, 0
      %p262 = por %p260, %p261
      %p263 = scmp.ne.s32.totalorder %s255, %s257
      %p264 = scmp.eq.s32.totalorder %s32, 1
      %p265 = por %p263, %p264
      %p266 = scmp.ne.s32.totalorder %s257, %s258
      %p267 = scmp.eq.s32.totalorder %s32, 0
      %p268 = por %p266, %p267
      %p269 = scmp.ne.s32.totalorder %s257, %s258
      %p270 = scmp.eq.s32.totalorder %s33, 1
      %p271 = por %p269, %p270
      %p273 = scmp.ne.s32.totalorder %s258, %s272
      %p274 = scmp.eq.s32.totalorder %s33, 0
      %p275 = por %p273, %p274
      %s277 = sadd.s32 %s276, 1
      %p280 = scmp.eq.s32.totalorder %s27, 1
      %p281 = scmp.ne.s32.totalorder %s276, %s278
      %p282 = scmp.eq.s32.totalorder %s27, 0
      %p283 = por %p281, %p282
      %p284 = scmp.ne.s32.totalorder %s276, %s278
      %p285 = scmp.eq.s32.totalorder %s32, 1
      %p286 = por %p284, %p285
      %p287 = scmp.ne.s32.totalorder %s278, %s279
      %p288 = scmp.eq.s32.totalorder %s32, 0
      %p289 = por %p287, %p288
      %p290 = scmp.ne.s32.totalorder %s278, %s279
      %p291 = scmp.eq.s32.totalorder %s33, 1
      %p292 = por %p290, %p291
      %p294 = scmp.ne.s32.totalorder %s279, %s293
      %p295 = scmp.eq.s32.totalorder %s33, 0
      %p296 = por %p294, %p295
      %s298 = sadd.s32 %s297, 1
      %p301 = scmp.eq.s32.totalorder %s27, 1
      %p302 = scmp.ne.s32.totalorder %s297, %s299
      %p303 = scmp.eq.s32.totalorder %s27, 0
      %p304 = por %p302, %p303
      %p305 = scmp.ne.s32.totalorder %s297, %s299
      %p306 = scmp.eq.s32.totalorder %s32, 1
      %p307 = por %p305, %p306
      %p308 = scmp.ne.s32.totalorder %s299, %s300
      %p309 = scmp.eq.s32.totalorder %s32, 0
      %p310 = por %p308, %p309
      %p311 = scmp.ne.s32.totalorder %s299, %s300
      %p312 = scmp.eq.s32.totalorder %s33, 1
      %p313 = por %p311, %p312
      %p315 = scmp.ne.s32.totalorder %s300, %s314
      %p316 = scmp.eq.s32.totalorder %s33, 0
      %p317 = por %p315, %p316
      %s319 = sadd.s32 %s318, 1
      %p322 = scmp.eq.s32.totalorder %s27, 1
      %p323 = scmp.ne.s32.totalorder %s318, %s320
      %p324 = scmp.eq.s32.totalorder %s27, 0
      %p325 = por %p323, %p324
      %p326 = scmp.ne.s32.totalorder %s318, %s320
      %p327 = scmp.eq.s32.totalorder %s32, 1
      %p328 = por %p326, %p327
      %p329 = scmp.ne.s32.totalorder %s320, %s321
      %p330 = scmp.eq.s32.totalorder %s32, 0
      %p331 = por %p329, %p330
      %p332 = scmp.ne.s32.totalorder %s320, %s321
      %p333 = scmp.eq.s32.totalorder %s33, 1
      %p334 = por %p332, %p333
      %p336 = scmp.ne.s32.totalorder %s321, %s335
      %p337 = scmp.eq.s32.totalorder %s33, 0
      %p338 = por %p336, %p337
      %s340 = sadd.s32 %s339, 1
      %p343 = scmp.eq.s32.totalorder %s27, 1
      %p344 = scmp.ne.s32.totalorder %s339, %s341
      %p345 = scmp.eq.s32.totalorder %s27, 0
      %p346 = por %p344, %p345
      %p347 = scmp.ne.s32.totalorder %s339, %s341
      %p348 = scmp.eq.s32.totalorder %s32, 1
      %p349 = por %p347, %p348
      %p350 = scmp.ne.s32.totalorder %s341, %s342
      %p351 = scmp.eq.s32.totalorder %s32, 0
      %p352 = por %p350, %p351
      %p353 = scmp.ne.s32.totalorder %s341, %s342
      %p354 = scmp.eq.s32.totalorder %s33, 1
      %p355 = por %p353, %p354
      %p357 = scmp.ne.s32.totalorder %s342, %s356
      %p358 = scmp.eq.s32.totalorder %s33, 0
      %p359 = por %p357, %p358
      %s361 = sadd.s32 %s360, 1
      %p364 = scmp.eq.s32.totalorder %s27, 1
      %p365 = scmp.ne.s32.totalorder %s360, %s362
      %p366 = scmp.eq.s32.totalorder %s27, 0
      %p367 = por %p365, %p366
      %p368 = scmp.ne.s32.totalorder %s360, %s362
      %p369 = scmp.eq.s32.totalorder %s32, 1
      %p370 = por %p368, %p369
      %p371 = scmp.ne.s32.totalorder %s362, %s363
      %p372 = scmp.eq.s32.totalorder %s32, 0
      %p373 = por %p371, %p372
      %p374 = scmp.ne.s32.totalorder %s362, %s363
      %p375 = scmp.eq.s32.totalorder %s33, 1
      %p376 = por %p374, %p375
      %p378 = scmp.ne.s32.totalorder %s363, %s377
      %p379 = scmp.eq.s32.totalorder %s33, 0
      %p380 = por %p378, %p379
      %s382 = sadd.s32 %s381, 1
      %p385 = scmp.eq.s32.totalorder %s27, 1
      %p386 = scmp.ne.s32.totalorder %s381, %s383
      %p387 = scmp.eq.s32.totalorder %s27, 0
      %p388 = por %p386, %p387
      %p389 = scmp.ne.s32.totalorder %s381, %s383
      %p390 = scmp.eq.s32.totalorder %s32, 1
      %p391 = por %p389, %p390
      %p392 = scmp.ne.s32.totalorder %s383, %s384
      %p393 = scmp.eq.s32.totalorder %s32, 0
      %p394 = por %p392, %p393
      %p395 = scmp.ne.s32.totalorder %s383, %s384
      %p396 = scmp.eq.s32.totalorder %s33, 1
      %p397 = por %p395, %p396
      %p399 = scmp.ne.s32.totalorder %s384, %s398
      %p400 = scmp.eq.s32.totalorder %s33, 0
      %p401 = por %p399, %p400
      %s403 = sadd.s32 %s402, 1
      %p406 = scmp.eq.s32.totalorder %s27, 1
      %p407 = scmp.ne.s32.totalorder %s402, %s404
      %p408 = scmp.eq.s32.totalorder %s27, 0
      %p409 = por %p407, %p408
      %p410 = scmp.ne.s32.totalorder %s402, %s404
      %p411 = scmp.eq.s32.totalorder %s32, 1
      %p412 = por %p410, %p411
      %p413 = scmp.ne.s32.totalorder %s404, %s405
      %p414 = scmp.eq.s32.totalorder %s32, 0
      %p415 = por %p413, %p414
      %p416 = scmp.ne.s32.totalorder %s404, %s405
      %p417 = scmp.eq.s32.totalorder %s33, 1
      %p418 = por %p416, %p417
      %p420 = scmp.ne.s32.totalorder %s405, %s419
      %p421 = scmp.eq.s32.totalorder %s33, 0
      %p422 = por %p420, %p421
      %s424 = sadd.s32 %s423, 1
      %p427 = scmp.eq.s32.totalorder %s27, 1
      %p428 = scmp.ne.s32.totalorder %s423, %s425
      %p429 = scmp.eq.s32.totalorder %s27, 0
      %p430 = por %p428, %p429
      %p431 = scmp.ne.s32.totalorder %s423, %s425
      %p432 = scmp.eq.s32.totalorder %s32, 1
      %p433 = por %p431, %p432
      %p434 = scmp.ne.s32.totalorder %s425, %s426
      %p435 = scmp.eq.s32.totalorder %s32, 0
      %p436 = por %p434, %p435
      %p437 = scmp.ne.s32.totalorder %s425, %s426
      %p438 = scmp.eq.s32.totalorder %s33, 1
      %p439 = por %p437, %p438
      %p441 = scmp.ne.s32.totalorder %s426, %s440
      %p442 = scmp.eq.s32.totalorder %s33, 0
      %p443 = por %p441, %p442
      %s445 = sadd.s32 %s444, 1
      %p448 = scmp.eq.s32.totalorder %s27, 1
      %p449 = scmp.ne.s32.totalorder %s444, %s446
      %p450 = scmp.eq.s32.totalorder %s27, 0
      %p451 = por %p449, %p450
      %p452 = scmp.ne.s32.totalorder %s444, %s446
      %p453 = scmp.eq.s32.totalorder %s32, 1
      %p454 = por %p452, %p453
      %p455 = scmp.ne.s32.totalorder %s446, %s447
      %p456 = scmp.eq.s32.totalorder %s32, 0
      %p457 = por %p455, %p456
      %p458 = scmp.ne.s32.totalorder %s446, %s447
      %p459 = scmp.eq.s32.totalorder %s33, 1
      %p460 = por %p458, %p459
      %p462 = scmp.ne.s32.totalorder %s447, %s461
      %p463 = scmp.eq.s32.totalorder %s33, 0
      %p464 = por %p462, %p463
      %s466 = sadd.s32 %s465, 1
      %p469 = scmp.eq.s32.totalorder %s27, 1
      %p470 = scmp.ne.s32.totalorder %s465, %s467
      %p471 = scmp.eq.s32.totalorder %s27, 0
      %p472 = por %p470, %p471
      %p473 = scmp.ne.s32.totalorder %s465, %s467
      %p474 = scmp.eq.s32.totalorder %s32, 1
      %p475 = por %p473, %p474
      %p476 = scmp.ne.s32.totalorder %s467, %s468
      %p477 = scmp.eq.s32.totalorder %s32, 0
      %p478 = por %p476, %p477
      %p479 = scmp.ne.s32.totalorder %s467, %s468
      %p480 = scmp.eq.s32.totalorder %s33, 1
      %p481 = por %p479, %p480
      %p483 = scmp.ne.s32.totalorder %s468, %s482
      %p484 = scmp.eq.s32.totalorder %s33, 0
      %p485 = por %p483, %p484
      %s486 = ssub.s32 %s27, %s34
      %p487 = scmp.eq.s32.totalorder %s486, 0
      %s489 = sadd.s32 %s488, 1
      %s490 = scalar_select %p487, %s488, %s489
      %p493 = pneg %p487
      %p494 = scmp.eq.s32.totalorder %s27, 1
      %p495 = por %p493, %p494
      %p496 = scmp.ne.s32.totalorder %s488, %s491
      %p497 = scmp.eq.s32.totalorder %s27, 0
      %p498 = por %p496, %p497
      %p499 = scmp.ne.s32.totalorder %s488, %s491
      %p500 = scmp.eq.s32.totalorder %s32, 1
      %p501 = por %p499, %p500
      %p502 = scmp.ne.s32.totalorder %s491, %s492
      %p503 = scmp.eq.s32.totalorder %s32, 0
      %p504 = por %p502, %p503
      %p505 = scmp.ne.s32.totalorder %s491, %s492
      %p506 = scmp.eq.s32.totalorder %s33, 1
      %p507 = por %p505, %p506
      %p509 = scmp.ne.s32.totalorder %s492, %s508
      %p510 = scmp.eq.s32.totalorder %s33, 0
      %p511 = por %p509, %p510
      %p512 = scmp.le.s32.totalorder 1, %s27
      %p513 = scmp.lt.s32.totalorder %s27, 3
      %p514 = pnand %p512, %p513
      %p515 = pneg %p514
      // Predicated region
      $region9: #{kalman_net_filter.1} parent=5 // pred_check
        _
      $region10: #{kalman_net_filter.1} parent=5 // pred_check_branch
        %517 = sbr.rel (%p514) target = $region12
      $region11: #{kalman_net_filter.1} parent=5 // pred_region
        %s518 = ssub.s32 %s27, 1
        // Predicated region
        $region13: #{kalman_net_filter.1} parent=11 // pred_check
          %p519 = pneg %p100
        $region14: #{kalman_net_filter.1} parent=11 // pred_check_branch
          %521 = sbr.rel (%p519) target = $region16
        $region15: #{kalman_net_filter.1} parent=11 // pred_region
          _
        $region16: #{kalman_net_filter.1} parent=11 // pred_fallthru
          _
        // Predicated region
        $region17: #{kalman_net_filter.1} parent=11 // pred_check
          %p522 = pneg %p121
        $region18: #{kalman_net_filter.1} parent=11 // pred_check_branch
          %524 = sbr.rel (%p522) target = $region20
        $region19: #{kalman_net_filter.1} parent=11 // pred_region
          _
        $region20: #{kalman_net_filter.1} parent=11 // pred_fallthru
          _
        // Predicated region
        $region21: #{kalman_net_filter.1} parent=11 // pred_check
          %p525 = pneg %p142
        $region22: #{kalman_net_filter.1} parent=11 // pred_check_branch
          %527 = sbr.rel (%p525) target = $region24
        $region23: #{kalman_net_filter.1} parent=11 // pred_region
          _
        $region24: #{kalman_net_filter.1} parent=11 // pred_fallthru
          _
        // Predicated region
        $region25: #{kalman_net_filter.1} parent=11 // pred_check
          %p528 = pneg %p163
        $region26: #{kalman_net_filter.1} parent=11 // pred_check_branch
          %530 = sbr.rel (%p528) target = $region28
        $region27: #{kalman_net_filter.1} parent=11 // pred_region
          _
        $region28: #{kalman_net_filter.1} parent=11 // pred_fallthru
          _
        // Predicated region
        $region29: #{kalman_net_filter.1} parent=11 // pred_check
          %p531 = pneg %p184
        $region30: #{kalman_net_filter.1} parent=11 // pred_check_branch
          %533 = sbr.rel (%p531) target = $region32
        $region31: #{kalman_net_filter.1} parent=11 // pred_region
          _
        $region32: #{kalman_net_filter.1} parent=11 // pred_fallthru
          _
        // Predicated region
        $region33: #{kalman_net_filter.1} parent=11 // pred_check
          %p534 = pneg %p205
        $region34: #{kalman_net_filter.1} parent=11 // pred_check_branch
          %536 = sbr.rel (%p534) target = $region36
        $region35: #{kalman_net_filter.1} parent=11 // pred_region
          _
        $region36: #{kalman_net_filter.1} parent=11 // pred_fallthru
          _
        // Predicated region
        $region37: #{kalman_net_filter.1} parent=11 // pred_check
          %p537 = pneg %p226
        $region38: #{kalman_net_filter.1} parent=11 // pred_check_branch
          %539 = sbr.rel (%p537) target = $region40
        $region39: #{kalman_net_filter.1} parent=11 // pred_region
          _
        $region40: #{kalman_net_filter.1} parent=11 // pred_fallthru
          _
        // Predicated region
        $region41: #{kalman_net_filter.1} parent=11 // pred_check
          %p540 = pneg %p247
        $region42: #{kalman_net_filter.1} parent=11 // pred_check_branch
          %542 = sbr.rel (%p540) target = $region44
        $region43: #{kalman_net_filter.1} parent=11 // pred_region
          _
        $region44: #{kalman_net_filter.1} parent=11 // pred_fallthru
          _
        // Predicated region
        $region45: #{kalman_net_filter.1} parent=11 // pred_check
          %p543 = pneg %p268
        $region46: #{kalman_net_filter.1} parent=11 // pred_check_branch
          %545 = sbr.rel (%p543) target = $region48
        $region47: #{kalman_net_filter.1} parent=11 // pred_region
          _
        $region48: #{kalman_net_filter.1} parent=11 // pred_fallthru
          _
        // Predicated region
        $region49: #{kalman_net_filter.1} parent=11 // pred_check
          %p546 = pneg %p289
        $region50: #{kalman_net_filter.1} parent=11 // pred_check_branch
          %548 = sbr.rel (%p546) target = $region52
        $region51: #{kalman_net_filter.1} parent=11 // pred_region
          _
        $region52: #{kalman_net_filter.1} parent=11 // pred_fallthru
          _
        // Predicated region
        $region53: #{kalman_net_filter.1} parent=11 // pred_check
          %p549 = pneg %p310
        $region54: #{kalman_net_filter.1} parent=11 // pred_check_branch
          %551 = sbr.rel (%p549) target = $region56
        $region55: #{kalman_net_filter.1} parent=11 // pred_region
          _
        $region56: #{kalman_net_filter.1} parent=11 // pred_fallthru
          _
        // Predicated region
        $region57: #{kalman_net_filter.1} parent=11 // pred_check
          %p552 = pneg %p331
        $region58: #{kalman_net_filter.1} parent=11 // pred_check_branch
          %554 = sbr.rel (%p552) target = $region60
        $region59: #{kalman_net_filter.1} parent=11 // pred_region
          _
        $region60: #{kalman_net_filter.1} parent=11 // pred_fallthru
          _
        // Predicated region
        $region61: #{kalman_net_filter.1} parent=11 // pred_check
          %p555 = pneg %p352
        $region62: #{kalman_net_filter.1} parent=11 // pred_check_branch
          %557 = sbr.rel (%p555) target = $region64
        $region63: #{kalman_net_filter.1} parent=11 // pred_region
          _
        $region64: #{kalman_net_filter.1} parent=11 // pred_fallthru
          _
        // Predicated region
        $region65: #{kalman_net_filter.1} parent=11 // pred_check
          %p558 = pneg %p373
        $region66: #{kalman_net_filter.1} parent=11 // pred_check_branch
          %560 = sbr.rel (%p558) target = $region68
        $region67: #{kalman_net_filter.1} parent=11 // pred_region
          _
        $region68: #{kalman_net_filter.1} parent=11 // pred_fallthru
          _
        // Predicated region
        $region69: #{kalman_net_filter.1} parent=11 // pred_check
          %p561 = pneg %p394
        $region70: #{kalman_net_filter.1} parent=11 // pred_check_branch
          %563 = sbr.rel (%p561) target = $region72
        $region71: #{kalman_net_filter.1} parent=11 // pred_region
          _
        $region72: #{kalman_net_filter.1} parent=11 // pred_fallthru
          _
        // Predicated region
        $region73: #{kalman_net_filter.1} parent=11 // pred_check
          %p564 = pneg %p415
        $region74: #{kalman_net_filter.1} parent=11 // pred_check_branch
          %566 = sbr.rel (%p564) target = $region76
        $region75: #{kalman_net_filter.1} parent=11 // pred_region
          _
        $region76: #{kalman_net_filter.1} parent=11 // pred_fallthru
          _
        // Predicated region
        $region77: #{kalman_net_filter.1} parent=11 // pred_check
          %p567 = pneg %p436
        $region78: #{kalman_net_filter.1} parent=11 // pred_check_branch
          %569 = sbr.rel (%p567) target = $region80
        $region79: #{kalman_net_filter.1} parent=11 // pred_region
          _
        $region80: #{kalman_net_filter.1} parent=11 // pred_fallthru
          _
        // Predicated region
        $region81: #{kalman_net_filter.1} parent=11 // pred_check
          %p570 = pneg %p457
        $region82: #{kalman_net_filter.1} parent=11 // pred_check_branch
          %572 = sbr.rel (%p570) target = $region84
        $region83: #{kalman_net_filter.1} parent=11 // pred_region
          _
        $region84: #{kalman_net_filter.1} parent=11 // pred_fallthru
          _
        // Predicated region
        $region85: #{kalman_net_filter.1} parent=11 // pred_check
          %p573 = pneg %p478
        $region86: #{kalman_net_filter.1} parent=11 // pred_check_branch
          %575 = sbr.rel (%p573) target = $region88
        $region87: #{kalman_net_filter.1} parent=11 // pred_region
          _
        $region88: #{kalman_net_filter.1} parent=11 // pred_fallthru
          _
      $region12: #{kalman_net_filter.1} parent=5 // pred_fallthru
        _
      %p576 = scmp.lt.s32.totalorder %s27, 2
      // Predicated region
      $region89: #{kalman_net_filter.1} parent=5 // pred_check
        %p577 = pneg %p576
      $region90: #{kalman_net_filter.1} parent=5 // pred_check_branch
        %579 = sbr.rel (%p577) target = $region92
      $region91: #{kalman_net_filter.1} parent=5 // pred_region
        // Predicated region
        $region93: #{kalman_net_filter.1} parent=91 // pred_check
          %p580 = pneg %p47
        $region94: #{kalman_net_filter.1} parent=91 // pred_check_branch
          %582 = sbr.rel (%p580) target = $region96
        $region95: #{kalman_net_filter.1} parent=91 // pred_region
          %s583 = sand.u32 %s37, 1
          %s584 = sand.u32 %s37, 1
          %s585 = smul.addr %s584, 768
          %s586 = scalar_lea.vmem [#allocation2], %s585
          %s587 = smul.u32 8, %s27
          %s588 = smul.addr %s587, 8
          %s589 = scalar_lea.vmem %s0, %s588
          // Predicated region
          $region97: #{kalman_net_filter.1} parent=95 // pred_check
            _
          $region98: #{kalman_net_filter.1} parent=95 // pred_check_branch
            %591 = sbr.rel (0) target = $region100
          $region99: #{kalman_net_filter.1} parent=95 // pred_region
            // Predicated region
            $region101: #{kalman_net_filter.1} parent=99 // pred_check
              _
            $region102: #{kalman_net_filter.1} parent=99 // pred_check_branch
              %593 = sbr.rel (0) target = $region104
            $region103: #{kalman_net_filter.1} parent=99 // pred_region
              // Predicated region
              $region116: #{kalman_net_filter.1} parent=103 // pred_check
                _
              $region117: #{kalman_net_filter.1} parent=103 // pred_check_branch
                %799 = sbr.rel (0) target = $region119
              $region118: #{kalman_net_filter.1} parent=103 // pred_region
                loop: start=0, step=1, limit=1
                $region120: #{kalman_net_filter.1} parent=118 // loop_pre_header
                  _
                $region121: #{kalman_net_filter.1} parent=118 // loop_header
                  %s801 = sphi 0, %s805
                  %p802 = scmp.ge.s32.totalorder %s801, 1
                  %s806 = sphi %s589, %s589
                  %s807 = sphi %s586, %s586
                $region122: #{kalman_net_filter.1} parent=118 // loop_header_branch
                  %804 = sbr.rel (%p802) target = $region126
                $region123: #{kalman_net_filter.1} parent=118 // loop_body
                  %v808 = vld [vmem:[%s806] sm:$0xff]
                  %809 = vst [vmem:[%s807] sm:$0xff] %v808
                  %v810 = vld [vmem:[%s806 + $0x8] sm:$0xff]
                  %811 = vst [vmem:[%s807 + $0x8] sm:$0xff] %v810
                  %v812 = vld [vmem:[%s806 + $0x10] sm:$0xff]
                  %813 = vst [vmem:[%s807 + $0x10] sm:$0xff] %v812
                  %v814 = vld [vmem:[%s806 + $0x18] sm:$0xff]
                  %815 = vst [vmem:[%s807 + $0x18] sm:$0xff] %v814
                  %v816 = vld [vmem:[%s806 + $0x20] sm:$0xff]
                  %817 = vst [vmem:[%s807 + $0x20] sm:$0xff] %v816
                  %v818 = vld [vmem:[%s806 + $0x28] sm:$0xff]
                  %819 = vst [vmem:[%s807 + $0x28] sm:$0xff] %v818
                  %v820 = vld [vmem:[%s806 + $0x30] sm:$0xff]
                  %821 = vst [vmem:[%s807 + $0x30] sm:$0xff] %v820
                  %v822 = vld [vmem:[%s806 + $0x38] sm:$0xff]
                  %823 = vst [vmem:[%s807 + $0x38] sm:$0xff] %v822
                  %v824 = vld [vmem:[%s806 + $0x80] sm:$0xff]
                  %825 = vst [vmem:[%s807 + $0x40] sm:$0xff] %v824
                  %v826 = vld [vmem:[%s806 + $0x88] sm:$0xff]
                  %827 = vst [vmem:[%s807 + $0x48] sm:$0xff] %v826
                  %v828 = vld [vmem:[%s806 + $0x90] sm:$0xff]
                  %829 = vst [vmem:[%s807 + $0x50] sm:$0xff] %v828
                  %v830 = vld [vmem:[%s806 + $0x98] sm:$0xff]
                  %831 = vst [vmem:[%s807 + $0x58] sm:$0xff] %v830
                  %v832 = vld [vmem:[%s806 + $0xa0] sm:$0xff]
                  %833 = vst [vmem:[%s807 + $0x60] sm:$0xff] %v832
                  %v834 = vld [vmem:[%s806 + $0xa8] sm:$0xff]
                  %835 = vst [vmem:[%s807 + $0x68] sm:$0xff] %v834
                  %v836 = vld [vmem:[%s806 + $0xb0] sm:$0xff]
                  %837 = vst [vmem:[%s807 + $0x70] sm:$0xff] %v836
                  %v838 = vld [vmem:[%s806 + $0xb8] sm:$0xff]
                  %839 = vst [vmem:[%s807 + $0x78] sm:$0xff] %v838
                  %v840 = vld [vmem:[%s806 + $0x100] sm:$0xff]
                  %841 = vst [vmem:[%s807 + $0x80] sm:$0xff] %v840
                  %v842 = vld [vmem:[%s806 + $0x108] sm:$0xff]
                  %843 = vst [vmem:[%s807 + $0x88] sm:$0xff] %v842
                  %v844 = vld [vmem:[%s806 + $0x110] sm:$0xff]
                  %845 = vst [vmem:[%s807 + $0x90] sm:$0xff] %v844
                  %v846 = vld [vmem:[%s806 + $0x118] sm:$0xff]
                  %847 = vst [vmem:[%s807 + $0x98] sm:$0xff] %v846
                  %v848 = vld [vmem:[%s806 + $0x120] sm:$0xff]
                  %849 = vst [vmem:[%s807 + $0xa0] sm:$0xff] %v848
                  %v850 = vld [vmem:[%s806 + $0x128] sm:$0xff]
                  %851 = vst [vmem:[%s807 + $0xa8] sm:$0xff] %v850
                  %v852 = vld [vmem:[%s806 + $0x130] sm:$0xff]
                  %853 = vst [vmem:[%s807 + $0xb0] sm:$0xff] %v852
                  %v854 = vld [vmem:[%s806 + $0x138] sm:$0xff]
                  %855 = vst [vmem:[%s807 + $0xb8] sm:$0xff] %v854
                  %v856 = vld [vmem:[%s806 + $0x180] sm:$0xff]
                  %857 = vst [vmem:[%s807 + $0xc0] sm:$0xff] %v856
                  %v858 = vld [vmem:[%s806 + $0x188] sm:$0xff]
                  %859 = vst [vmem:[%s807 + $0xc8] sm:$0xff] %v858
                  %v860 = vld [vmem:[%s806 + $0x190] sm:$0xff]
                  %861 = vst [vmem:[%s807 + $0xd0] sm:$0xff] %v860
                  %v862 = vld [vmem:[%s806 + $0x198] sm:$0xff]
                  %863 = vst [vmem:[%s807 + $0xd8] sm:$0xff] %v862
                  %v864 = vld [vmem:[%s806 + $0x1a0] sm:$0xff]
                  %865 = vst [vmem:[%s807 + $0xe0] sm:$0xff] %v864
                  %v866 = vld [vmem:[%s806 + $0x1a8] sm:$0xff]
                  %867 = vst [vmem:[%s807 + $0xe8] sm:$0xff] %v866
                  %v868 = vld [vmem:[%s806 + $0x1b0] sm:$0xff]
                  %869 = vst [vmem:[%s807 + $0xf0] sm:$0xff] %v868
                  %v870 = vld [vmem:[%s806 + $0x1b8] sm:$0xff]
                  %871 = vst [vmem:[%s807 + $0xf8] sm:$0xff] %v870
                  %v872 = vld [vmem:[%s806 + $0x200] sm:$0xff]
                  %873 = vst [vmem:[%s807 + $0x100] sm:$0xff] %v872
                  %v874 = vld [vmem:[%s806 + $0x208] sm:$0xff]
                  %875 = vst [vmem:[%s807 + $0x108] sm:$0xff] %v874
                  %v876 = vld [vmem:[%s806 + $0x210] sm:$0xff]
                  %877 = vst [vmem:[%s807 + $0x110] sm:$0xff] %v876
                  %v878 = vld [vmem:[%s806 + $0x218] sm:$0xff]
                  %879 = vst [vmem:[%s807 + $0x118] sm:$0xff] %v878
                  %v880 = vld [vmem:[%s806 + $0x220] sm:$0xff]
                  %881 = vst [vmem:[%s807 + $0x120] sm:$0xff] %v880
                  %v882 = vld [vmem:[%s806 + $0x228] sm:$0xff]
                  %883 = vst [vmem:[%s807 + $0x128] sm:$0xff] %v882
                  %v884 = vld [vmem:[%s806 + $0x230] sm:$0xff]
                  %885 = vst [vmem:[%s807 + $0x130] sm:$0xff] %v884
                  %v886 = vld [vmem:[%s806 + $0x238] sm:$0xff]
                  %887 = vst [vmem:[%s807 + $0x138] sm:$0xff] %v886
                  %v888 = vld [vmem:[%s806 + $0x280] sm:$0xff]
                  %889 = vst [vmem:[%s807 + $0x140] sm:$0xff] %v888
                  %v890 = vld [vmem:[%s806 + $0x288] sm:$0xff]
                  %891 = vst [vmem:[%s807 + $0x148] sm:$0xff] %v890
                  %v892 = vld [vmem:[%s806 + $0x290] sm:$0xff]
                  %893 = vst [vmem:[%s807 + $0x150] sm:$0xff] %v892
                  %v894 = vld [vmem:[%s806 + $0x298] sm:$0xff]
                  %895 = vst [vmem:[%s807 + $0x158] sm:$0xff] %v894
                  %v896 = vld [vmem:[%s806 + $0x2a0] sm:$0xff]
                  %897 = vst [vmem:[%s807 + $0x160] sm:$0xff] %v896
                  %v898 = vld [vmem:[%s806 + $0x2a8] sm:$0xff]
                  %899 = vst [vmem:[%s807 + $0x168] sm:$0xff] %v898
                  %v900 = vld [vmem:[%s806 + $0x2b0] sm:$0xff]
                  %901 = vst [vmem:[%s807 + $0x170] sm:$0xff] %v900
                  %v902 = vld [vmem:[%s806 + $0x2b8] sm:$0xff]
                  %903 = vst [vmem:[%s807 + $0x178] sm:$0xff] %v902
                  %v904 = vld [vmem:[%s806 + $0x300] sm:$0xff]
                  %905 = vst [vmem:[%s807 + $0x180] sm:$0xff] %v904
                  %v906 = vld [vmem:[%s806 + $0x308] sm:$0xff]
                  %907 = vst [vmem:[%s807 + $0x188] sm:$0xff] %v906
                  %v908 = vld [vmem:[%s806 + $0x310] sm:$0xff]
                  %909 = vst [vmem:[%s807 + $0x190] sm:$0xff] %v908
                  %v910 = vld [vmem:[%s806 + $0x318] sm:$0xff]
                  %911 = vst [vmem:[%s807 + $0x198] sm:$0xff] %v910
                  %v912 = vld [vmem:[%s806 + $0x320] sm:$0xff]
                  %913 = vst [vmem:[%s807 + $0x1a0] sm:$0xff] %v912
                  %v914 = vld [vmem:[%s806 + $0x328] sm:$0xff]
                  %915 = vst [vmem:[%s807 + $0x1a8] sm:$0xff] %v914
                  %v916 = vld [vmem:[%s806 + $0x330] sm:$0xff]
                  %917 = vst [vmem:[%s807 + $0x1b0] sm:$0xff] %v916
                  %v918 = vld [vmem:[%s806 + $0x338] sm:$0xff]
                  %919 = vst [vmem:[%s807 + $0x1b8] sm:$0xff] %v918
                  %v920 = vld [vmem:[%s806 + $0x380] sm:$0xff]
                  %921 = vst [vmem:[%s807 + $0x1c0] sm:$0xff] %v920
                  %v922 = vld [vmem:[%s806 + $0x388] sm:$0xff]
                  %923 = vst [vmem:[%s807 + $0x1c8] sm:$0xff] %v922
                  %v924 = vld [vmem:[%s806 + $0x390] sm:$0xff]
                  %925 = vst [vmem:[%s807 + $0x1d0] sm:$0xff] %v924
                  %v926 = vld [vmem:[%s806 + $0x398] sm:$0xff]
                  %927 = vst [vmem:[%s807 + $0x1d8] sm:$0xff] %v926
                  %v928 = vld [vmem:[%s806 + $0x3a0] sm:$0xff]
                  %929 = vst [vmem:[%s807 + $0x1e0] sm:$0xff] %v928
                  %v930 = vld [vmem:[%s806 + $0x3a8] sm:$0xff]
                  %931 = vst [vmem:[%s807 + $0x1e8] sm:$0xff] %v930
                  %v932 = vld [vmem:[%s806 + $0x3b0] sm:$0xff]
                  %933 = vst [vmem:[%s807 + $0x1f0] sm:$0xff] %v932
                  %v934 = vld [vmem:[%s806 + $0x3b8] sm:$0xff]
                  %935 = vst [vmem:[%s807 + $0x1f8] sm:$0xff] %v934
                  %v936 = vld [vmem:[%s806 + $0x400] sm:$0xff]
                  %937 = vst [vmem:[%s807 + $0x200] sm:$0xff] %v936
                  %v938 = vld [vmem:[%s806 + $0x408] sm:$0xff]
                  %939 = vst [vmem:[%s807 + $0x208] sm:$0xff] %v938
                  %v940 = vld [vmem:[%s806 + $0x410] sm:$0xff]
                  %941 = vst [vmem:[%s807 + $0x210] sm:$0xff] %v940
                  %v942 = vld [vmem:[%s806 + $0x418] sm:$0xff]
                  %943 = vst [vmem:[%s807 + $0x218] sm:$0xff] %v942
                  %v944 = vld [vmem:[%s806 + $0x420] sm:$0xff]
                  %945 = vst [vmem:[%s807 + $0x220] sm:$0xff] %v944
                  %v946 = vld [vmem:[%s806 + $0x428] sm:$0xff]
                  %947 = vst [vmem:[%s807 + $0x228] sm:$0xff] %v946
                  %v948 = vld [vmem:[%s806 + $0x430] sm:$0xff]
                  %949 = vst [vmem:[%s807 + $0x230] sm:$0xff] %v948
                  %v950 = vld [vmem:[%s806 + $0x438] sm:$0xff]
                  %951 = vst [vmem:[%s807 + $0x238] sm:$0xff] %v950
                  %v952 = vld [vmem:[%s806 + $0x480] sm:$0xff]
                  %953 = vst [vmem:[%s807 + $0x240] sm:$0xff] %v952
                  %v954 = vld [vmem:[%s806 + $0x488] sm:$0xff]
                  %955 = vst [vmem:[%s807 + $0x248] sm:$0xff] %v954
                  %v956 = vld [vmem:[%s806 + $0x490] sm:$0xff]
                  %957 = vst [vmem:[%s807 + $0x250] sm:$0xff] %v956
                  %v958 = vld [vmem:[%s806 + $0x498] sm:$0xff]
                  %959 = vst [vmem:[%s807 + $0x258] sm:$0xff] %v958
                  %v960 = vld [vmem:[%s806 + $0x4a0] sm:$0xff]
                  %961 = vst [vmem:[%s807 + $0x260] sm:$0xff] %v960
                  %v962 = vld [vmem:[%s806 + $0x4a8] sm:$0xff]
                  %963 = vst [vmem:[%s807 + $0x268] sm:$0xff] %v962
                  %v964 = vld [vmem:[%s806 + $0x4b0] sm:$0xff]
                  %965 = vst [vmem:[%s807 + $0x270] sm:$0xff] %v964
                  %v966 = vld [vmem:[%s806 + $0x4b8] sm:$0xff]
                  %967 = vst [vmem:[%s807 + $0x278] sm:$0xff] %v966
                  %v968 = vld [vmem:[%s806 + $0x500] sm:$0xff]
                  %969 = vst [vmem:[%s807 + $0x280] sm:$0xff] %v968
                  %v970 = vld [vmem:[%s806 + $0x508] sm:$0xff]
                  %971 = vst [vmem:[%s807 + $0x288] sm:$0xff] %v970
                  %v972 = vld [vmem:[%s806 + $0x510] sm:$0xff]
                  %973 = vst [vmem:[%s807 + $0x290] sm:$0xff] %v972
                  %v974 = vld [vmem:[%s806 + $0x518] sm:$0xff]
                  %975 = vst [vmem:[%s807 + $0x298] sm:$0xff] %v974
                  %v976 = vld [vmem:[%s806 + $0x520] sm:$0xff]
                  %977 = vst [vmem:[%s807 + $0x2a0] sm:$0xff] %v976
                  %v978 = vld [vmem:[%s806 + $0x528] sm:$0xff]
                  %979 = vst [vmem:[%s807 + $0x2a8] sm:$0xff] %v978
                  %v980 = vld [vmem:[%s806 + $0x530] sm:$0xff]
                  %981 = vst [vmem:[%s807 + $0x2b0] sm:$0xff] %v980
                  %v982 = vld [vmem:[%s806 + $0x538] sm:$0xff]
                  %983 = vst [vmem:[%s807 + $0x2b8] sm:$0xff] %v982
                  %v984 = vld [vmem:[%s806 + $0x580] sm:$0xff]
                  %985 = vst [vmem:[%s807 + $0x2c0] sm:$0xff] %v984
                  %v986 = vld [vmem:[%s806 + $0x588] sm:$0xff]
                  %987 = vst [vmem:[%s807 + $0x2c8] sm:$0xff] %v986
                  %v988 = vld [vmem:[%s806 + $0x590] sm:$0xff]
                  %989 = vst [vmem:[%s807 + $0x2d0] sm:$0xff] %v988
                  %v990 = vld [vmem:[%s806 + $0x598] sm:$0xff]
                  %991 = vst [vmem:[%s807 + $0x2d8] sm:$0xff] %v990
                  %v992 = vld [vmem:[%s806 + $0x5a0] sm:$0xff]
                  %993 = vst [vmem:[%s807 + $0x2e0] sm:$0xff] %v992
                  %v994 = vld [vmem:[%s806 + $0x5a8] sm:$0xff]
                  %995 = vst [vmem:[%s807 + $0x2e8] sm:$0xff] %v994
                  %v996 = vld [vmem:[%s806 + $0x5b0] sm:$0xff]
                  %997 = vst [vmem:[%s807 + $0x2f0] sm:$0xff] %v996
                  %v998 = vld [vmem:[%s806 + $0x5b8] sm:$0xff]
                  %999 = vst [vmem:[%s807 + $0x2f8] sm:$0xff] %v998
                $region124: #{kalman_net_filter.1} parent=118 // loop_footer
                  %s805 = sadd.s32 1, %s801
                $region125: #{kalman_net_filter.1} parent=118 // loop_footer_branch
                  %800 = sbr.rel target = $region121
                $region126: #{kalman_net_filter.1} parent=118 // loop_exit
                  _
              $region119: #{kalman_net_filter.1} parent=103 // pred_fallthru
                _
              // Predicated region
              $region127: #{kalman_net_filter.1} parent=103 // pred_check
                _
              $region128: #{kalman_net_filter.1} parent=103 // pred_check_branch
                %1001 = sbr.rel target = $region130
              $region129: #{kalman_net_filter.1} parent=103 // pred_region
                _
              $region130: #{kalman_net_filter.1} parent=103 // pred_fallthru
                _
            $region104: #{kalman_net_filter.1} parent=99 // pred_fallthru
              _
            // Predicated region
            $region105: #{kalman_net_filter.1} parent=99 // pred_check
              _
            $region106: #{kalman_net_filter.1} parent=99 // pred_check_branch
              %595 = sbr.rel target = $region108
            $region107: #{kalman_net_filter.1} parent=99 // pred_region
              %s597 = ssub.s32 256, 1
              loop: start=0, step=1, limit=1
              $region109: #{kalman_net_filter.1} parent=107 // loop_pre_header
                _
              $region110: #{kalman_net_filter.1} parent=107 // loop_header
                %s599 = sphi 0, %s603
                %p600 = scmp.ge.s32.totalorder %s599, 1
                %s604 = sphi %s589, %s589
                %s605 = sphi %s586, %s586
              $region111: #{kalman_net_filter.1} parent=107 // loop_header_branch
                %602 = sbr.rel (%p600) target = $region115
              $region112: #{kalman_net_filter.1} parent=107 // loop_body
                %v606 = vld [vmem:[%s604] sm:%s597]
                %607 = vst [vmem:[%s605] sm:%s597] %v606
                %v608 = vld [vmem:[%s604 + $0x8] sm:%s597]
                %609 = vst [vmem:[%s605 + $0x8] sm:%s597] %v608
                %v610 = vld [vmem:[%s604 + $0x10] sm:%s597]
                %611 = vst [vmem:[%s605 + $0x10] sm:%s597] %v610
                %v612 = vld [vmem:[%s604 + $0x18] sm:%s597]
                %613 = vst [vmem:[%s605 + $0x18] sm:%s597] %v612
                %v614 = vld [vmem:[%s604 + $0x20] sm:%s597]
                %615 = vst [vmem:[%s605 + $0x20] sm:%s597] %v614
                %v616 = vld [vmem:[%s604 + $0x28] sm:%s597]
                %617 = vst [vmem:[%s605 + $0x28] sm:%s597] %v616
                %v618 = vld [vmem:[%s604 + $0x30] sm:%s597]
                %619 = vst [vmem:[%s605 + $0x30] sm:%s597] %v618
                %v620 = vld [vmem:[%s604 + $0x38] sm:%s597]
                %621 = vst [vmem:[%s605 + $0x38] sm:%s597] %v620
                %v622 = vld [vmem:[%s604 + $0x80] sm:%s597]
                %623 = vst [vmem:[%s605 + $0x40] sm:%s597] %v622
                %v624 = vld [vmem:[%s604 + $0x88] sm:%s597]
                %625 = vst [vmem:[%s605 + $0x48] sm:%s597] %v624
                %v626 = vld [vmem:[%s604 + $0x90] sm:%s597]
                %627 = vst [vmem:[%s605 + $0x50] sm:%s597] %v626
                %v628 = vld [vmem:[%s604 + $0x98] sm:%s597]
                %629 = vst [vmem:[%s605 + $0x58] sm:%s597] %v628
                %v630 = vld [vmem:[%s604 + $0xa0] sm:%s597]
                %631 = vst [vmem:[%s605 + $0x60] sm:%s597] %v630
                %v632 = vld [vmem:[%s604 + $0xa8] sm:%s597]
                %633 = vst [vmem:[%s605 + $0x68] sm:%s597] %v632
                %v634 = vld [vmem:[%s604 + $0xb0] sm:%s597]
                %635 = vst [vmem:[%s605 + $0x70] sm:%s597] %v634
                %v636 = vld [vmem:[%s604 + $0xb8] sm:%s597]
                %637 = vst [vmem:[%s605 + $0x78] sm:%s597] %v636
                %v638 = vld [vmem:[%s604 + $0x100] sm:%s597]
                %639 = vst [vmem:[%s605 + $0x80] sm:%s597] %v638
                %v640 = vld [vmem:[%s604 + $0x108] sm:%s597]
                %641 = vst [vmem:[%s605 + $0x88] sm:%s597] %v640
                %v642 = vld [vmem:[%s604 + $0x110] sm:%s597]
                %643 = vst [vmem:[%s605 + $0x90] sm:%s597] %v642
                %v644 = vld [vmem:[%s604 + $0x118] sm:%s597]
                %645 = vst [vmem:[%s605 + $0x98] sm:%s597] %v644
                %v646 = vld [vmem:[%s604 + $0x120] sm:%s597]
                %647 = vst [vmem:[%s605 + $0xa0] sm:%s597] %v646
                %v648 = vld [vmem:[%s604 + $0x128] sm:%s597]
                %649 = vst [vmem:[%s605 + $0xa8] sm:%s597] %v648
                %v650 = vld [vmem:[%s604 + $0x130] sm:%s597]
                %651 = vst [vmem:[%s605 + $0xb0] sm:%s597] %v650
                %v652 = vld [vmem:[%s604 + $0x138] sm:%s597]
                %653 = vst [vmem:[%s605 + $0xb8] sm:%s597] %v652
                %v654 = vld [vmem:[%s604 + $0x180] sm:%s597]
                %655 = vst [vmem:[%s605 + $0xc0] sm:%s597] %v654
                %v656 = vld [vmem:[%s604 + $0x188] sm:%s597]
                %657 = vst [vmem:[%s605 + $0xc8] sm:%s597] %v656
                %v658 = vld [vmem:[%s604 + $0x190] sm:%s597]
                %659 = vst [vmem:[%s605 + $0xd0] sm:%s597] %v658
                %v660 = vld [vmem:[%s604 + $0x198] sm:%s597]
                %661 = vst [vmem:[%s605 + $0xd8] sm:%s597] %v660
                %v662 = vld [vmem:[%s604 + $0x1a0] sm:%s597]
                %663 = vst [vmem:[%s605 + $0xe0] sm:%s597] %v662
                %v664 = vld [vmem:[%s604 + $0x1a8] sm:%s597]
                %665 = vst [vmem:[%s605 + $0xe8] sm:%s597] %v664
                %v666 = vld [vmem:[%s604 + $0x1b0] sm:%s597]
                %667 = vst [vmem:[%s605 + $0xf0] sm:%s597] %v666
                %v668 = vld [vmem:[%s604 + $0x1b8] sm:%s597]
                %669 = vst [vmem:[%s605 + $0xf8] sm:%s597] %v668
                %v670 = vld [vmem:[%s604 + $0x200] sm:%s597]
                %671 = vst [vmem:[%s605 + $0x100] sm:%s597] %v670
                %v672 = vld [vmem:[%s604 + $0x208] sm:%s597]
                %673 = vst [vmem:[%s605 + $0x108] sm:%s597] %v672
                %v674 = vld [vmem:[%s604 + $0x210] sm:%s597]
                %675 = vst [vmem:[%s605 + $0x110] sm:%s597] %v674
                %v676 = vld [vmem:[%s604 + $0x218] sm:%s597]
                %677 = vst [vmem:[%s605 + $0x118] sm:%s597] %v676
                %v678 = vld [vmem:[%s604 + $0x220] sm:%s597]
                %679 = vst [vmem:[%s605 + $0x120] sm:%s597] %v678
                %v680 = vld [vmem:[%s604 + $0x228] sm:%s597]
                %681 = vst [vmem:[%s605 + $0x128] sm:%s597] %v680
                %v682 = vld [vmem:[%s604 + $0x230] sm:%s597]
                %683 = vst [vmem:[%s605 + $0x130] sm:%s597] %v682
                %v684 = vld [vmem:[%s604 + $0x238] sm:%s597]
                %685 = vst [vmem:[%s605 + $0x138] sm:%s597] %v684
                %v686 = vld [vmem:[%s604 + $0x280] sm:%s597]
                %687 = vst [vmem:[%s605 + $0x140] sm:%s597] %v686
                %v688 = vld [vmem:[%s604 + $0x288] sm:%s597]
                %689 = vst [vmem:[%s605 + $0x148] sm:%s597] %v688
                %v690 = vld [vmem:[%s604 + $0x290] sm:%s597]
                %691 = vst [vmem:[%s605 + $0x150] sm:%s597] %v690
                %v692 = vld [vmem:[%s604 + $0x298] sm:%s597]
                %693 = vst [vmem:[%s605 + $0x158] sm:%s597] %v692
                %v694 = vld [vmem:[%s604 + $0x2a0] sm:%s597]
                %695 = vst [vmem:[%s605 + $0x160] sm:%s597] %v694
                %v696 = vld [vmem:[%s604 + $0x2a8] sm:%s597]
                %697 = vst [vmem:[%s605 + $0x168] sm:%s597] %v696
                %v698 = vld [vmem:[%s604 + $0x2b0] sm:%s597]
                %699 = vst [vmem:[%s605 + $0x170] sm:%s597] %v698
                %v700 = vld [vmem:[%s604 + $0x2b8] sm:%s597]
                %701 = vst [vmem:[%s605 + $0x178] sm:%s597] %v700
                %v702 = vld [vmem:[%s604 + $0x300] sm:%s597]
                %703 = vst [vmem:[%s605 + $0x180] sm:%s597] %v702
                %v704 = vld [vmem:[%s604 + $0x308] sm:%s597]
                %705 = vst [vmem:[%s605 + $0x188] sm:%s597] %v704
                %v706 = vld [vmem:[%s604 + $0x310] sm:%s597]
                %707 = vst [vmem:[%s605 + $0x190] sm:%s597] %v706
                %v708 = vld [vmem:[%s604 + $0x318] sm:%s597]
                %709 = vst [vmem:[%s605 + $0x198] sm:%s597] %v708
                %v710 = vld [vmem:[%s604 + $0x320] sm:%s597]
                %711 = vst [vmem:[%s605 + $0x1a0] sm:%s597] %v710
                %v712 = vld [vmem:[%s604 + $0x328] sm:%s597]
                %713 = vst [vmem:[%s605 + $0x1a8] sm:%s597] %v712
                %v714 = vld [vmem:[%s604 + $0x330] sm:%s597]
                %715 = vst [vmem:[%s605 + $0x1b0] sm:%s597] %v714
                %v716 = vld [vmem:[%s604 + $0x338] sm:%s597]
                %717 = vst [vmem:[%s605 + $0x1b8] sm:%s597] %v716
                %v718 = vld [vmem:[%s604 + $0x380] sm:%s597]
                %719 = vst [vmem:[%s605 + $0x1c0] sm:%s597] %v718
                %v720 = vld [vmem:[%s604 + $0x388] sm:%s597]
                %721 = vst [vmem:[%s605 + $0x1c8] sm:%s597] %v720
                %v722 = vld [vmem:[%s604 + $0x390] sm:%s597]
                %723 = vst [vmem:[%s605 + $0x1d0] sm:%s597] %v722
                %v724 = vld [vmem:[%s604 + $0x398] sm:%s597]
                %725 = vst [vmem:[%s605 + $0x1d8] sm:%s597] %v724
                %v726 = vld [vmem:[%s604 + $0x3a0] sm:%s597]
                %727 = vst [vmem:[%s605 + $0x1e0] sm:%s597] %v726
                %v728 = vld [vmem:[%s604 + $0x3a8] sm:%s597]
                %729 = vst [vmem:[%s605 + $0x1e8] sm:%s597] %v728
                %v730 = vld [vmem:[%s604 + $0x3b0] sm:%s597]
                %731 = vst [vmem:[%s605 + $0x1f0] sm:%s597] %v730
                %v732 = vld [vmem:[%s604 + $0x3b8] sm:%s597]
                %733 = vst [vmem:[%s605 + $0x1f8] sm:%s597] %v732
                %v734 = vld [vmem:[%s604 + $0x400] sm:%s597]
                %735 = vst [vmem:[%s605 + $0x200] sm:%s597] %v734
                %v736 = vld [vmem:[%s604 + $0x408] sm:%s597]
                %737 = vst [vmem:[%s605 + $0x208] sm:%s597] %v736
                %v738 = vld [vmem:[%s604 + $0x410] sm:%s597]
                %739 = vst [vmem:[%s605 + $0x210] sm:%s597] %v738
                %v740 = vld [vmem:[%s604 + $0x418] sm:%s597]
                %741 = vst [vmem:[%s605 + $0x218] sm:%s597] %v740
                %v742 = vld [vmem:[%s604 + $0x420] sm:%s597]
                %743 = vst [vmem:[%s605 + $0x220] sm:%s597] %v742
                %v744 = vld [vmem:[%s604 + $0x428] sm:%s597]
                %745 = vst [vmem:[%s605 + $0x228] sm:%s597] %v744
                %v746 = vld [vmem:[%s604 + $0x430] sm:%s597]
                %747 = vst [vmem:[%s605 + $0x230] sm:%s597] %v746
                %v748 = vld [vmem:[%s604 + $0x438] sm:%s597]
                %749 = vst [vmem:[%s605 + $0x238] sm:%s597] %v748
                %v750 = vld [vmem:[%s604 + $0x480] sm:%s597]
                %751 = vst [vmem:[%s605 + $0x240] sm:%s597] %v750
                %v752 = vld [vmem:[%s604 + $0x488] sm:%s597]
                %753 = vst [vmem:[%s605 + $0x248] sm:%s597] %v752
                %v754 = vld [vmem:[%s604 + $0x490] sm:%s597]
                %755 = vst [vmem:[%s605 + $0x250] sm:%s597] %v754
                %v756 = vld [vmem:[%s604 + $0x498] sm:%s597]
                %757 = vst [vmem:[%s605 + $0x258] sm:%s597] %v756
                %v758 = vld [vmem:[%s604 + $0x4a0] sm:%s597]
                %759 = vst [vmem:[%s605 + $0x260] sm:%s597] %v758
                %v760 = vld [vmem:[%s604 + $0x4a8] sm:%s597]
                %761 = vst [vmem:[%s605 + $0x268] sm:%s597] %v760
                %v762 = vld [vmem:[%s604 + $0x4b0] sm:%s597]
                %763 = vst [vmem:[%s605 + $0x270] sm:%s597] %v762
                %v764 = vld [vmem:[%s604 + $0x4b8] sm:%s597]
                %765 = vst [vmem:[%s605 + $0x278] sm:%s597] %v764
                %v766 = vld [vmem:[%s604 + $0x500] sm:%s597]
                %767 = vst [vmem:[%s605 + $0x280] sm:%s597] %v766
                %v768 = vld [vmem:[%s604 + $0x508] sm:%s597]
                %769 = vst [vmem:[%s605 + $0x288] sm:%s597] %v768
                %v770 = vld [vmem:[%s604 + $0x510] sm:%s597]
                %771 = vst [vmem:[%s605 + $0x290] sm:%s597] %v770
                %v772 = vld [vmem:[%s604 + $0x518] sm:%s597]
                %773 = vst [vmem:[%s605 + $0x298] sm:%s597] %v772
                %v774 = vld [vmem:[%s604 + $0x520] sm:%s597]
                %775 = vst [vmem:[%s605 + $0x2a0] sm:%s597] %v774
                %v776 = vld [vmem:[%s604 + $0x528] sm:%s597]
                %777 = vst [vmem:[%s605 + $0x2a8] sm:%s597] %v776
                %v778 = vld [vmem:[%s604 + $0x530] sm:%s597]
                %779 = vst [vmem:[%s605 + $0x2b0] sm:%s597] %v778
                %v780 = vld [vmem:[%s604 + $0x538] sm:%s597]
                %781 = vst [vmem:[%s605 + $0x2b8] sm:%s597] %v780
                %v782 = vld [vmem:[%s604 + $0x580] sm:%s597]
                %783 = vst [vmem:[%s605 + $0x2c0] sm:%s597] %v782
                %v784 = vld [vmem:[%s604 + $0x588] sm:%s597]
                %785 = vst [vmem:[%s605 + $0x2c8] sm:%s597] %v784
                %v786 = vld [vmem:[%s604 + $0x590] sm:%s597]
                %787 = vst [vmem:[%s605 + $0x2d0] sm:%s597] %v786
                %v788 = vld [vmem:[%s604 + $0x598] sm:%s597]
                %789 = vst [vmem:[%s605 + $0x2d8] sm:%s597] %v788
                %v790 = vld [vmem:[%s604 + $0x5a0] sm:%s597]
                %791 = vst [vmem:[%s605 + $0x2e0] sm:%s597] %v790
                %v792 = vld [vmem:[%s604 + $0x5a8] sm:%s597]
                %793 = vst [vmem:[%s605 + $0x2e8] sm:%s597] %v792
                %v794 = vld [vmem:[%s604 + $0x5b0] sm:%s597]
                %795 = vst [vmem:[%s605 + $0x2f0] sm:%s597] %v794
                %v796 = vld [vmem:[%s604 + $0x5b8] sm:%s597]
                %797 = vst [vmem:[%s605 + $0x2f8] sm:%s597] %v796
              $region113: #{kalman_net_filter.1} parent=107 // loop_footer
                %s603 = sadd.s32 1, %s599
              $region114: #{kalman_net_filter.1} parent=107 // loop_footer_branch
                %598 = sbr.rel target = $region110
              $region115: #{kalman_net_filter.1} parent=107 // loop_exit
                _
            $region108: #{kalman_net_filter.1} parent=99 // pred_fallthru
              _
          $region100: #{kalman_net_filter.1} parent=95 // pred_fallthru
            _
          %1002 = vnop
        $region96: #{kalman_net_filter.1} parent=91 // pred_fallthru
          _
        // Predicated region
        $region131: #{kalman_net_filter.1} parent=91 // pred_check
          %p1003 = pneg %p73
        $region132: #{kalman_net_filter.1} parent=91 // pred_check_branch
          %1005 = sbr.rel (%p1003) target = $region134
        $region133: #{kalman_net_filter.1} parent=91 // pred_region
          %s1006 = smul.u32 8, %s27
          %p1007 = scmp.lt.s32.totalorder %s1006, 15
          %s1008 = scalar_select %p1007, %s1006, 15
          %s1009 = smul.addr %s1008, 8
          %s1010 = scalar_lea.vmem %s1, %s1009
          %s1011 = smul.u32 8, %s27
        $region134: #{kalman_net_filter.1} parent=91 // pred_fallthru
          _
      $region92: #{kalman_net_filter.1} parent=5 // pred_fallthru
        _
      %p1012 = scmp.le.s32.totalorder 1, %s27
      %p1013 = scmp.lt.s32.totalorder %s27, 3
      %p1014 = pnand %p1012, %p1013
      %p1015 = pneg %p1014
      // Predicated region
      $region135: #{kalman_net_filter.1} parent=5 // pred_check
        _
      $region136: #{kalman_net_filter.1} parent=5 // pred_check_branch
        %1017 = sbr.rel (%p1014) target = $region138
      $region137: #{kalman_net_filter.1} parent=5 // pred_region
        %s1018 = ssub.s32 %s27, 1
        %s1019 = sand.u32 %s40, 1
        %s1020 = sand.u32 %s40, 1
        %s1021 = smul.addr %s1020, 768
        %s1022 = scalar_lea.vmem [#allocation2], %s1021
        // Predicated region
        $region139: #{kalman_net_filter.1} parent=137 // pred_check
          %p1023 = pneg %p53
        $region140: #{kalman_net_filter.1} parent=137 // pred_check_branch
          %1025 = sbr.rel (%p1023) target = $region142
        $region141: #{kalman_net_filter.1} parent=137 // pred_region
          _
        $region142: #{kalman_net_filter.1} parent=137 // pred_fallthru
          _
        %s1026 = sand.u32 %s40, 1
        %s1027 = sand.u32 %s40, 1
        %s1028 = smul.addr %s1027, 768
        %s1029 = scalar_lea.vmem [#allocation2], %s1028
        %p1030 = pneg %p53
        %p1031 = pneg %p50
        %s1032 = smul.u32 8, %s32
        %p1033 = scmp.lt.s32.totalorder %s1032, 15
        %s1034 = scalar_select %p1033, %s1032, 15
        %s1035 = smul.addr %s1034, 8
        %s1036 = scalar_lea.vmem %s1, %s1035
        %p1037 = pneg %p79
        %p1038 = pneg %p76
        %p1039 = pneg %p100
        %p1040 = pneg %p97
        %p1041 = pneg %p121
        %p1042 = pneg %p118
        %p1043 = pneg %p142
        %p1044 = pneg %p139
        %p1045 = pneg %p163
        %p1046 = pneg %p160
        %p1047 = pneg %p184
        %p1048 = pneg %p181
        %p1049 = pneg %p205
        %p1050 = pneg %p202
        %p1051 = pneg %p226
        %p1052 = pneg %p223
        %p1053 = pneg %p247
        %p1054 = pneg %p244
        %p1055 = pneg %p268
        %p1056 = pneg %p265
        %p1057 = pneg %p289
        %p1058 = pneg %p286
        %p1059 = pneg %p310
        %p1060 = pneg %p307
        %p1061 = pneg %p331
        %p1062 = pneg %p328
        %p1063 = pneg %p352
        %p1064 = pneg %p349
        %p1065 = pneg %p373
        %p1066 = pneg %p370
        %p1067 = pneg %p394
        %p1068 = pneg %p391
        %p1069 = pneg %p415
        %p1070 = pneg %p412
        %p1071 = pneg %p436
        %p1072 = pneg %p433
        %p1073 = pneg %p457
        %p1074 = pneg %p454
        %p1075 = pneg %p478
        %p1076 = pneg %p475
        %p1077 = pneg %p504
        %p1078 = pneg %p501
        %s1079 = sand.u32 %s491, 1
        %s1080 = sand.u32 %s491, 1
        %s1081 = smul.addr %s1080, 768
        %s1082 = scalar_lea.vmem [#allocation3], %s1081
        %s1083 = smul.u32 8, %s32
        %s1084 = smul.u32 8, %s32
        %p1085 = scmp.lt.s32.totalorder %s1084, 15
        %s1086 = scalar_select %p1085, %s1084, 15
        %s1087 = smul.addr %s1086, 8
        %s1088 = scalar_lea.vmem %s1, %s1087
        %s1089 = smul.u32 8, %s32
        %s1090 = smul.u32 8, %s32
        %v1092 = vld [vmem:[%s2] sm:$0xf]
        %v1093 = vld [vmem:[%s3] sm:$0xf]
        %v1094 = vld [vmem:[%s3 + $0x4] sm:$0x3]
        %v1095 = vld [vmem:[%s4] sm:$0x3]
        %v1096 = vld [vmem:[%s5] sm:$0xff]
        %v1097 = vld [vmem:[%s6] sm:$0xf]
        %v1098 = vld [vmem:[%s6 + $0x4] sm:$0x3]
        %v1099 = vld [vmem:[%s7] sm:$0x1]
        %v1100 = vld [vmem:[%s8] sm:$0xf]
        %v1101 = vld [vmem:[%s8 + $0x4] sm:$0xf]
        %v1102 = vld [vmem:[%s8 + $0x8] sm:$0xf]
        %v1103 = vld [vmem:[%s8 + $0xc] sm:$0xf]
        %v1104 = vld [vmem:[%s8 + $0x10] sm:$0xf]
        %v1105 = vld [vmem:[%s8 + $0x14] sm:$0xf]
        %v1106 = vld [vmem:[%s8 + $0x18] sm:$0xf]
        %v1107 = vld [vmem:[%s8 + $0x1c] sm:$0xf]
        %v1108 = vld [vmem:[%s8 + $0x20] sm:$0xf]
        %v1109 = vld [vmem:[%s8 + $0x24] sm:$0x3]
        %v1110 = vld [vmem:[%s9] sm:$0x1]
        %v1111 = vld [vmem:[%s10] sm:$0xf]
        %v1112 = vld [vmem:[%s10 + $0x4] sm:$0xf]
        %v1113 = vld [vmem:[%s10 + $0x8] sm:$0xf]
        %v1114 = vld [vmem:[%s10 + $0xc] sm:$0xf]
        %v1115 = vld [vmem:[%s10 + $0x10] sm:$0xf]
        %v1116 = vld [vmem:[%s10 + $0x14] sm:$0xf]
        %v1117 = vld [vmem:[%s10 + $0x18] sm:$0xf]
        %v1118 = vld [vmem:[%s10 + $0x1c] sm:$0xf]
        %v1119 = vld [vmem:[%s10 + $0x20] sm:$0xf]
        %v1120 = vld [vmem:[%s10 + $0x24] sm:$0xf]
        %v1121 = vld [vmem:[%s10 + $0x28] sm:$0xf]
        %v1122 = vld [vmem:[%s10 + $0x2c] sm:$0x3]
        %v1123 = vld [vmem:[%s11] sm:$0x1]
        %v1124 = vld [vmem:[%s12] sm:$0xf]
        %v1125 = vld [vmem:[%s12 + $0x4] sm:$0xf]
        %v1126 = vld [vmem:[%s12 + $0x8] sm:$0xf]
        %v1127 = vld [vmem:[%s12 + $0xc] sm:$0xf]
        %v1128 = vld [vmem:[%s12 + $0x10] sm:$0xf]
        %v1129 = vld [vmem:[%s12 + $0x14] sm:$0xf]
        %v1130 = vld [vmem:[%s12 + $0x18] sm:$0xf]
        %v1131 = vld [vmem:[%s12 + $0x1c] sm:$0xf]
        %v1132 = vld [vmem:[%s12 + $0x20] sm:$0x3]
        %v1133 = vld [vmem:[%s13] sm:$0x1]
        %v1134 = vld [vmem:[%s14] sm:$0xf]
        %v1135 = vld [vmem:[%s14 + $0x4] sm:$0xf]
        %v1136 = vld [vmem:[%s15] sm:$0x1]
        %v1137 = vld [vmem:[%s16] sm:$0xff]
        %v1138 = vld [vmem:[%s16 + $0x8] sm:$0xff]
        %v1139 = vld [vmem:[%s16 + $0x10] sm:$0xff]
        %v1140 = vld [vmem:[%s16 + $0x18] sm:$0xff]
        %v1141 = vld [vmem:[%s16 + $0x20] sm:$0xff]
        %v1142 = vld [vmem:[%s16 + $0x28] sm:$0xff]
        %v1143 = vld [vmem:[%s16 + $0x30] sm:$0xff]
        %v1144 = vld [vmem:[%s16 + $0x38] sm:$0xff]
        %v1145 = vld [vmem:[%s16 + $0x40] sm:$0x33]
        %v1146 = vld [vmem:[%s16 + $0x48] sm:$0x33]
        %v1147 = vld [vmem:[%s16 + $0x50] sm:$0x33]
        %v1148 = vld [vmem:[%s16 + $0x58] sm:$0x33]
        %v1149 = vld [vmem:[%s17] sm:$0xff]
        %v1150 = vld [vmem:[%s18] sm:$0xf]
        %v1151 = vld [vmem:[%s18 + $0x4] sm:$0xf]
        %v1152 = vld [vmem:[%s18 + $0x8] sm:$0xf]
        %v1153 = vld [vmem:[%s18 + $0xc] sm:$0xf]
        %v1154 = vld [vmem:[%s18 + $0x10] sm:$0xf]
        %v1155 = vld [vmem:[%s18 + $0x14] sm:$0xf]
        %v1156 = vld [vmem:[%s18 + $0x18] sm:$0xf]
        %v1157 = vld [vmem:[%s18 + $0x1c] sm:$0xf]
        %v1158 = vld [vmem:[%s18 + $0x20] sm:$0xf]
        %v1159 = vld [vmem:[%s18 + $0x24] sm:$0xf]
        %v1160 = vld [vmem:[%s18 + $0x28] sm:$0xf]
        %v1161 = vld [vmem:[%s18 + $0x2c] sm:$0xf]
        %v1162 = vld [vmem:[%s18 + $0x30] sm:$0xf]
        %v1163 = vld [vmem:[%s18 + $0x34] sm:$0xf]
        %v1164 = vld [vmem:[%s18 + $0x38] sm:$0xf]
        %v1165 = vld [vmem:[%s18 + $0x3c] sm:$0xf]
        %v1166 = vld [vmem:[%s18 + $0x40] sm:$0xf]
        %v1167 = vld [vmem:[%s18 + $0x44] sm:$0xf]
        %v1168 = vld [vmem:[%s18 + $0x48] sm:$0xf]
        %v1169 = vld [vmem:[%s18 + $0x4c] sm:$0xf]
        %v1170 = vld [vmem:[%s18 + $0x50] sm:$0xf]
        %v1171 = vld [vmem:[%s18 + $0x54] sm:$0xf]
        %v1172 = vld [vmem:[%s18 + $0x58] sm:$0xf]
        %v1173 = vld [vmem:[%s18 + $0x5c] sm:$0xf]
        %v1174 = vld [vmem:[%s18 + $0x60] sm:$0xf]
        %v1175 = vld [vmem:[%s18 + $0x64] sm:$0xf]
        %v1176 = vld [vmem:[%s18 + $0x68] sm:$0xf]
        %v1177 = vld [vmem:[%s18 + $0x6c] sm:$0xf]
        %v1178 = vld [vmem:[%s18 + $0x70] sm:$0xf]
        %v1179 = vld [vmem:[%s18 + $0x74] sm:$0xf]
        %v1180 = vld [vmem:[%s18 + $0x78] sm:$0xf]
        %v1181 = vld [vmem:[%s18 + $0x7c] sm:$0xf]
        %v1182 = vld [vmem:[%s18 + $0x80] sm:$0xf]
        %v1183 = vld [vmem:[%s18 + $0x84] sm:$0xf]
        %v1184 = vld [vmem:[%s18 + $0x88] sm:$0xf]
        %v1185 = vld [vmem:[%s18 + $0x8c] sm:$0xf]
        %v1186 = vld [vmem:[%s18 + $0x90] sm:$0xf]
        %v1187 = vld [vmem:[%s18 + $0x94] sm:$0xf]
        %v1188 = vld [vmem:[%s18 + $0x98] sm:$0xf]
        %v1189 = vld [vmem:[%s18 + $0x9c] sm:$0xf]
        %v1190 = vld [vmem:[%s18 + $0xa0] sm:$0xf]
        %v1191 = vld [vmem:[%s18 + $0xa4] sm:$0xf]
        %v1192 = vld [vmem:[%s18 + $0xa8] sm:$0xf]
        %v1193 = vld [vmem:[%s18 + $0xac] sm:$0xf]
        %v1194 = vld [vmem:[%s18 + $0xb0] sm:$0xf]
        %v1195 = vld [vmem:[%s18 + $0xb4] sm:$0xf]
        %v1196 = vld [vmem:[%s18 + $0xb8] sm:$0xf]
        %v1197 = vld [vmem:[%s18 + $0xbc] sm:$0xf]
        %v1198 = vld [vmem:[%s18 + $0xc0] sm:$0xf]
        %v1199 = vld [vmem:[%s18 + $0xc4] sm:$0xf]
        %v1200 = vld [vmem:[%s18 + $0xc8] sm:$0xf]
        %v1201 = vld [vmem:[%s18 + $0xcc] sm:$0xf]
        %v1202 = vld [vmem:[%s18 + $0xd0] sm:$0xf]
        %v1203 = vld [vmem:[%s18 + $0xd4] sm:$0xf]
        %v1204 = vld [vmem:[%s18 + $0xd8] sm:$0xf]
        %v1205 = vld [vmem:[%s18 + $0xdc] sm:$0xf]
        %v1206 = vld [vmem:[%s18 + $0xe0] sm:$0xf]
        %v1207 = vld [vmem:[%s18 + $0xe4] sm:$0xf]
        %v1208 = vld [vmem:[%s18 + $0xe8] sm:$0xf]
        %v1209 = vld [vmem:[%s18 + $0xec] sm:$0xf]
        %v1210 = vld [vmem:[%s18 + $0xf0] sm:$0xf]
        %v1211 = vld [vmem:[%s18 + $0xf4] sm:$0xf]
        %v1212 = vld [vmem:[%s18 + $0xf8] sm:$0xf]
        %v1213 = vld [vmem:[%s18 + $0xfc] sm:$0xf]
        %v1214 = vld [vmem:[%s18 + $0x100] sm:$0xf]
        %v1215 = vld [vmem:[%s18 + $0x104] sm:$0xf]
        %v1216 = vld [vmem:[%s18 + $0x108] sm:$0xf]
        %v1217 = vld [vmem:[%s18 + $0x10c] sm:$0xf]
        %v1218 = vld [vmem:[%s18 + $0x110] sm:$0xf]
        %v1219 = vld [vmem:[%s18 + $0x114] sm:$0xf]
        %v1220 = vld [vmem:[%s18 + $0x118] sm:$0xf]
        %v1221 = vld [vmem:[%s18 + $0x11c] sm:$0xf]
        %v1222 = vld [vmem:[%s18 + $0x120] sm:$0xf]
        %v1223 = vld [vmem:[%s18 + $0x124] sm:$0xf]
        %v1224 = vld [vmem:[%s18 + $0x128] sm:$0xf]
        %v1225 = vld [vmem:[%s18 + $0x12c] sm:$0xf]
        %v1226 = vld [vmem:[%s18 + $0x130] sm:$0xf]
        %v1227 = vld [vmem:[%s18 + $0x134] sm:$0xf]
        %v1228 = vld [vmem:[%s18 + $0x138] sm:$0xf]
        %v1229 = vld [vmem:[%s18 + $0x13c] sm:$0xf]
        %v1230 = vld [vmem:[%s18 + $0x140] sm:$0xf]
        %v1231 = vld [vmem:[%s18 + $0x144] sm:$0xf]
        %v1232 = vld [vmem:[%s18 + $0x148] sm:$0xf]
        %v1233 = vld [vmem:[%s18 + $0x14c] sm:$0xf]
        %v1234 = vld [vmem:[%s18 + $0x150] sm:$0xf]
        %v1235 = vld [vmem:[%s18 + $0x154] sm:$0xf]
        %v1236 = vld [vmem:[%s18 + $0x158] sm:$0xf]
        %v1237 = vld [vmem:[%s18 + $0x15c] sm:$0xf]
        %v1238 = vld [vmem:[%s18 + $0x160] sm:$0xf]
        %v1239 = vld [vmem:[%s18 + $0x164] sm:$0xf]
        %v1240 = vld [vmem:[%s18 + $0x168] sm:$0xf]
        %v1241 = vld [vmem:[%s18 + $0x16c] sm:$0xf]
        %v1242 = vld [vmem:[%s18 + $0x170] sm:$0xf]
        %v1243 = vld [vmem:[%s18 + $0x174] sm:$0xf]
        %v1244 = vld [vmem:[%s18 + $0x178] sm:$0xf]
        %v1245 = vld [vmem:[%s18 + $0x17c] sm:$0xf]
        %v1246 = vld [vmem:[%s18 + $0x180] sm:$0xf]
        %v1247 = vld [vmem:[%s18 + $0x184] sm:$0xf]
        %v1248 = vld [vmem:[%s18 + $0x188] sm:$0xf]
        %v1249 = vld [vmem:[%s18 + $0x18c] sm:$0xf]
        %v1250 = vld [vmem:[%s18 + $0x190] sm:$0xf]
        %v1251 = vld [vmem:[%s18 + $0x194] sm:$0xf]
        %v1252 = vld [vmem:[%s18 + $0x198] sm:$0xf]
        %v1253 = vld [vmem:[%s18 + $0x19c] sm:$0xf]
        %v1254 = vld [vmem:[%s18 + $0x1a0] sm:$0xf]
        %v1255 = vld [vmem:[%s18 + $0x1a4] sm:$0xf]
        %v1256 = vld [vmem:[%s18 + $0x1a8] sm:$0xf]
        %v1257 = vld [vmem:[%s18 + $0x1ac] sm:$0xf]
        %v1258 = vld [vmem:[%s18 + $0x1b0] sm:$0xf]
        %v1259 = vld [vmem:[%s18 + $0x1b4] sm:$0xf]
        %v1260 = vld [vmem:[%s18 + $0x1b8] sm:$0xf]
        %v1261 = vld [vmem:[%s18 + $0x1bc] sm:$0xf]
        %v1262 = vld [vmem:[%s19] sm:$0x1]
        %v1263 = vld [vmem:[%s20] sm:$0xf]
        %v1264 = vld [vmem:[%s20 + $0x4] sm:$0xf]
        %vm1265 = vcmask 523264
        %1266 = vst.msk [vmem:[%s1082] sm:$0xff] %vm1265, 0.0
        %1267 = vst.msk [vmem:[%s1082 + $0x8] sm:$0xff] %vm1265, 0.0
        %1268 = vst.msk [vmem:[%s1082 + $0x10] sm:$0xff] %vm1265, 0.0
        %1269 = vst.msk [vmem:[%s1082 + $0x18] sm:$0xff] %vm1265, 0.0
        %1270 = vst.msk [vmem:[%s1082 + $0x20] sm:$0xff] %vm1265, 0.0
        %1271 = vst.msk [vmem:[%s1082 + $0x28] sm:$0xff] %vm1265, 0.0
        %1272 = vst.msk [vmem:[%s1082 + $0x30] sm:$0xff] %vm1265, 0.0
        %1273 = vst.msk [vmem:[%s1082 + $0x38] sm:$0xff] %vm1265, 0.0
        %1274 = vst.msk [vmem:[%s1082 + $0x40] sm:$0xff] %vm1265, 0.0
        %1275 = vst.msk [vmem:[%s1082 + $0x48] sm:$0xff] %vm1265, 0.0
        %1276 = vst.msk [vmem:[%s1082 + $0x50] sm:$0xff] %vm1265, 0.0
        %1277 = vst.msk [vmem:[%s1082 + $0x58] sm:$0xff] %vm1265, 0.0
        %1278 = vst.msk [vmem:[%s1082 + $0x60] sm:$0xff] %vm1265, 0.0
        %1279 = vst.msk [vmem:[%s1082 + $0x68] sm:$0xff] %vm1265, 0.0
        %1280 = vst.msk [vmem:[%s1082 + $0x70] sm:$0xff] %vm1265, 0.0
        %1281 = vst.msk [vmem:[%s1082 + $0x78] sm:$0xff] %vm1265, 0.0
        %1282 = vst.msk [vmem:[%s1082 + $0x80] sm:$0xff] %vm1265, 0.0
        %1283 = vst.msk [vmem:[%s1082 + $0x88] sm:$0xff] %vm1265, 0.0
        %1284 = vst.msk [vmem:[%s1082 + $0x90] sm:$0xff] %vm1265, 0.0
        %1285 = vst.msk [vmem:[%s1082 + $0x98] sm:$0xff] %vm1265, 0.0
        %1286 = vst.msk [vmem:[%s1082 + $0xa0] sm:$0xff] %vm1265, 0.0
        %1287 = vst.msk [vmem:[%s1082 + $0xa8] sm:$0xff] %vm1265, 0.0
        %1288 = vst.msk [vmem:[%s1082 + $0xb0] sm:$0xff] %vm1265, 0.0
        %1289 = vst.msk [vmem:[%s1082 + $0xb8] sm:$0xff] %vm1265, 0.0
        %1290 = vst.msk [vmem:[%s1082 + $0xc0] sm:$0xff] %vm1265, 0.0
        %1291 = vst.msk [vmem:[%s1082 + $0xc8] sm:$0xff] %vm1265, 0.0
        %1292 = vst.msk [vmem:[%s1082 + $0xd0] sm:$0xff] %vm1265, 0.0
        %1293 = vst.msk [vmem:[%s1082 + $0xd8] sm:$0xff] %vm1265, 0.0
        %1294 = vst.msk [vmem:[%s1082 + $0xe0] sm:$0xff] %vm1265, 0.0
        %1295 = vst.msk [vmem:[%s1082 + $0xe8] sm:$0xff] %vm1265, 0.0
        %1296 = vst.msk [vmem:[%s1082 + $0xf0] sm:$0xff] %vm1265, 0.0
        %1297 = vst.msk [vmem:[%s1082 + $0xf8] sm:$0xff] %vm1265, 0.0
        %1298 = vst.msk [vmem:[%s1082 + $0x100] sm:$0xff] %vm1265, 0.0
        %1299 = vst.msk [vmem:[%s1082 + $0x108] sm:$0xff] %vm1265, 0.0
        %1300 = vst.msk [vmem:[%s1082 + $0x110] sm:$0xff] %vm1265, 0.0
        %1301 = vst.msk [vmem:[%s1082 + $0x118] sm:$0xff] %vm1265, 0.0
        %1302 = vst.msk [vmem:[%s1082 + $0x120] sm:$0xff] %vm1265, 0.0
        %1303 = vst.msk [vmem:[%s1082 + $0x128] sm:$0xff] %vm1265, 0.0
        %1304 = vst.msk [vmem:[%s1082 + $0x130] sm:$0xff] %vm1265, 0.0
        %1305 = vst.msk [vmem:[%s1082 + $0x138] sm:$0xff] %vm1265, 0.0
        %1306 = vst.msk [vmem:[%s1082 + $0x140] sm:$0xff] %vm1265, 0.0
        %1307 = vst.msk [vmem:[%s1082 + $0x148] sm:$0xff] %vm1265, 0.0
        %1308 = vst.msk [vmem:[%s1082 + $0x150] sm:$0xff] %vm1265, 0.0
        %1309 = vst.msk [vmem:[%s1082 + $0x158] sm:$0xff] %vm1265, 0.0
        %1310 = vst.msk [vmem:[%s1082 + $0x160] sm:$0xff] %vm1265, 0.0
        %1311 = vst.msk [vmem:[%s1082 + $0x168] sm:$0xff] %vm1265, 0.0
        %1312 = vst.msk [vmem:[%s1082 + $0x170] sm:$0xff] %vm1265, 0.0
        %1313 = vst.msk [vmem:[%s1082 + $0x178] sm:$0xff] %vm1265, 0.0
        %1314 = vst.msk [vmem:[%s1082 + $0x180] sm:$0xff] %vm1265, 0.0
        %1315 = vst.msk [vmem:[%s1082 + $0x188] sm:$0xff] %vm1265, 0.0
        %1316 = vst.msk [vmem:[%s1082 + $0x190] sm:$0xff] %vm1265, 0.0
        %1317 = vst.msk [vmem:[%s1082 + $0x198] sm:$0xff] %vm1265, 0.0
        %1318 = vst.msk [vmem:[%s1082 + $0x1a0] sm:$0xff] %vm1265, 0.0
        %1319 = vst.msk [vmem:[%s1082 + $0x1a8] sm:$0xff] %vm1265, 0.0
        %1320 = vst.msk [vmem:[%s1082 + $0x1b0] sm:$0xff] %vm1265, 0.0
        %1321 = vst.msk [vmem:[%s1082 + $0x1b8] sm:$0xff] %vm1265, 0.0
        %1322 = vst.msk [vmem:[%s1082 + $0x1c0] sm:$0xff] %vm1265, 0.0
        %1323 = vst.msk [vmem:[%s1082 + $0x1c8] sm:$0xff] %vm1265, 0.0
        %1324 = vst.msk [vmem:[%s1082 + $0x1d0] sm:$0xff] %vm1265, 0.0
        %1325 = vst.msk [vmem:[%s1082 + $0x1d8] sm:$0xff] %vm1265, 0.0
        %1326 = vst.msk [vmem:[%s1082 + $0x1e0] sm:$0xff] %vm1265, 0.0
        %1327 = vst.msk [vmem:[%s1082 + $0x1e8] sm:$0xff] %vm1265, 0.0
        %1328 = vst.msk [vmem:[%s1082 + $0x1f0] sm:$0xff] %vm1265, 0.0
        %1329 = vst.msk [vmem:[%s1082 + $0x1f8] sm:$0xff] %vm1265, 0.0
        %1330 = vst.msk [vmem:[%s1082 + $0x200] sm:$0xff] %vm1265, 0.0
        %1331 = vst.msk [vmem:[%s1082 + $0x208] sm:$0xff] %vm1265, 0.0
        %1332 = vst.msk [vmem:[%s1082 + $0x210] sm:$0xff] %vm1265, 0.0
        %1333 = vst.msk [vmem:[%s1082 + $0x218] sm:$0xff] %vm1265, 0.0
        %1334 = vst.msk [vmem:[%s1082 + $0x220] sm:$0xff] %vm1265, 0.0
        %1335 = vst.msk [vmem:[%s1082 + $0x228] sm:$0xff] %vm1265, 0.0
        %1336 = vst.msk [vmem:[%s1082 + $0x230] sm:$0xff] %vm1265, 0.0
        %1337 = vst.msk [vmem:[%s1082 + $0x238] sm:$0xff] %vm1265, 0.0
        %1338 = vst.msk [vmem:[%s1082 + $0x240] sm:$0xff] %vm1265, 0.0
        %1339 = vst.msk [vmem:[%s1082 + $0x248] sm:$0xff] %vm1265, 0.0
        %1340 = vst.msk [vmem:[%s1082 + $0x250] sm:$0xff] %vm1265, 0.0
        %1341 = vst.msk [vmem:[%s1082 + $0x258] sm:$0xff] %vm1265, 0.0
        %1342 = vst.msk [vmem:[%s1082 + $0x260] sm:$0xff] %vm1265, 0.0
        %1343 = vst.msk [vmem:[%s1082 + $0x268] sm:$0xff] %vm1265, 0.0
        %1344 = vst.msk [vmem:[%s1082 + $0x270] sm:$0xff] %vm1265, 0.0
        %1345 = vst.msk [vmem:[%s1082 + $0x278] sm:$0xff] %vm1265, 0.0
        %1346 = vst.msk [vmem:[%s1082 + $0x280] sm:$0xff] %vm1265, 0.0
        %1347 = vst.msk [vmem:[%s1082 + $0x288] sm:$0xff] %vm1265, 0.0
        %1348 = vst.msk [vmem:[%s1082 + $0x290] sm:$0xff] %vm1265, 0.0
        %1349 = vst.msk [vmem:[%s1082 + $0x298] sm:$0xff] %vm1265, 0.0
        %1350 = vst.msk [vmem:[%s1082 + $0x2a0] sm:$0xff] %vm1265, 0.0
        %1351 = vst.msk [vmem:[%s1082 + $0x2a8] sm:$0xff] %vm1265, 0.0
        %1352 = vst.msk [vmem:[%s1082 + $0x2b0] sm:$0xff] %vm1265, 0.0
        %1353 = vst.msk [vmem:[%s1082 + $0x2b8] sm:$0xff] %vm1265, 0.0
        %1354 = vst.msk [vmem:[%s1082 + $0x2c0] sm:$0xff] %vm1265, 0.0
        %1355 = vst.msk [vmem:[%s1082 + $0x2c8] sm:$0xff] %vm1265, 0.0
        %1356 = vst.msk [vmem:[%s1082 + $0x2d0] sm:$0xff] %vm1265, 0.0
        %1357 = vst.msk [vmem:[%s1082 + $0x2d8] sm:$0xff] %vm1265, 0.0
        %1358 = vst.msk [vmem:[%s1082 + $0x2e0] sm:$0xff] %vm1265, 0.0
        %1359 = vst.msk [vmem:[%s1082 + $0x2e8] sm:$0xff] %vm1265, 0.0
        %1360 = vst.msk [vmem:[%s1082 + $0x2f0] sm:$0xff] %vm1265, 0.0
        %1361 = vst.msk [vmem:[%s1082 + $0x2f8] sm:$0xff] %vm1265, 0.0
        %v1362 = vld [vmem:[%s1088] sm:$0xff]
        %v1363 = vld [vmem:[%s1088 + $0x8] sm:$0xff]
        %v1364 = vld [vmem:[%s1088 + $0x10] sm:$0xff]
        %v1365 = vld [vmem:[%s1088 + $0x18] sm:$0xff]
        %v1366 = vld [vmem:[%s1088 + $0x20] sm:$0xff]
        %v1367 = vld [vmem:[%s1088 + $0x28] sm:$0xff]
        %v1368 = vld [vmem:[%s1088 + $0x30] sm:$0xff]
        %v1369 = vld [vmem:[%s1088 + $0x38] sm:$0xff]
        %1378 = vrot.lane.b32.xlu0 %v1362, 124
        %v1379 = vpop.permute.xlu0 %1378
        %1380 = vrot.lane.b32.xlu0 %v1363, 124
        %v1381 = vpop.permute.xlu0 %1380
        %1382 = vrot.lane.b32.xlu0 %v1364, 124
        %v1383 = vpop.permute.xlu0 %1382
        %1384 = vrot.lane.b32.xlu0 %v1365, 124
        %v1385 = vpop.permute.xlu0 %1384
        %1386 = vrot.lane.b32.xlu0 %v1366, 124
        %v1387 = vpop.permute.xlu0 %1386
        %1388 = vrot.lane.b32.xlu0 %v1367, 124
        %v1389 = vpop.permute.xlu0 %1388
        %1390 = vrot.lane.b32.xlu0 %v1368, 124
        %v1391 = vpop.permute.xlu0 %1390
        %1392 = vrot.lane.b32.xlu0 %v1369, 124
        %v1393 = vpop.permute.xlu0 %1392
        %1402 = vrot.lane.b32.xlu0 %v1362, 120
        %v1403 = vpop.permute.xlu0 %1402
        %1404 = vrot.lane.b32.xlu0 %v1363, 120
        %v1405 = vpop.permute.xlu0 %1404
        %1406 = vrot.lane.b32.xlu0 %v1364, 120
        %v1407 = vpop.permute.xlu0 %1406
        %1408 = vrot.lane.b32.xlu0 %v1365, 120
        %v1409 = vpop.permute.xlu0 %1408
        %1410 = vrot.lane.b32.xlu0 %v1366, 120
        %v1411 = vpop.permute.xlu0 %1410
        %1412 = vrot.lane.b32.xlu0 %v1367, 120
        %v1413 = vpop.permute.xlu0 %1412
        %1414 = vrot.lane.b32.xlu0 %v1368, 120
        %v1415 = vpop.permute.xlu0 %1414
        %1416 = vrot.lane.b32.xlu0 %v1369, 120
        %v1417 = vpop.permute.xlu0 %1416
        %1426 = vrot.lane.b32.xlu0 %v1362, 116
        %v1427 = vpop.permute.xlu0 %1426
        %1428 = vrot.lane.b32.xlu0 %v1363, 116
        %v1429 = vpop.permute.xlu0 %1428
        %1430 = vrot.lane.b32.xlu0 %v1364, 116
        %v1431 = vpop.permute.xlu0 %1430
        %1432 = vrot.lane.b32.xlu0 %v1365, 116
        %v1433 = vpop.permute.xlu0 %1432
        %1434 = vrot.lane.b32.xlu0 %v1366, 116
        %v1435 = vpop.permute.xlu0 %1434
        %1436 = vrot.lane.b32.xlu0 %v1367, 116
        %v1437 = vpop.permute.xlu0 %1436
        %1438 = vrot.lane.b32.xlu0 %v1368, 116
        %v1439 = vpop.permute.xlu0 %1438
        %1440 = vrot.lane.b32.xlu0 %v1369, 116
        %v1441 = vpop.permute.xlu0 %1440
        %1450 = vrot.lane.b32.xlu0 %v1362, 96
        %v1451 = vpop.permute.xlu0 %1450
        %1452 = vrot.lane.b32.xlu0 %v1363, 96
        %v1453 = vpop.permute.xlu0 %1452
        %1454 = vrot.lane.b32.xlu0 %v1364, 96
        %v1455 = vpop.permute.xlu0 %1454
        %1456 = vrot.lane.b32.xlu0 %v1365, 96
        %v1457 = vpop.permute.xlu0 %1456
        %1458 = vrot.lane.b32.xlu0 %v1366, 96
        %v1459 = vpop.permute.xlu0 %1458
        %1460 = vrot.lane.b32.xlu0 %v1367, 96
        %v1461 = vpop.permute.xlu0 %1460
        %1462 = vrot.lane.b32.xlu0 %v1368, 96
        %v1463 = vpop.permute.xlu0 %1462
        %1464 = vrot.lane.b32.xlu0 %v1369, 96
        %v1465 = vpop.permute.xlu0 %1464
        %1474 = vrot.lane.b32.xlu0 %v1362, 80
        %v1475 = vpop.permute.xlu0 %1474
        %1476 = vrot.lane.b32.xlu0 %v1363, 80
        %v1477 = vpop.permute.xlu0 %1476
        %1478 = vrot.lane.b32.xlu0 %v1364, 80
        %v1479 = vpop.permute.xlu0 %1478
        %1480 = vrot.lane.b32.xlu0 %v1365, 80
        %v1481 = vpop.permute.xlu0 %1480
        %1482 = vrot.lane.b32.xlu0 %v1366, 80
        %v1483 = vpop.permute.xlu0 %1482
        %1484 = vrot.lane.b32.xlu0 %v1367, 80
        %v1485 = vpop.permute.xlu0 %1484
        %1486 = vrot.lane.b32.xlu0 %v1368, 80
        %v1487 = vpop.permute.xlu0 %1486
        %1488 = vrot.lane.b32.xlu0 %v1369, 80
        %v1489 = vpop.permute.xlu0 %1488
        loop: start=0, step=1, limit=12
        $region143: #{kalman_net_filter.1} parent=137 // loop_pre_header
          _
        $region144: #{kalman_net_filter.1} parent=137 // loop_header
          %s1499 = sphi 0, %s1503
          %p1500 = scmp.ge.s32.totalorder %s1499, 12
          %v1504 = vphi %v1362, %v5121
          %v1505 = vphi %v1363, %v5122
          %v1506 = vphi %v1364, %v5123
          %v1507 = vphi %v1365, %v5124
          %v1508 = vphi %v1366, %v5125
          %v1509 = vphi %v1367, %v5126
          %v1510 = vphi %v1368, %v5127
          %v1511 = vphi %v1369, %v5128
          %v1512 = vphi %v1379, %v1504
          %v1513 = vphi %v1381, %v1505
          %v1514 = vphi %v1383, %v1506
          %v1515 = vphi %v1385, %v1507
          %v1516 = vphi %v1387, %v1508
          %v1517 = vphi %v1389, %v1509
          %v1518 = vphi %v1391, %v1510
          %v1519 = vphi %v1393, %v1511
          %v1520 = vphi %v1403, %v1617
          %v1521 = vphi %v1405, %v1620
          %v1522 = vphi %v1407, %v1623
          %v1523 = vphi %v1409, %v1626
          %v1524 = vphi %v1411, %v1629
          %v1525 = vphi %v1413, %v1632
          %v1526 = vphi %v1415, %v1635
          %v1527 = vphi %v1417, %v1638
          %v1528 = vphi %v1427, %v1562
          %v1529 = vphi %v1429, %v1563
          %v1530 = vphi %v1431, %v1564
          %v1531 = vphi %v1433, %v1565
          %v1532 = vphi %v1435, %v1566
          %v1533 = vphi %v1437, %v1567
          %v1534 = vphi %v1439, %v1568
          %v1535 = vphi %v1441, %v1569
          %v1536 = vphi %v1362, %v2684
          %v1537 = vphi %v1363, %v2685
          %v1538 = vphi %v1364, %v2686
          %v1539 = vphi %v1365, %v2687
          %v1540 = vphi %v1366, %v2688
          %v1541 = vphi %v1367, %v2689
          %v1542 = vphi %v1368, %v2690
          %v1543 = vphi %v1369, %v2691
          %v1544 = vphi %v1451, %v5329
          %v1545 = vphi %v1453, %v5331
          %v1546 = vphi %v1455, %v5333
          %v1547 = vphi %v1457, %v5335
          %v1548 = vphi %v1459, %v5337
          %v1549 = vphi %v1461, %v5339
          %v1550 = vphi %v1463, %v5341
          %v1551 = vphi %v1465, %v5343
          %v1552 = vphi %v1475, %v5353
          %v1553 = vphi %v1477, %v5355
          %v1554 = vphi %v1479, %v5357
          %v1555 = vphi %v1481, %v5359
          %v1556 = vphi %v1483, %v5361
          %v1557 = vphi %v1485, %v5363
          %v1558 = vphi %v1487, %v5365
          %v1559 = vphi %v1489, %v5367
        $region145: #{kalman_net_filter.1} parent=137 // loop_header_branch
          %1502 = sbr.rel (%p1500) target = $region149
        $region146: #{kalman_net_filter.1} parent=137 // loop_body
          %s1560 = smul.u32 %s1499, 64
          %s1561 = scalar_lea.vmem %s1022, %s1560 [#allocation2]
          %v1562 = vld [vmem:[%s1561] sm:$0xff]
          %v1563 = vld [vmem:[%s1561 + $0x8] sm:$0xff]
          %v1564 = vld [vmem:[%s1561 + $0x10] sm:$0xff]
          %v1565 = vld [vmem:[%s1561 + $0x18] sm:$0xff]
          %v1566 = vld [vmem:[%s1561 + $0x20] sm:$0xff]
          %v1567 = vld [vmem:[%s1561 + $0x28] sm:$0xff]
          %v1568 = vld [vmem:[%s1561 + $0x30] sm:$0xff]
          %v1569 = vld [vmem:[%s1561 + $0x38] sm:$0xff]
          %vm1570 = vcmask 31744
          %v1572 = vsel %vm1570, %v1504, 0
          %v1575 = vsel %vm1570, %v1505, 0
          %v1578 = vsel %vm1570, %v1506, 0
          %v1581 = vsel %vm1570, %v1507, 0
          %v1584 = vsel %vm1570, %v1508, 0
          %v1587 = vsel %vm1570, %v1509, 0
          %v1590 = vsel %vm1570, %v1510, 0
          %v1593 = vsel %vm1570, %v1511, 0
          %vm1595 = vcmask 1043456
          %v1597 = vsel %vm1595, %v1092, 0
          %1599 = vmatpush.msra.mxu0 0.0
          %1600 = vmatpush.msra.mxu0 0.0
          %1601 = vmatpush.msra.mxu0 0.0
          %1602 = vmatpush.msra.mxu0 0.0
          %1603 = vmatpush.msra.mxu0 0.0
          %1604 = vmatpush.msra.mxu0 0.0
          %1605 = vmatpush.msra.mxu0 0.0
          %1606 = vmatpush.msra.mxu0 0.0
          %1607 = vmatpush.msra.mxu0 0.0
          %1608 = vmatpush.msra.mxu0 0.0
          %1609 = vmatpush.msra.mxu0 0.0
          %1610 = vmatpush.msra.mxu0 0.0
          %1611 = vmatpush.msra.mxu0 0.0
          %1612 = vmatpush.msra.mxu0 0.0
          %1613 = vmatpush.msra.mxu0 0.0
          %1614 = vmatpush.msra.mxu0 %v1597
          %1615 = vmatmul.f32.gmra.mxu0 %v1572
          %v1616 = vpop.f32.mrf.mxu0
          %v1617 = vadd.f32 0.0, %v1616
          %1618 = vmatmul.f32.gmra.mxu0 %v1575
          %v1619 = vpop.f32.mrf.mxu0
          %v1620 = vadd.f32 0.0, %v1619
          %1621 = vmatmul.f32.gmra.mxu0 %v1578
          %v1622 = vpop.f32.mrf.mxu0
          %v1623 = vadd.f32 0.0, %v1622
          %1624 = vmatmul.f32.gmra.mxu0 %v1581
          %v1625 = vpop.f32.mrf.mxu0
          %v1626 = vadd.f32 0.0, %v1625
          %1627 = vmatmul.f32.gmra.mxu0 %v1584
          %v1628 = vpop.f32.mrf.mxu0
          %v1629 = vadd.f32 0.0, %v1628
          %1630 = vmatmul.f32.gmra.mxu0 %v1587
          %v1631 = vpop.f32.mrf.mxu0
          %v1632 = vadd.f32 0.0, %v1631
          %1633 = vmatmul.f32.gmra.mxu0 %v1590
          %v1634 = vpop.f32.mrf.mxu0
          %v1635 = vadd.f32 0.0, %v1634
          %1636 = vmatmul.f32.gmra.mxu0 %v1593
          %v1637 = vpop.f32.mrf.mxu0
          %v1638 = vadd.f32 0.0, %v1637
          %1639 = vdwg.mxu0
          %1648 = vrot.lane.b32.xlu0 %v1617, 124
          %v1649 = vpop.permute.xlu0 %1648
          %1650 = vrot.lane.b32.xlu0 %v1620, 124
          %v1651 = vpop.permute.xlu0 %1650
          %1652 = vrot.lane.b32.xlu0 %v1623, 124
          %v1653 = vpop.permute.xlu0 %1652
          %1654 = vrot.lane.b32.xlu0 %v1626, 124
          %v1655 = vpop.permute.xlu0 %1654
          %1656 = vrot.lane.b32.xlu0 %v1629, 124
          %v1657 = vpop.permute.xlu0 %1656
          %1658 = vrot.lane.b32.xlu0 %v1632, 124
          %v1659 = vpop.permute.xlu0 %1658
          %1660 = vrot.lane.b32.xlu0 %v1635, 124
          %v1661 = vpop.permute.xlu0 %1660
          %1662 = vrot.lane.b32.xlu0 %v1638, 124
          %v1663 = vpop.permute.xlu0 %1662
          %v1672 = vsub.f32 %v1562, %v1649
          %v1673 = vsub.f32 %v1563, %v1651
          %v1674 = vsub.f32 %v1564, %v1653
          %v1675 = vsub.f32 %v1565, %v1655
          %v1676 = vsub.f32 %v1566, %v1657
          %v1677 = vsub.f32 %v1567, %v1659
          %v1678 = vsub.f32 %v1568, %v1661
          %v1679 = vsub.f32 %v1569, %v1663
          %v1680 = vsub.f32 %v1504, %v1512
          %v1681 = vsub.f32 %v1505, %v1513
          %v1682 = vsub.f32 %v1506, %v1514
          %v1683 = vsub.f32 %v1507, %v1515
          %v1684 = vsub.f32 %v1508, %v1516
          %v1685 = vsub.f32 %v1509, %v1517
          %v1686 = vsub.f32 %v1510, %v1518
          %v1687 = vsub.f32 %v1511, %v1519
          %v1688 = vsub.f32 %v1504, %v1520
          %v1689 = vsub.f32 %v1505, %v1521
          %v1690 = vsub.f32 %v1506, %v1522
          %v1691 = vsub.f32 %v1507, %v1523
          %v1692 = vsub.f32 %v1508, %v1524
          %v1693 = vsub.f32 %v1509, %v1525
          %v1694 = vsub.f32 %v1510, %v1526
          %v1695 = vsub.f32 %v1511, %v1527
          %v1696 = vsub.f32 %v1562, %v1528
          %v1697 = vsub.f32 %v1563, %v1529
          %v1698 = vsub.f32 %v1564, %v1530
          %v1699 = vsub.f32 %v1565, %v1531
          %v1700 = vsub.f32 %v1566, %v1532
          %v1701 = vsub.f32 %v1567, %v1533
          %v1702 = vsub.f32 %v1568, %v1534
          %v1703 = vsub.f32 %v1569, %v1535
          %1712 = vrot.lane.b32.xlu0 %v1688, 4
          %v1713 = vpop.permute.xlu0 %1712
          %1714 = vrot.lane.b32.xlu0 %v1689, 4
          %v1715 = vpop.permute.xlu0 %1714
          %1716 = vrot.lane.b32.xlu0 %v1690, 4
          %v1717 = vpop.permute.xlu0 %1716
          %1718 = vrot.lane.b32.xlu0 %v1691, 4
          %v1719 = vpop.permute.xlu0 %1718
          %1720 = vrot.lane.b32.xlu0 %v1692, 4
          %v1721 = vpop.permute.xlu0 %1720
          %1722 = vrot.lane.b32.xlu0 %v1693, 4
          %v1723 = vpop.permute.xlu0 %1722
          %1724 = vrot.lane.b32.xlu0 %v1694, 4
          %v1725 = vpop.permute.xlu0 %1724
          %1726 = vrot.lane.b32.xlu0 %v1695, 4
          %v1727 = vpop.permute.xlu0 %1726
          %1744 = vrot.lane.b32.xlu0 %v1696, 8
          %v1745 = vpop.permute.xlu0 %1744
          %1746 = vrot.lane.b32.xlu0 %v1697, 8
          %v1747 = vpop.permute.xlu0 %1746
          %1748 = vrot.lane.b32.xlu0 %v1698, 8
          %v1749 = vpop.permute.xlu0 %1748
          %1750 = vrot.lane.b32.xlu0 %v1699, 8
          %v1751 = vpop.permute.xlu0 %1750
          %1752 = vrot.lane.b32.xlu0 %v1700, 8
          %v1753 = vpop.permute.xlu0 %1752
          %1754 = vrot.lane.b32.xlu0 %v1701, 8
          %v1755 = vpop.permute.xlu0 %1754
          %1756 = vrot.lane.b32.xlu0 %v1702, 8
          %v1757 = vpop.permute.xlu0 %1756
          %1758 = vrot.lane.b32.xlu0 %v1703, 8
          %v1759 = vpop.permute.xlu0 %1758
          %1776 = vrot.lane.b32.xlu0 %v1672, 10
          %v1777 = vpop.permute.xlu0 %1776
          %1778 = vrot.lane.b32.xlu0 %v1673, 10
          %v1779 = vpop.permute.xlu0 %1778
          %1780 = vrot.lane.b32.xlu0 %v1674, 10
          %v1781 = vpop.permute.xlu0 %1780
          %1782 = vrot.lane.b32.xlu0 %v1675, 10
          %v1783 = vpop.permute.xlu0 %1782
          %1784 = vrot.lane.b32.xlu0 %v1676, 10
          %v1785 = vpop.permute.xlu0 %1784
          %1786 = vrot.lane.b32.xlu0 %v1677, 10
          %v1787 = vpop.permute.xlu0 %1786
          %1788 = vrot.lane.b32.xlu0 %v1678, 10
          %v1789 = vpop.permute.xlu0 %1788
          %1790 = vrot.lane.b32.xlu0 %v1679, 10
          %v1791 = vpop.permute.xlu0 %1790
          %v1800 = vsel %vm1570, %v1680, %v1713
          %v1801 = vsel %vm1570, %v1681, %v1715
          %v1802 = vsel %vm1570, %v1682, %v1717
          %v1803 = vsel %vm1570, %v1683, %v1719
          %v1804 = vsel %vm1570, %v1684, %v1721
          %v1805 = vsel %vm1570, %v1685, %v1723
          %v1806 = vsel %vm1570, %v1686, %v1725
          %v1807 = vsel %vm1570, %v1687, %v1727
          %vm1808 = vcmask 64512
          %v1809 = vsel %vm1808, %v1800, %v1745
          %v1810 = vsel %vm1808, %v1801, %v1747
          %v1811 = vsel %vm1808, %v1802, %v1749
          %v1812 = vsel %vm1808, %v1803, %v1751
          %v1813 = vsel %vm1808, %v1804, %v1753
          %v1814 = vsel %vm1808, %v1805, %v1755
          %v1815 = vsel %vm1808, %v1806, %v1757
          %v1816 = vsel %vm1808, %v1807, %v1759
          %vm1817 = vcmask 80896
          %v1818 = vsel %vm1817, %v1809, %v1777
          %v1819 = vsel %vm1817, %v1810, %v1779
          %v1820 = vsel %vm1817, %v1811, %v1781
          %v1821 = vsel %vm1817, %v1812, %v1783
          %v1822 = vsel %vm1817, %v1813, %v1785
          %v1823 = vsel %vm1817, %v1814, %v1787
          %v1824 = vsel %vm1817, %v1815, %v1789
          %v1825 = vsel %vm1817, %v1816, %v1791
          %v1826 = vmul.f32 %v1818, %v1818
          %v1827 = vmul.f32 %v1819, %v1819
          %v1828 = vmul.f32 %v1820, %v1820
          %v1829 = vmul.f32 %v1821, %v1821
          %v1830 = vmul.f32 %v1822, %v1822
          %v1831 = vmul.f32 %v1823, %v1823
          %v1832 = vmul.f32 %v1824, %v1824
          %v1833 = vmul.f32 %v1825, %v1825
          %v1834 = vpack.c.bf16 %v1827, %v1826
          %v1835 = vpack.c.bf16 %v1829, %v1828
          %v1836 = vpack.c.bf16 %v1831, %v1830
          %v1837 = vpack.c.bf16 %v1833, %v1832
          %v1840 = vunpack.c.l.b16 %v1093
          %v1841 = vunpack.c.l.b16 %v1094
          %v1842 = vpack.c.b16 %v1841, %v1840
          %vm1843 = vcmask 97280
          %v1845 = vsel %vm1843, %v1834, 0
          %v1848 = vsel %vm1843, %v1835, 0
          %v1851 = vsel %vm1843, %v1836, 0
          %v1854 = vsel %vm1843, %v1837, 0
          %vm1856 = vcmask 1045504
          %v1858 = vsel %vm1856, %v1842, 0
          %1860 = vmatpush.bf16.msra.mxu0 0
          %1861 = vmatpush.bf16.msra.mxu0 0
          %1862 = vmatpush.bf16.msra.mxu0 0
          %1863 = vmatpush.bf16.msra.mxu0 0
          %1864 = vmatpush.bf16.msra.mxu0 0
          %1865 = vmatpush.bf16.msra.mxu0 0
          %1866 = vmatpush.bf16.msra.mxu0 0
          %1867 = vmatpush.bf16.msra.mxu0 %v1858
          %1868 = vmatmul.bf16.gmra.mxu0 %v1845
          %v1869 = vpop.f32.mrf.mxu0
          %v1870 = vadd.f32 0.0, %v1869
          %v1871 = vpop.f32.mrf.mxu0
          %v1872 = vadd.f32 0.0, %v1871
          %1873 = vmatmul.bf16.gmra.mxu0 %v1848
          %v1874 = vpop.f32.mrf.mxu0
          %v1875 = vadd.f32 0.0, %v1874
          %v1876 = vpop.f32.mrf.mxu0
          %v1877 = vadd.f32 0.0, %v1876
          %1878 = vmatmul.bf16.gmra.mxu0 %v1851
          %v1879 = vpop.f32.mrf.mxu0
          %v1880 = vadd.f32 0.0, %v1879
          %v1881 = vpop.f32.mrf.mxu0
          %v1882 = vadd.f32 0.0, %v1881
          %1883 = vmatmul.bf16.gmra.mxu0 %v1854
          %v1884 = vpop.f32.mrf.mxu0
          %v1885 = vadd.f32 0.0, %v1884
          %v1886 = vpop.f32.mrf.mxu0
          %v1887 = vadd.f32 0.0, %v1886
          %1888 = vdwg.mxu0
          %v1889 = vmax.f32 %v1870, 1e-24
          %v1890 = vmax.f32 %v1872, 1e-24
          %v1891 = vmax.f32 %v1875, 1e-24
          %v1892 = vmax.f32 %v1877, 1e-24
          %v1893 = vmax.f32 %v1880, 1e-24
          %v1894 = vmax.f32 %v1882, 1e-24
          %v1895 = vmax.f32 %v1885, 1e-24
          %v1896 = vmax.f32 %v1887, 1e-24
          %v1897 = vrsqrt.pop %v1889
          %v1898 = vmul.f32 %v1897, %v1889
          %v1899 = vmul.f32 %v1898, %v1897
          %v1900 = vmul.f32 0.5, %v1899
          %v1901 = vsub.f32 1.5, %v1900
          %v1902 = vmul.f32 %v1897, %v1901
          %v1903 = vmul.f32 %v1889, %v1902
          %vm1904 = vcmp.eq.f32.partialorder %v1889, inf
          %v1905 = vsel %vm1904, %v1889, %v1903
          %vm1906 = vcmp.eq.f32.partialorder %v1889, 0.0
          %v1907 = vand.u32 %v1889, 2147483648
          %v1908 = vsel %vm1906, %v1907, %v1905
          %v1909 = vrsqrt.pop %v1890
          %v1910 = vmul.f32 %v1909, %v1890
          %v1911 = vmul.f32 %v1910, %v1909
          %v1912 = vmul.f32 0.5, %v1911
          %v1913 = vsub.f32 1.5, %v1912
          %v1914 = vmul.f32 %v1909, %v1913
          %v1915 = vmul.f32 %v1890, %v1914
          %vm1916 = vcmp.eq.f32.partialorder %v1890, inf
          %v1917 = vsel %vm1916, %v1890, %v1915
          %vm1918 = vcmp.eq.f32.partialorder %v1890, 0.0
          %v1919 = vand.u32 %v1890, 2147483648
          %v1920 = vsel %vm1918, %v1919, %v1917
          %v1921 = vrsqrt.pop %v1891
          %v1922 = vmul.f32 %v1921, %v1891
          %v1923 = vmul.f32 %v1922, %v1921
          %v1924 = vmul.f32 0.5, %v1923
          %v1925 = vsub.f32 1.5, %v1924
          %v1926 = vmul.f32 %v1921, %v1925
          %v1927 = vmul.f32 %v1891, %v1926
          %vm1928 = vcmp.eq.f32.partialorder %v1891, inf
          %v1929 = vsel %vm1928, %v1891, %v1927
          %vm1930 = vcmp.eq.f32.partialorder %v1891, 0.0
          %v1931 = vand.u32 %v1891, 2147483648
          %v1932 = vsel %vm1930, %v1931, %v1929
          %v1933 = vrsqrt.pop %v1892
          %v1934 = vmul.f32 %v1933, %v1892
          %v1935 = vmul.f32 %v1934, %v1933
          %v1936 = vmul.f32 0.5, %v1935
          %v1937 = vsub.f32 1.5, %v1936
          %v1938 = vmul.f32 %v1933, %v1937
          %v1939 = vmul.f32 %v1892, %v1938
          %vm1940 = vcmp.eq.f32.partialorder %v1892, inf
          %v1941 = vsel %vm1940, %v1892, %v1939
          %vm1942 = vcmp.eq.f32.partialorder %v1892, 0.0
          %v1943 = vand.u32 %v1892, 2147483648
          %v1944 = vsel %vm1942, %v1943, %v1941
          %v1945 = vrsqrt.pop %v1893
          %v1946 = vmul.f32 %v1945, %v1893
          %v1947 = vmul.f32 %v1946, %v1945
          %v1948 = vmul.f32 0.5, %v1947
          %v1949 = vsub.f32 1.5, %v1948
          %v1950 = vmul.f32 %v1945, %v1949
          %v1951 = vmul.f32 %v1893, %v1950
          %vm1952 = vcmp.eq.f32.partialorder %v1893, inf
          %v1953 = vsel %vm1952, %v1893, %v1951
          %vm1954 = vcmp.eq.f32.partialorder %v1893, 0.0
          %v1955 = vand.u32 %v1893, 2147483648
          %v1956 = vsel %vm1954, %v1955, %v1953
          %v1957 = vrsqrt.pop %v1894
          %v1958 = vmul.f32 %v1957, %v1894
          %v1959 = vmul.f32 %v1958, %v1957
          %v1960 = vmul.f32 0.5, %v1959
          %v1961 = vsub.f32 1.5, %v1960
          %v1962 = vmul.f32 %v1957, %v1961
          %v1963 = vmul.f32 %v1894, %v1962
          %vm1964 = vcmp.eq.f32.partialorder %v1894, inf
          %v1965 = vsel %vm1964, %v1894, %v1963
          %vm1966 = vcmp.eq.f32.partialorder %v1894, 0.0
          %v1967 = vand.u32 %v1894, 2147483648
          %v1968 = vsel %vm1966, %v1967, %v1965
          %v1969 = vrsqrt.pop %v1895
          %v1970 = vmul.f32 %v1969, %v1895
          %v1971 = vmul.f32 %v1970, %v1969
          %v1972 = vmul.f32 0.5, %v1971
          %v1973 = vsub.f32 1.5, %v1972
          %v1974 = vmul.f32 %v1969, %v1973
          %v1975 = vmul.f32 %v1895, %v1974
          %vm1976 = vcmp.eq.f32.partialorder %v1895, inf
          %v1977 = vsel %vm1976, %v1895, %v1975
          %vm1978 = vcmp.eq.f32.partialorder %v1895, 0.0
          %v1979 = vand.u32 %v1895, 2147483648
          %v1980 = vsel %vm1978, %v1979, %v1977
          %v1981 = vrsqrt.pop %v1896
          %v1982 = vmul.f32 %v1981, %v1896
          %v1983 = vmul.f32 %v1982, %v1981
          %v1984 = vmul.f32 0.5, %v1983
          %v1985 = vsub.f32 1.5, %v1984
          %v1986 = vmul.f32 %v1981, %v1985
          %v1987 = vmul.f32 %v1896, %v1986
          %vm1988 = vcmp.eq.f32.partialorder %v1896, inf
          %v1989 = vsel %vm1988, %v1896, %v1987
          %vm1990 = vcmp.eq.f32.partialorder %v1896, 0.0
          %v1991 = vand.u32 %v1896, 2147483648
          %v1992 = vsel %vm1990, %v1991, %v1989
          %v1993 = vrcp.pop %v1908
          %v1994 = vmul.f32 %v1908, %v1993
          %v1995 = vsub.f32 1.0, %v1994
          %v1996 = vmul.f32 %v1993, %v1995
          %v1997 = vadd.f32 %v1993, %v1996
          %vm1998 = vweird.f32 %v1908
          %vm1999 = vweird.f32 %v1993
          %vm2000 = vmor %vm1998, %vm1999
          %v2001 = vsel %vm2000, %v1993, %v1997
          %v2002 = vand.u32 2147483647, %v1908
          %vm2003 = vcmp.eq.f32.partialorder %v2002, 8.507059e+37
          %v2004 = vand.u32 %v1908, 2147483648
          %v2005 = vor.u32 1.1754944e-38, %v2004
          %v2006 = vsel %vm2003, %v2005, %v2001
          %v2007 = vmul.f32 1.0, %v2006
          %v2008 = vrcp.pop %v1920
          %v2009 = vmul.f32 %v1920, %v2008
          %v2010 = vsub.f32 1.0, %v2009
          %v2011 = vmul.f32 %v2008, %v2010
          %v2012 = vadd.f32 %v2008, %v2011
          %vm2013 = vweird.f32 %v1920
          %vm2014 = vweird.f32 %v2008
          %vm2015 = vmor %vm2013, %vm2014
          %v2016 = vsel %vm2015, %v2008, %v2012
          %v2017 = vand.u32 2147483647, %v1920
          %vm2018 = vcmp.eq.f32.partialorder %v2017, 8.507059e+37
          %v2019 = vand.u32 %v1920, 2147483648
          %v2020 = vor.u32 1.1754944e-38, %v2019
          %v2021 = vsel %vm2018, %v2020, %v2016
          %v2022 = vmul.f32 1.0, %v2021
          %v2023 = vrcp.pop %v1932
          %v2024 = vmul.f32 %v1932, %v2023
          %v2025 = vsub.f32 1.0, %v2024
          %v2026 = vmul.f32 %v2023, %v2025
          %v2027 = vadd.f32 %v2023, %v2026
          %vm2028 = vweird.f32 %v1932
          %vm2029 = vweird.f32 %v2023
          %vm2030 = vmor %vm2028, %vm2029
          %v2031 = vsel %vm2030, %v2023, %v2027
          %v2032 = vand.u32 2147483647, %v1932
          %vm2033 = vcmp.eq.f32.partialorder %v2032, 8.507059e+37
          %v2034 = vand.u32 %v1932, 2147483648
          %v2035 = vor.u32 1.1754944e-38, %v2034
          %v2036 = vsel %vm2033, %v2035, %v2031
          %v2037 = vmul.f32 1.0, %v2036
          %v2038 = vrcp.pop %v1944
          %v2039 = vmul.f32 %v1944, %v2038
          %v2040 = vsub.f32 1.0, %v2039
          %v2041 = vmul.f32 %v2038, %v2040
          %v2042 = vadd.f32 %v2038, %v2041
          %vm2043 = vweird.f32 %v1944
          %vm2044 = vweird.f32 %v2038
          %vm2045 = vmor %vm2043, %vm2044
          %v2046 = vsel %vm2045, %v2038, %v2042
          %v2047 = vand.u32 2147483647, %v1944
          %vm2048 = vcmp.eq.f32.partialorder %v2047, 8.507059e+37
          %v2049 = vand.u32 %v1944, 2147483648
          %v2050 = vor.u32 1.1754944e-38, %v2049
          %v2051 = vsel %vm2048, %v2050, %v2046
          %v2052 = vmul.f32 1.0, %v2051
          %v2053 = vrcp.pop %v1956
          %v2054 = vmul.f32 %v1956, %v2053
          %v2055 = vsub.f32 1.0, %v2054
          %v2056 = vmul.f32 %v2053, %v2055
          %v2057 = vadd.f32 %v2053, %v2056
          %vm2058 = vweird.f32 %v1956
          %vm2059 = vweird.f32 %v2053
          %vm2060 = vmor %vm2058, %vm2059
          %v2061 = vsel %vm2060, %v2053, %v2057
          %v2062 = vand.u32 2147483647, %v1956
          %vm2063 = vcmp.eq.f32.partialorder %v2062, 8.507059e+37
          %v2064 = vand.u32 %v1956, 2147483648
          %v2065 = vor.u32 1.1754944e-38, %v2064
          %v2066 = vsel %vm2063, %v2065, %v2061
          %v2067 = vmul.f32 1.0, %v2066
          %v2068 = vrcp.pop %v1968
          %v2069 = vmul.f32 %v1968, %v2068
          %v2070 = vsub.f32 1.0, %v2069
          %v2071 = vmul.f32 %v2068, %v2070
          %v2072 = vadd.f32 %v2068, %v2071
          %vm2073 = vweird.f32 %v1968
          %vm2074 = vweird.f32 %v2068
          %vm2075 = vmor %vm2073, %vm2074
          %v2076 = vsel %vm2075, %v2068, %v2072
          %v2077 = vand.u32 2147483647, %v1968
          %vm2078 = vcmp.eq.f32.partialorder %v2077, 8.507059e+37
          %v2079 = vand.u32 %v1968, 2147483648
          %v2080 = vor.u32 1.1754944e-38, %v2079
          %v2081 = vsel %vm2078, %v2080, %v2076
          %v2082 = vmul.f32 1.0, %v2081
          %v2083 = vrcp.pop %v1980
          %v2084 = vmul.f32 %v1980, %v2083
          %v2085 = vsub.f32 1.0, %v2084
          %v2086 = vmul.f32 %v2083, %v2085
          %v2087 = vadd.f32 %v2083, %v2086
          %vm2088 = vweird.f32 %v1980
          %vm2089 = vweird.f32 %v2083
          %vm2090 = vmor %vm2088, %vm2089
          %v2091 = vsel %vm2090, %v2083, %v2087
          %v2092 = vand.u32 2147483647, %v1980
          %vm2093 = vcmp.eq.f32.partialorder %v2092, 8.507059e+37
          %v2094 = vand.u32 %v1980, 2147483648
          %v2095 = vor.u32 1.1754944e-38, %v2094
          %v2096 = vsel %vm2093, %v2095, %v2091
          %v2097 = vmul.f32 1.0, %v2096
          %v2098 = vrcp.pop %v1992
          %v2099 = vmul.f32 %v1992, %v2098
          %v2100 = vsub.f32 1.0, %v2099
          %v2101 = vmul.f32 %v2098, %v2100
          %v2102 = vadd.f32 %v2098, %v2101
          %vm2103 = vweird.f32 %v1992
          %vm2104 = vweird.f32 %v2098
          %vm2105 = vmor %vm2103, %vm2104
          %v2106 = vsel %vm2105, %v2098, %v2102
          %v2107 = vand.u32 2147483647, %v1992
          %vm2108 = vcmp.eq.f32.partialorder %v2107, 8.507059e+37
          %v2109 = vand.u32 %v1992, 2147483648
          %v2110 = vor.u32 1.1754944e-38, %v2109
          %v2111 = vsel %vm2108, %v2110, %v2106
          %v2112 = vmul.f32 1.0, %v2111
          %v2113 = vpack.c.bf16 %v2022, %v2007
          %v2114 = vpack.c.bf16 %v2052, %v2037
          %v2115 = vpack.c.bf16 %v2082, %v2067
          %v2116 = vpack.c.bf16 %v2112, %v2097
          %v2118 = vsel %vm1570, %v2113, 0
          %v2121 = vsel %vm1570, %v2114, 0
          %v2124 = vsel %vm1570, %v2115, 0
          %v2127 = vsel %vm1570, %v2116, 0
          %vm2129 = vcmask 1041408
          %v2131 = vsel %vm2129, %v1095, 0
          %2133 = vmatpush.bf16.msra.mxu0 0
          %2134 = vmatpush.bf16.msra.mxu0 0
          %2135 = vmatpush.bf16.msra.mxu0 0
          %2136 = vmatpush.bf16.msra.mxu0 0
          %2137 = vmatpush.bf16.msra.mxu0 0
          %2138 = vmatpush.bf16.msra.mxu0 0
          %2139 = vmatpush.bf16.msra.mxu0 0
          %2140 = vmatpush.bf16.msra.mxu0 %v2131
          %2141 = vmatmul.bf16.gmra.mxu0 %v2118
          %v2142 = vpop.f32.mrf.mxu0
          %v2143 = vadd.f32 0.0, %v2142
          %v2144 = vpop.f32.mrf.mxu0
          %v2145 = vadd.f32 0.0, %v2144
          %2146 = vmatmul.bf16.gmra.mxu0 %v2121
          %v2147 = vpop.f32.mrf.mxu0
          %v2148 = vadd.f32 0.0, %v2147
          %v2149 = vpop.f32.mrf.mxu0
          %v2150 = vadd.f32 0.0, %v2149
          %2151 = vmatmul.bf16.gmra.mxu0 %v2124
          %v2152 = vpop.f32.mrf.mxu0
          %v2153 = vadd.f32 0.0, %v2152
          %v2154 = vpop.f32.mrf.mxu0
          %v2155 = vadd.f32 0.0, %v2154
          %2156 = vmatmul.bf16.gmra.mxu0 %v2127
          %v2157 = vpop.f32.mrf.mxu0
          %v2158 = vadd.f32 0.0, %v2157
          %v2159 = vpop.f32.mrf.mxu0
          %v2160 = vadd.f32 0.0, %v2159
          %2161 = vdwg.mxu0
          %v2162 = vmul.f32 %v1818, %v2143
          %v2163 = vmul.f32 %v1819, %v2145
          %v2164 = vmul.f32 %v1820, %v2148
          %v2165 = vmul.f32 %v1821, %v2150
          %v2166 = vmul.f32 %v1822, %v2153
          %v2167 = vmul.f32 %v1823, %v2155
          %v2168 = vmul.f32 %v1824, %v2158
          %v2169 = vmul.f32 %v1825, %v2160
          %v2170 = vpack.c.bf16 %v2163, %v2162
          %v2171 = vpack.c.bf16 %v2165, %v2164
          %v2172 = vpack.c.bf16 %v2167, %v2166
          %v2173 = vpack.c.bf16 %v2169, %v2168
          %v2175 = vperm.slane %v1099, 0
          %v2179 = vunpack.c.l.b16 %v1097
          %v2180 = vunpack.c.l.b16 %v1098
          %v2181 = vpack.c.b16 %v2180, %v2179
          %v2183 = vsel %vm1843, %v2170, 0
          %v2186 = vsel %vm1843, %v2171, 0
          %v2189 = vsel %vm1843, %v2172, 0
          %v2192 = vsel %vm1843, %v2173, 0
          %v2195 = vsel %vm1856, %v2181, 0
          %2197 = vmatpush.bf16.msra.mxu0 0
          %2198 = vmatpush.bf16.msra.mxu0 0
          %2199 = vmatpush.bf16.msra.mxu0 0
          %2200 = vmatpush.bf16.msra.mxu0 0
          %2201 = vmatpush.bf16.msra.mxu0 0
          %2202 = vmatpush.bf16.msra.mxu0 0
          %2203 = vmatpush.bf16.msra.mxu0 0
          %2204 = vmatpush.bf16.msra.mxu0 %v2195
          %2205 = vmatmul.bf16.gmra.mxu0 %v2183
          %v2206 = vpop.f32.mrf.mxu0
          %v2207 = vadd.f32 %v2175, %v2206
          %v2208 = vpop.f32.mrf.mxu0
          %v2209 = vadd.f32 %v2175, %v2208
          %2210 = vmatmul.bf16.gmra.mxu0 %v2186
          %v2211 = vpop.f32.mrf.mxu0
          %v2212 = vadd.f32 %v2175, %v2211
          %v2213 = vpop.f32.mrf.mxu0
          %v2214 = vadd.f32 %v2175, %v2213
          %2215 = vmatmul.bf16.gmra.mxu0 %v2189
          %v2216 = vpop.f32.mrf.mxu0
          %v2217 = vadd.f32 %v2175, %v2216
          %v2218 = vpop.f32.mrf.mxu0
          %v2219 = vadd.f32 %v2175, %v2218
          %2220 = vmatmul.bf16.gmra.mxu0 %v2192
          %v2221 = vpop.f32.mrf.mxu0
          %v2222 = vadd.f32 %v2175, %v2221
          %v2223 = vpop.f32.mrf.mxu0
          %v2224 = vadd.f32 %v2175, %v2223
          %2225 = vdwg.mxu0
          %v2226 = vmax.f32 %v2207, 0.0
          %v2227 = vmax.f32 %v2209, 0.0
          %v2228 = vmax.f32 %v2212, 0.0
          %v2229 = vmax.f32 %v2214, 0.0
          %v2230 = vmax.f32 %v2217, 0.0
          %v2231 = vmax.f32 %v2219, 0.0
          %v2232 = vmax.f32 %v2222, 0.0
          %v2233 = vmax.f32 %v2224, 0.0
          %2242 = vrot.lane.b32.xlu0 %v1536, 44
          %v2243 = vpop.permute.xlu0 %2242
          %2244 = vrot.lane.b32.xlu0 %v1537, 44
          %v2245 = vpop.permute.xlu0 %2244
          %2246 = vrot.lane.b32.xlu0 %v1538, 44
          %v2247 = vpop.permute.xlu0 %2246
          %2248 = vrot.lane.b32.xlu0 %v1539, 44
          %v2249 = vpop.permute.xlu0 %2248
          %2250 = vrot.lane.b32.xlu0 %v1540, 44
          %v2251 = vpop.permute.xlu0 %2250
          %2252 = vrot.lane.b32.xlu0 %v1541, 44
          %v2253 = vpop.permute.xlu0 %2252
          %2254 = vrot.lane.b32.xlu0 %v1542, 44
          %v2255 = vpop.permute.xlu0 %2254
          %2256 = vrot.lane.b32.xlu0 %v1543, 44
          %v2257 = vpop.permute.xlu0 %2256
          %vm2266 = vcmask 490496
          %v2267 = vsel %vm2266, %v2226, %v2243
          %v2268 = vsel %vm2266, %v2227, %v2245
          %v2269 = vsel %vm2266, %v2228, %v2247
          %v2270 = vsel %vm2266, %v2229, %v2249
          %v2271 = vsel %vm2266, %v2230, %v2251
          %v2272 = vsel %vm2266, %v2231, %v2253
          %v2273 = vsel %vm2266, %v2232, %v2255
          %v2274 = vsel %vm2266, %v2233, %v2257
          %v2275 = vpack.c.bf16 %v2268, %v2267
          %v2276 = vpack.c.bf16 %v2270, %v2269
          %v2277 = vpack.c.bf16 %v2272, %v2271
          %v2278 = vpack.c.bf16 %v2274, %v2273
          %v2280 = vperm.slane %v1110, 0
          %v2292 = vunpack.c.l.b16 %v1100
          %v2293 = vunpack.c.l.b16 %v1101
          %v2294 = vunpack.c.l.b16 %v1102
          %v2295 = vunpack.c.l.b16 %v1103
          %v2296 = vunpack.c.l.b16 %v1104
          %v2297 = vunpack.c.l.b16 %v1105
          %v2298 = vunpack.c.l.b16 %v1106
          %v2299 = vunpack.c.l.b16 %v1107
          %v2300 = vunpack.c.l.b16 %v1108
          %v2301 = vunpack.c.l.b16 %v1109
          %v2302 = vpack.c.b16 %v2293, %v2292
          %v2303 = vpack.c.b16 %v2295, %v2294
          %v2304 = vpack.c.b16 %v2297, %v2296
          %v2305 = vpack.c.b16 %v2299, %v2298
          %v2306 = vpack.c.b16 %v2301, %v2300
          %vm2311 = vcmask 621568
          %v2313 = vsel %vm2311, %v2275, 0
          %v2316 = vsel %vm2311, %v2276, 0
          %v2319 = vsel %vm2311, %v2277, 0
          %v2322 = vsel %vm2311, %v2278, 0
          %v2325 = vsel %vm1856, %v2306, 0
          %2327 = vmatpush.bf16.msra.mxu0 0
          %2328 = vmatpush.bf16.msra.mxu0 0
          %2329 = vmatpush.bf16.msra.mxu0 0
          %2330 = vmatpush.bf16.msra.mxu0 %v2325
          %2331 = vmatpush.bf16.msra.mxu0 %v2305
          %2332 = vmatpush.bf16.msra.mxu0 %v2304
          %2333 = vmatpush.bf16.msra.mxu0 %v2303
          %2334 = vmatpush.bf16.msra.mxu0 %v2302
          %2335 = vmatmul.bf16.gmra.mxu0 %v2313
          %v2336 = vpop.f32.mrf.mxu0
          %v2337 = vadd.f32 %v2280, %v2336
          %v2338 = vpop.f32.mrf.mxu0
          %v2339 = vadd.f32 %v2280, %v2338
          %2340 = vmatmul.bf16.gmra.mxu0 %v2316
          %v2341 = vpop.f32.mrf.mxu0
          %v2342 = vadd.f32 %v2280, %v2341
          %v2343 = vpop.f32.mrf.mxu0
          %v2344 = vadd.f32 %v2280, %v2343
          %2345 = vmatmul.bf16.gmra.mxu0 %v2319
          %v2346 = vpop.f32.mrf.mxu0
          %v2347 = vadd.f32 %v2280, %v2346
          %v2348 = vpop.f32.mrf.mxu0
          %v2349 = vadd.f32 %v2280, %v2348
          %2350 = vmatmul.bf16.gmra.mxu0 %v2322
          %v2351 = vpop.f32.mrf.mxu0
          %v2352 = vadd.f32 %v2280, %v2351
          %v2353 = vpop.f32.mrf.mxu0
          %v2354 = vadd.f32 %v2280, %v2353
          %2355 = vdwg.mxu0
          %2364 = vrot.lane.b32.xlu0 %v2337, 80
          %v2365 = vpop.permute.xlu0 %2364
          %2366 = vrot.lane.b32.xlu0 %v2339, 80
          %v2367 = vpop.permute.xlu0 %2366
          %2368 = vrot.lane.b32.xlu0 %v2342, 80
          %v2369 = vpop.permute.xlu0 %2368
          %2370 = vrot.lane.b32.xlu0 %v2344, 80
          %v2371 = vpop.permute.xlu0 %2370
          %2372 = vrot.lane.b32.xlu0 %v2347, 80
          %v2373 = vpop.permute.xlu0 %2372
          %2374 = vrot.lane.b32.xlu0 %v2349, 80
          %v2375 = vpop.permute.xlu0 %2374
          %2376 = vrot.lane.b32.xlu0 %v2352, 80
          %v2377 = vpop.permute.xlu0 %2376
          %2378 = vrot.lane.b32.xlu0 %v2354, 80
          %v2379 = vpop.permute.xlu0 %2378
          %v2388 = vadd.f32 %v2337, %v2365
          %v2389 = vadd.f32 %v2339, %v2367
          %v2390 = vadd.f32 %v2342, %v2369
          %v2391 = vadd.f32 %v2344, %v2371
          %v2392 = vadd.f32 %v2347, %v2373
          %v2393 = vadd.f32 %v2349, %v2375
          %v2394 = vadd.f32 %v2352, %v2377
          %v2395 = vadd.f32 %v2354, %v2379
          %v2396 = vsub.f32 0.0, %v2388
          %v2397 = vsub.f32 0.0, %v2389
          %v2398 = vsub.f32 0.0, %v2390
          %v2399 = vsub.f32 0.0, %v2391
          %v2400 = vsub.f32 0.0, %v2392
          %v2401 = vsub.f32 0.0, %v2393
          %v2402 = vsub.f32 0.0, %v2394
          %v2403 = vsub.f32 0.0, %v2395
          %v2404 = vmul.f32 %v2396, 1.442695
          %v2405 = vpow.pop %v2404
          %v2406 = vmul.f32 %v2397, 1.442695
          %v2407 = vpow.pop %v2406
          %v2408 = vmul.f32 %v2398, 1.442695
          %v2409 = vpow.pop %v2408
          %v2410 = vmul.f32 %v2399, 1.442695
          %v2411 = vpow.pop %v2410
          %v2412 = vmul.f32 %v2400, 1.442695
          %v2413 = vpow.pop %v2412
          %v2414 = vmul.f32 %v2401, 1.442695
          %v2415 = vpow.pop %v2414
          %v2416 = vmul.f32 %v2402, 1.442695
          %v2417 = vpow.pop %v2416
          %v2418 = vmul.f32 %v2403, 1.442695
          %v2419 = vpow.pop %v2418
          %v2420 = vadd.f32 %v2405, 1.0
          %v2421 = vadd.f32 %v2407, 1.0
          %v2422 = vadd.f32 %v2409, 1.0
          %v2423 = vadd.f32 %v2411, 1.0
          %v2424 = vadd.f32 %v2413, 1.0
          %v2425 = vadd.f32 %v2415, 1.0
          %v2426 = vadd.f32 %v2417, 1.0
          %v2427 = vadd.f32 %v2419, 1.0
          %v2428 = vrcp.pop %v2420
          %v2429 = vmul.f32 %v2420, %v2428
          %v2430 = vsub.f32 1.0, %v2429
          %v2431 = vmul.f32 %v2428, %v2430
          %v2432 = vadd.f32 %v2428, %v2431
          %vm2433 = vweird.f32 %v2420
          %vm2434 = vweird.f32 %v2428
          %vm2435 = vmor %vm2433, %vm2434
          %v2436 = vsel %vm2435, %v2428, %v2432
          %v2437 = vand.u32 2147483647, %v2420
          %vm2438 = vcmp.eq.f32.partialorder %v2437, 8.507059e+37
          %v2439 = vand.u32 %v2420, 2147483648
          %v2440 = vor.u32 1.1754944e-38, %v2439
          %v2441 = vsel %vm2438, %v2440, %v2436
          %v2442 = vmul.f32 1.0, %v2441
          %v2443 = vrcp.pop %v2421
          %v2444 = vmul.f32 %v2421, %v2443
          %v2445 = vsub.f32 1.0, %v2444
          %v2446 = vmul.f32 %v2443, %v2445
          %v2447 = vadd.f32 %v2443, %v2446
          %vm2448 = vweird.f32 %v2421
          %vm2449 = vweird.f32 %v2443
          %vm2450 = vmor %vm2448, %vm2449
          %v2451 = vsel %vm2450, %v2443, %v2447
          %v2452 = vand.u32 2147483647, %v2421
          %vm2453 = vcmp.eq.f32.partialorder %v2452, 8.507059e+37
          %v2454 = vand.u32 %v2421, 2147483648
          %v2455 = vor.u32 1.1754944e-38, %v2454
          %v2456 = vsel %vm2453, %v2455, %v2451
          %v2457 = vmul.f32 1.0, %v2456
          %v2458 = vrcp.pop %v2422
          %v2459 = vmul.f32 %v2422, %v2458
          %v2460 = vsub.f32 1.0, %v2459
          %v2461 = vmul.f32 %v2458, %v2460
          %v2462 = vadd.f32 %v2458, %v2461
          %vm2463 = vweird.f32 %v2422
          %vm2464 = vweird.f32 %v2458
          %vm2465 = vmor %vm2463, %vm2464
          %v2466 = vsel %vm2465, %v2458, %v2462
          %v2467 = vand.u32 2147483647, %v2422
          %vm2468 = vcmp.eq.f32.partialorder %v2467, 8.507059e+37
          %v2469 = vand.u32 %v2422, 2147483648
          %v2470 = vor.u32 1.1754944e-38, %v2469
          %v2471 = vsel %vm2468, %v2470, %v2466
          %v2472 = vmul.f32 1.0, %v2471
          %v2473 = vrcp.pop %v2423
          %v2474 = vmul.f32 %v2423, %v2473
          %v2475 = vsub.f32 1.0, %v2474
          %v2476 = vmul.f32 %v2473, %v2475
          %v2477 = vadd.f32 %v2473, %v2476
          %vm2478 = vweird.f32 %v2423
          %vm2479 = vweird.f32 %v2473
          %vm2480 = vmor %vm2478, %vm2479
          %v2481 = vsel %vm2480, %v2473, %v2477
          %v2482 = vand.u32 2147483647, %v2423
          %vm2483 = vcmp.eq.f32.partialorder %v2482, 8.507059e+37
          %v2484 = vand.u32 %v2423, 2147483648
          %v2485 = vor.u32 1.1754944e-38, %v2484
          %v2486 = vsel %vm2483, %v2485, %v2481
          %v2487 = vmul.f32 1.0, %v2486
          %v2488 = vrcp.pop %v2424
          %v2489 = vmul.f32 %v2424, %v2488
          %v2490 = vsub.f32 1.0, %v2489
          %v2491 = vmul.f32 %v2488, %v2490
          %v2492 = vadd.f32 %v2488, %v2491
          %vm2493 = vweird.f32 %v2424
          %vm2494 = vweird.f32 %v2488
          %vm2495 = vmor %vm2493, %vm2494
          %v2496 = vsel %vm2495, %v2488, %v2492
          %v2497 = vand.u32 2147483647, %v2424
          %vm2498 = vcmp.eq.f32.partialorder %v2497, 8.507059e+37
          %v2499 = vand.u32 %v2424, 2147483648
          %v2500 = vor.u32 1.1754944e-38, %v2499
          %v2501 = vsel %vm2498, %v2500, %v2496
          %v2502 = vmul.f32 1.0, %v2501
          %v2503 = vrcp.pop %v2425
          %v2504 = vmul.f32 %v2425, %v2503
          %v2505 = vsub.f32 1.0, %v2504
          %v2506 = vmul.f32 %v2503, %v2505
          %v2507 = vadd.f32 %v2503, %v2506
          %vm2508 = vweird.f32 %v2425
          %vm2509 = vweird.f32 %v2503
          %vm2510 = vmor %vm2508, %vm2509
          %v2511 = vsel %vm2510, %v2503, %v2507
          %v2512 = vand.u32 2147483647, %v2425
          %vm2513 = vcmp.eq.f32.partialorder %v2512, 8.507059e+37
          %v2514 = vand.u32 %v2425, 2147483648
          %v2515 = vor.u32 1.1754944e-38, %v2514
          %v2516 = vsel %vm2513, %v2515, %v2511
          %v2517 = vmul.f32 1.0, %v2516
          %v2518 = vrcp.pop %v2426
          %v2519 = vmul.f32 %v2426, %v2518
          %v2520 = vsub.f32 1.0, %v2519
          %v2521 = vmul.f32 %v2518, %v2520
          %v2522 = vadd.f32 %v2518, %v2521
          %vm2523 = vweird.f32 %v2426
          %vm2524 = vweird.f32 %v2518
          %vm2525 = vmor %vm2523, %vm2524
          %v2526 = vsel %vm2525, %v2518, %v2522
          %v2527 = vand.u32 2147483647, %v2426
          %vm2528 = vcmp.eq.f32.partialorder %v2527, 8.507059e+37
          %v2529 = vand.u32 %v2426, 2147483648
          %v2530 = vor.u32 1.1754944e-38, %v2529
          %v2531 = vsel %vm2528, %v2530, %v2526
          %v2532 = vmul.f32 1.0, %v2531
          %v2533 = vrcp.pop %v2427
          %v2534 = vmul.f32 %v2427, %v2533
          %v2535 = vsub.f32 1.0, %v2534
          %v2536 = vmul.f32 %v2533, %v2535
          %v2537 = vadd.f32 %v2533, %v2536
          %vm2538 = vweird.f32 %v2427
          %vm2539 = vweird.f32 %v2533
          %vm2540 = vmor %vm2538, %vm2539
          %v2541 = vsel %vm2540, %v2533, %v2537
          %v2542 = vand.u32 2147483647, %v2427
          %vm2543 = vcmp.eq.f32.partialorder %v2542, 8.507059e+37
          %v2544 = vand.u32 %v2427, 2147483648
          %v2545 = vor.u32 1.1754944e-38, %v2544
          %v2546 = vsel %vm2543, %v2545, %v2541
          %v2547 = vmul.f32 1.0, %v2546
          %2548 = vrot.lane.b32.xlu0 %v2337, 48
          %v2549 = vpop.permute.xlu0 %2548
          %2550 = vrot.lane.b32.xlu0 %v2339, 48
          %v2551 = vpop.permute.xlu0 %2550
          %2552 = vrot.lane.b32.xlu0 %v2342, 48
          %v2553 = vpop.permute.xlu0 %2552
          %2554 = vrot.lane.b32.xlu0 %v2344, 48
          %v2555 = vpop.permute.xlu0 %2554
          %2556 = vrot.lane.b32.xlu0 %v2347, 48
          %v2557 = vpop.permute.xlu0 %2556
          %2558 = vrot.lane.b32.xlu0 %v2349, 48
          %v2559 = vpop.permute.xlu0 %2558
          %2560 = vrot.lane.b32.xlu0 %v2352, 48
          %v2561 = vpop.permute.xlu0 %2560
          %2562 = vrot.lane.b32.xlu0 %v2354, 48
          %v2563 = vpop.permute.xlu0 %2562
          %v2572 = vmul.f32 %v2442, %v2549
          %v2573 = vmul.f32 %v2457, %v2551
          %v2574 = vmul.f32 %v2472, %v2553
          %v2575 = vmul.f32 %v2487, %v2555
          %v2576 = vmul.f32 %v2502, %v2557
          %v2577 = vmul.f32 %v2517, %v2559
          %v2578 = vmul.f32 %v2532, %v2561
          %v2579 = vmul.f32 %v2547, %v2563
          %2588 = vrot.lane.b32.xlu0 %v2572, 32
          %v2589 = vpop.permute.xlu0 %2588
          %2590 = vrot.lane.b32.xlu0 %v2573, 32
          %v2591 = vpop.permute.xlu0 %2590
          %2592 = vrot.lane.b32.xlu0 %v2574, 32
          %v2593 = vpop.permute.xlu0 %2592
          %2594 = vrot.lane.b32.xlu0 %v2575, 32
          %v2595 = vpop.permute.xlu0 %2594
          %2596 = vrot.lane.b32.xlu0 %v2576, 32
          %v2597 = vpop.permute.xlu0 %2596
          %2598 = vrot.lane.b32.xlu0 %v2577, 32
          %v2599 = vpop.permute.xlu0 %2598
          %2600 = vrot.lane.b32.xlu0 %v2578, 32
          %v2601 = vpop.permute.xlu0 %2600
          %2602 = vrot.lane.b32.xlu0 %v2579, 32
          %v2603 = vpop.permute.xlu0 %2602
          %v2612 = vadd.f32 %v2337, %v2589
          %v2613 = vadd.f32 %v2339, %v2591
          %v2614 = vadd.f32 %v2342, %v2593
          %v2615 = vadd.f32 %v2344, %v2595
          %v2616 = vadd.f32 %v2347, %v2597
          %v2617 = vadd.f32 %v2349, %v2599
          %v2618 = vadd.f32 %v2352, %v2601
          %v2619 = vadd.f32 %v2354, %v2603
          %v2620 = vtanh.pop %v2612
          %v2621 = vtanh.pop %v2613
          %v2622 = vtanh.pop %v2614
          %v2623 = vtanh.pop %v2615
          %v2624 = vtanh.pop %v2616
          %v2625 = vtanh.pop %v2617
          %v2626 = vtanh.pop %v2618
          %v2627 = vtanh.pop %v2619
          %v2628 = vsub.f32 1.0, %v2442
          %v2629 = vsub.f32 1.0, %v2457
          %v2630 = vsub.f32 1.0, %v2472
          %v2631 = vsub.f32 1.0, %v2487
          %v2632 = vsub.f32 1.0, %v2502
          %v2633 = vsub.f32 1.0, %v2517
          %v2634 = vsub.f32 1.0, %v2532
          %v2635 = vsub.f32 1.0, %v2547
          %2644 = vrot.lane.b32.xlu0 %v2620, 112
          %v2645 = vpop.permute.xlu0 %2644
          %2646 = vrot.lane.b32.xlu0 %v2621, 112
          %v2647 = vpop.permute.xlu0 %2646
          %2648 = vrot.lane.b32.xlu0 %v2622, 112
          %v2649 = vpop.permute.xlu0 %2648
          %2650 = vrot.lane.b32.xlu0 %v2623, 112
          %v2651 = vpop.permute.xlu0 %2650
          %2652 = vrot.lane.b32.xlu0 %v2624, 112
          %v2653 = vpop.permute.xlu0 %2652
          %2654 = vrot.lane.b32.xlu0 %v2625, 112
          %v2655 = vpop.permute.xlu0 %2654
          %2656 = vrot.lane.b32.xlu0 %v2626, 112
          %v2657 = vpop.permute.xlu0 %2656
          %2658 = vrot.lane.b32.xlu0 %v2627, 112
          %v2659 = vpop.permute.xlu0 %2658
          %v2668 = vmul.f32 %v2628, %v2645
          %v2669 = vmul.f32 %v2629, %v2647
          %v2670 = vmul.f32 %v2630, %v2649
          %v2671 = vmul.f32 %v2631, %v2651
          %v2672 = vmul.f32 %v2632, %v2653
          %v2673 = vmul.f32 %v2633, %v2655
          %v2674 = vmul.f32 %v2634, %v2657
          %v2675 = vmul.f32 %v2635, %v2659
          %v2676 = vmul.f32 %v2442, %v1536
          %v2677 = vmul.f32 %v2457, %v1537
          %v2678 = vmul.f32 %v2472, %v1538
          %v2679 = vmul.f32 %v2487, %v1539
          %v2680 = vmul.f32 %v2502, %v1540
          %v2681 = vmul.f32 %v2517, %v1541
          %v2682 = vmul.f32 %v2532, %v1542
          %v2683 = vmul.f32 %v2547, %v1543
          %v2684 = vadd.f32 %v2668, %v2676
          %v2685 = vadd.f32 %v2669, %v2677
          %v2686 = vadd.f32 %v2670, %v2678
          %v2687 = vadd.f32 %v2671, %v2679
          %v2688 = vadd.f32 %v2672, %v2680
          %v2689 = vadd.f32 %v2673, %v2681
          %v2690 = vadd.f32 %v2674, %v2682
          %v2691 = vadd.f32 %v2675, %v2683
          %2700 = vrot.lane.b32.xlu0 %v2684, 44
          %v2701 = vpop.permute.xlu0 %2700
          %2702 = vrot.lane.b32.xlu0 %v2685, 44
          %v2703 = vpop.permute.xlu0 %2702
          %2704 = vrot.lane.b32.xlu0 %v2686, 44
          %v2705 = vpop.permute.xlu0 %2704
          %2706 = vrot.lane.b32.xlu0 %v2687, 44
          %v2707 = vpop.permute.xlu0 %2706
          %2708 = vrot.lane.b32.xlu0 %v2688, 44
          %v2709 = vpop.permute.xlu0 %2708
          %2710 = vrot.lane.b32.xlu0 %v2689, 44
          %v2711 = vpop.permute.xlu0 %2710
          %2712 = vrot.lane.b32.xlu0 %v2690, 44
          %v2713 = vpop.permute.xlu0 %2712
          %2714 = vrot.lane.b32.xlu0 %v2691, 44
          %v2715 = vpop.permute.xlu0 %2714
          %2732 = vrot.lane.b32.xlu0 %v1544, 76
          %v2733 = vpop.permute.xlu0 %2732
          %2734 = vrot.lane.b32.xlu0 %v1545, 76
          %v2735 = vpop.permute.xlu0 %2734
          %2736 = vrot.lane.b32.xlu0 %v1546, 76
          %v2737 = vpop.permute.xlu0 %2736
          %2738 = vrot.lane.b32.xlu0 %v1547, 76
          %v2739 = vpop.permute.xlu0 %2738
          %2740 = vrot.lane.b32.xlu0 %v1548, 76
          %v2741 = vpop.permute.xlu0 %2740
          %2742 = vrot.lane.b32.xlu0 %v1549, 76
          %v2743 = vpop.permute.xlu0 %2742
          %2744 = vrot.lane.b32.xlu0 %v1550, 76
          %v2745 = vpop.permute.xlu0 %2744
          %2746 = vrot.lane.b32.xlu0 %v1551, 76
          %v2747 = vpop.permute.xlu0 %2746
          %v2756 = vsel %vm2266, %v2226, %v2701
          %v2757 = vsel %vm2266, %v2227, %v2703
          %v2758 = vsel %vm2266, %v2228, %v2705
          %v2759 = vsel %vm2266, %v2229, %v2707
          %v2760 = vsel %vm2266, %v2230, %v2709
          %v2761 = vsel %vm2266, %v2231, %v2711
          %v2762 = vsel %vm2266, %v2232, %v2713
          %v2763 = vsel %vm2266, %v2233, %v2715
          %v2764 = vsel %vm2311, %v2756, %v2733
          %v2765 = vsel %vm2311, %v2757, %v2735
          %v2766 = vsel %vm2311, %v2758, %v2737
          %v2767 = vsel %vm2311, %v2759, %v2739
          %v2768 = vsel %vm2311, %v2760, %v2741
          %v2769 = vsel %vm2311, %v2761, %v2743
          %v2770 = vsel %vm2311, %v2762, %v2745
          %v2771 = vsel %vm2311, %v2763, %v2747
          %v2772 = vpack.c.bf16 %v2765, %v2764
          %v2773 = vpack.c.bf16 %v2767, %v2766
          %v2774 = vpack.c.bf16 %v2769, %v2768
          %v2775 = vpack.c.bf16 %v2771, %v2770
          %v2777 = vperm.slane %v1123, 0
          %v2791 = vunpack.c.l.b16 %v1111
          %v2792 = vunpack.c.l.b16 %v1112
          %v2793 = vunpack.c.l.b16 %v1113
          %v2794 = vunpack.c.l.b16 %v1114
          %v2795 = vunpack.c.l.b16 %v1115
          %v2796 = vunpack.c.l.b16 %v1116
          %v2797 = vunpack.c.l.b16 %v1117
          %v2798 = vunpack.c.l.b16 %v1118
          %v2799 = vunpack.c.l.b16 %v1119
          %v2800 = vunpack.c.l.b16 %v1120
          %v2801 = vunpack.c.l.b16 %v1121
          %v2802 = vunpack.c.l.b16 %v1122
          %v2803 = vpack.c.b16 %v2792, %v2791
          %v2804 = vpack.c.b16 %v2794, %v2793
          %v2805 = vpack.c.b16 %v2796, %v2795
          %v2806 = vpack.c.b16 %v2798, %v2797
          %v2807 = vpack.c.b16 %v2800, %v2799
          %v2808 = vpack.c.b16 %v2802, %v2801
          %vm2814 = vcmask 752640
          %v2816 = vsel %vm2814, %v2772, 0
          %v2819 = vsel %vm2814, %v2773, 0
          %v2822 = vsel %vm2814, %v2774, 0
          %v2825 = vsel %vm2814, %v2775, 0
          %v2828 = vsel %vm1856, %v2808, 0
          %2830 = vmatpush.bf16.msra.mxu0 0
          %2831 = vmatpush.bf16.msra.mxu0 0
          %2832 = vmatpush.bf16.msra.mxu0 %v2828
          %2833 = vmatpush.bf16.msra.mxu0 %v2807
          %2834 = vmatpush.bf16.msra.mxu0 %v2806
          %2835 = vmatpush.bf16.msra.mxu0 %v2805
          %2836 = vmatpush.bf16.msra.mxu0 %v2804
          %2837 = vmatpush.bf16.msra.mxu0 %v2803
          %2838 = vmatmul.bf16.gmra.mxu0 %v2816
          %v2839 = vpop.f32.mrf.mxu0
          %v2840 = vadd.f32 %v2777, %v2839
          %v2841 = vpop.f32.mrf.mxu0
          %v2842 = vadd.f32 %v2777, %v2841
          %2843 = vmatmul.bf16.gmra.mxu0 %v2819
          %v2844 = vpop.f32.mrf.mxu0
          %v2845 = vadd.f32 %v2777, %v2844
          %v2846 = vpop.f32.mrf.mxu0
          %v2847 = vadd.f32 %v2777, %v2846
          %2848 = vmatmul.bf16.gmra.mxu0 %v2822
          %v2849 = vpop.f32.mrf.mxu0
          %v2850 = vadd.f32 %v2777, %v2849
          %v2851 = vpop.f32.mrf.mxu0
          %v2852 = vadd.f32 %v2777, %v2851
          %2853 = vmatmul.bf16.gmra.mxu0 %v2825
          %v2854 = vpop.f32.mrf.mxu0
          %v2855 = vadd.f32 %v2777, %v2854
          %v2856 = vpop.f32.mrf.mxu0
          %v2857 = vadd.f32 %v2777, %v2856
          %2858 = vdwg.mxu0
          %2867 = vrot.lane.b32.xlu0 %v2840, 80
          %v2868 = vpop.permute.xlu0 %2867
          %2869 = vrot.lane.b32.xlu0 %v2842, 80
          %v2870 = vpop.permute.xlu0 %2869
          %2871 = vrot.lane.b32.xlu0 %v2845, 80
          %v2872 = vpop.permute.xlu0 %2871
          %2873 = vrot.lane.b32.xlu0 %v2847, 80
          %v2874 = vpop.permute.xlu0 %2873
          %2875 = vrot.lane.b32.xlu0 %v2850, 80
          %v2876 = vpop.permute.xlu0 %2875
          %2877 = vrot.lane.b32.xlu0 %v2852, 80
          %v2878 = vpop.permute.xlu0 %2877
          %2879 = vrot.lane.b32.xlu0 %v2855, 80
          %v2880 = vpop.permute.xlu0 %2879
          %2881 = vrot.lane.b32.xlu0 %v2857, 80
          %v2882 = vpop.permute.xlu0 %2881
          %v2891 = vadd.f32 %v2840, %v2868
          %v2892 = vadd.f32 %v2842, %v2870
          %v2893 = vadd.f32 %v2845, %v2872
          %v2894 = vadd.f32 %v2847, %v2874
          %v2895 = vadd.f32 %v2850, %v2876
          %v2896 = vadd.f32 %v2852, %v2878
          %v2897 = vadd.f32 %v2855, %v2880
          %v2898 = vadd.f32 %v2857, %v2882
          %v2899 = vsub.f32 0.0, %v2891
          %v2900 = vsub.f32 0.0, %v2892
          %v2901 = vsub.f32 0.0, %v2893
          %v2902 = vsub.f32 0.0, %v2894
          %v2903 = vsub.f32 0.0, %v2895
          %v2904 = vsub.f32 0.0, %v2896
          %v2905 = vsub.f32 0.0, %v2897
          %v2906 = vsub.f32 0.0, %v2898
          %v2907 = vmul.f32 %v2899, 1.442695
          %v2908 = vpow.pop %v2907
          %v2909 = vmul.f32 %v2900, 1.442695
          %v2910 = vpow.pop %v2909
          %v2911 = vmul.f32 %v2901, 1.442695
          %v2912 = vpow.pop %v2911
          %v2913 = vmul.f32 %v2902, 1.442695
          %v2914 = vpow.pop %v2913
          %v2915 = vmul.f32 %v2903, 1.442695
          %v2916 = vpow.pop %v2915
          %v2917 = vmul.f32 %v2904, 1.442695
          %v2918 = vpow.pop %v2917
          %v2919 = vmul.f32 %v2905, 1.442695
          %v2920 = vpow.pop %v2919
          %v2921 = vmul.f32 %v2906, 1.442695
          %v2922 = vpow.pop %v2921
          %v2923 = vadd.f32 %v2908, 1.0
          %v2924 = vadd.f32 %v2910, 1.0
          %v2925 = vadd.f32 %v2912, 1.0
          %v2926 = vadd.f32 %v2914, 1.0
          %v2927 = vadd.f32 %v2916, 1.0
          %v2928 = vadd.f32 %v2918, 1.0
          %v2929 = vadd.f32 %v2920, 1.0
          %v2930 = vadd.f32 %v2922, 1.0
          %v2931 = vrcp.pop %v2923
          %v2932 = vmul.f32 %v2923, %v2931
          %v2933 = vsub.f32 1.0, %v2932
          %v2934 = vmul.f32 %v2931, %v2933
          %v2935 = vadd.f32 %v2931, %v2934
          %vm2936 = vweird.f32 %v2923
          %vm2937 = vweird.f32 %v2931
          %vm2938 = vmor %vm2936, %vm2937
          %v2939 = vsel %vm2938, %v2931, %v2935
          %v2940 = vand.u32 2147483647, %v2923
          %vm2941 = vcmp.eq.f32.partialorder %v2940, 8.507059e+37
          %v2942 = vand.u32 %v2923, 2147483648
          %v2943 = vor.u32 1.1754944e-38, %v2942
          %v2944 = vsel %vm2941, %v2943, %v2939
          %v2945 = vmul.f32 1.0, %v2944
          %v2946 = vrcp.pop %v2924
          %v2947 = vmul.f32 %v2924, %v2946
          %v2948 = vsub.f32 1.0, %v2947
          %v2949 = vmul.f32 %v2946, %v2948
          %v2950 = vadd.f32 %v2946, %v2949
          %vm2951 = vweird.f32 %v2924
          %vm2952 = vweird.f32 %v2946
          %vm2953 = vmor %vm2951, %vm2952
          %v2954 = vsel %vm2953, %v2946, %v2950
          %v2955 = vand.u32 2147483647, %v2924
          %vm2956 = vcmp.eq.f32.partialorder %v2955, 8.507059e+37
          %v2957 = vand.u32 %v2924, 2147483648
          %v2958 = vor.u32 1.1754944e-38, %v2957
          %v2959 = vsel %vm2956, %v2958, %v2954
          %v2960 = vmul.f32 1.0, %v2959
          %v2961 = vrcp.pop %v2925
          %v2962 = vmul.f32 %v2925, %v2961
          %v2963 = vsub.f32 1.0, %v2962
          %v2964 = vmul.f32 %v2961, %v2963
          %v2965 = vadd.f32 %v2961, %v2964
          %vm2966 = vweird.f32 %v2925
          %vm2967 = vweird.f32 %v2961
          %vm2968 = vmor %vm2966, %vm2967
          %v2969 = vsel %vm2968, %v2961, %v2965
          %v2970 = vand.u32 2147483647, %v2925
          %vm2971 = vcmp.eq.f32.partialorder %v2970, 8.507059e+37
          %v2972 = vand.u32 %v2925, 2147483648
          %v2973 = vor.u32 1.1754944e-38, %v2972
          %v2974 = vsel %vm2971, %v2973, %v2969
          %v2975 = vmul.f32 1.0, %v2974
          %v2976 = vrcp.pop %v2926
          %v2977 = vmul.f32 %v2926, %v2976
          %v2978 = vsub.f32 1.0, %v2977
          %v2979 = vmul.f32 %v2976, %v2978
          %v2980 = vadd.f32 %v2976, %v2979
          %vm2981 = vweird.f32 %v2926
          %vm2982 = vweird.f32 %v2976
          %vm2983 = vmor %vm2981, %vm2982
          %v2984 = vsel %vm2983, %v2976, %v2980
          %v2985 = vand.u32 2147483647, %v2926
          %vm2986 = vcmp.eq.f32.partialorder %v2985, 8.507059e+37
          %v2987 = vand.u32 %v2926, 2147483648
          %v2988 = vor.u32 1.1754944e-38, %v2987
          %v2989 = vsel %vm2986, %v2988, %v2984
          %v2990 = vmul.f32 1.0, %v2989
          %v2991 = vrcp.pop %v2927
          %v2992 = vmul.f32 %v2927, %v2991
          %v2993 = vsub.f32 1.0, %v2992
          %v2994 = vmul.f32 %v2991, %v2993
          %v2995 = vadd.f32 %v2991, %v2994
          %vm2996 = vweird.f32 %v2927
          %vm2997 = vweird.f32 %v2991
          %vm2998 = vmor %vm2996, %vm2997
          %v2999 = vsel %vm2998, %v2991, %v2995
          %v3000 = vand.u32 2147483647, %v2927
          %vm3001 = vcmp.eq.f32.partialorder %v3000, 8.507059e+37
          %v3002 = vand.u32 %v2927, 2147483648
          %v3003 = vor.u32 1.1754944e-38, %v3002
          %v3004 = vsel %vm3001, %v3003, %v2999
          %v3005 = vmul.f32 1.0, %v3004
          %v3006 = vrcp.pop %v2928
          %v3007 = vmul.f32 %v2928, %v3006
          %v3008 = vsub.f32 1.0, %v3007
          %v3009 = vmul.f32 %v3006, %v3008
          %v3010 = vadd.f32 %v3006, %v3009
          %vm3011 = vweird.f32 %v2928
          %vm3012 = vweird.f32 %v3006
          %vm3013 = vmor %vm3011, %vm3012
          %v3014 = vsel %vm3013, %v3006, %v3010
          %v3015 = vand.u32 2147483647, %v2928
          %vm3016 = vcmp.eq.f32.partialorder %v3015, 8.507059e+37
          %v3017 = vand.u32 %v2928, 2147483648
          %v3018 = vor.u32 1.1754944e-38, %v3017
          %v3019 = vsel %vm3016, %v3018, %v3014
          %v3020 = vmul.f32 1.0, %v3019
          %v3021 = vrcp.pop %v2929
          %v3022 = vmul.f32 %v2929, %v3021
          %v3023 = vsub.f32 1.0, %v3022
          %v3024 = vmul.f32 %v3021, %v3023
          %v3025 = vadd.f32 %v3021, %v3024
          %vm3026 = vweird.f32 %v2929
          %vm3027 = vweird.f32 %v3021
          %vm3028 = vmor %vm3026, %vm3027
          %v3029 = vsel %vm3028, %v3021, %v3025
          %v3030 = vand.u32 2147483647, %v2929
          %vm3031 = vcmp.eq.f32.partialorder %v3030, 8.507059e+37
          %v3032 = vand.u32 %v2929, 2147483648
          %v3033 = vor.u32 1.1754944e-38, %v3032
          %v3034 = vsel %vm3031, %v3033, %v3029
          %v3035 = vmul.f32 1.0, %v3034
          %v3036 = vrcp.pop %v2930
          %v3037 = vmul.f32 %v2930, %v3036
          %v3038 = vsub.f32 1.0, %v3037
          %v3039 = vmul.f32 %v3036, %v3038
          %v3040 = vadd.f32 %v3036, %v3039
          %vm3041 = vweird.f32 %v2930
          %vm3042 = vweird.f32 %v3036
          %vm3043 = vmor %vm3041, %vm3042
          %v3044 = vsel %vm3043, %v3036, %v3040
          %v3045 = vand.u32 2147483647, %v2930
          %vm3046 = vcmp.eq.f32.partialorder %v3045, 8.507059e+37
          %v3047 = vand.u32 %v2930, 2147483648
          %v3048 = vor.u32 1.1754944e-38, %v3047
          %v3049 = vsel %vm3046, %v3048, %v3044
          %v3050 = vmul.f32 1.0, %v3049
          %3051 = vrot.lane.b32.xlu0 %v2840, 48
          %v3052 = vpop.permute.xlu0 %3051
          %3053 = vrot.lane.b32.xlu0 %v2842, 48
          %v3054 = vpop.permute.xlu0 %3053
          %3055 = vrot.lane.b32.xlu0 %v2845, 48
          %v3056 = vpop.permute.xlu0 %3055
          %3057 = vrot.lane.b32.xlu0 %v2847, 48
          %v3058 = vpop.permute.xlu0 %3057
          %3059 = vrot.lane.b32.xlu0 %v2850, 48
          %v3060 = vpop.permute.xlu0 %3059
          %3061 = vrot.lane.b32.xlu0 %v2852, 48
          %v3062 = vpop.permute.xlu0 %3061
          %3063 = vrot.lane.b32.xlu0 %v2855, 48
          %v3064 = vpop.permute.xlu0 %3063
          %3065 = vrot.lane.b32.xlu0 %v2857, 48
          %v3066 = vpop.permute.xlu0 %3065
          %v3075 = vmul.f32 %v2945, %v3052
          %v3076 = vmul.f32 %v2960, %v3054
          %v3077 = vmul.f32 %v2975, %v3056
          %v3078 = vmul.f32 %v2990, %v3058
          %v3079 = vmul.f32 %v3005, %v3060
          %v3080 = vmul.f32 %v3020, %v3062
          %v3081 = vmul.f32 %v3035, %v3064
          %v3082 = vmul.f32 %v3050, %v3066
          %3091 = vrot.lane.b32.xlu0 %v3075, 32
          %v3092 = vpop.permute.xlu0 %3091
          %3093 = vrot.lane.b32.xlu0 %v3076, 32
          %v3094 = vpop.permute.xlu0 %3093
          %3095 = vrot.lane.b32.xlu0 %v3077, 32
          %v3096 = vpop.permute.xlu0 %3095
          %3097 = vrot.lane.b32.xlu0 %v3078, 32
          %v3098 = vpop.permute.xlu0 %3097
          %3099 = vrot.lane.b32.xlu0 %v3079, 32
          %v3100 = vpop.permute.xlu0 %3099
          %3101 = vrot.lane.b32.xlu0 %v3080, 32
          %v3102 = vpop.permute.xlu0 %3101
          %3103 = vrot.lane.b32.xlu0 %v3081, 32
          %v3104 = vpop.permute.xlu0 %3103
          %3105 = vrot.lane.b32.xlu0 %v3082, 32
          %v3106 = vpop.permute.xlu0 %3105
          %v3115 = vadd.f32 %v2840, %v3092
          %v3116 = vadd.f32 %v2842, %v3094
          %v3117 = vadd.f32 %v2845, %v3096
          %v3118 = vadd.f32 %v2847, %v3098
          %v3119 = vadd.f32 %v2850, %v3100
          %v3120 = vadd.f32 %v2852, %v3102
          %v3121 = vadd.f32 %v2855, %v3104
          %v3122 = vadd.f32 %v2857, %v3106
          %v3123 = vtanh.pop %v3115
          %v3124 = vtanh.pop %v3116
          %v3125 = vtanh.pop %v3117
          %v3126 = vtanh.pop %v3118
          %v3127 = vtanh.pop %v3119
          %v3128 = vtanh.pop %v3120
          %v3129 = vtanh.pop %v3121
          %v3130 = vtanh.pop %v3122
          %v3131 = vsub.f32 1.0, %v2945
          %v3132 = vsub.f32 1.0, %v2960
          %v3133 = vsub.f32 1.0, %v2975
          %v3134 = vsub.f32 1.0, %v2990
          %v3135 = vsub.f32 1.0, %v3005
          %v3136 = vsub.f32 1.0, %v3020
          %v3137 = vsub.f32 1.0, %v3035
          %v3138 = vsub.f32 1.0, %v3050
          %3147 = vrot.lane.b32.xlu0 %v3123, 112
          %v3148 = vpop.permute.xlu0 %3147
          %3149 = vrot.lane.b32.xlu0 %v3124, 112
          %v3150 = vpop.permute.xlu0 %3149
          %3151 = vrot.lane.b32.xlu0 %v3125, 112
          %v3152 = vpop.permute.xlu0 %3151
          %3153 = vrot.lane.b32.xlu0 %v3126, 112
          %v3154 = vpop.permute.xlu0 %3153
          %3155 = vrot.lane.b32.xlu0 %v3127, 112
          %v3156 = vpop.permute.xlu0 %3155
          %3157 = vrot.lane.b32.xlu0 %v3128, 112
          %v3158 = vpop.permute.xlu0 %3157
          %3159 = vrot.lane.b32.xlu0 %v3129, 112
          %v3160 = vpop.permute.xlu0 %3159
          %3161 = vrot.lane.b32.xlu0 %v3130, 112
          %v3162 = vpop.permute.xlu0 %3161
          %v3171 = vmul.f32 %v3131, %v3148
          %v3172 = vmul.f32 %v3132, %v3150
          %v3173 = vmul.f32 %v3133, %v3152
          %v3174 = vmul.f32 %v3134, %v3154
          %v3175 = vmul.f32 %v3135, %v3156
          %v3176 = vmul.f32 %v3136, %v3158
          %v3177 = vmul.f32 %v3137, %v3160
          %v3178 = vmul.f32 %v3138, %v3162
          %3179 = vrot.lane.b32.xlu0 %v1544, 16
          %v3180 = vpop.permute.xlu0 %3179
          %3181 = vrot.lane.b32.xlu0 %v1545, 16
          %v3182 = vpop.permute.xlu0 %3181
          %3183 = vrot.lane.b32.xlu0 %v1546, 16
          %v3184 = vpop.permute.xlu0 %3183
          %3185 = vrot.lane.b32.xlu0 %v1547, 16
          %v3186 = vpop.permute.xlu0 %3185
          %3187 = vrot.lane.b32.xlu0 %v1548, 16
          %v3188 = vpop.permute.xlu0 %3187
          %3189 = vrot.lane.b32.xlu0 %v1549, 16
          %v3190 = vpop.permute.xlu0 %3189
          %3191 = vrot.lane.b32.xlu0 %v1550, 16
          %v3192 = vpop.permute.xlu0 %3191
          %3193 = vrot.lane.b32.xlu0 %v1551, 16
          %v3194 = vpop.permute.xlu0 %3193
          %v3203 = vmul.f32 %v2945, %v3180
          %v3204 = vmul.f32 %v2960, %v3182
          %v3205 = vmul.f32 %v2975, %v3184
          %v3206 = vmul.f32 %v2990, %v3186
          %v3207 = vmul.f32 %v3005, %v3188
          %v3208 = vmul.f32 %v3020, %v3190
          %v3209 = vmul.f32 %v3035, %v3192
          %v3210 = vmul.f32 %v3050, %v3194
          %v3211 = vadd.f32 %v3171, %v3203
          %v3212 = vadd.f32 %v3172, %v3204
          %v3213 = vadd.f32 %v3173, %v3205
          %v3214 = vadd.f32 %v3174, %v3206
          %v3215 = vadd.f32 %v3175, %v3207
          %v3216 = vadd.f32 %v3176, %v3208
          %v3217 = vadd.f32 %v3177, %v3209
          %v3218 = vadd.f32 %v3178, %v3210
          %v3219 = vpack.c.bf16 %v3212, %v3211
          %v3220 = vpack.c.bf16 %v3214, %v3213
          %v3221 = vpack.c.bf16 %v3216, %v3215
          %v3222 = vpack.c.bf16 %v3218, %v3217
          %v3224 = vperm.slane %v1136, 0
          %3230 = vrot.lane.b32.xlu0 %v3219, 112
          %v3231 = vpop.permute.xlu0 %3230
          %3232 = vrot.lane.b32.xlu0 %v3220, 112
          %v3233 = vpop.permute.xlu0 %3232
          %3234 = vrot.lane.b32.xlu0 %v3221, 112
          %v3235 = vpop.permute.xlu0 %3234
          %3236 = vrot.lane.b32.xlu0 %v3222, 112
          %v3237 = vpop.permute.xlu0 %3236
          %v3240 = vunpack.c.l.b16 %v1134
          %v3241 = vunpack.c.l.b16 %v1135
          %v3242 = vpack.c.b16 %v3241, %v3240
          %vm3244 = vcmask 130048
          %v3246 = vsel %vm3244, %v3231, 0
          %v3249 = vsel %vm3244, %v3233, 0
          %v3252 = vsel %vm3244, %v3235, 0
          %v3255 = vsel %vm3244, %v3237, 0
          %3257 = vmatpush.bf16.msra.mxu0 0
          %3258 = vmatpush.bf16.msra.mxu0 0
          %3259 = vmatpush.bf16.msra.mxu0 0
          %3260 = vmatpush.bf16.msra.mxu0 0
          %3261 = vmatpush.bf16.msra.mxu0 0
          %3262 = vmatpush.bf16.msra.mxu0 0
          %3263 = vmatpush.bf16.msra.mxu0 0
          %3264 = vmatpush.bf16.msra.mxu0 %v3242
          %3265 = vmatmul.bf16.gmra.mxu0 %v3246
          %v3266 = vpop.f32.mrf.mxu0
          %v3267 = vadd.f32 %v3224, %v3266
          %v3268 = vpop.f32.mrf.mxu0
          %v3269 = vadd.f32 %v3224, %v3268
          %3270 = vmatmul.bf16.gmra.mxu0 %v3249
          %v3271 = vpop.f32.mrf.mxu0
          %v3272 = vadd.f32 %v3224, %v3271
          %v3273 = vpop.f32.mrf.mxu0
          %v3274 = vadd.f32 %v3224, %v3273
          %3275 = vmatmul.bf16.gmra.mxu0 %v3252
          %v3276 = vpop.f32.mrf.mxu0
          %v3277 = vadd.f32 %v3224, %v3276
          %v3278 = vpop.f32.mrf.mxu0
          %v3279 = vadd.f32 %v3224, %v3278
          %3280 = vmatmul.bf16.gmra.mxu0 %v3255
          %v3281 = vpop.f32.mrf.mxu0
          %v3282 = vadd.f32 %v3224, %v3281
          %v3283 = vpop.f32.mrf.mxu0
          %v3284 = vadd.f32 %v3224, %v3283
          %3285 = vdwg.mxu0
          %v3286 = vmax.f32 %v3267, 0.0
          %v3287 = vmax.f32 %v3269, 0.0
          %v3288 = vmax.f32 %v3272, 0.0
          %v3289 = vmax.f32 %v3274, 0.0
          %v3290 = vmax.f32 %v3277, 0.0
          %v3291 = vmax.f32 %v3279, 0.0
          %v3292 = vmax.f32 %v3282, 0.0
          %v3293 = vmax.f32 %v3284, 0.0
          %3302 = vrot.lane.b32.xlu0 %v3286, 60
          %v3303 = vpop.permute.xlu0 %3302
          %3304 = vrot.lane.b32.xlu0 %v3287, 60
          %v3305 = vpop.permute.xlu0 %3304
          %3306 = vrot.lane.b32.xlu0 %v3288, 60
          %v3307 = vpop.permute.xlu0 %3306
          %3308 = vrot.lane.b32.xlu0 %v3289, 60
          %v3309 = vpop.permute.xlu0 %3308
          %3310 = vrot.lane.b32.xlu0 %v3290, 60
          %v3311 = vpop.permute.xlu0 %3310
          %3312 = vrot.lane.b32.xlu0 %v3291, 60
          %v3313 = vpop.permute.xlu0 %3312
          %3314 = vrot.lane.b32.xlu0 %v3292, 60
          %v3315 = vpop.permute.xlu0 %3314
          %3316 = vrot.lane.b32.xlu0 %v3293, 60
          %v3317 = vpop.permute.xlu0 %3316
          %3334 = vrot.lane.b32.xlu0 %v1552, 64
          %v3335 = vpop.permute.xlu0 %3334
          %3336 = vrot.lane.b32.xlu0 %v1553, 64
          %v3337 = vpop.permute.xlu0 %3336
          %3338 = vrot.lane.b32.xlu0 %v1554, 64
          %v3339 = vpop.permute.xlu0 %3338
          %3340 = vrot.lane.b32.xlu0 %v1555, 64
          %v3341 = vpop.permute.xlu0 %3340
          %3342 = vrot.lane.b32.xlu0 %v1556, 64
          %v3343 = vpop.permute.xlu0 %3342
          %3344 = vrot.lane.b32.xlu0 %v1557, 64
          %v3345 = vpop.permute.xlu0 %3344
          %3346 = vrot.lane.b32.xlu0 %v1558, 64
          %v3347 = vpop.permute.xlu0 %3346
          %3348 = vrot.lane.b32.xlu0 %v1559, 64
          %v3349 = vpop.permute.xlu0 %3348
          %v3358 = vsel %vm2266, %v2226, %v3303
          %v3359 = vsel %vm2266, %v2227, %v3305
          %v3360 = vsel %vm2266, %v2228, %v3307
          %v3361 = vsel %vm2266, %v2229, %v3309
          %v3362 = vsel %vm2266, %v2230, %v3311
          %v3363 = vsel %vm2266, %v2231, %v3313
          %v3364 = vsel %vm2266, %v2232, %v3315
          %v3365 = vsel %vm2266, %v2233, %v3317
          %v3366 = vsel %vm1265, %v3358, %v3335
          %v3367 = vsel %vm1265, %v3359, %v3337
          %v3368 = vsel %vm1265, %v3360, %v3339
          %v3369 = vsel %vm1265, %v3361, %v3341
          %v3370 = vsel %vm1265, %v3362, %v3343
          %v3371 = vsel %vm1265, %v3363, %v3345
          %v3372 = vsel %vm1265, %v3364, %v3347
          %v3373 = vsel %vm1265, %v3365, %v3349
          %v3374 = vpack.c.bf16 %v3367, %v3366
          %v3375 = vpack.c.bf16 %v3369, %v3368
          %v3376 = vpack.c.bf16 %v3371, %v3370
          %v3377 = vpack.c.bf16 %v3373, %v3372
          %v3379 = vperm.slane %v1133, 0
          %v3390 = vunpack.c.l.b16 %v1124
          %v3391 = vunpack.c.l.b16 %v1125
          %v3392 = vunpack.c.l.b16 %v1126
          %v3393 = vunpack.c.l.b16 %v1127
          %v3394 = vunpack.c.l.b16 %v1128
          %v3395 = vunpack.c.l.b16 %v1129
          %v3396 = vunpack.c.l.b16 %v1130
          %v3397 = vunpack.c.l.b16 %v1131
          %v3398 = vunpack.c.l.b16 %v1132
          %v3399 = vpack.c.b16 %v3391, %v3390
          %v3400 = vpack.c.b16 %v3393, %v3392
          %v3401 = vpack.c.b16 %v3395, %v3394
          %v3402 = vpack.c.b16 %v3397, %v3396
          %v3403 = vpack.c.b16 %v3398, %v3398
          %vm3408 = vcmask 556032
          %v3410 = vsel %vm3408, %v3374, 0
          %v3413 = vsel %vm3408, %v3375, 0
          %v3416 = vsel %vm3408, %v3376, 0
          %v3419 = vsel %vm3408, %v3377, 0
          %v3422 = vsel %vm2129, %v3403, 0
          %3424 = vmatpush.bf16.msra.mxu0 0
          %3425 = vmatpush.bf16.msra.mxu0 0
          %3426 = vmatpush.bf16.msra.mxu0 0
          %3427 = vmatpush.bf16.msra.mxu0 %v3422
          %3428 = vmatpush.bf16.msra.mxu0 %v3402
          %3429 = vmatpush.bf16.msra.mxu0 %v3401
          %3430 = vmatpush.bf16.msra.mxu0 %v3400
          %3431 = vmatpush.bf16.msra.mxu0 %v3399
          %3432 = vmatmul.bf16.gmra.mxu0 %v3410
          %v3433 = vpop.f32.mrf.mxu0
          %v3434 = vadd.f32 %v3379, %v3433
          %v3435 = vpop.f32.mrf.mxu0
          %v3436 = vadd.f32 %v3379, %v3435
          %3437 = vmatmul.bf16.gmra.mxu0 %v3413
          %v3438 = vpop.f32.mrf.mxu0
          %v3439 = vadd.f32 %v3379, %v3438
          %v3440 = vpop.f32.mrf.mxu0
          %v3441 = vadd.f32 %v3379, %v3440
          %3442 = vmatmul.bf16.gmra.mxu0 %v3416
          %v3443 = vpop.f32.mrf.mxu0
          %v3444 = vadd.f32 %v3379, %v3443
          %v3445 = vpop.f32.mrf.mxu0
          %v3446 = vadd.f32 %v3379, %v3445
          %3447 = vmatmul.bf16.gmra.mxu0 %v3419
          %v3448 = vpop.f32.mrf.mxu0
          %v3449 = vadd.f32 %v3379, %v3448
          %v3450 = vpop.f32.mrf.mxu0
          %v3451 = vadd.f32 %v3379, %v3450
          %3452 = vdwg.mxu0
          %3461 = vrot.lane.b32.xlu0 %v3434, 116
          %v3462 = vpop.permute.xlu0 %3461
          %3463 = vrot.lane.b32.xlu0 %v3436, 116
          %v3464 = vpop.permute.xlu0 %3463
          %3465 = vrot.lane.b32.xlu0 %v3439, 116
          %v3466 = vpop.permute.xlu0 %3465
          %3467 = vrot.lane.b32.xlu0 %v3441, 116
          %v3468 = vpop.permute.xlu0 %3467
          %3469 = vrot.lane.b32.xlu0 %v3444, 116
          %v3470 = vpop.permute.xlu0 %3469
          %3471 = vrot.lane.b32.xlu0 %v3446, 116
          %v3472 = vpop.permute.xlu0 %3471
          %3473 = vrot.lane.b32.xlu0 %v3449, 116
          %v3474 = vpop.permute.xlu0 %3473
          %3475 = vrot.lane.b32.xlu0 %v3451, 116
          %v3476 = vpop.permute.xlu0 %3475
          %v3485 = vadd.f32 %v3434, %v3462
          %v3486 = vadd.f32 %v3436, %v3464
          %v3487 = vadd.f32 %v3439, %v3466
          %v3488 = vadd.f32 %v3441, %v3468
          %v3489 = vadd.f32 %v3444, %v3470
          %v3490 = vadd.f32 %v3446, %v3472
          %v3491 = vadd.f32 %v3449, %v3474
          %v3492 = vadd.f32 %v3451, %v3476
          %v3493 = vsub.f32 0.0, %v3485
          %v3494 = vsub.f32 0.0, %v3486
          %v3495 = vsub.f32 0.0, %v3487
          %v3496 = vsub.f32 0.0, %v3488
          %v3497 = vsub.f32 0.0, %v3489
          %v3498 = vsub.f32 0.0, %v3490
          %v3499 = vsub.f32 0.0, %v3491
          %v3500 = vsub.f32 0.0, %v3492
          %v3501 = vmul.f32 %v3493, 1.442695
          %v3502 = vpow.pop %v3501
          %v3503 = vmul.f32 %v3494, 1.442695
          %v3504 = vpow.pop %v3503
          %v3505 = vmul.f32 %v3495, 1.442695
          %v3506 = vpow.pop %v3505
          %v3507 = vmul.f32 %v3496, 1.442695
          %v3508 = vpow.pop %v3507
          %v3509 = vmul.f32 %v3497, 1.442695
          %v3510 = vpow.pop %v3509
          %v3511 = vmul.f32 %v3498, 1.442695
          %v3512 = vpow.pop %v3511
          %v3513 = vmul.f32 %v3499, 1.442695
          %v3514 = vpow.pop %v3513
          %v3515 = vmul.f32 %v3500, 1.442695
          %v3516 = vpow.pop %v3515
          %v3517 = vadd.f32 %v3502, 1.0
          %v3518 = vadd.f32 %v3504, 1.0
          %v3519 = vadd.f32 %v3506, 1.0
          %v3520 = vadd.f32 %v3508, 1.0
          %v3521 = vadd.f32 %v3510, 1.0
          %v3522 = vadd.f32 %v3512, 1.0
          %v3523 = vadd.f32 %v3514, 1.0
          %v3524 = vadd.f32 %v3516, 1.0
          %v3525 = vrcp.pop %v3517
          %v3526 = vmul.f32 %v3517, %v3525
          %v3527 = vsub.f32 1.0, %v3526
          %v3528 = vmul.f32 %v3525, %v3527
          %v3529 = vadd.f32 %v3525, %v3528
          %vm3530 = vweird.f32 %v3517
          %vm3531 = vweird.f32 %v3525
          %vm3532 = vmor %vm3530, %vm3531
          %v3533 = vsel %vm3532, %v3525, %v3529
          %v3534 = vand.u32 2147483647, %v3517
          %vm3535 = vcmp.eq.f32.partialorder %v3534, 8.507059e+37
          %v3536 = vand.u32 %v3517, 2147483648
          %v3537 = vor.u32 1.1754944e-38, %v3536
          %v3538 = vsel %vm3535, %v3537, %v3533
          %v3539 = vmul.f32 1.0, %v3538
          %v3540 = vrcp.pop %v3518
          %v3541 = vmul.f32 %v3518, %v3540
          %v3542 = vsub.f32 1.0, %v3541
          %v3543 = vmul.f32 %v3540, %v3542
          %v3544 = vadd.f32 %v3540, %v3543
          %vm3545 = vweird.f32 %v3518
          %vm3546 = vweird.f32 %v3540
          %vm3547 = vmor %vm3545, %vm3546
          %v3548 = vsel %vm3547, %v3540, %v3544
          %v3549 = vand.u32 2147483647, %v3518
          %vm3550 = vcmp.eq.f32.partialorder %v3549, 8.507059e+37
          %v3551 = vand.u32 %v3518, 2147483648
          %v3552 = vor.u32 1.1754944e-38, %v3551
          %v3553 = vsel %vm3550, %v3552, %v3548
          %v3554 = vmul.f32 1.0, %v3553
          %v3555 = vrcp.pop %v3519
          %v3556 = vmul.f32 %v3519, %v3555
          %v3557 = vsub.f32 1.0, %v3556
          %v3558 = vmul.f32 %v3555, %v3557
          %v3559 = vadd.f32 %v3555, %v3558
          %vm3560 = vweird.f32 %v3519
          %vm3561 = vweird.f32 %v3555
          %vm3562 = vmor %vm3560, %vm3561
          %v3563 = vsel %vm3562, %v3555, %v3559
          %v3564 = vand.u32 2147483647, %v3519
          %vm3565 = vcmp.eq.f32.partialorder %v3564, 8.507059e+37
          %v3566 = vand.u32 %v3519, 2147483648
          %v3567 = vor.u32 1.1754944e-38, %v3566
          %v3568 = vsel %vm3565, %v3567, %v3563
          %v3569 = vmul.f32 1.0, %v3568
          %v3570 = vrcp.pop %v3520
          %v3571 = vmul.f32 %v3520, %v3570
          %v3572 = vsub.f32 1.0, %v3571
          %v3573 = vmul.f32 %v3570, %v3572
          %v3574 = vadd.f32 %v3570, %v3573
          %vm3575 = vweird.f32 %v3520
          %vm3576 = vweird.f32 %v3570
          %vm3577 = vmor %vm3575, %vm3576
          %v3578 = vsel %vm3577, %v3570, %v3574
          %v3579 = vand.u32 2147483647, %v3520
          %vm3580 = vcmp.eq.f32.partialorder %v3579, 8.507059e+37
          %v3581 = vand.u32 %v3520, 2147483648
          %v3582 = vor.u32 1.1754944e-38, %v3581
          %v3583 = vsel %vm3580, %v3582, %v3578
          %v3584 = vmul.f32 1.0, %v3583
          %v3585 = vrcp.pop %v3521
          %v3586 = vmul.f32 %v3521, %v3585
          %v3587 = vsub.f32 1.0, %v3586
          %v3588 = vmul.f32 %v3585, %v3587
          %v3589 = vadd.f32 %v3585, %v3588
          %vm3590 = vweird.f32 %v3521
          %vm3591 = vweird.f32 %v3585
          %vm3592 = vmor %vm3590, %vm3591
          %v3593 = vsel %vm3592, %v3585, %v3589
          %v3594 = vand.u32 2147483647, %v3521
          %vm3595 = vcmp.eq.f32.partialorder %v3594, 8.507059e+37
          %v3596 = vand.u32 %v3521, 2147483648
          %v3597 = vor.u32 1.1754944e-38, %v3596
          %v3598 = vsel %vm3595, %v3597, %v3593
          %v3599 = vmul.f32 1.0, %v3598
          %v3600 = vrcp.pop %v3522
          %v3601 = vmul.f32 %v3522, %v3600
          %v3602 = vsub.f32 1.0, %v3601
          %v3603 = vmul.f32 %v3600, %v3602
          %v3604 = vadd.f32 %v3600, %v3603
          %vm3605 = vweird.f32 %v3522
          %vm3606 = vweird.f32 %v3600
          %vm3607 = vmor %vm3605, %vm3606
          %v3608 = vsel %vm3607, %v3600, %v3604
          %v3609 = vand.u32 2147483647, %v3522
          %vm3610 = vcmp.eq.f32.partialorder %v3609, 8.507059e+37
          %v3611 = vand.u32 %v3522, 2147483648
          %v3612 = vor.u32 1.1754944e-38, %v3611
          %v3613 = vsel %vm3610, %v3612, %v3608
          %v3614 = vmul.f32 1.0, %v3613
          %v3615 = vrcp.pop %v3523
          %v3616 = vmul.f32 %v3523, %v3615
          %v3617 = vsub.f32 1.0, %v3616
          %v3618 = vmul.f32 %v3615, %v3617
          %v3619 = vadd.f32 %v3615, %v3618
          %vm3620 = vweird.f32 %v3523
          %vm3621 = vweird.f32 %v3615
          %vm3622 = vmor %vm3620, %vm3621
          %v3623 = vsel %vm3622, %v3615, %v3619
          %v3624 = vand.u32 2147483647, %v3523
          %vm3625 = vcmp.eq.f32.partialorder %v3624, 8.507059e+37
          %v3626 = vand.u32 %v3523, 2147483648
          %v3627 = vor.u32 1.1754944e-38, %v3626
          %v3628 = vsel %vm3625, %v3627, %v3623
          %v3629 = vmul.f32 1.0, %v3628
          %v3630 = vrcp.pop %v3524
          %v3631 = vmul.f32 %v3524, %v3630
          %v3632 = vsub.f32 1.0, %v3631
          %v3633 = vmul.f32 %v3630, %v3632
          %v3634 = vadd.f32 %v3630, %v3633
          %vm3635 = vweird.f32 %v3524
          %vm3636 = vweird.f32 %v3630
          %vm3637 = vmor %vm3635, %vm3636
          %v3638 = vsel %vm3637, %v3630, %v3634
          %v3639 = vand.u32 2147483647, %v3524
          %vm3640 = vcmp.eq.f32.partialorder %v3639, 8.507059e+37
          %v3641 = vand.u32 %v3524, 2147483648
          %v3642 = vor.u32 1.1754944e-38, %v3641
          %v3643 = vsel %vm3640, %v3642, %v3638
          %v3644 = vmul.f32 1.0, %v3643
          %3645 = vrot.lane.b32.xlu0 %v3434, 108
          %v3646 = vpop.permute.xlu0 %3645
          %3647 = vrot.lane.b32.xlu0 %v3436, 108
          %v3648 = vpop.permute.xlu0 %3647
          %3649 = vrot.lane.b32.xlu0 %v3439, 108
          %v3650 = vpop.permute.xlu0 %3649
          %3651 = vrot.lane.b32.xlu0 %v3441, 108
          %v3652 = vpop.permute.xlu0 %3651
          %3653 = vrot.lane.b32.xlu0 %v3444, 108
          %v3654 = vpop.permute.xlu0 %3653
          %3655 = vrot.lane.b32.xlu0 %v3446, 108
          %v3656 = vpop.permute.xlu0 %3655
          %3657 = vrot.lane.b32.xlu0 %v3449, 108
          %v3658 = vpop.permute.xlu0 %3657
          %3659 = vrot.lane.b32.xlu0 %v3451, 108
          %v3660 = vpop.permute.xlu0 %3659
          %v3669 = vmul.f32 %v3539, %v3646
          %v3670 = vmul.f32 %v3554, %v3648
          %v3671 = vmul.f32 %v3569, %v3650
          %v3672 = vmul.f32 %v3584, %v3652
          %v3673 = vmul.f32 %v3599, %v3654
          %v3674 = vmul.f32 %v3614, %v3656
          %v3675 = vmul.f32 %v3629, %v3658
          %v3676 = vmul.f32 %v3644, %v3660
          %3685 = vrot.lane.b32.xlu0 %v3669, 8
          %v3686 = vpop.permute.xlu0 %3685
          %3687 = vrot.lane.b32.xlu0 %v3670, 8
          %v3688 = vpop.permute.xlu0 %3687
          %3689 = vrot.lane.b32.xlu0 %v3671, 8
          %v3690 = vpop.permute.xlu0 %3689
          %3691 = vrot.lane.b32.xlu0 %v3672, 8
          %v3692 = vpop.permute.xlu0 %3691
          %3693 = vrot.lane.b32.xlu0 %v3673, 8
          %v3694 = vpop.permute.xlu0 %3693
          %3695 = vrot.lane.b32.xlu0 %v3674, 8
          %v3696 = vpop.permute.xlu0 %3695
          %3697 = vrot.lane.b32.xlu0 %v3675, 8
          %v3698 = vpop.permute.xlu0 %3697
          %3699 = vrot.lane.b32.xlu0 %v3676, 8
          %v3700 = vpop.permute.xlu0 %3699
          %v3709 = vadd.f32 %v3434, %v3686
          %v3710 = vadd.f32 %v3436, %v3688
          %v3711 = vadd.f32 %v3439, %v3690
          %v3712 = vadd.f32 %v3441, %v3692
          %v3713 = vadd.f32 %v3444, %v3694
          %v3714 = vadd.f32 %v3446, %v3696
          %v3715 = vadd.f32 %v3449, %v3698
          %v3716 = vadd.f32 %v3451, %v3700
          %v3717 = vtanh.pop %v3709
          %v3718 = vtanh.pop %v3710
          %v3719 = vtanh.pop %v3711
          %v3720 = vtanh.pop %v3712
          %v3721 = vtanh.pop %v3713
          %v3722 = vtanh.pop %v3714
          %v3723 = vtanh.pop %v3715
          %v3724 = vtanh.pop %v3716
          %v3725 = vsub.f32 1.0, %v3539
          %v3726 = vsub.f32 1.0, %v3554
          %v3727 = vsub.f32 1.0, %v3569
          %v3728 = vsub.f32 1.0, %v3584
          %v3729 = vsub.f32 1.0, %v3599
          %v3730 = vsub.f32 1.0, %v3614
          %v3731 = vsub.f32 1.0, %v3629
          %v3732 = vsub.f32 1.0, %v3644
          %3741 = vrot.lane.b32.xlu0 %v3717, 124
          %v3742 = vpop.permute.xlu0 %3741
          %3743 = vrot.lane.b32.xlu0 %v3718, 124
          %v3744 = vpop.permute.xlu0 %3743
          %3745 = vrot.lane.b32.xlu0 %v3719, 124
          %v3746 = vpop.permute.xlu0 %3745
          %3747 = vrot.lane.b32.xlu0 %v3720, 124
          %v3748 = vpop.permute.xlu0 %3747
          %3749 = vrot.lane.b32.xlu0 %v3721, 124
          %v3750 = vpop.permute.xlu0 %3749
          %3751 = vrot.lane.b32.xlu0 %v3722, 124
          %v3752 = vpop.permute.xlu0 %3751
          %3753 = vrot.lane.b32.xlu0 %v3723, 124
          %v3754 = vpop.permute.xlu0 %3753
          %3755 = vrot.lane.b32.xlu0 %v3724, 124
          %v3756 = vpop.permute.xlu0 %3755
          %v3765 = vmul.f32 %v3725, %v3742
          %v3766 = vmul.f32 %v3726, %v3744
          %v3767 = vmul.f32 %v3727, %v3746
          %v3768 = vmul.f32 %v3728, %v3748
          %v3769 = vmul.f32 %v3729, %v3750
          %v3770 = vmul.f32 %v3730, %v3752
          %v3771 = vmul.f32 %v3731, %v3754
          %v3772 = vmul.f32 %v3732, %v3756
          %3773 = vrot.lane.b32.xlu0 %v1552, 4
          %v3774 = vpop.permute.xlu0 %3773
          %3775 = vrot.lane.b32.xlu0 %v1553, 4
          %v3776 = vpop.permute.xlu0 %3775
          %3777 = vrot.lane.b32.xlu0 %v1554, 4
          %v3778 = vpop.permute.xlu0 %3777
          %3779 = vrot.lane.b32.xlu0 %v1555, 4
          %v3780 = vpop.permute.xlu0 %3779
          %3781 = vrot.lane.b32.xlu0 %v1556, 4
          %v3782 = vpop.permute.xlu0 %3781
          %3783 = vrot.lane.b32.xlu0 %v1557, 4
          %v3784 = vpop.permute.xlu0 %3783
          %3785 = vrot.lane.b32.xlu0 %v1558, 4
          %v3786 = vpop.permute.xlu0 %3785
          %3787 = vrot.lane.b32.xlu0 %v1559, 4
          %v3788 = vpop.permute.xlu0 %3787
          %v3797 = vmul.f32 %v3539, %v3774
          %v3798 = vmul.f32 %v3554, %v3776
          %v3799 = vmul.f32 %v3569, %v3778
          %v3800 = vmul.f32 %v3584, %v3780
          %v3801 = vmul.f32 %v3599, %v3782
          %v3802 = vmul.f32 %v3614, %v3784
          %v3803 = vmul.f32 %v3629, %v3786
          %v3804 = vmul.f32 %v3644, %v3788
          %v3805 = vadd.f32 %v3765, %v3797
          %v3806 = vadd.f32 %v3766, %v3798
          %v3807 = vadd.f32 %v3767, %v3799
          %v3808 = vadd.f32 %v3768, %v3800
          %v3809 = vadd.f32 %v3769, %v3801
          %v3810 = vadd.f32 %v3770, %v3802
          %v3811 = vadd.f32 %v3771, %v3803
          %v3812 = vadd.f32 %v3772, %v3804
          %3821 = vrot.lane.b32.xlu0 %v3211, 112
          %v3822 = vpop.permute.xlu0 %3821
          %3823 = vrot.lane.b32.xlu0 %v3212, 112
          %v3824 = vpop.permute.xlu0 %3823
          %3825 = vrot.lane.b32.xlu0 %v3213, 112
          %v3826 = vpop.permute.xlu0 %3825
          %3827 = vrot.lane.b32.xlu0 %v3214, 112
          %v3828 = vpop.permute.xlu0 %3827
          %3829 = vrot.lane.b32.xlu0 %v3215, 112
          %v3830 = vpop.permute.xlu0 %3829
          %3831 = vrot.lane.b32.xlu0 %v3216, 112
          %v3832 = vpop.permute.xlu0 %3831
          %3833 = vrot.lane.b32.xlu0 %v3217, 112
          %v3834 = vpop.permute.xlu0 %3833
          %3835 = vrot.lane.b32.xlu0 %v3218, 112
          %v3836 = vpop.permute.xlu0 %3835
          %3853 = vrot.lane.b32.xlu0 %v3805, 12
          %v3854 = vpop.permute.xlu0 %3853
          %3855 = vrot.lane.b32.xlu0 %v3806, 12
          %v3856 = vpop.permute.xlu0 %3855
          %3857 = vrot.lane.b32.xlu0 %v3807, 12
          %v3858 = vpop.permute.xlu0 %3857
          %3859 = vrot.lane.b32.xlu0 %v3808, 12
          %v3860 = vpop.permute.xlu0 %3859
          %3861 = vrot.lane.b32.xlu0 %v3809, 12
          %v3862 = vpop.permute.xlu0 %3861
          %3863 = vrot.lane.b32.xlu0 %v3810, 12
          %v3864 = vpop.permute.xlu0 %3863
          %3865 = vrot.lane.b32.xlu0 %v3811, 12
          %v3866 = vpop.permute.xlu0 %3865
          %3867 = vrot.lane.b32.xlu0 %v3812, 12
          %v3868 = vpop.permute.xlu0 %3867
          %v3877 = vsel %vm3244, %v3822, %v3854
          %v3878 = vsel %vm3244, %v3824, %v3856
          %v3879 = vsel %vm3244, %v3826, %v3858
          %v3880 = vsel %vm3244, %v3828, %v3860
          %v3881 = vsel %vm3244, %v3830, %v3862
          %v3882 = vsel %vm3244, %v3832, %v3864
          %v3883 = vsel %vm3244, %v3834, %v3866
          %v3884 = vsel %vm3244, %v3836, %v3868
          %v3885 = vpack.c.bf16 %v3878, %v3877
          %v3886 = vpack.c.bf16 %v3880, %v3879
          %v3887 = vpack.c.bf16 %v3882, %v3881
          %v3888 = vpack.c.bf16 %v3884, %v3883
          %v3890 = vperm.slane %v1149, 0
          %v3891 = vperm.slane %v1149, 1
          %v3892 = vperm.slane %v1149, 2
          %v3893 = vperm.slane %v1149, 3
          %v3894 = vperm.slane %v1149, 4
          %v3895 = vperm.slane %v1149, 5
          %v3896 = vperm.slane %v1149, 6
          %v3897 = vperm.slane %v1149, 7
          %v3918 = vunpack.c.l.b16 %v1137
          %v3919 = vunpack.c.h.b16 %v1137
          %v3920 = vunpack.c.l.b16 %v1138
          %v3921 = vunpack.c.h.b16 %v1138
          %v3922 = vunpack.c.l.b16 %v1139
          %v3923 = vunpack.c.h.b16 %v1139
          %v3924 = vunpack.c.l.b16 %v1140
          %v3925 = vunpack.c.h.b16 %v1140
          %v3926 = vunpack.c.l.b16 %v1141
          %v3927 = vunpack.c.h.b16 %v1141
          %v3928 = vunpack.c.l.b16 %v1142
          %v3929 = vunpack.c.h.b16 %v1142
          %v3930 = vunpack.c.l.b16 %v1143
          %v3931 = vunpack.c.h.b16 %v1143
          %v3932 = vunpack.c.l.b16 %v1144
          %v3933 = vunpack.c.h.b16 %v1144
          %v3934 = vunpack.c.l.b16 %v1145
          %v3935 = vunpack.c.h.b16 %v1145
          %v3936 = vunpack.c.l.b16 %v1146
          %v3937 = vunpack.c.h.b16 %v1146
          %v3938 = vunpack.c.l.b16 %v1147
          %v3939 = vunpack.c.h.b16 %v1147
          %v3940 = vunpack.c.l.b16 %v1148
          %v3941 = vunpack.c.h.b16 %v1148
          %v3942 = vpack.c.b16 %v3926, %v3918
          %v3943 = vpack.c.b16 %v3927, %v3919
          %v3944 = vpack.c.b16 %v3928, %v3920
          %v3945 = vpack.c.b16 %v3929, %v3921
          %v3946 = vpack.c.b16 %v3930, %v3922
          %v3947 = vpack.c.b16 %v3931, %v3923
          %v3948 = vpack.c.b16 %v3932, %v3924
          %v3949 = vpack.c.b16 %v3933, %v3925
          %v3950 = vpack.c.b16 %v3934, %v3934
          %v3951 = vpack.c.b16 %v3935, %v3935
          %v3952 = vpack.c.b16 %v3936, %v3936
          %v3953 = vpack.c.b16 %v3937, %v3937
          %v3954 = vpack.c.b16 %v3938, %v3938
          %v3955 = vpack.c.b16 %v3939, %v3939
          %v3956 = vpack.c.b16 %v3940, %v3940
          %v3957 = vpack.c.b16 %v3941, %v3941
          %vm3966 = vcmask 162816
          %v3968 = vsel %vm3966, %v3885, 0
          %v3971 = vsel %vm3966, %v3886, 0
          %v3974 = vsel %vm3966, %v3887, 0
          %v3977 = vsel %vm3966, %v3888, 0
          %v3980 = vsel %vm2129, %v3950, 0
          %v3983 = vsel %vm2129, %v3951, 0
          %v3986 = vsel %vm2129, %v3952, 0
          %v3989 = vsel %vm2129, %v3953, 0
          %v3992 = vsel %vm2129, %v3954, 0
          %v3995 = vsel %vm2129, %v3955, 0
          %v3998 = vsel %vm2129, %v3956, 0
          %v4001 = vsel %vm2129, %v3957, 0
          %4003 = vmatpush.bf16.msra.mxu0 0
          %4004 = vmatpush.bf16.msra.mxu0 0
          %4005 = vmatpush.bf16.msra.mxu0 0
          %4006 = vmatpush.bf16.msra.mxu0 0
          %4007 = vmatpush.bf16.msra.mxu0 0
          %4008 = vmatpush.bf16.msra.mxu0 0
          %4009 = vmatpush.bf16.msra.mxu0 %v3980
          %4010 = vmatpush.bf16.msra.mxu0 %v3942
          %4011 = vmatmul.bf16.gmra.mxu0 %v3968
          %v4012 = vpop.f32.mrf.mxu0
          %v4013 = vadd.f32 %v3890, %v4012
          %v4014 = vpop.f32.mrf.mxu0
          %v4015 = vadd.f32 %v3890, %v4014
          %4016 = vmatmul.bf16.gmra.mxu0 %v3971
          %v4017 = vpop.f32.mrf.mxu0
          %v4018 = vadd.f32 %v3890, %v4017
          %v4019 = vpop.f32.mrf.mxu0
          %v4020 = vadd.f32 %v3890, %v4019
          %4021 = vmatmul.bf16.gmra.mxu0 %v3974
          %v4022 = vpop.f32.mrf.mxu0
          %v4023 = vadd.f32 %v3890, %v4022
          %v4024 = vpop.f32.mrf.mxu0
          %v4025 = vadd.f32 %v3890, %v4024
          %4026 = vmatmul.bf16.gmra.mxu0 %v3977
          %v4027 = vpop.f32.mrf.mxu0
          %v4028 = vadd.f32 %v3890, %v4027
          %v4029 = vpop.f32.mrf.mxu0
          %v4030 = vadd.f32 %v3890, %v4029
          %4031 = vdwg.mxu0
          %4032 = vmatpush.bf16.msra.mxu0 0
          %4033 = vmatpush.bf16.msra.mxu0 0
          %4034 = vmatpush.bf16.msra.mxu0 0
          %4035 = vmatpush.bf16.msra.mxu0 0
          %4036 = vmatpush.bf16.msra.mxu0 0
          %4037 = vmatpush.bf16.msra.mxu0 0
          %4038 = vmatpush.bf16.msra.mxu0 %v3983
          %4039 = vmatpush.bf16.msra.mxu0 %v3943
          %4040 = vmatmul.bf16.gmra.mxu0 %v3968
          %v4041 = vpop.f32.mrf.mxu0
          %v4042 = vadd.f32 %v3891, %v4041
          %v4043 = vpop.f32.mrf.mxu0
          %v4044 = vadd.f32 %v3891, %v4043
          %4045 = vmatmul.bf16.gmra.mxu0 %v3971
          %v4046 = vpop.f32.mrf.mxu0
          %v4047 = vadd.f32 %v3891, %v4046
          %v4048 = vpop.f32.mrf.mxu0
          %v4049 = vadd.f32 %v3891, %v4048
          %4050 = vmatmul.bf16.gmra.mxu0 %v3974
          %v4051 = vpop.f32.mrf.mxu0
          %v4052 = vadd.f32 %v3891, %v4051
          %v4053 = vpop.f32.mrf.mxu0
          %v4054 = vadd.f32 %v3891, %v4053
          %4055 = vmatmul.bf16.gmra.mxu0 %v3977
          %v4056 = vpop.f32.mrf.mxu0
          %v4057 = vadd.f32 %v3891, %v4056
          %v4058 = vpop.f32.mrf.mxu0
          %v4059 = vadd.f32 %v3891, %v4058
          %4060 = vdwg.mxu0
          %4061 = vmatpush.bf16.msra.mxu0 0
          %4062 = vmatpush.bf16.msra.mxu0 0
          %4063 = vmatpush.bf16.msra.mxu0 0
          %4064 = vmatpush.bf16.msra.mxu0 0
          %4065 = vmatpush.bf16.msra.mxu0 0
          %4066 = vmatpush.bf16.msra.mxu0 0
          %4067 = vmatpush.bf16.msra.mxu0 %v3986
          %4068 = vmatpush.bf16.msra.mxu0 %v3944
          %4069 = vmatmul.bf16.gmra.mxu0 %v3968
          %v4070 = vpop.f32.mrf.mxu0
          %v4071 = vadd.f32 %v3892, %v4070
          %v4072 = vpop.f32.mrf.mxu0
          %v4073 = vadd.f32 %v3892, %v4072
          %4074 = vmatmul.bf16.gmra.mxu0 %v3971
          %v4075 = vpop.f32.mrf.mxu0
          %v4076 = vadd.f32 %v3892, %v4075
          %v4077 = vpop.f32.mrf.mxu0
          %v4078 = vadd.f32 %v3892, %v4077
          %4079 = vmatmul.bf16.gmra.mxu0 %v3974
          %v4080 = vpop.f32.mrf.mxu0
          %v4081 = vadd.f32 %v3892, %v4080
          %v4082 = vpop.f32.mrf.mxu0
          %v4083 = vadd.f32 %v3892, %v4082
          %4084 = vmatmul.bf16.gmra.mxu0 %v3977
          %v4085 = vpop.f32.mrf.mxu0
          %v4086 = vadd.f32 %v3892, %v4085
          %v4087 = vpop.f32.mrf.mxu0
          %v4088 = vadd.f32 %v3892, %v4087
          %4089 = vdwg.mxu0
          %4090 = vmatpush.bf16.msra.mxu0 0
          %4091 = vmatpush.bf16.msra.mxu0 0
          %4092 = vmatpush.bf16.msra.mxu0 0
          %4093 = vmatpush.bf16.msra.mxu0 0
          %4094 = vmatpush.bf16.msra.mxu0 0
          %4095 = vmatpush.bf16.msra.mxu0 0
          %4096 = vmatpush.bf16.msra.mxu0 %v3989
          %4097 = vmatpush.bf16.msra.mxu0 %v3945
          %4098 = vmatmul.bf16.gmra.mxu0 %v3968
          %v4099 = vpop.f32.mrf.mxu0
          %v4100 = vadd.f32 %v3893, %v4099
          %v4101 = vpop.f32.mrf.mxu0
          %v4102 = vadd.f32 %v3893, %v4101
          %4103 = vmatmul.bf16.gmra.mxu0 %v3971
          %v4104 = vpop.f32.mrf.mxu0
          %v4105 = vadd.f32 %v3893, %v4104
          %v4106 = vpop.f32.mrf.mxu0
          %v4107 = vadd.f32 %v3893, %v4106
          %4108 = vmatmul.bf16.gmra.mxu0 %v3974
          %v4109 = vpop.f32.mrf.mxu0
          %v4110 = vadd.f32 %v3893, %v4109
          %v4111 = vpop.f32.mrf.mxu0
          %v4112 = vadd.f32 %v3893, %v4111
          %4113 = vmatmul.bf16.gmra.mxu0 %v3977
          %v4114 = vpop.f32.mrf.mxu0
          %v4115 = vadd.f32 %v3893, %v4114
          %v4116 = vpop.f32.mrf.mxu0
          %v4117 = vadd.f32 %v3893, %v4116
          %4118 = vdwg.mxu0
          %4119 = vmatpush.bf16.msra.mxu0 0
          %4120 = vmatpush.bf16.msra.mxu0 0
          %4121 = vmatpush.bf16.msra.mxu0 0
          %4122 = vmatpush.bf16.msra.mxu0 0
          %4123 = vmatpush.bf16.msra.mxu0 0
          %4124 = vmatpush.bf16.msra.mxu0 0
          %4125 = vmatpush.bf16.msra.mxu0 %v3992
          %4126 = vmatpush.bf16.msra.mxu0 %v3946
          %4127 = vmatmul.bf16.gmra.mxu0 %v3968
          %v4128 = vpop.f32.mrf.mxu0
          %v4129 = vadd.f32 %v3894, %v4128
          %v4130 = vpop.f32.mrf.mxu0
          %v4131 = vadd.f32 %v3894, %v4130
          %4132 = vmatmul.bf16.gmra.mxu0 %v3971
          %v4133 = vpop.f32.mrf.mxu0
          %v4134 = vadd.f32 %v3894, %v4133
          %v4135 = vpop.f32.mrf.mxu0
          %v4136 = vadd.f32 %v3894, %v4135
          %4137 = vmatmul.bf16.gmra.mxu0 %v3974
          %v4138 = vpop.f32.mrf.mxu0
          %v4139 = vadd.f32 %v3894, %v4138
          %v4140 = vpop.f32.mrf.mxu0
          %v4141 = vadd.f32 %v3894, %v4140
          %4142 = vmatmul.bf16.gmra.mxu0 %v3977
          %v4143 = vpop.f32.mrf.mxu0
          %v4144 = vadd.f32 %v3894, %v4143
          %v4145 = vpop.f32.mrf.mxu0
          %v4146 = vadd.f32 %v3894, %v4145
          %4147 = vdwg.mxu0
          %4148 = vmatpush.bf16.msra.mxu0 0
          %4149 = vmatpush.bf16.msra.mxu0 0
          %4150 = vmatpush.bf16.msra.mxu0 0
          %4151 = vmatpush.bf16.msra.mxu0 0
          %4152 = vmatpush.bf16.msra.mxu0 0
          %4153 = vmatpush.bf16.msra.mxu0 0
          %4154 = vmatpush.bf16.msra.mxu0 %v3995
          %4155 = vmatpush.bf16.msra.mxu0 %v3947
          %4156 = vmatmul.bf16.gmra.mxu0 %v3968
          %v4157 = vpop.f32.mrf.mxu0
          %v4158 = vadd.f32 %v3895, %v4157
          %v4159 = vpop.f32.mrf.mxu0
          %v4160 = vadd.f32 %v3895, %v4159
          %4161 = vmatmul.bf16.gmra.mxu0 %v3971
          %v4162 = vpop.f32.mrf.mxu0
          %v4163 = vadd.f32 %v3895, %v4162
          %v4164 = vpop.f32.mrf.mxu0
          %v4165 = vadd.f32 %v3895, %v4164
          %4166 = vmatmul.bf16.gmra.mxu0 %v3974
          %v4167 = vpop.f32.mrf.mxu0
          %v4168 = vadd.f32 %v3895, %v4167
          %v4169 = vpop.f32.mrf.mxu0
          %v4170 = vadd.f32 %v3895, %v4169
          %4171 = vmatmul.bf16.gmra.mxu0 %v3977
          %v4172 = vpop.f32.mrf.mxu0
          %v4173 = vadd.f32 %v3895, %v4172
          %v4174 = vpop.f32.mrf.mxu0
          %v4175 = vadd.f32 %v3895, %v4174
          %4176 = vdwg.mxu0
          %4177 = vmatpush.bf16.msra.mxu0 0
          %4178 = vmatpush.bf16.msra.mxu0 0
          %4179 = vmatpush.bf16.msra.mxu0 0
          %4180 = vmatpush.bf16.msra.mxu0 0
          %4181 = vmatpush.bf16.msra.mxu0 0
          %4182 = vmatpush.bf16.msra.mxu0 0
          %4183 = vmatpush.bf16.msra.mxu0 %v3998
          %4184 = vmatpush.bf16.msra.mxu0 %v3948
          %4185 = vmatmul.bf16.gmra.mxu0 %v3968
          %v4186 = vpop.f32.mrf.mxu0
          %v4187 = vadd.f32 %v3896, %v4186
          %v4188 = vpop.f32.mrf.mxu0
          %v4189 = vadd.f32 %v3896, %v4188
          %4190 = vmatmul.bf16.gmra.mxu0 %v3971
          %v4191 = vpop.f32.mrf.mxu0
          %v4192 = vadd.f32 %v3896, %v4191
          %v4193 = vpop.f32.mrf.mxu0
          %v4194 = vadd.f32 %v3896, %v4193
          %4195 = vmatmul.bf16.gmra.mxu0 %v3974
          %v4196 = vpop.f32.mrf.mxu0
          %v4197 = vadd.f32 %v3896, %v4196
          %v4198 = vpop.f32.mrf.mxu0
          %v4199 = vadd.f32 %v3896, %v4198
          %4200 = vmatmul.bf16.gmra.mxu0 %v3977
          %v4201 = vpop.f32.mrf.mxu0
          %v4202 = vadd.f32 %v3896, %v4201
          %v4203 = vpop.f32.mrf.mxu0
          %v4204 = vadd.f32 %v3896, %v4203
          %4205 = vdwg.mxu0
          %4206 = vmatpush.bf16.msra.mxu0 0
          %4207 = vmatpush.bf16.msra.mxu0 0
          %4208 = vmatpush.bf16.msra.mxu0 0
          %4209 = vmatpush.bf16.msra.mxu0 0
          %4210 = vmatpush.bf16.msra.mxu0 0
          %4211 = vmatpush.bf16.msra.mxu0 0
          %4212 = vmatpush.bf16.msra.mxu0 %v4001
          %4213 = vmatpush.bf16.msra.mxu0 %v3949
          %4214 = vmatmul.bf16.gmra.mxu0 %v3968
          %v4215 = vpop.f32.mrf.mxu0
          %v4216 = vadd.f32 %v3897, %v4215
          %v4217 = vpop.f32.mrf.mxu0
          %v4218 = vadd.f32 %v3897, %v4217
          %4219 = vmatmul.bf16.gmra.mxu0 %v3971
          %v4220 = vpop.f32.mrf.mxu0
          %v4221 = vadd.f32 %v3897, %v4220
          %v4222 = vpop.f32.mrf.mxu0
          %v4223 = vadd.f32 %v3897, %v4222
          %4224 = vmatmul.bf16.gmra.mxu0 %v3974
          %v4225 = vpop.f32.mrf.mxu0
          %v4226 = vadd.f32 %v3897, %v4225
          %v4227 = vpop.f32.mrf.mxu0
          %v4228 = vadd.f32 %v3897, %v4227
          %4229 = vmatmul.bf16.gmra.mxu0 %v3977
          %v4230 = vpop.f32.mrf.mxu0
          %v4231 = vadd.f32 %v3897, %v4230
          %v4232 = vpop.f32.mrf.mxu0
          %v4233 = vadd.f32 %v3897, %v4232
          %4234 = vdwg.mxu0
          %v4235 = vmax.f32 %v4013, 0.0
          %v4236 = vmax.f32 %v4042, 0.0
          %v4237 = vmax.f32 %v4071, 0.0
          %v4238 = vmax.f32 %v4100, 0.0
          %v4239 = vmax.f32 %v4129, 0.0
          %v4240 = vmax.f32 %v4158, 0.0
          %v4241 = vmax.f32 %v4187, 0.0
          %v4242 = vmax.f32 %v4015, 0.0
          %v4243 = vmax.f32 %v4044, 0.0
          %v4244 = vmax.f32 %v4073, 0.0
          %v4245 = vmax.f32 %v4102, 0.0
          %v4246 = vmax.f32 %v4131, 0.0
          %v4247 = vmax.f32 %v4160, 0.0
          %v4248 = vmax.f32 %v4189, 0.0
          %v4249 = vmax.f32 %v4018, 0.0
          %v4250 = vmax.f32 %v4047, 0.0
          %v4251 = vmax.f32 %v4076, 0.0
          %v4252 = vmax.f32 %v4105, 0.0
          %v4253 = vmax.f32 %v4134, 0.0
          %v4254 = vmax.f32 %v4163, 0.0
          %v4255 = vmax.f32 %v4192, 0.0
          %v4256 = vmax.f32 %v4020, 0.0
          %v4257 = vmax.f32 %v4049, 0.0
          %v4258 = vmax.f32 %v4078, 0.0
          %v4259 = vmax.f32 %v4107, 0.0
          %v4260 = vmax.f32 %v4136, 0.0
          %v4261 = vmax.f32 %v4165, 0.0
          %v4262 = vmax.f32 %v4194, 0.0
          %v4263 = vmax.f32 %v4023, 0.0
          %v4264 = vmax.f32 %v4052, 0.0
          %v4265 = vmax.f32 %v4081, 0.0
          %v4266 = vmax.f32 %v4110, 0.0
          %v4267 = vmax.f32 %v4139, 0.0
          %v4268 = vmax.f32 %v4168, 0.0
          %v4269 = vmax.f32 %v4197, 0.0
          %v4270 = vmax.f32 %v4025, 0.0
          %v4271 = vmax.f32 %v4054, 0.0
          %v4272 = vmax.f32 %v4083, 0.0
          %v4273 = vmax.f32 %v4112, 0.0
          %v4274 = vmax.f32 %v4141, 0.0
          %v4275 = vmax.f32 %v4170, 0.0
          %v4276 = vmax.f32 %v4199, 0.0
          %v4277 = vmax.f32 %v4028, 0.0
          %v4278 = vmax.f32 %v4057, 0.0
          %v4279 = vmax.f32 %v4086, 0.0
          %v4280 = vmax.f32 %v4115, 0.0
          %v4281 = vmax.f32 %v4144, 0.0
          %v4282 = vmax.f32 %v4173, 0.0
          %v4283 = vmax.f32 %v4202, 0.0
          %v4284 = vmax.f32 %v4030, 0.0
          %v4285 = vmax.f32 %v4059, 0.0
          %v4286 = vmax.f32 %v4088, 0.0
          %v4287 = vmax.f32 %v4117, 0.0
          %v4288 = vmax.f32 %v4146, 0.0
          %v4289 = vmax.f32 %v4175, 0.0
          %v4290 = vmax.f32 %v4204, 0.0
          %v4291 = vpack.c.bf16 %v4242, %v4235
          %v4292 = vpack.c.bf16 %v4243, %v4236
          %v4293 = vpack.c.bf16 %v4244, %v4237
          %v4294 = vpack.c.bf16 %v4245, %v4238
          %v4295 = vpack.c.bf16 %v4246, %v4239
          %v4296 = vpack.c.bf16 %v4247, %v4240
          %v4297 = vpack.c.bf16 %v4248, %v4241
          %v4298 = vpack.c.bf16 %v4256, %v4249
          %v4299 = vpack.c.bf16 %v4257, %v4250
          %v4300 = vpack.c.bf16 %v4258, %v4251
          %v4301 = vpack.c.bf16 %v4259, %v4252
          %v4302 = vpack.c.bf16 %v4260, %v4253
          %v4303 = vpack.c.bf16 %v4261, %v4254
          %v4304 = vpack.c.bf16 %v4262, %v4255
          %v4305 = vpack.c.bf16 %v4270, %v4263
          %v4306 = vpack.c.bf16 %v4271, %v4264
          %v4307 = vpack.c.bf16 %v4272, %v4265
          %v4308 = vpack.c.bf16 %v4273, %v4266
          %v4309 = vpack.c.bf16 %v4274, %v4267
          %v4310 = vpack.c.bf16 %v4275, %v4268
          %v4311 = vpack.c.bf16 %v4276, %v4269
          %v4312 = vpack.c.bf16 %v4284, %v4277
          %v4313 = vpack.c.bf16 %v4285, %v4278
          %v4314 = vpack.c.bf16 %v4286, %v4279
          %v4315 = vpack.c.bf16 %v4287, %v4280
          %v4316 = vpack.c.bf16 %v4288, %v4281
          %v4317 = vpack.c.bf16 %v4289, %v4282
          %v4318 = vpack.c.bf16 %v4290, %v4283
          %v4320 = vperm.slane %v1262, 0
          %v4434 = vunpack.c.l.b16 %v1150
          %v4435 = vunpack.c.l.b16 %v1151
          %v4436 = vunpack.c.l.b16 %v1152
          %v4437 = vunpack.c.l.b16 %v1153
          %v4438 = vunpack.c.l.b16 %v1154
          %v4439 = vunpack.c.l.b16 %v1155
          %v4440 = vunpack.c.l.b16 %v1156
          %v4441 = vunpack.c.l.b16 %v1157
          %v4442 = vunpack.c.l.b16 %v1158
          %v4443 = vunpack.c.l.b16 %v1159
          %v4444 = vunpack.c.l.b16 %v1160
          %v4445 = vunpack.c.l.b16 %v1161
          %v4446 = vunpack.c.l.b16 %v1162
          %v4447 = vunpack.c.l.b16 %v1163
          %v4448 = vunpack.c.l.b16 %v1164
          %v4449 = vunpack.c.l.b16 %v1165
          %v4450 = vunpack.c.l.b16 %v1166
          %v4451 = vunpack.c.l.b16 %v1167
          %v4452 = vunpack.c.l.b16 %v1168
          %v4453 = vunpack.c.l.b16 %v1169
          %v4454 = vunpack.c.l.b16 %v1170
          %v4455 = vunpack.c.l.b16 %v1171
          %v4456 = vunpack.c.l.b16 %v1172
          %v4457 = vunpack.c.l.b16 %v1173
          %v4458 = vunpack.c.l.b16 %v1174
          %v4459 = vunpack.c.l.b16 %v1175
          %v4460 = vunpack.c.l.b16 %v1176
          %v4461 = vunpack.c.l.b16 %v1177
          %v4462 = vunpack.c.l.b16 %v1178
          %v4463 = vunpack.c.l.b16 %v1179
          %v4464 = vunpack.c.l.b16 %v1180
          %v4465 = vunpack.c.l.b16 %v1181
          %v4466 = vunpack.c.l.b16 %v1182
          %v4467 = vunpack.c.l.b16 %v1183
          %v4468 = vunpack.c.l.b16 %v1184
          %v4469 = vunpack.c.l.b16 %v1185
          %v4470 = vunpack.c.l.b16 %v1186
          %v4471 = vunpack.c.l.b16 %v1187
          %v4472 = vunpack.c.l.b16 %v1188
          %v4473 = vunpack.c.l.b16 %v1189
          %v4474 = vunpack.c.l.b16 %v1190
          %v4475 = vunpack.c.l.b16 %v1191
          %v4476 = vunpack.c.l.b16 %v1192
          %v4477 = vunpack.c.l.b16 %v1193
          %v4478 = vunpack.c.l.b16 %v1194
          %v4479 = vunpack.c.l.b16 %v1195
          %v4480 = vunpack.c.l.b16 %v1196
          %v4481 = vunpack.c.l.b16 %v1197
          %v4482 = vunpack.c.l.b16 %v1198
          %v4483 = vunpack.c.l.b16 %v1199
          %v4484 = vunpack.c.l.b16 %v1200
          %v4485 = vunpack.c.l.b16 %v1201
          %v4486 = vunpack.c.l.b16 %v1202
          %v4487 = vunpack.c.l.b16 %v1203
          %v4488 = vunpack.c.l.b16 %v1204
          %v4489 = vunpack.c.l.b16 %v1205
          %v4490 = vunpack.c.l.b16 %v1206
          %v4491 = vunpack.c.l.b16 %v1207
          %v4492 = vunpack.c.l.b16 %v1208
          %v4493 = vunpack.c.l.b16 %v1209
          %v4494 = vunpack.c.l.b16 %v1210
          %v4495 = vunpack.c.l.b16 %v1211
          %v4496 = vunpack.c.l.b16 %v1212
          %v4497 = vunpack.c.l.b16 %v1213
          %v4498 = vunpack.c.l.b16 %v1214
          %v4499 = vunpack.c.l.b16 %v1215
          %v4500 = vunpack.c.l.b16 %v1216
          %v4501 = vunpack.c.l.b16 %v1217
          %v4502 = vunpack.c.l.b16 %v1218
          %v4503 = vunpack.c.l.b16 %v1219
          %v4504 = vunpack.c.l.b16 %v1220
          %v4505 = vunpack.c.l.b16 %v1221
          %v4506 = vunpack.c.l.b16 %v1222
          %v4507 = vunpack.c.l.b16 %v1223
          %v4508 = vunpack.c.l.b16 %v1224
          %v4509 = vunpack.c.l.b16 %v1225
          %v4510 = vunpack.c.l.b16 %v1226
          %v4511 = vunpack.c.l.b16 %v1227
          %v4512 = vunpack.c.l.b16 %v1228
          %v4513 = vunpack.c.l.b16 %v1229
          %v4514 = vunpack.c.l.b16 %v1230
          %v4515 = vunpack.c.l.b16 %v1231
          %v4516 = vunpack.c.l.b16 %v1232
          %v4517 = vunpack.c.l.b16 %v1233
          %v4518 = vunpack.c.l.b16 %v1234
          %v4519 = vunpack.c.l.b16 %v1235
          %v4520 = vunpack.c.l.b16 %v1236
          %v4521 = vunpack.c.l.b16 %v1237
          %v4522 = vunpack.c.l.b16 %v1238
          %v4523 = vunpack.c.l.b16 %v1239
          %v4524 = vunpack.c.l.b16 %v1240
          %v4525 = vunpack.c.l.b16 %v1241
          %v4526 = vunpack.c.l.b16 %v1242
          %v4527 = vunpack.c.l.b16 %v1243
          %v4528 = vunpack.c.l.b16 %v1244
          %v4529 = vunpack.c.l.b16 %v1245
          %v4530 = vunpack.c.l.b16 %v1246
          %v4531 = vunpack.c.l.b16 %v1247
          %v4532 = vunpack.c.l.b16 %v1248
          %v4533 = vunpack.c.l.b16 %v1249
          %v4534 = vunpack.c.l.b16 %v1250
          %v4535 = vunpack.c.l.b16 %v1251
          %v4536 = vunpack.c.l.b16 %v1252
          %v4537 = vunpack.c.l.b16 %v1253
          %v4538 = vunpack.c.l.b16 %v1254
          %v4539 = vunpack.c.l.b16 %v1255
          %v4540 = vunpack.c.l.b16 %v1256
          %v4541 = vunpack.c.l.b16 %v1257
          %v4542 = vunpack.c.l.b16 %v1258
          %v4543 = vunpack.c.l.b16 %v1259
          %v4544 = vunpack.c.l.b16 %v1260
          %v4545 = vunpack.c.l.b16 %v1261
          %v4546 = vpack.c.b16 %v4435, %v4434
          %v4547 = vpack.c.b16 %v4437, %v4436
          %v4548 = vpack.c.b16 %v4439, %v4438
          %v4549 = vpack.c.b16 %v4441, %v4440
          %v4550 = vpack.c.b16 %v4443, %v4442
          %v4551 = vpack.c.b16 %v4445, %v4444
          %v4552 = vpack.c.b16 %v4447, %v4446
          %v4553 = vpack.c.b16 %v4449, %v4448
          %v4554 = vpack.c.b16 %v4451, %v4450
          %v4555 = vpack.c.b16 %v4453, %v4452
          %v4556 = vpack.c.b16 %v4455, %v4454
          %v4557 = vpack.c.b16 %v4457, %v4456
          %v4558 = vpack.c.b16 %v4459, %v4458
          %v4559 = vpack.c.b16 %v4461, %v4460
          %v4560 = vpack.c.b16 %v4463, %v4462
          %v4561 = vpack.c.b16 %v4465, %v4464
          %v4562 = vpack.c.b16 %v4467, %v4466
          %v4563 = vpack.c.b16 %v4469, %v4468
          %v4564 = vpack.c.b16 %v4471, %v4470
          %v4565 = vpack.c.b16 %v4473, %v4472
          %v4566 = vpack.c.b16 %v4475, %v4474
          %v4567 = vpack.c.b16 %v4477, %v4476
          %v4568 = vpack.c.b16 %v4479, %v4478
          %v4569 = vpack.c.b16 %v4481, %v4480
          %v4570 = vpack.c.b16 %v4483, %v4482
          %v4571 = vpack.c.b16 %v4485, %v4484
          %v4572 = vpack.c.b16 %v4487, %v4486
          %v4573 = vpack.c.b16 %v4489, %v4488
          %v4574 = vpack.c.b16 %v4491, %v4490
          %v4575 = vpack.c.b16 %v4493, %v4492
          %v4576 = vpack.c.b16 %v4495, %v4494
          %v4577 = vpack.c.b16 %v4497, %v4496
          %v4578 = vpack.c.b16 %v4499, %v4498
          %v4579 = vpack.c.b16 %v4501, %v4500
          %v4580 = vpack.c.b16 %v4503, %v4502
          %v4581 = vpack.c.b16 %v4505, %v4504
          %v4582 = vpack.c.b16 %v4507, %v4506
          %v4583 = vpack.c.b16 %v4509, %v4508
          %v4584 = vpack.c.b16 %v4511, %v4510
          %v4585 = vpack.c.b16 %v4513, %v4512
          %v4586 = vpack.c.b16 %v4515, %v4514
          %v4587 = vpack.c.b16 %v4517, %v4516
          %v4588 = vpack.c.b16 %v4519, %v4518
          %v4589 = vpack.c.b16 %v4521, %v4520
          %v4590 = vpack.c.b16 %v4523, %v4522
          %v4591 = vpack.c.b16 %v4525, %v4524
          %v4592 = vpack.c.b16 %v4527, %v4526
          %v4593 = vpack.c.b16 %v4529, %v4528
          %v4594 = vpack.c.b16 %v4531, %v4530
          %v4595 = vpack.c.b16 %v4533, %v4532
          %v4596 = vpack.c.b16 %v4535, %v4534
          %v4597 = vpack.c.b16 %v4537, %v4536
          %v4598 = vpack.c.b16 %v4539, %v4538
          %v4599 = vpack.c.b16 %v4541, %v4540
          %v4600 = vpack.c.b16 %v4543, %v4542
          %v4601 = vpack.c.b16 %v4545, %v4544
          %4658 = vmatpush.bf16.msra.mxu0 %v4553
          %4659 = vmatpush.bf16.msra.mxu0 %v4552
          %4660 = vmatpush.bf16.msra.mxu0 %v4551
          %4661 = vmatpush.bf16.msra.mxu0 %v4550
          %4662 = vmatpush.bf16.msra.mxu0 %v4549
          %4663 = vmatpush.bf16.msra.mxu0 %v4548
          %4664 = vmatpush.bf16.msra.mxu0 %v4547
          %4665 = vmatpush.bf16.msra.mxu0 %v4546
          %4666 = vmatmul.bf16.gmra.mxu0 %v4291
          %v4667 = vpop.f32.mrf.mxu0
          %v4668 = vadd.f32 %v4320, %v4667
          %v4669 = vpop.f32.mrf.mxu0
          %v4670 = vadd.f32 %v4320, %v4669
          %4671 = vmatmul.bf16.gmra.mxu0 %v4298
          %v4672 = vpop.f32.mrf.mxu0
          %v4673 = vadd.f32 %v4320, %v4672
          %v4674 = vpop.f32.mrf.mxu0
          %v4675 = vadd.f32 %v4320, %v4674
          %4676 = vmatmul.bf16.gmra.mxu0 %v4305
          %v4677 = vpop.f32.mrf.mxu0
          %v4678 = vadd.f32 %v4320, %v4677
          %v4679 = vpop.f32.mrf.mxu0
          %v4680 = vadd.f32 %v4320, %v4679
          %4681 = vmatmul.bf16.gmra.mxu0 %v4312
          %v4682 = vpop.f32.mrf.mxu0
          %v4683 = vadd.f32 %v4320, %v4682
          %v4684 = vpop.f32.mrf.mxu0
          %v4685 = vadd.f32 %v4320, %v4684
          %4686 = vdwg.mxu0
          %4687 = vmatpush.bf16.msra.mxu0 %v4561
          %4688 = vmatpush.bf16.msra.mxu0 %v4560
          %4689 = vmatpush.bf16.msra.mxu0 %v4559
          %4690 = vmatpush.bf16.msra.mxu0 %v4558
          %4691 = vmatpush.bf16.msra.mxu0 %v4557
          %4692 = vmatpush.bf16.msra.mxu0 %v4556
          %4693 = vmatpush.bf16.msra.mxu0 %v4555
          %4694 = vmatpush.bf16.msra.mxu0 %v4554
          %4695 = vmatmul.bf16.gmra.mxu0 %v4292
          %v4696 = vpop.f32.mrf.mxu0
          %v4697 = vadd.f32 %v4668, %v4696
          %v4698 = vpop.f32.mrf.mxu0
          %v4699 = vadd.f32 %v4670, %v4698
          %4700 = vmatmul.bf16.gmra.mxu0 %v4299
          %v4701 = vpop.f32.mrf.mxu0
          %v4702 = vadd.f32 %v4673, %v4701
          %v4703 = vpop.f32.mrf.mxu0
          %v4704 = vadd.f32 %v4675, %v4703
          %4705 = vmatmul.bf16.gmra.mxu0 %v4306
          %v4706 = vpop.f32.mrf.mxu0
          %v4707 = vadd.f32 %v4678, %v4706
          %v4708 = vpop.f32.mrf.mxu0
          %v4709 = vadd.f32 %v4680, %v4708
          %4710 = vmatmul.bf16.gmra.mxu0 %v4313
          %v4711 = vpop.f32.mrf.mxu0
          %v4712 = vadd.f32 %v4683, %v4711
          %v4713 = vpop.f32.mrf.mxu0
          %v4714 = vadd.f32 %v4685, %v4713
          %4715 = vdwg.mxu0
          %4716 = vmatpush.bf16.msra.mxu0 %v4569
          %4717 = vmatpush.bf16.msra.mxu0 %v4568
          %4718 = vmatpush.bf16.msra.mxu0 %v4567
          %4719 = vmatpush.bf16.msra.mxu0 %v4566
          %4720 = vmatpush.bf16.msra.mxu0 %v4565
          %4721 = vmatpush.bf16.msra.mxu0 %v4564
          %4722 = vmatpush.bf16.msra.mxu0 %v4563
          %4723 = vmatpush.bf16.msra.mxu0 %v4562
          %4724 = vmatmul.bf16.gmra.mxu0 %v4293
          %v4725 = vpop.f32.mrf.mxu0
          %v4726 = vadd.f32 %v4697, %v4725
          %v4727 = vpop.f32.mrf.mxu0
          %v4728 = vadd.f32 %v4699, %v4727
          %4729 = vmatmul.bf16.gmra.mxu0 %v4300
          %v4730 = vpop.f32.mrf.mxu0
          %v4731 = vadd.f32 %v4702, %v4730
          %v4732 = vpop.f32.mrf.mxu0
          %v4733 = vadd.f32 %v4704, %v4732
          %4734 = vmatmul.bf16.gmra.mxu0 %v4307
          %v4735 = vpop.f32.mrf.mxu0
          %v4736 = vadd.f32 %v4707, %v4735
          %v4737 = vpop.f32.mrf.mxu0
          %v4738 = vadd.f32 %v4709, %v4737
          %4739 = vmatmul.bf16.gmra.mxu0 %v4314
          %v4740 = vpop.f32.mrf.mxu0
          %v4741 = vadd.f32 %v4712, %v4740
          %v4742 = vpop.f32.mrf.mxu0
          %v4743 = vadd.f32 %v4714, %v4742
          %4744 = vdwg.mxu0
          %4745 = vmatpush.bf16.msra.mxu0 %v4577
          %4746 = vmatpush.bf16.msra.mxu0 %v4576
          %4747 = vmatpush.bf16.msra.mxu0 %v4575
          %4748 = vmatpush.bf16.msra.mxu0 %v4574
          %4749 = vmatpush.bf16.msra.mxu0 %v4573
          %4750 = vmatpush.bf16.msra.mxu0 %v4572
          %4751 = vmatpush.bf16.msra.mxu0 %v4571
          %4752 = vmatpush.bf16.msra.mxu0 %v4570
          %4753 = vmatmul.bf16.gmra.mxu0 %v4294
          %v4754 = vpop.f32.mrf.mxu0
          %v4755 = vadd.f32 %v4726, %v4754
          %v4756 = vpop.f32.mrf.mxu0
          %v4757 = vadd.f32 %v4728, %v4756
          %4758 = vmatmul.bf16.gmra.mxu0 %v4301
          %v4759 = vpop.f32.mrf.mxu0
          %v4760 = vadd.f32 %v4731, %v4759
          %v4761 = vpop.f32.mrf.mxu0
          %v4762 = vadd.f32 %v4733, %v4761
          %4763 = vmatmul.bf16.gmra.mxu0 %v4308
          %v4764 = vpop.f32.mrf.mxu0
          %v4765 = vadd.f32 %v4736, %v4764
          %v4766 = vpop.f32.mrf.mxu0
          %v4767 = vadd.f32 %v4738, %v4766
          %4768 = vmatmul.bf16.gmra.mxu0 %v4315
          %v4769 = vpop.f32.mrf.mxu0
          %v4770 = vadd.f32 %v4741, %v4769
          %v4771 = vpop.f32.mrf.mxu0
          %v4772 = vadd.f32 %v4743, %v4771
          %4773 = vdwg.mxu0
          %4774 = vmatpush.bf16.msra.mxu0 %v4585
          %4775 = vmatpush.bf16.msra.mxu0 %v4584
          %4776 = vmatpush.bf16.msra.mxu0 %v4583
          %4777 = vmatpush.bf16.msra.mxu0 %v4582
          %4778 = vmatpush.bf16.msra.mxu0 %v4581
          %4779 = vmatpush.bf16.msra.mxu0 %v4580
          %4780 = vmatpush.bf16.msra.mxu0 %v4579
          %4781 = vmatpush.bf16.msra.mxu0 %v4578
          %4782 = vmatmul.bf16.gmra.mxu0 %v4295
          %v4783 = vpop.f32.mrf.mxu0
          %v4784 = vadd.f32 %v4755, %v4783
          %v4785 = vpop.f32.mrf.mxu0
          %v4786 = vadd.f32 %v4757, %v4785
          %4787 = vmatmul.bf16.gmra.mxu0 %v4302
          %v4788 = vpop.f32.mrf.mxu0
          %v4789 = vadd.f32 %v4760, %v4788
          %v4790 = vpop.f32.mrf.mxu0
          %v4791 = vadd.f32 %v4762, %v4790
          %4792 = vmatmul.bf16.gmra.mxu0 %v4309
          %v4793 = vpop.f32.mrf.mxu0
          %v4794 = vadd.f32 %v4765, %v4793
          %v4795 = vpop.f32.mrf.mxu0
          %v4796 = vadd.f32 %v4767, %v4795
          %4797 = vmatmul.bf16.gmra.mxu0 %v4316
          %v4798 = vpop.f32.mrf.mxu0
          %v4799 = vadd.f32 %v4770, %v4798
          %v4800 = vpop.f32.mrf.mxu0
          %v4801 = vadd.f32 %v4772, %v4800
          %4802 = vdwg.mxu0
          %4803 = vmatpush.bf16.msra.mxu0 %v4593
          %4804 = vmatpush.bf16.msra.mxu0 %v4592
          %4805 = vmatpush.bf16.msra.mxu0 %v4591
          %4806 = vmatpush.bf16.msra.mxu0 %v4590
          %4807 = vmatpush.bf16.msra.mxu0 %v4589
          %4808 = vmatpush.bf16.msra.mxu0 %v4588
          %4809 = vmatpush.bf16.msra.mxu0 %v4587
          %4810 = vmatpush.bf16.msra.mxu0 %v4586
          %4811 = vmatmul.bf16.gmra.mxu0 %v4296
          %v4812 = vpop.f32.mrf.mxu0
          %v4813 = vadd.f32 %v4784, %v4812
          %v4814 = vpop.f32.mrf.mxu0
          %v4815 = vadd.f32 %v4786, %v4814
          %4816 = vmatmul.bf16.gmra.mxu0 %v4303
          %v4817 = vpop.f32.mrf.mxu0
          %v4818 = vadd.f32 %v4789, %v4817
          %v4819 = vpop.f32.mrf.mxu0
          %v4820 = vadd.f32 %v4791, %v4819
          %4821 = vmatmul.bf16.gmra.mxu0 %v4310
          %v4822 = vpop.f32.mrf.mxu0
          %v4823 = vadd.f32 %v4794, %v4822
          %v4824 = vpop.f32.mrf.mxu0
          %v4825 = vadd.f32 %v4796, %v4824
          %4826 = vmatmul.bf16.gmra.mxu0 %v4317
          %v4827 = vpop.f32.mrf.mxu0
          %v4828 = vadd.f32 %v4799, %v4827
          %v4829 = vpop.f32.mrf.mxu0
          %v4830 = vadd.f32 %v4801, %v4829
          %4831 = vdwg.mxu0
          %4832 = vmatpush.bf16.msra.mxu0 %v4601
          %4833 = vmatpush.bf16.msra.mxu0 %v4600
          %4834 = vmatpush.bf16.msra.mxu0 %v4599
          %4835 = vmatpush.bf16.msra.mxu0 %v4598
          %4836 = vmatpush.bf16.msra.mxu0 %v4597
          %4837 = vmatpush.bf16.msra.mxu0 %v4596
          %4838 = vmatpush.bf16.msra.mxu0 %v4595
          %4839 = vmatpush.bf16.msra.mxu0 %v4594
          %4840 = vmatmul.bf16.gmra.mxu0 %v4297
          %v4841 = vpop.f32.mrf.mxu0
          %v4842 = vadd.f32 %v4813, %v4841
          %v4843 = vpop.f32.mrf.mxu0
          %v4844 = vadd.f32 %v4815, %v4843
          %4845 = vmatmul.bf16.gmra.mxu0 %v4304
          %v4846 = vpop.f32.mrf.mxu0
          %v4847 = vadd.f32 %v4818, %v4846
          %v4848 = vpop.f32.mrf.mxu0
          %v4849 = vadd.f32 %v4820, %v4848
          %4850 = vmatmul.bf16.gmra.mxu0 %v4311
          %v4851 = vpop.f32.mrf.mxu0
          %v4852 = vadd.f32 %v4823, %v4851
          %v4853 = vpop.f32.mrf.mxu0
          %v4854 = vadd.f32 %v4825, %v4853
          %4855 = vmatmul.bf16.gmra.mxu0 %v4318
          %v4856 = vpop.f32.mrf.mxu0
          %v4857 = vadd.f32 %v4828, %v4856
          %v4858 = vpop.f32.mrf.mxu0
          %v4859 = vadd.f32 %v4830, %v4858
          %4860 = vdwg.mxu0
          %4869 = vrot.lane.b32.xlu0 %v4842, 120
          %v4870 = vpop.permute.xlu0 %4869
          %4871 = vrot.lane.b32.xlu0 %v4844, 120
          %v4872 = vpop.permute.xlu0 %4871
          %4873 = vrot.lane.b32.xlu0 %v4847, 120
          %v4874 = vpop.permute.xlu0 %4873
          %4875 = vrot.lane.b32.xlu0 %v4849, 120
          %v4876 = vpop.permute.xlu0 %4875
          %4877 = vrot.lane.b32.xlu0 %v4852, 120
          %v4878 = vpop.permute.xlu0 %4877
          %4879 = vrot.lane.b32.xlu0 %v4854, 120
          %v4880 = vpop.permute.xlu0 %4879
          %4881 = vrot.lane.b32.xlu0 %v4857, 120
          %v4882 = vpop.permute.xlu0 %4881
          %4883 = vrot.lane.b32.xlu0 %v4859, 120
          %v4884 = vpop.permute.xlu0 %4883
          %v4893 = vadd.f32 %v4216, %v4870
          %v4894 = vadd.f32 %v4218, %v4872
          %v4895 = vadd.f32 %v4221, %v4874
          %v4896 = vadd.f32 %v4223, %v4876
          %v4897 = vadd.f32 %v4226, %v4878
          %v4898 = vadd.f32 %v4228, %v4880
          %v4899 = vadd.f32 %v4231, %v4882
          %v4900 = vadd.f32 %v4233, %v4884
          %v4901 = vmax.f32 %v4893, 0.0
          %v4902 = vmax.f32 %v4894, 0.0
          %v4903 = vmax.f32 %v4895, 0.0
          %v4904 = vmax.f32 %v4896, 0.0
          %v4905 = vmax.f32 %v4897, 0.0
          %v4906 = vmax.f32 %v4898, 0.0
          %v4907 = vmax.f32 %v4899, 0.0
          %v4908 = vmax.f32 %v4900, 0.0
          %v4909 = vpack.c.bf16 %v4902, %v4901
          %v4910 = vpack.c.bf16 %v4904, %v4903
          %v4911 = vpack.c.bf16 %v4906, %v4905
          %v4912 = vpack.c.bf16 %v4908, %v4907
          %v4915 = vunpack.c.l.b16 %v1263
          %v4916 = vunpack.c.l.b16 %v1264
          %v4917 = vpack.c.b16 %v4916, %v4915
          %v4920 = vsel %vm3244, %v4909, 0
          %v4923 = vsel %vm3244, %v4910, 0
          %v4926 = vsel %vm3244, %v4911, 0
          %v4929 = vsel %vm3244, %v4912, 0
          %4931 = vmatpush.bf16.msra.mxu0 0
          %4932 = vmatpush.bf16.msra.mxu0 0
          %4933 = vmatpush.bf16.msra.mxu0 0
          %4934 = vmatpush.bf16.msra.mxu0 0
          %4935 = vmatpush.bf16.msra.mxu0 0
          %4936 = vmatpush.bf16.msra.mxu0 0
          %4937 = vmatpush.bf16.msra.mxu0 0
          %4938 = vmatpush.bf16.msra.mxu0 %v4917
          %4939 = vmatmul.bf16.gmra.mxu0 %v4920
          %v4940 = vpop.f32.mrf.mxu0
          %v4941 = vadd.f32 0.0, %v4940
          %v4942 = vpop.f32.mrf.mxu0
          %v4943 = vadd.f32 0.0, %v4942
          %4944 = vmatmul.bf16.gmra.mxu0 %v4923
          %v4945 = vpop.f32.mrf.mxu0
          %v4946 = vadd.f32 0.0, %v4945
          %v4947 = vpop.f32.mrf.mxu0
          %v4948 = vadd.f32 0.0, %v4947
          %4949 = vmatmul.bf16.gmra.mxu0 %v4926
          %v4950 = vpop.f32.mrf.mxu0
          %v4951 = vadd.f32 0.0, %v4950
          %v4952 = vpop.f32.mrf.mxu0
          %v4953 = vadd.f32 0.0, %v4952
          %4954 = vmatmul.bf16.gmra.mxu0 %v4929
          %v4955 = vpop.f32.mrf.mxu0
          %v4956 = vadd.f32 0.0, %v4955
          %v4957 = vpop.f32.mrf.mxu0
          %v4958 = vadd.f32 0.0, %v4957
          %4959 = vdwg.mxu0
          %4968 = vrot.lane.b32.xlu0 %v4941, 4
          %v4969 = vpop.permute.xlu0 %4968
          %4970 = vrot.lane.b32.xlu0 %v4943, 4
          %v4971 = vpop.permute.xlu0 %4970
          %4972 = vrot.lane.b32.xlu0 %v4946, 4
          %v4973 = vpop.permute.xlu0 %4972
          %4974 = vrot.lane.b32.xlu0 %v4948, 4
          %v4975 = vpop.permute.xlu0 %4974
          %4976 = vrot.lane.b32.xlu0 %v4951, 4
          %v4977 = vpop.permute.xlu0 %4976
          %4978 = vrot.lane.b32.xlu0 %v4953, 4
          %v4979 = vpop.permute.xlu0 %4978
          %4980 = vrot.lane.b32.xlu0 %v4956, 4
          %v4981 = vpop.permute.xlu0 %4980
          %4982 = vrot.lane.b32.xlu0 %v4958, 4
          %v4983 = vpop.permute.xlu0 %4982
          %v4992 = vadd.f32 %v3267, %v4969
          %v4993 = vadd.f32 %v3269, %v4971
          %v4994 = vadd.f32 %v3272, %v4973
          %v4995 = vadd.f32 %v3274, %v4975
          %v4996 = vadd.f32 %v3277, %v4977
          %v4997 = vadd.f32 %v3279, %v4979
          %v4998 = vadd.f32 %v3282, %v4981
          %v4999 = vadd.f32 %v3284, %v4983
          %v5000 = vmax.f32 %v4992, 0.0
          %v5001 = vmax.f32 %v4993, 0.0
          %v5002 = vmax.f32 %v4994, 0.0
          %v5003 = vmax.f32 %v4995, 0.0
          %v5004 = vmax.f32 %v4996, 0.0
          %v5005 = vmax.f32 %v4997, 0.0
          %v5006 = vmax.f32 %v4998, 0.0
          %v5007 = vmax.f32 %v4999, 0.0
          %5008 = vrot.lane.b32.xlu0 %v4842, 2
          %v5009 = vpop.permute.xlu0 %5008
          %5010 = vrot.lane.b32.xlu0 %v4844, 2
          %v5011 = vpop.permute.xlu0 %5010
          %5012 = vrot.lane.b32.xlu0 %v4847, 2
          %v5013 = vpop.permute.xlu0 %5012
          %5014 = vrot.lane.b32.xlu0 %v4849, 2
          %v5015 = vpop.permute.xlu0 %5014
          %5016 = vrot.lane.b32.xlu0 %v4852, 2
          %v5017 = vpop.permute.xlu0 %5016
          %5018 = vrot.lane.b32.xlu0 %v4854, 2
          %v5019 = vpop.permute.xlu0 %5018
          %5020 = vrot.lane.b32.xlu0 %v4857, 2
          %v5021 = vpop.permute.xlu0 %5020
          %5022 = vrot.lane.b32.xlu0 %v4859, 2
          %v5023 = vpop.permute.xlu0 %5022
          %v5032 = vmul.f32 %v1672, %v5009
          %v5033 = vmul.f32 %v1673, %v5011
          %v5034 = vmul.f32 %v1674, %v5013
          %v5035 = vmul.f32 %v1675, %v5015
          %v5036 = vmul.f32 %v1676, %v5017
          %v5037 = vmul.f32 %v1677, %v5019
          %v5038 = vmul.f32 %v1678, %v5021
          %v5039 = vmul.f32 %v1679, %v5023
          %5048 = vrot.lane.b32.xlu0 %v5032, 126
          %v5049 = vpop.permute.xlu0 %5048
          %5050 = vrot.lane.b32.xlu0 %v5033, 126
          %v5051 = vpop.permute.xlu0 %5050
          %5052 = vrot.lane.b32.xlu0 %v5034, 126
          %v5053 = vpop.permute.xlu0 %5052
          %5054 = vrot.lane.b32.xlu0 %v5035, 126
          %v5055 = vpop.permute.xlu0 %5054
          %5056 = vrot.lane.b32.xlu0 %v5036, 126
          %v5057 = vpop.permute.xlu0 %5056
          %5058 = vrot.lane.b32.xlu0 %v5037, 126
          %v5059 = vpop.permute.xlu0 %5058
          %5060 = vrot.lane.b32.xlu0 %v5038, 126
          %v5061 = vpop.permute.xlu0 %5060
          %5062 = vrot.lane.b32.xlu0 %v5039, 126
          %v5063 = vpop.permute.xlu0 %5062
          %v5064 = vsel %vm1808, %v5049, 0
          %v5066 = vsel %vm1808, %v5051, 0
          %v5068 = vsel %vm1808, %v5053, 0
          %v5070 = vsel %vm1808, %v5055, 0
          %v5072 = vsel %vm1808, %v5057, 0
          %v5074 = vsel %vm1808, %v5059, 0
          %v5076 = vsel %vm1808, %v5061, 0
          %v5078 = vsel %vm1808, %v5063, 0
          %5080 = vmatpush.msra.mxu0 0.0
          %5081 = vmatpush.msra.mxu0 0.0
          %5082 = vmatpush.msra.mxu0 0.0
          %5083 = vmatpush.msra.mxu0 0.0
          %5084 = vmatpush.msra.mxu0 0.0
          %5085 = vmatpush.msra.mxu0 0.0
          %5086 = vmatpush.msra.mxu0 0.0
          %5087 = vmatpush.msra.mxu0 0.0
          %5088 = vmatpush.msra.mxu0 0.0
          %5089 = vmatpush.msra.mxu0 0.0
          %5090 = vmatpush.msra.mxu0 0.0
          %5091 = vmatpush.msra.mxu0 0.0
          %5092 = vmatpush.msra.mxu0 0.0
          %5093 = vmatpush.msra.mxu0 0.0
          %5094 = vmatpush.msra.mxu0 0.0
          %5095 = vmatpush.msra.mxu0 %v1096
          %5096 = vmatmul.f32.gmra.mxu0 %v5064
          %v5097 = vpop.f32.mrf.mxu0
          %v5098 = vadd.f32 0.0, %v5097
          %5099 = vmatmul.f32.gmra.mxu0 %v5066
          %v5100 = vpop.f32.mrf.mxu0
          %v5101 = vadd.f32 0.0, %v5100
          %5102 = vmatmul.f32.gmra.mxu0 %v5068
          %v5103 = vpop.f32.mrf.mxu0
          %v5104 = vadd.f32 0.0, %v5103
          %5105 = vmatmul.f32.gmra.mxu0 %v5070
          %v5106 = vpop.f32.mrf.mxu0
          %v5107 = vadd.f32 0.0, %v5106
          %5108 = vmatmul.f32.gmra.mxu0 %v5072
          %v5109 = vpop.f32.mrf.mxu0
          %v5110 = vadd.f32 0.0, %v5109
          %5111 = vmatmul.f32.gmra.mxu0 %v5074
          %v5112 = vpop.f32.mrf.mxu0
          %v5113 = vadd.f32 0.0, %v5112
          %5114 = vmatmul.f32.gmra.mxu0 %v5076
          %v5115 = vpop.f32.mrf.mxu0
          %v5116 = vadd.f32 0.0, %v5115
          %5117 = vmatmul.f32.gmra.mxu0 %v5078
          %v5118 = vpop.f32.mrf.mxu0
          %v5119 = vadd.f32 0.0, %v5118
          %5120 = vdwg.mxu0
          %v5121 = vadd.f32 %v1617, %v5098
          %v5122 = vadd.f32 %v1620, %v5101
          %v5123 = vadd.f32 %v1623, %v5104
          %v5124 = vadd.f32 %v1626, %v5107
          %v5125 = vadd.f32 %v1629, %v5110
          %v5126 = vadd.f32 %v1632, %v5113
          %v5127 = vadd.f32 %v1635, %v5116
          %v5128 = vadd.f32 %v1638, %v5119
          %s5129 = scalar_lea.vmem %s1082, %s1560 [#allocation3]
          %5130 = vst.msk [vmem:[%s5129] sm:$0xff] %vm1570, %v5121
          %5131 = vst.msk [vmem:[%s5129 + $0x8] sm:$0xff] %vm1570, %v5122
          %5132 = vst.msk [vmem:[%s5129 + $0x10] sm:$0xff] %vm1570, %v5123
          %5133 = vst.msk [vmem:[%s5129 + $0x18] sm:$0xff] %vm1570, %v5124
          %5134 = vst.msk [vmem:[%s5129 + $0x20] sm:$0xff] %vm1570, %v5125
          %5135 = vst.msk [vmem:[%s5129 + $0x28] sm:$0xff] %vm1570, %v5126
          %5136 = vst.msk [vmem:[%s5129 + $0x30] sm:$0xff] %vm1570, %v5127
          %5137 = vst.msk [vmem:[%s5129 + $0x38] sm:$0xff] %vm1570, %v5128
          %5138 = vrot.lane.b32.xlu0 %v1504, 4
          %v5139 = vpop.permute.xlu0 %5138
          %5140 = vrot.lane.b32.xlu0 %v1505, 4
          %v5141 = vpop.permute.xlu0 %5140
          %5142 = vrot.lane.b32.xlu0 %v1506, 4
          %v5143 = vpop.permute.xlu0 %5142
          %5144 = vrot.lane.b32.xlu0 %v1507, 4
          %v5145 = vpop.permute.xlu0 %5144
          %5146 = vrot.lane.b32.xlu0 %v1508, 4
          %v5147 = vpop.permute.xlu0 %5146
          %5148 = vrot.lane.b32.xlu0 %v1509, 4
          %v5149 = vpop.permute.xlu0 %5148
          %5150 = vrot.lane.b32.xlu0 %v1510, 4
          %v5151 = vpop.permute.xlu0 %5150
          %5152 = vrot.lane.b32.xlu0 %v1511, 4
          %v5153 = vpop.permute.xlu0 %5152
          %vm5162 = vcmask 64544
          %5163 = vst.msk [vmem:[%s5129] sm:$0xff] %vm5162, %v5139
          %5164 = vst.msk [vmem:[%s5129 + $0x8] sm:$0xff] %vm5162, %v5141
          %5165 = vst.msk [vmem:[%s5129 + $0x10] sm:$0xff] %vm5162, %v5143
          %5166 = vst.msk [vmem:[%s5129 + $0x18] sm:$0xff] %vm5162, %v5145
          %5167 = vst.msk [vmem:[%s5129 + $0x20] sm:$0xff] %vm5162, %v5147
          %5168 = vst.msk [vmem:[%s5129 + $0x28] sm:$0xff] %vm5162, %v5149
          %5169 = vst.msk [vmem:[%s5129 + $0x30] sm:$0xff] %vm5162, %v5151
          %5170 = vst.msk [vmem:[%s5129 + $0x38] sm:$0xff] %vm5162, %v5153
          %5171 = vrot.lane.b32.xlu0 %v1617, 8
          %v5172 = vpop.permute.xlu0 %5171
          %5173 = vrot.lane.b32.xlu0 %v1620, 8
          %v5174 = vpop.permute.xlu0 %5173
          %5175 = vrot.lane.b32.xlu0 %v1623, 8
          %v5176 = vpop.permute.xlu0 %5175
          %5177 = vrot.lane.b32.xlu0 %v1626, 8
          %v5178 = vpop.permute.xlu0 %5177
          %5179 = vrot.lane.b32.xlu0 %v1629, 8
          %v5180 = vpop.permute.xlu0 %5179
          %5181 = vrot.lane.b32.xlu0 %v1632, 8
          %v5182 = vpop.permute.xlu0 %5181
          %5183 = vrot.lane.b32.xlu0 %v1635, 8
          %v5184 = vpop.permute.xlu0 %5183
          %5185 = vrot.lane.b32.xlu0 %v1638, 8
          %v5186 = vpop.permute.xlu0 %5185
          %vm5195 = vcmask 97344
          %5196 = vst.msk [vmem:[%s5129] sm:$0xff] %vm5195, %v5172
          %5197 = vst.msk [vmem:[%s5129 + $0x8] sm:$0xff] %vm5195, %v5174
          %5198 = vst.msk [vmem:[%s5129 + $0x10] sm:$0xff] %vm5195, %v5176
          %5199 = vst.msk [vmem:[%s5129 + $0x18] sm:$0xff] %vm5195, %v5178
          %5200 = vst.msk [vmem:[%s5129 + $0x20] sm:$0xff] %vm5195, %v5180
          %5201 = vst.msk [vmem:[%s5129 + $0x28] sm:$0xff] %vm5195, %v5182
          %5202 = vst.msk [vmem:[%s5129 + $0x30] sm:$0xff] %vm5195, %v5184
          %5203 = vst.msk [vmem:[%s5129 + $0x38] sm:$0xff] %vm5195, %v5186
          %5212 = vrot.lane.b32.xlu0 %v1562, 12
          %v5213 = vpop.permute.xlu0 %5212
          %5214 = vrot.lane.b32.xlu0 %v1563, 12
          %v5215 = vpop.permute.xlu0 %5214
          %5216 = vrot.lane.b32.xlu0 %v1564, 12
          %v5217 = vpop.permute.xlu0 %5216
          %5218 = vrot.lane.b32.xlu0 %v1565, 12
          %v5219 = vpop.permute.xlu0 %5218
          %5220 = vrot.lane.b32.xlu0 %v1566, 12
          %v5221 = vpop.permute.xlu0 %5220
          %5222 = vrot.lane.b32.xlu0 %v1567, 12
          %v5223 = vpop.permute.xlu0 %5222
          %5224 = vrot.lane.b32.xlu0 %v1568, 12
          %v5225 = vpop.permute.xlu0 %5224
          %5226 = vrot.lane.b32.xlu0 %v1569, 12
          %v5227 = vpop.permute.xlu0 %5226
          %vm5236 = vcmask 113760
          %5237 = vst.msk [vmem:[%s5129] sm:$0xff] %vm5236, %v5213
          %5238 = vst.msk [vmem:[%s5129 + $0x8] sm:$0xff] %vm5236, %v5215
          %5239 = vst.msk [vmem:[%s5129 + $0x10] sm:$0xff] %vm5236, %v5217
          %5240 = vst.msk [vmem:[%s5129 + $0x18] sm:$0xff] %vm5236, %v5219
          %5241 = vst.msk [vmem:[%s5129 + $0x20] sm:$0xff] %vm5236, %v5221
          %5242 = vst.msk [vmem:[%s5129 + $0x28] sm:$0xff] %vm5236, %v5223
          %5243 = vst.msk [vmem:[%s5129 + $0x30] sm:$0xff] %vm5236, %v5225
          %5244 = vst.msk [vmem:[%s5129 + $0x38] sm:$0xff] %vm5236, %v5227
          %vm5245 = vcmask 261248
          %5246 = vst.msk [vmem:[%s5129] sm:$0xff] %vm5245, %v2684
          %5247 = vst.msk [vmem:[%s5129 + $0x8] sm:$0xff] %vm5245, %v2685
          %5248 = vst.msk [vmem:[%s5129 + $0x10] sm:$0xff] %vm5245, %v2686
          %5249 = vst.msk [vmem:[%s5129 + $0x18] sm:$0xff] %vm5245, %v2687
          %5250 = vst.msk [vmem:[%s5129 + $0x20] sm:$0xff] %vm5245, %v2688
          %5251 = vst.msk [vmem:[%s5129 + $0x28] sm:$0xff] %vm5245, %v2689
          %5252 = vst.msk [vmem:[%s5129 + $0x30] sm:$0xff] %vm5245, %v2690
          %5253 = vst.msk [vmem:[%s5129 + $0x38] sm:$0xff] %vm5245, %v2691
          %5262 = vrot.lane.b32.xlu0 %v5000, 28
          %v5263 = vpop.permute.xlu0 %5262
          %5264 = vrot.lane.b32.xlu0 %v5001, 28
          %v5265 = vpop.permute.xlu0 %5264
          %5266 = vrot.lane.b32.xlu0 %v5002, 28
          %v5267 = vpop.permute.xlu0 %5266
          %5268 = vrot.lane.b32.xlu0 %v5003, 28
          %v5269 = vpop.permute.xlu0 %5268
          %5270 = vrot.lane.b32.xlu0 %v5004, 28
          %v5271 = vpop.permute.xlu0 %5270
          %5272 = vrot.lane.b32.xlu0 %v5005, 28
          %v5273 = vpop.permute.xlu0 %5272
          %5274 = vrot.lane.b32.xlu0 %v5006, 28
          %v5275 = vpop.permute.xlu0 %5274
          %5276 = vrot.lane.b32.xlu0 %v5007, 28
          %v5277 = vpop.permute.xlu0 %5276
          %vm5286 = vcmask 392448
          %5287 = vst.msk [vmem:[%s5129] sm:$0xff] %vm5286, %v5263
          %5288 = vst.msk [vmem:[%s5129 + $0x8] sm:$0xff] %vm5286, %v5265
          %5289 = vst.msk [vmem:[%s5129 + $0x10] sm:$0xff] %vm5286, %v5267
          %5290 = vst.msk [vmem:[%s5129 + $0x18] sm:$0xff] %vm5286, %v5269
          %5291 = vst.msk [vmem:[%s5129 + $0x20] sm:$0xff] %vm5286, %v5271
          %5292 = vst.msk [vmem:[%s5129 + $0x28] sm:$0xff] %vm5286, %v5273
          %5293 = vst.msk [vmem:[%s5129 + $0x30] sm:$0xff] %vm5286, %v5275
          %5294 = vst.msk [vmem:[%s5129 + $0x38] sm:$0xff] %vm5286, %v5277
          %5295 = vrot.lane.b32.xlu0 %v3805, 44
          %v5296 = vpop.permute.xlu0 %5295
          %5297 = vrot.lane.b32.xlu0 %v3806, 44
          %v5298 = vpop.permute.xlu0 %5297
          %5299 = vrot.lane.b32.xlu0 %v3807, 44
          %v5300 = vpop.permute.xlu0 %5299
          %5301 = vrot.lane.b32.xlu0 %v3808, 44
          %v5302 = vpop.permute.xlu0 %5301
          %5303 = vrot.lane.b32.xlu0 %v3809, 44
          %v5304 = vpop.permute.xlu0 %5303
          %5305 = vrot.lane.b32.xlu0 %v3810, 44
          %v5306 = vpop.permute.xlu0 %5305
          %5307 = vrot.lane.b32.xlu0 %v3811, 44
          %v5308 = vpop.permute.xlu0 %5307
          %5309 = vrot.lane.b32.xlu0 %v3812, 44
          %v5310 = vpop.permute.xlu0 %5309
          %vm5319 = vcmask 425344
          %5320 = vst.msk [vmem:[%s5129] sm:$0xff] %vm5319, %v5296
          %5321 = vst.msk [vmem:[%s5129 + $0x8] sm:$0xff] %vm5319, %v5298
          %5322 = vst.msk [vmem:[%s5129 + $0x10] sm:$0xff] %vm5319, %v5300
          %5323 = vst.msk [vmem:[%s5129 + $0x18] sm:$0xff] %vm5319, %v5302
          %5324 = vst.msk [vmem:[%s5129 + $0x20] sm:$0xff] %vm5319, %v5304
          %5325 = vst.msk [vmem:[%s5129 + $0x28] sm:$0xff] %vm5319, %v5306
          %5326 = vst.msk [vmem:[%s5129 + $0x30] sm:$0xff] %vm5319, %v5308
          %5327 = vst.msk [vmem:[%s5129 + $0x38] sm:$0xff] %vm5319, %v5310
          %5328 = vrot.lane.b32.xlu0 %v5000, 124
          %v5329 = vpop.permute.xlu0 %5328
          %5330 = vrot.lane.b32.xlu0 %v5001, 124
          %v5331 = vpop.permute.xlu0 %5330
          %5332 = vrot.lane.b32.xlu0 %v5002, 124
          %v5333 = vpop.permute.xlu0 %5332
          %5334 = vrot.lane.b32.xlu0 %v5003, 124
          %v5335 = vpop.permute.xlu0 %5334
          %5336 = vrot.lane.b32.xlu0 %v5004, 124
          %v5337 = vpop.permute.xlu0 %5336
          %5338 = vrot.lane.b32.xlu0 %v5005, 124
          %v5339 = vpop.permute.xlu0 %5338
          %5340 = vrot.lane.b32.xlu0 %v5006, 124
          %v5341 = vpop.permute.xlu0 %5340
          %5342 = vrot.lane.b32.xlu0 %v5007, 124
          %v5343 = vpop.permute.xlu0 %5342
          %5352 = vrot.lane.b32.xlu0 %v3805, 124
          %v5353 = vpop.permute.xlu0 %5352
          %5354 = vrot.lane.b32.xlu0 %v3806, 124
          %v5355 = vpop.permute.xlu0 %5354
          %5356 = vrot.lane.b32.xlu0 %v3807, 124
          %v5357 = vpop.permute.xlu0 %5356
          %5358 = vrot.lane.b32.xlu0 %v3808, 124
          %v5359 = vpop.permute.xlu0 %5358
          %5360 = vrot.lane.b32.xlu0 %v3809, 124
          %v5361 = vpop.permute.xlu0 %5360
          %5362 = vrot.lane.b32.xlu0 %v3810, 124
          %v5363 = vpop.permute.xlu0 %5362
          %5364 = vrot.lane.b32.xlu0 %v3811, 124
          %v5365 = vpop.permute.xlu0 %5364
          %5366 = vrot.lane.b32.xlu0 %v3812, 124
          %v5367 = vpop.permute.xlu0 %5366
        $region147: #{kalman_net_filter.1} parent=137 // loop_footer
          %s1503 = sadd.s32 1, %s1499
        $region148: #{kalman_net_filter.1} parent=137 // loop_footer_branch
          %1498 = sbr.rel target = $region144
        $region149: #{kalman_net_filter.1} parent=137 // loop_exit
          _
        %s5376 = sand.u32 %s491, 1
        %s5377 = sand.u32 %s491, 1
        %s5378 = smul.addr %s5377, 768
        %s5379 = scalar_lea.vmem [#allocation3], %s5378
        // Predicated region
        $region150: #{kalman_net_filter.1} parent=137 // pred_check
          %p5380 = pneg %p501
        $region151: #{kalman_net_filter.1} parent=137 // pred_check_branch
          %5382 = sbr.rel (%p5380) target = $region153
        $region152: #{kalman_net_filter.1} parent=137 // pred_region
          %s5383 = smul.u32 8, %s32
          %s5384 = smul.addr %s5383, 8
          %s5385 = scalar_lea.vmem %s21, %s5384
          // Predicated region
          $region154: #{kalman_net_filter.1} parent=152 // pred_check
            _
          $region155: #{kalman_net_filter.1} parent=152 // pred_check_branch
            %5387 = sbr.rel (0) target = $region157
          $region156: #{kalman_net_filter.1} parent=152 // pred_region
            // Predicated region
            $region158: #{kalman_net_filter.1} parent=156 // pred_check
              _
            $region159: #{kalman_net_filter.1} parent=156 // pred_check_branch
              %5389 = sbr.rel (0) target = $region161
            $region160: #{kalman_net_filter.1} parent=156 // pred_region
              // Predicated region
              $region173: #{kalman_net_filter.1} parent=160 // pred_check
                _
              $region174: #{kalman_net_filter.1} parent=160 // pred_check_branch
                %5595 = sbr.rel (0) target = $region176
              $region175: #{kalman_net_filter.1} parent=160 // pred_region
                loop: start=0, step=1, limit=1
                $region177: #{kalman_net_filter.1} parent=175 // loop_pre_header
                  _
                $region178: #{kalman_net_filter.1} parent=175 // loop_header
                  %s5597 = sphi 0, %s5601
                  %p5598 = scmp.ge.s32.totalorder %s5597, 1
                  %s5602 = sphi %s5379, %s5379
                  %s5603 = sphi %s5385, %s5385
                $region179: #{kalman_net_filter.1} parent=175 // loop_header_branch
                  %5600 = sbr.rel (%p5598) target = $region183
                $region180: #{kalman_net_filter.1} parent=175 // loop_body
                  %v5604 = vld [vmem:[%s5602] sm:$0xff]
                  %5605 = vst [vmem:[%s5603] sm:$0xff] %v5604
                  %v5606 = vld [vmem:[%s5602 + $0x8] sm:$0xff]
                  %5607 = vst [vmem:[%s5603 + $0x8] sm:$0xff] %v5606
                  %v5608 = vld [vmem:[%s5602 + $0x10] sm:$0xff]
                  %5609 = vst [vmem:[%s5603 + $0x10] sm:$0xff] %v5608
                  %v5610 = vld [vmem:[%s5602 + $0x18] sm:$0xff]
                  %5611 = vst [vmem:[%s5603 + $0x18] sm:$0xff] %v5610
                  %v5612 = vld [vmem:[%s5602 + $0x20] sm:$0xff]
                  %5613 = vst [vmem:[%s5603 + $0x20] sm:$0xff] %v5612
                  %v5614 = vld [vmem:[%s5602 + $0x28] sm:$0xff]
                  %5615 = vst [vmem:[%s5603 + $0x28] sm:$0xff] %v5614
                  %v5616 = vld [vmem:[%s5602 + $0x30] sm:$0xff]
                  %5617 = vst [vmem:[%s5603 + $0x30] sm:$0xff] %v5616
                  %v5618 = vld [vmem:[%s5602 + $0x38] sm:$0xff]
                  %5619 = vst [vmem:[%s5603 + $0x38] sm:$0xff] %v5618
                  %v5620 = vld [vmem:[%s5602 + $0x40] sm:$0xff]
                  %5621 = vst [vmem:[%s5603 + $0x80] sm:$0xff] %v5620
                  %v5622 = vld [vmem:[%s5602 + $0x48] sm:$0xff]
                  %5623 = vst [vmem:[%s5603 + $0x88] sm:$0xff] %v5622
                  %v5624 = vld [vmem:[%s5602 + $0x50] sm:$0xff]
                  %5625 = vst [vmem:[%s5603 + $0x90] sm:$0xff] %v5624
                  %v5626 = vld [vmem:[%s5602 + $0x58] sm:$0xff]
                  %5627 = vst [vmem:[%s5603 + $0x98] sm:$0xff] %v5626
                  %v5628 = vld [vmem:[%s5602 + $0x60] sm:$0xff]
                  %5629 = vst [vmem:[%s5603 + $0xa0] sm:$0xff] %v5628
                  %v5630 = vld [vmem:[%s5602 + $0x68] sm:$0xff]
                  %5631 = vst [vmem:[%s5603 + $0xa8] sm:$0xff] %v5630
                  %v5632 = vld [vmem:[%s5602 + $0x70] sm:$0xff]
                  %5633 = vst [vmem:[%s5603 + $0xb0] sm:$0xff] %v5632
                  %v5634 = vld [vmem:[%s5602 + $0x78] sm:$0xff]
                  %5635 = vst [vmem:[%s5603 + $0xb8] sm:$0xff] %v5634
                  %v5636 = vld [vmem:[%s5602 + $0x80] sm:$0xff]
                  %5637 = vst [vmem:[%s5603 + $0x100] sm:$0xff] %v5636
                  %v5638 = vld [vmem:[%s5602 + $0x88] sm:$0xff]
                  %5639 = vst [vmem:[%s5603 + $0x108] sm:$0xff] %v5638
                  %v5640 = vld [vmem:[%s5602 + $0x90] sm:$0xff]
                  %5641 = vst [vmem:[%s5603 + $0x110] sm:$0xff] %v5640
                  %v5642 = vld [vmem:[%s5602 + $0x98] sm:$0xff]
                  %5643 = vst [vmem:[%s5603 + $0x118] sm:$0xff] %v5642
                  %v5644 = vld [vmem:[%s5602 + $0xa0] sm:$0xff]
                  %5645 = vst [vmem:[%s5603 + $0x120] sm:$0xff] %v5644
                  %v5646 = vld [vmem:[%s5602 + $0xa8] sm:$0xff]
                  %5647 = vst [vmem:[%s5603 + $0x128] sm:$0xff] %v5646
                  %v5648 = vld [vmem:[%s5602 + $0xb0] sm:$0xff]
                  %5649 = vst [vmem:[%s5603 + $0x130] sm:$0xff] %v5648
                  %v5650 = vld [vmem:[%s5602 + $0xb8] sm:$0xff]
                  %5651 = vst [vmem:[%s5603 + $0x138] sm:$0xff] %v5650
                  %v5652 = vld [vmem:[%s5602 + $0xc0] sm:$0xff]
                  %5653 = vst [vmem:[%s5603 + $0x180] sm:$0xff] %v5652
                  %v5654 = vld [vmem:[%s5602 + $0xc8] sm:$0xff]
                  %5655 = vst [vmem:[%s5603 + $0x188] sm:$0xff] %v5654
                  %v5656 = vld [vmem:[%s5602 + $0xd0] sm:$0xff]
                  %5657 = vst [vmem:[%s5603 + $0x190] sm:$0xff] %v5656
                  %v5658 = vld [vmem:[%s5602 + $0xd8] sm:$0xff]
                  %5659 = vst [vmem:[%s5603 + $0x198] sm:$0xff] %v5658
                  %v5660 = vld [vmem:[%s5602 + $0xe0] sm:$0xff]
                  %5661 = vst [vmem:[%s5603 + $0x1a0] sm:$0xff] %v5660
                  %v5662 = vld [vmem:[%s5602 + $0xe8] sm:$0xff]
                  %5663 = vst [vmem:[%s5603 + $0x1a8] sm:$0xff] %v5662
                  %v5664 = vld [vmem:[%s5602 + $0xf0] sm:$0xff]
                  %5665 = vst [vmem:[%s5603 + $0x1b0] sm:$0xff] %v5664
                  %v5666 = vld [vmem:[%s5602 + $0xf8] sm:$0xff]
                  %5667 = vst [vmem:[%s5603 + $0x1b8] sm:$0xff] %v5666
                  %v5668 = vld [vmem:[%s5602 + $0x100] sm:$0xff]
                  %5669 = vst [vmem:[%s5603 + $0x200] sm:$0xff] %v5668
                  %v5670 = vld [vmem:[%s5602 + $0x108] sm:$0xff]
                  %5671 = vst [vmem:[%s5603 + $0x208] sm:$0xff] %v5670
                  %v5672 = vld [vmem:[%s5602 + $0x110] sm:$0xff]
                  %5673 = vst [vmem:[%s5603 + $0x210] sm:$0xff] %v5672
                  %v5674 = vld [vmem:[%s5602 + $0x118] sm:$0xff]
                  %5675 = vst [vmem:[%s5603 + $0x218] sm:$0xff] %v5674
                  %v5676 = vld [vmem:[%s5602 + $0x120] sm:$0xff]
                  %5677 = vst [vmem:[%s5603 + $0x220] sm:$0xff] %v5676
                  %v5678 = vld [vmem:[%s5602 + $0x128] sm:$0xff]
                  %5679 = vst [vmem:[%s5603 + $0x228] sm:$0xff] %v5678
                  %v5680 = vld [vmem:[%s5602 + $0x130] sm:$0xff]
                  %5681 = vst [vmem:[%s5603 + $0x230] sm:$0xff] %v5680
                  %v5682 = vld [vmem:[%s5602 + $0x138] sm:$0xff]
                  %5683 = vst [vmem:[%s5603 + $0x238] sm:$0xff] %v5682
                  %v5684 = vld [vmem:[%s5602 + $0x140] sm:$0xff]
                  %5685 = vst [vmem:[%s5603 + $0x280] sm:$0xff] %v5684
                  %v5686 = vld [vmem:[%s5602 + $0x148] sm:$0xff]
                  %5687 = vst [vmem:[%s5603 + $0x288] sm:$0xff] %v5686
                  %v5688 = vld [vmem:[%s5602 + $0x150] sm:$0xff]
                  %5689 = vst [vmem:[%s5603 + $0x290] sm:$0xff] %v5688
                  %v5690 = vld [vmem:[%s5602 + $0x158] sm:$0xff]
                  %5691 = vst [vmem:[%s5603 + $0x298] sm:$0xff] %v5690
                  %v5692 = vld [vmem:[%s5602 + $0x160] sm:$0xff]
                  %5693 = vst [vmem:[%s5603 + $0x2a0] sm:$0xff] %v5692
                  %v5694 = vld [vmem:[%s5602 + $0x168] sm:$0xff]
                  %5695 = vst [vmem:[%s5603 + $0x2a8] sm:$0xff] %v5694
                  %v5696 = vld [vmem:[%s5602 + $0x170] sm:$0xff]
                  %5697 = vst [vmem:[%s5603 + $0x2b0] sm:$0xff] %v5696
                  %v5698 = vld [vmem:[%s5602 + $0x178] sm:$0xff]
                  %5699 = vst [vmem:[%s5603 + $0x2b8] sm:$0xff] %v5698
                  %v5700 = vld [vmem:[%s5602 + $0x180] sm:$0xff]
                  %5701 = vst [vmem:[%s5603 + $0x300] sm:$0xff] %v5700
                  %v5702 = vld [vmem:[%s5602 + $0x188] sm:$0xff]
                  %5703 = vst [vmem:[%s5603 + $0x308] sm:$0xff] %v5702
                  %v5704 = vld [vmem:[%s5602 + $0x190] sm:$0xff]
                  %5705 = vst [vmem:[%s5603 + $0x310] sm:$0xff] %v5704
                  %v5706 = vld [vmem:[%s5602 + $0x198] sm:$0xff]
                  %5707 = vst [vmem:[%s5603 + $0x318] sm:$0xff] %v5706
                  %v5708 = vld [vmem:[%s5602 + $0x1a0] sm:$0xff]
                  %5709 = vst [vmem:[%s5603 + $0x320] sm:$0xff] %v5708
                  %v5710 = vld [vmem:[%s5602 + $0x1a8] sm:$0xff]
                  %5711 = vst [vmem:[%s5603 + $0x328] sm:$0xff] %v5710
                  %v5712 = vld [vmem:[%s5602 + $0x1b0] sm:$0xff]
                  %5713 = vst [vmem:[%s5603 + $0x330] sm:$0xff] %v5712
                  %v5714 = vld [vmem:[%s5602 + $0x1b8] sm:$0xff]
                  %5715 = vst [vmem:[%s5603 + $0x338] sm:$0xff] %v5714
                  %v5716 = vld [vmem:[%s5602 + $0x1c0] sm:$0xff]
                  %5717 = vst [vmem:[%s5603 + $0x380] sm:$0xff] %v5716
                  %v5718 = vld [vmem:[%s5602 + $0x1c8] sm:$0xff]
                  %5719 = vst [vmem:[%s5603 + $0x388] sm:$0xff] %v5718
                  %v5720 = vld [vmem:[%s5602 + $0x1d0] sm:$0xff]
                  %5721 = vst [vmem:[%s5603 + $0x390] sm:$0xff] %v5720
                  %v5722 = vld [vmem:[%s5602 + $0x1d8] sm:$0xff]
                  %5723 = vst [vmem:[%s5603 + $0x398] sm:$0xff] %v5722
                  %v5724 = vld [vmem:[%s5602 + $0x1e0] sm:$0xff]
                  %5725 = vst [vmem:[%s5603 + $0x3a0] sm:$0xff] %v5724
                  %v5726 = vld [vmem:[%s5602 + $0x1e8] sm:$0xff]
                  %5727 = vst [vmem:[%s5603 + $0x3a8] sm:$0xff] %v5726
                  %v5728 = vld [vmem:[%s5602 + $0x1f0] sm:$0xff]
                  %5729 = vst [vmem:[%s5603 + $0x3b0] sm:$0xff] %v5728
                  %v5730 = vld [vmem:[%s5602 + $0x1f8] sm:$0xff]
                  %5731 = vst [vmem:[%s5603 + $0x3b8] sm:$0xff] %v5730
                  %v5732 = vld [vmem:[%s5602 + $0x200] sm:$0xff]
                  %5733 = vst [vmem:[%s5603 + $0x400] sm:$0xff] %v5732
                  %v5734 = vld [vmem:[%s5602 + $0x208] sm:$0xff]
                  %5735 = vst [vmem:[%s5603 + $0x408] sm:$0xff] %v5734
                  %v5736 = vld [vmem:[%s5602 + $0x210] sm:$0xff]
                  %5737 = vst [vmem:[%s5603 + $0x410] sm:$0xff] %v5736
                  %v5738 = vld [vmem:[%s5602 + $0x218] sm:$0xff]
                  %5739 = vst [vmem:[%s5603 + $0x418] sm:$0xff] %v5738
                  %v5740 = vld [vmem:[%s5602 + $0x220] sm:$0xff]
                  %5741 = vst [vmem:[%s5603 + $0x420] sm:$0xff] %v5740
                  %v5742 = vld [vmem:[%s5602 + $0x228] sm:$0xff]
                  %5743 = vst [vmem:[%s5603 + $0x428] sm:$0xff] %v5742
                  %v5744 = vld [vmem:[%s5602 + $0x230] sm:$0xff]
                  %5745 = vst [vmem:[%s5603 + $0x430] sm:$0xff] %v5744
                  %v5746 = vld [vmem:[%s5602 + $0x238] sm:$0xff]
                  %5747 = vst [vmem:[%s5603 + $0x438] sm:$0xff] %v5746
                  %v5748 = vld [vmem:[%s5602 + $0x240] sm:$0xff]
                  %5749 = vst [vmem:[%s5603 + $0x480] sm:$0xff] %v5748
                  %v5750 = vld [vmem:[%s5602 + $0x248] sm:$0xff]
                  %5751 = vst [vmem:[%s5603 + $0x488] sm:$0xff] %v5750
                  %v5752 = vld [vmem:[%s5602 + $0x250] sm:$0xff]
                  %5753 = vst [vmem:[%s5603 + $0x490] sm:$0xff] %v5752
                  %v5754 = vld [vmem:[%s5602 + $0x258] sm:$0xff]
                  %5755 = vst [vmem:[%s5603 + $0x498] sm:$0xff] %v5754
                  %v5756 = vld [vmem:[%s5602 + $0x260] sm:$0xff]
                  %5757 = vst [vmem:[%s5603 + $0x4a0] sm:$0xff] %v5756
                  %v5758 = vld [vmem:[%s5602 + $0x268] sm:$0xff]
                  %5759 = vst [vmem:[%s5603 + $0x4a8] sm:$0xff] %v5758
                  %v5760 = vld [vmem:[%s5602 + $0x270] sm:$0xff]
                  %5761 = vst [vmem:[%s5603 + $0x4b0] sm:$0xff] %v5760
                  %v5762 = vld [vmem:[%s5602 + $0x278] sm:$0xff]
                  %5763 = vst [vmem:[%s5603 + $0x4b8] sm:$0xff] %v5762
                  %v5764 = vld [vmem:[%s5602 + $0x280] sm:$0xff]
                  %5765 = vst [vmem:[%s5603 + $0x500] sm:$0xff] %v5764
                  %v5766 = vld [vmem:[%s5602 + $0x288] sm:$0xff]
                  %5767 = vst [vmem:[%s5603 + $0x508] sm:$0xff] %v5766
                  %v5768 = vld [vmem:[%s5602 + $0x290] sm:$0xff]
                  %5769 = vst [vmem:[%s5603 + $0x510] sm:$0xff] %v5768
                  %v5770 = vld [vmem:[%s5602 + $0x298] sm:$0xff]
                  %5771 = vst [vmem:[%s5603 + $0x518] sm:$0xff] %v5770
                  %v5772 = vld [vmem:[%s5602 + $0x2a0] sm:$0xff]
                  %5773 = vst [vmem:[%s5603 + $0x520] sm:$0xff] %v5772
                  %v5774 = vld [vmem:[%s5602 + $0x2a8] sm:$0xff]
                  %5775 = vst [vmem:[%s5603 + $0x528] sm:$0xff] %v5774
                  %v5776 = vld [vmem:[%s5602 + $0x2b0] sm:$0xff]
                  %5777 = vst [vmem:[%s5603 + $0x530] sm:$0xff] %v5776
                  %v5778 = vld [vmem:[%s5602 + $0x2b8] sm:$0xff]
                  %5779 = vst [vmem:[%s5603 + $0x538] sm:$0xff] %v5778
                  %v5780 = vld [vmem:[%s5602 + $0x2c0] sm:$0xff]
                  %5781 = vst [vmem:[%s5603 + $0x580] sm:$0xff] %v5780
                  %v5782 = vld [vmem:[%s5602 + $0x2c8] sm:$0xff]
                  %5783 = vst [vmem:[%s5603 + $0x588] sm:$0xff] %v5782
                  %v5784 = vld [vmem:[%s5602 + $0x2d0] sm:$0xff]
                  %5785 = vst [vmem:[%s5603 + $0x590] sm:$0xff] %v5784
                  %v5786 = vld [vmem:[%s5602 + $0x2d8] sm:$0xff]
                  %5787 = vst [vmem:[%s5603 + $0x598] sm:$0xff] %v5786
                  %v5788 = vld [vmem:[%s5602 + $0x2e0] sm:$0xff]
                  %5789 = vst [vmem:[%s5603 + $0x5a0] sm:$0xff] %v5788
                  %v5790 = vld [vmem:[%s5602 + $0x2e8] sm:$0xff]
                  %5791 = vst [vmem:[%s5603 + $0x5a8] sm:$0xff] %v5790
                  %v5792 = vld [vmem:[%s5602 + $0x2f0] sm:$0xff]
                  %5793 = vst [vmem:[%s5603 + $0x5b0] sm:$0xff] %v5792
                  %v5794 = vld [vmem:[%s5602 + $0x2f8] sm:$0xff]
                  %5795 = vst [vmem:[%s5603 + $0x5b8] sm:$0xff] %v5794
                $region181: #{kalman_net_filter.1} parent=175 // loop_footer
                  %s5601 = sadd.s32 1, %s5597
                $region182: #{kalman_net_filter.1} parent=175 // loop_footer_branch
                  %5596 = sbr.rel target = $region178
                $region183: #{kalman_net_filter.1} parent=175 // loop_exit
                  _
              $region176: #{kalman_net_filter.1} parent=160 // pred_fallthru
                _
              // Predicated region
              $region184: #{kalman_net_filter.1} parent=160 // pred_check
                _
              $region185: #{kalman_net_filter.1} parent=160 // pred_check_branch
                %5797 = sbr.rel target = $region187
              $region186: #{kalman_net_filter.1} parent=160 // pred_region
                _
              $region187: #{kalman_net_filter.1} parent=160 // pred_fallthru
                _
            $region161: #{kalman_net_filter.1} parent=156 // pred_fallthru
              _
            // Predicated region
            $region162: #{kalman_net_filter.1} parent=156 // pred_check
              _
            $region163: #{kalman_net_filter.1} parent=156 // pred_check_branch
              %5391 = sbr.rel target = $region165
            $region164: #{kalman_net_filter.1} parent=156 // pred_region
              %s5393 = ssub.s32 256, 1
              loop: start=0, step=1, limit=1
              $region166: #{kalman_net_filter.1} parent=164 // loop_pre_header
                _
              $region167: #{kalman_net_filter.1} parent=164 // loop_header
                %s5395 = sphi 0, %s5399
                %p5396 = scmp.ge.s32.totalorder %s5395, 1
                %s5400 = sphi %s5379, %s5379
                %s5401 = sphi %s5385, %s5385
              $region168: #{kalman_net_filter.1} parent=164 // loop_header_branch
                %5398 = sbr.rel (%p5396) target = $region172
              $region169: #{kalman_net_filter.1} parent=164 // loop_body
                %v5402 = vld [vmem:[%s5400] sm:%s5393]
                %5403 = vst [vmem:[%s5401] sm:%s5393] %v5402
                %v5404 = vld [vmem:[%s5400 + $0x8] sm:%s5393]
                %5405 = vst [vmem:[%s5401 + $0x8] sm:%s5393] %v5404
                %v5406 = vld [vmem:[%s5400 + $0x10] sm:%s5393]
                %5407 = vst [vmem:[%s5401 + $0x10] sm:%s5393] %v5406
                %v5408 = vld [vmem:[%s5400 + $0x18] sm:%s5393]
                %5409 = vst [vmem:[%s5401 + $0x18] sm:%s5393] %v5408
                %v5410 = vld [vmem:[%s5400 + $0x20] sm:%s5393]
                %5411 = vst [vmem:[%s5401 + $0x20] sm:%s5393] %v5410
                %v5412 = vld [vmem:[%s5400 + $0x28] sm:%s5393]
                %5413 = vst [vmem:[%s5401 + $0x28] sm:%s5393] %v5412
                %v5414 = vld [vmem:[%s5400 + $0x30] sm:%s5393]
                %5415 = vst [vmem:[%s5401 + $0x30] sm:%s5393] %v5414
                %v5416 = vld [vmem:[%s5400 + $0x38] sm:%s5393]
                %5417 = vst [vmem:[%s5401 + $0x38] sm:%s5393] %v5416
                %v5418 = vld [vmem:[%s5400 + $0x40] sm:%s5393]
                %5419 = vst [vmem:[%s5401 + $0x80] sm:%s5393] %v5418
                %v5420 = vld [vmem:[%s5400 + $0x48] sm:%s5393]
                %5421 = vst [vmem:[%s5401 + $0x88] sm:%s5393] %v5420
                %v5422 = vld [vmem:[%s5400 + $0x50] sm:%s5393]
                %5423 = vst [vmem:[%s5401 + $0x90] sm:%s5393] %v5422
                %v5424 = vld [vmem:[%s5400 + $0x58] sm:%s5393]
                %5425 = vst [vmem:[%s5401 + $0x98] sm:%s5393] %v5424
                %v5426 = vld [vmem:[%s5400 + $0x60] sm:%s5393]
                %5427 = vst [vmem:[%s5401 + $0xa0] sm:%s5393] %v5426
                %v5428 = vld [vmem:[%s5400 + $0x68] sm:%s5393]
                %5429 = vst [vmem:[%s5401 + $0xa8] sm:%s5393] %v5428
                %v5430 = vld [vmem:[%s5400 + $0x70] sm:%s5393]
                %5431 = vst [vmem:[%s5401 + $0xb0] sm:%s5393] %v5430
                %v5432 = vld [vmem:[%s5400 + $0x78] sm:%s5393]
                %5433 = vst [vmem:[%s5401 + $0xb8] sm:%s5393] %v5432
                %v5434 = vld [vmem:[%s5400 + $0x80] sm:%s5393]
                %5435 = vst [vmem:[%s5401 + $0x100] sm:%s5393] %v5434
                %v5436 = vld [vmem:[%s5400 + $0x88] sm:%s5393]
                %5437 = vst [vmem:[%s5401 + $0x108] sm:%s5393] %v5436
                %v5438 = vld [vmem:[%s5400 + $0x90] sm:%s5393]
                %5439 = vst [vmem:[%s5401 + $0x110] sm:%s5393] %v5438
                %v5440 = vld [vmem:[%s5400 + $0x98] sm:%s5393]
                %5441 = vst [vmem:[%s5401 + $0x118] sm:%s5393] %v5440
                %v5442 = vld [vmem:[%s5400 + $0xa0] sm:%s5393]
                %5443 = vst [vmem:[%s5401 + $0x120] sm:%s5393] %v5442
                %v5444 = vld [vmem:[%s5400 + $0xa8] sm:%s5393]
                %5445 = vst [vmem:[%s5401 + $0x128] sm:%s5393] %v5444
                %v5446 = vld [vmem:[%s5400 + $0xb0] sm:%s5393]
                %5447 = vst [vmem:[%s5401 + $0x130] sm:%s5393] %v5446
                %v5448 = vld [vmem:[%s5400 + $0xb8] sm:%s5393]
                %5449 = vst [vmem:[%s5401 + $0x138] sm:%s5393] %v5448
                %v5450 = vld [vmem:[%s5400 + $0xc0] sm:%s5393]
                %5451 = vst [vmem:[%s5401 + $0x180] sm:%s5393] %v5450
                %v5452 = vld [vmem:[%s5400 + $0xc8] sm:%s5393]
                %5453 = vst [vmem:[%s5401 + $0x188] sm:%s5393] %v5452
                %v5454 = vld [vmem:[%s5400 + $0xd0] sm:%s5393]
                %5455 = vst [vmem:[%s5401 + $0x190] sm:%s5393] %v5454
                %v5456 = vld [vmem:[%s5400 + $0xd8] sm:%s5393]
                %5457 = vst [vmem:[%s5401 + $0x198] sm:%s5393] %v5456
                %v5458 = vld [vmem:[%s5400 + $0xe0] sm:%s5393]
                %5459 = vst [vmem:[%s5401 + $0x1a0] sm:%s5393] %v5458
                %v5460 = vld [vmem:[%s5400 + $0xe8] sm:%s5393]
                %5461 = vst [vmem:[%s5401 + $0x1a8] sm:%s5393] %v5460
                %v5462 = vld [vmem:[%s5400 + $0xf0] sm:%s5393]
                %5463 = vst [vmem:[%s5401 + $0x1b0] sm:%s5393] %v5462
                %v5464 = vld [vmem:[%s5400 + $0xf8] sm:%s5393]
                %5465 = vst [vmem:[%s5401 + $0x1b8] sm:%s5393] %v5464
                %v5466 = vld [vmem:[%s5400 + $0x100] sm:%s5393]
                %5467 = vst [vmem:[%s5401 + $0x200] sm:%s5393] %v5466
                %v5468 = vld [vmem:[%s5400 + $0x108] sm:%s5393]
                %5469 = vst [vmem:[%s5401 + $0x208] sm:%s5393] %v5468
                %v5470 = vld [vmem:[%s5400 + $0x110] sm:%s5393]
                %5471 = vst [vmem:[%s5401 + $0x210] sm:%s5393] %v5470
                %v5472 = vld [vmem:[%s5400 + $0x118] sm:%s5393]
                %5473 = vst [vmem:[%s5401 + $0x218] sm:%s5393] %v5472
                %v5474 = vld [vmem:[%s5400 + $0x120] sm:%s5393]
                %5475 = vst [vmem:[%s5401 + $0x220] sm:%s5393] %v5474
                %v5476 = vld [vmem:[%s5400 + $0x128] sm:%s5393]
                %5477 = vst [vmem:[%s5401 + $0x228] sm:%s5393] %v5476
                %v5478 = vld [vmem:[%s5400 + $0x130] sm:%s5393]
                %5479 = vst [vmem:[%s5401 + $0x230] sm:%s5393] %v5478
                %v5480 = vld [vmem:[%s5400 + $0x138] sm:%s5393]
                %5481 = vst [vmem:[%s5401 + $0x238] sm:%s5393] %v5480
                %v5482 = vld [vmem:[%s5400 + $0x140] sm:%s5393]
                %5483 = vst [vmem:[%s5401 + $0x280] sm:%s5393] %v5482
                %v5484 = vld [vmem:[%s5400 + $0x148] sm:%s5393]
                %5485 = vst [vmem:[%s5401 + $0x288] sm:%s5393] %v5484
                %v5486 = vld [vmem:[%s5400 + $0x150] sm:%s5393]
                %5487 = vst [vmem:[%s5401 + $0x290] sm:%s5393] %v5486
                %v5488 = vld [vmem:[%s5400 + $0x158] sm:%s5393]
                %5489 = vst [vmem:[%s5401 + $0x298] sm:%s5393] %v5488
                %v5490 = vld [vmem:[%s5400 + $0x160] sm:%s5393]
                %5491 = vst [vmem:[%s5401 + $0x2a0] sm:%s5393] %v5490
                %v5492 = vld [vmem:[%s5400 + $0x168] sm:%s5393]
                %5493 = vst [vmem:[%s5401 + $0x2a8] sm:%s5393] %v5492
                %v5494 = vld [vmem:[%s5400 + $0x170] sm:%s5393]
                %5495 = vst [vmem:[%s5401 + $0x2b0] sm:%s5393] %v5494
                %v5496 = vld [vmem:[%s5400 + $0x178] sm:%s5393]
                %5497 = vst [vmem:[%s5401 + $0x2b8] sm:%s5393] %v5496
                %v5498 = vld [vmem:[%s5400 + $0x180] sm:%s5393]
                %5499 = vst [vmem:[%s5401 + $0x300] sm:%s5393] %v5498
                %v5500 = vld [vmem:[%s5400 + $0x188] sm:%s5393]
                %5501 = vst [vmem:[%s5401 + $0x308] sm:%s5393] %v5500
                %v5502 = vld [vmem:[%s5400 + $0x190] sm:%s5393]
                %5503 = vst [vmem:[%s5401 + $0x310] sm:%s5393] %v5502
                %v5504 = vld [vmem:[%s5400 + $0x198] sm:%s5393]
                %5505 = vst [vmem:[%s5401 + $0x318] sm:%s5393] %v5504
                %v5506 = vld [vmem:[%s5400 + $0x1a0] sm:%s5393]
                %5507 = vst [vmem:[%s5401 + $0x320] sm:%s5393] %v5506
                %v5508 = vld [vmem:[%s5400 + $0x1a8] sm:%s5393]
                %5509 = vst [vmem:[%s5401 + $0x328] sm:%s5393] %v5508
                %v5510 = vld [vmem:[%s5400 + $0x1b0] sm:%s5393]
                %5511 = vst [vmem:[%s5401 + $0x330] sm:%s5393] %v5510
                %v5512 = vld [vmem:[%s5400 + $0x1b8] sm:%s5393]
                %5513 = vst [vmem:[%s5401 + $0x338] sm:%s5393] %v5512
                %v5514 = vld [vmem:[%s5400 + $0x1c0] sm:%s5393]
                %5515 = vst [vmem:[%s5401 + $0x380] sm:%s5393] %v5514
                %v5516 = vld [vmem:[%s5400 + $0x1c8] sm:%s5393]
                %5517 = vst [vmem:[%s5401 + $0x388] sm:%s5393] %v5516
                %v5518 = vld [vmem:[%s5400 + $0x1d0] sm:%s5393]
                %5519 = vst [vmem:[%s5401 + $0x390] sm:%s5393] %v5518
                %v5520 = vld [vmem:[%s5400 + $0x1d8] sm:%s5393]
                %5521 = vst [vmem:[%s5401 + $0x398] sm:%s5393] %v5520
                %v5522 = vld [vmem:[%s5400 + $0x1e0] sm:%s5393]
                %5523 = vst [vmem:[%s5401 + $0x3a0] sm:%s5393] %v5522
                %v5524 = vld [vmem:[%s5400 + $0x1e8] sm:%s5393]
                %5525 = vst [vmem:[%s5401 + $0x3a8] sm:%s5393] %v5524
                %v5526 = vld [vmem:[%s5400 + $0x1f0] sm:%s5393]
                %5527 = vst [vmem:[%s5401 + $0x3b0] sm:%s5393] %v5526
                %v5528 = vld [vmem:[%s5400 + $0x1f8] sm:%s5393]
                %5529 = vst [vmem:[%s5401 + $0x3b8] sm:%s5393] %v5528
                %v5530 = vld [vmem:[%s5400 + $0x200] sm:%s5393]
                %5531 = vst [vmem:[%s5401 + $0x400] sm:%s5393] %v5530
                %v5532 = vld [vmem:[%s5400 + $0x208] sm:%s5393]
                %5533 = vst [vmem:[%s5401 + $0x408] sm:%s5393] %v5532
                %v5534 = vld [vmem:[%s5400 + $0x210] sm:%s5393]
                %5535 = vst [vmem:[%s5401 + $0x410] sm:%s5393] %v5534
                %v5536 = vld [vmem:[%s5400 + $0x218] sm:%s5393]
                %5537 = vst [vmem:[%s5401 + $0x418] sm:%s5393] %v5536
                %v5538 = vld [vmem:[%s5400 + $0x220] sm:%s5393]
                %5539 = vst [vmem:[%s5401 + $0x420] sm:%s5393] %v5538
                %v5540 = vld [vmem:[%s5400 + $0x228] sm:%s5393]
                %5541 = vst [vmem:[%s5401 + $0x428] sm:%s5393] %v5540
                %v5542 = vld [vmem:[%s5400 + $0x230] sm:%s5393]
                %5543 = vst [vmem:[%s5401 + $0x430] sm:%s5393] %v5542
                %v5544 = vld [vmem:[%s5400 + $0x238] sm:%s5393]
                %5545 = vst [vmem:[%s5401 + $0x438] sm:%s5393] %v5544
                %v5546 = vld [vmem:[%s5400 + $0x240] sm:%s5393]
                %5547 = vst [vmem:[%s5401 + $0x480] sm:%s5393] %v5546
                %v5548 = vld [vmem:[%s5400 + $0x248] sm:%s5393]
                %5549 = vst [vmem:[%s5401 + $0x488] sm:%s5393] %v5548
                %v5550 = vld [vmem:[%s5400 + $0x250] sm:%s5393]
                %5551 = vst [vmem:[%s5401 + $0x490] sm:%s5393] %v5550
                %v5552 = vld [vmem:[%s5400 + $0x258] sm:%s5393]
                %5553 = vst [vmem:[%s5401 + $0x498] sm:%s5393] %v5552
                %v5554 = vld [vmem:[%s5400 + $0x260] sm:%s5393]
                %5555 = vst [vmem:[%s5401 + $0x4a0] sm:%s5393] %v5554
                %v5556 = vld [vmem:[%s5400 + $0x268] sm:%s5393]
                %5557 = vst [vmem:[%s5401 + $0x4a8] sm:%s5393] %v5556
                %v5558 = vld [vmem:[%s5400 + $0x270] sm:%s5393]
                %5559 = vst [vmem:[%s5401 + $0x4b0] sm:%s5393] %v5558
                %v5560 = vld [vmem:[%s5400 + $0x278] sm:%s5393]
                %5561 = vst [vmem:[%s5401 + $0x4b8] sm:%s5393] %v5560
                %v5562 = vld [vmem:[%s5400 + $0x280] sm:%s5393]
                %5563 = vst [vmem:[%s5401 + $0x500] sm:%s5393] %v5562
                %v5564 = vld [vmem:[%s5400 + $0x288] sm:%s5393]
                %5565 = vst [vmem:[%s5401 + $0x508] sm:%s5393] %v5564
                %v5566 = vld [vmem:[%s5400 + $0x290] sm:%s5393]
                %5567 = vst [vmem:[%s5401 + $0x510] sm:%s5393] %v5566
                %v5568 = vld [vmem:[%s5400 + $0x298] sm:%s5393]
                %5569 = vst [vmem:[%s5401 + $0x518] sm:%s5393] %v5568
                %v5570 = vld [vmem:[%s5400 + $0x2a0] sm:%s5393]
                %5571 = vst [vmem:[%s5401 + $0x520] sm:%s5393] %v5570
                %v5572 = vld [vmem:[%s5400 + $0x2a8] sm:%s5393]
                %5573 = vst [vmem:[%s5401 + $0x528] sm:%s5393] %v5572
                %v5574 = vld [vmem:[%s5400 + $0x2b0] sm:%s5393]
                %5575 = vst [vmem:[%s5401 + $0x530] sm:%s5393] %v5574
                %v5576 = vld [vmem:[%s5400 + $0x2b8] sm:%s5393]
                %5577 = vst [vmem:[%s5401 + $0x538] sm:%s5393] %v5576
                %v5578 = vld [vmem:[%s5400 + $0x2c0] sm:%s5393]
                %5579 = vst [vmem:[%s5401 + $0x580] sm:%s5393] %v5578
                %v5580 = vld [vmem:[%s5400 + $0x2c8] sm:%s5393]
                %5581 = vst [vmem:[%s5401 + $0x588] sm:%s5393] %v5580
                %v5582 = vld [vmem:[%s5400 + $0x2d0] sm:%s5393]
                %5583 = vst [vmem:[%s5401 + $0x590] sm:%s5393] %v5582
                %v5584 = vld [vmem:[%s5400 + $0x2d8] sm:%s5393]
                %5585 = vst [vmem:[%s5401 + $0x598] sm:%s5393] %v5584
                %v5586 = vld [vmem:[%s5400 + $0x2e0] sm:%s5393]
                %5587 = vst [vmem:[%s5401 + $0x5a0] sm:%s5393] %v5586
                %v5588 = vld [vmem:[%s5400 + $0x2e8] sm:%s5393]
                %5589 = vst [vmem:[%s5401 + $0x5a8] sm:%s5393] %v5588
                %v5590 = vld [vmem:[%s5400 + $0x2f0] sm:%s5393]
                %5591 = vst [vmem:[%s5401 + $0x5b0] sm:%s5393] %v5590
                %v5592 = vld [vmem:[%s5400 + $0x2f8] sm:%s5393]
                %5593 = vst [vmem:[%s5401 + $0x5b8] sm:%s5393] %v5592
              $region170: #{kalman_net_filter.1} parent=164 // loop_footer
                %s5399 = sadd.s32 1, %s5395
              $region171: #{kalman_net_filter.1} parent=164 // loop_footer_branch
                %5394 = sbr.rel target = $region167
              $region172: #{kalman_net_filter.1} parent=164 // loop_exit
                _
            $region165: #{kalman_net_filter.1} parent=156 // pred_fallthru
              _
          $region157: #{kalman_net_filter.1} parent=152 // pred_fallthru
            _
          %5798 = vnop
        $region153: #{kalman_net_filter.1} parent=137 // pred_fallthru
          _
      $region138: #{kalman_net_filter.1} parent=5 // pred_fallthru
        _
      %p5799 = scmp.le.s32.totalorder 2, %s27
      // Predicated region
      $region188: #{kalman_net_filter.1} parent=5 // pred_check
        %p5800 = pneg %p5799
      $region189: #{kalman_net_filter.1} parent=5 // pred_check_branch
        %5802 = sbr.rel (%p5800) target = $region191
      $region190: #{kalman_net_filter.1} parent=5 // pred_region
        %s5803 = ssub.s32 %s27, 2
        // Predicated region
        $region192: #{kalman_net_filter.1} parent=190 // pred_check
          %p5804 = pneg %p507
        $region193: #{kalman_net_filter.1} parent=190 // pred_check_branch
          %5806 = sbr.rel (%p5804) target = $region195
        $region194: #{kalman_net_filter.1} parent=190 // pred_region
          %s5807 = sand.u32 %s492, 1
          %s5808 = sand.u32 %s492, 1
          %s5809 = smul.addr %s5808, 768
          %s5810 = scalar_lea.vmem [#allocation3], %s5809
        $region195: #{kalman_net_filter.1} parent=190 // pred_fallthru
          _
      $region191: #{kalman_net_filter.1} parent=5 // pred_fallthru
        _
    $region6: #{kalman_net_filter.1} parent=1 // loop_footer
      %s31 = sadd.s32 1, %s27
    $region7: #{kalman_net_filter.1} parent=1 // loop_footer_branch
      %26 = sbr.rel target = $region3
    $region8: #{kalman_net_filter.1} parent=1 // loop_exit
      _

</llo_original>
